<compile_context>
chip_gen: v6e
topology: v6e:2x2x1
jax: 0.10.0
libtpu: 0.0.40
codegen_flags: <defaults>
</compile_context>

<pallas_src>
import functools
import math

import jax
import jax.numpy as jnp
from jax.experimental import pallas as pl
from jax.experimental.pallas import tpu as pltpu


def _encoder_block_kernel(
    x_ref, ln1g_ref, ln1b_ref, wd_ref, bd_ref,
    wqkv_ref, bqkv_ref, woh_ref, bo_ref, ln2g_ref, ln2b_ref,
    out_ref,
    *, num_heads, eps=1e-5,
):
    bt, seq, embed = x_ref.shape                       # (Bt, S, E) activation block
    head_dim = embed // num_heads
    m = bt * seq                                       # packed row count fed to the MXU

    def layer_norm(v, g, b):
        # Single-pass statistics: var = E[x^2] - mean^2 (no centered second pass), rsqrt.
        mu = jnp.mean(v, axis=-1, keepdims=True)
        ms = jnp.mean(v * v, axis=-1, keepdims=True)
        var = ms - mu * mu
        return (v - mu) * jax.lax.rsqrt(var + eps) * g + b

    x = x_ref[...].reshape(m, embed)                   # flatten (Bt, S) -> M rows

    # --- LayerNorm 1 (f32) ---
    y = layer_norm(x, ln1g_ref[...], ln1b_ref[...])

    # --- Dense + ReLU (bf16 operands, f32 accumulation) ---
    y = jnp.dot(y.astype(jnp.bfloat16), wd_ref[...],
                preferred_element_type=jnp.float32) + bd_ref[...]
    y = jnp.maximum(y, 0.0)                            # (M, E); dense_dim == embed_dim

    # --- Fused QKV projection: one (M, E) x (E, 3E) matmul; q scale pre-folded into weights ---
    qkv = jnp.dot(y.astype(jnp.bfloat16), wqkv_ref[...],
                  preferred_element_type=jnp.float32) + bqkv_ref[...]
    qkv = qkv.astype(jnp.bfloat16)                     # matmul-operand dtype for attention

    def split_heads(col_off):                          # (M, E) columns -> (H*Bt, S, Dh)
        return jnp.concatenate(
            [qkv[:, col_off + h * head_dim: col_off + (h + 1) * head_dim]
             .reshape(bt, seq, head_dim) for h in range(num_heads)],
            axis=0)

    qh = split_heads(0)                                # (G, S, Dh), G = H*Bt, g = h*Bt + b
    kh = split_heads(embed)
    vh = split_heads(2 * embed)

    # --- Attention, batched over (head, batch) on the leading dim ---
    s = jnp.einsum('gqd,gkd->gqk', qh, kh, preferred_element_type=jnp.float32)
    s = s - jnp.max(s, axis=-1, keepdims=True)
    p = jnp.exp(s)
    p = p * pl.reciprocal(jnp.sum(p, axis=-1, keepdims=True), approx=True)
    o = jnp.einsum('gqk,gkd->gqd', p.astype(jnp.bfloat16), vh,
                   preferred_element_type=jnp.float32)           # (G, S, Dh) f32
    o = o.astype(jnp.bfloat16)

    # --- Output projection with the head merge fused into the contraction:
    #     attn = sum_h o_h @ wo[h]   (no scratch, no masked per-head column stores) ---
    attn = jnp.dot(o[0:bt].reshape(m, head_dim), woh_ref[0],
                   preferred_element_type=jnp.float32)
    for h in range(1, num_heads):
        attn = attn + jnp.dot(o[h * bt:(h + 1) * bt].reshape(m, head_dim), woh_ref[h],
                              preferred_element_type=jnp.float32)
    attn = attn + bo_ref[...]

    # --- Residual + LayerNorm 2 ---
    out = layer_norm(y + attn, ln2g_ref[...], ln2b_ref[...])
    out_ref[...] = out.reshape(bt, seq, embed).astype(out_ref.dtype)


def prepare_operands(params, num_heads):
    """One-time weight prep (hoisted out of the call path): (in, out) transposes, fused QKV
    weight/bias with 1/sqrt(head_dim) folded into the q columns, bf16 matmul weights, and the
    out-proj weight pre-split per head as (H, Dh, E)."""
    E = params["wq"].shape[0]
    D = params["wd"].shape[0]
    head_dim = E // num_heads
    scale = 1.0 / math.sqrt(head_dim)
    f32, bf16 = jnp.float32, jnp.bfloat16
    wqkv = jnp.concatenate(
        [params["wq"].T * scale, params["wk"].T, params["wv"].T], axis=1).astype(bf16)
    bqkv = jnp.concatenate(
        [params["bq"] * scale, params["bk"], params["bv"]], axis=0).reshape(1, 3 * E).astype(f32)
    woh = params["wo"].T.reshape(num_heads, head_dim, E).astype(bf16)    # (H, Dh, E)
    return (
        params["ln1_g"].reshape(1, E).astype(f32), params["ln1_b"].reshape(1, E).astype(f32),
        params["wd"].T.astype(bf16), params["bd"].reshape(1, D).astype(f32),
        wqkv, bqkv,
        woh, params["bo"].reshape(1, E).astype(f32),
        params["ln2_g"].reshape(1, E).astype(f32), params["ln2_b"].reshape(1, E).astype(f32),
    )


def _pick_batch_tile(batch, seq, target_rows=256):
    """Largest batch tile with Bt*S <= target_rows, preferring an even grid of >= 2 steps so
    v7x's two TensorCores both get work."""
    divisors = [d for d in range(1, batch + 1) if batch % d == 0]
    fits = [d for d in divisors if d * seq <= target_rows] or [1]
    even = [d for d in fits if (batch // d) >= 2 and (batch // d) % 2 == 0]
    return max(even) if even else max(fits)


def transformer_encoder_block_batch_first(xb, prepared, num_heads, block_batch=None):
    """xb: (batch, seq, embed) — batch-first entry point (no wrapper transposes)."""
    B, S, E = xb.shape
    D = prepared[2].shape[1]                            # wd is (E, D)
    H = num_heads
    assert D == E, "dense_dim must equal embed_dim for this module's forward to be valid"
    assert E % H == 0
    Bt = block_batch if block_batch is not None else _pick_batch_tile(B, S)
    assert B % Bt == 0

    kernel = functools.partial(_encoder_block_kernel, num_heads=H)

    x_spec = pl.BlockSpec((Bt, S, E), lambda g: (g, 0, 0))
    weight_specs = [pl.BlockSpec(op.shape, lambda g, _nd=op.ndim: (0,) * _nd)
                    for op in prepared]

    head_dim = E // H
    flops = (2 * B * S * E * D                 # dense
             + 2 * B * S * E * 3 * E           # fused QKV
             + 4 * B * H * S * S * head_dim    # scores + probs @ V
             + 2 * B * S * E * E)              # out-proj
    transcendentals = B * H * S * S + 2 * B * S + B * H * S
    bytes_accessed = (int(xb.size) * 4 + B * S * E * 4
                      + sum(int(op.size) * op.dtype.itemsize for op in prepared))
    cost = pl.CostEstimate(flops=int(flops), transcendentals=int(transcendentals),
                           bytes_accessed=int(bytes_accessed))

    return pl.pallas_call(
        kernel,
        grid=(B // Bt,),
        in_specs=[x_spec] + weight_specs,
        out_specs=pl.BlockSpec((Bt, S, E), lambda g: (g, 0, 0)),
        out_shape=jax.ShapeDtypeStruct((B, S, E), jnp.float32),
        compiler_params=pltpu.CompilerParams(
            # Batch-tile axis is independent -> megacore sharding on v7x (grid kept even, >= 2).
            dimension_semantics=("parallel",),
            # 32 MiB is safe on every generation (v7x has only 64 MiB physical VMEM);
            # can be raised to 64-96 MiB on v6e when using larger batch tiles.
            vmem_limit_bytes=32 * 1024 * 1024,
        ),
        cost_estimate=cost,
    )(xb, *prepared)


def transformer_encoder_block(x_sbe, prepared, num_heads, block_batch=None):
    """x: (seq, batch, embed) — nn.MultiheadAttention's default batch_first=False layout.
    Prefer the batch-first entry point above to avoid the two extra HBM transpose passes."""
    xb = jnp.transpose(x_sbe, (1, 0, 2))
    out = transformer_encoder_block_batch_first(xb, prepared, num_heads, block_batch)
    return jnp.transpose(out, (1, 0, 2))


def init_params(key, embed_dim, dense_dim):
    E, D = embed_dim, dense_dim
    ks = jax.random.split(key, 6)
    u = lambda k, shape, lim: jax.random.uniform(k, shape, jnp.float32, -lim, lim)
    lim_d = 1.0 / math.sqrt(E)
    return {
        # LayerNorms (PyTorch default init: weight=1, bias=0)
        "ln1_g": jnp.ones((E,), jnp.float32), "ln1_b": jnp.zeros((E,), jnp.float32),
        "ln2_g": jnp.ones((E,), jnp.float32), "ln2_b": jnp.zeros((E,), jnp.float32),
        # Dense(embed_dim -> dense_dim)
        "wd": u(ks[0], (D, E), lim_d), "bd": u(ks[1], (D,), lim_d),
        # MultiheadAttention in_proj split into q/k/v, bias zero-init like PyTorch
        "wq": u(ks[2], (E, E), lim_d), "bq": jnp.zeros((E,), jnp.float32),
        "wk": u(ks[3], (E, E), lim_d), "bk": jnp.zeros((E,), jnp.float32),
        "wv": u(ks[4], (E, E), lim_d), "bv": jnp.zeros((E,), jnp.float32),
        # out_proj Linear(E, E)
        "wo": u(ks[5], (E, E), lim_d), "bo": jnp.zeros((E,), jnp.float32),
    }


def reference_forward(xb, params, num_heads, eps=1e-5, matmul_dtype=jnp.float32):
    """Pure-JAX reference of the PyTorch forward in batch-first layout. With
    matmul_dtype=bfloat16 it mirrors the kernel's bf16-operand / f32-accumulate matmuls."""
    B, S, E = xb.shape
    H, Dh = num_heads, E // num_heads
    md = matmul_dtype
    scale = 1.0 / math.sqrt(Dh)

    def ln(v, g, b):
        mu = v.mean(-1, keepdims=True)
        var = ((v - mu) ** 2).mean(-1, keepdims=True)
        return (v - mu) / jnp.sqrt(var + eps) * g + b

    def mm(a, w):                                      # a @ w.T, operands cast to md, f32 acc
        return jnp.einsum('bse,de->bsd', a.astype(md), w.astype(md),
                          preferred_element_type=jnp.float32)

    y = ln(xb, params["ln1_g"], params["ln1_b"])
    y = jnp.maximum(mm(y, params["wd"]) + params["bd"], 0.0)

    q = mm(y, params["wq"] * scale) + params["bq"] * scale   # scale folded like the kernel
    k = mm(y, params["wk"]) + params["bk"]
    v = mm(y, params["wv"]) + params["bv"]

    def heads(t):                                      # (B,S,E) -> (B,H,S,Dh)
        return t.reshape(B, S, H, Dh).transpose(0, 2, 1, 3)

    qh, kh, vh = heads(q.astype(md)), heads(k.astype(md)), heads(v.astype(md))
    s = jnp.einsum('bhqd,bhkd->bhqk', qh, kh, preferred_element_type=jnp.float32)
    p = jax.nn.softmax(s, axis=-1)
    o = jnp.einsum('bhqk,bhkd->bhqd', p.astype(md), vh, preferred_element_type=jnp.float32)
    o = o.transpose(0, 2, 1, 3).reshape(B, S, E)
    attn = jnp.einsum('bse,de->bsd', o.astype(md), params["wo"].astype(md),
                      preferred_element_type=jnp.float32) + params["bo"]
    return ln(y + attn, params["ln2_g"], params["ln2_b"])


if __name__ == "__main__":
    # Small shapes: E a multiple of 128 (lane-dense stores); batch chosen so the packed row
    # count is Bt*S = 128 (full MXU occupancy on v5e) with a grid of 2 even "parallel" steps.
    SEQ, BATCH, EMBED, DENSE, HEADS = 8, 32, 128, 128, 4
    key = jax.random.PRNGKey(0)
    k_x, k_p = jax.random.split(key)
    xb = jax.random.normal(k_x, (BATCH, SEQ, EMBED), jnp.float32)     # batch-first (B, S, E)
    params = init_params(k_p, EMBED, DENSE)

    prepared = prepare_operands(params, HEADS)          # one-time weight prep (hoisted)
    fwd = jax.jit(functools.partial(transformer_encoder_block_batch_first, num_heads=HEADS))
    out = jax.block_until_ready(fwd(xb, prepared))

    assert out.shape == (BATCH, SEQ, EMBED)
    assert bool(jnp.all(jnp.isfinite(out)))

    # Tight check vs. a reference using the same bf16 matmul operands (structural correctness).
    ref_matched = reference_forward(xb, params, HEADS, matmul_dtype=jnp.bfloat16)
    err_matched = float(jnp.max(jnp.abs(out - ref_matched)))
    assert err_matched < 2e-2, f"mismatch vs bf16-matched reference: {err_matched}"

    # Loose sanity check vs. the full-f32 PyTorch-style reference (bf16 quantization error).
    ref_f32 = reference_forward(xb, params, HEADS, matmul_dtype=jnp.float32)
    err_f32 = float(jnp.max(jnp.abs(out - ref_f32)))
    assert err_f32 < 2e-1, f"mismatch vs f32 reference: {err_f32}"

    # Seq-first wrapper (PyTorch's default (S, B, E) layout) must agree with the batch-first path.
    out_sbe = jax.jit(functools.partial(transformer_encoder_block, num_heads=HEADS))(
        jnp.transpose(xb, (1, 0, 2)), prepared)
    err_layout = float(jnp.max(jnp.abs(jnp.transpose(out_sbe, (1, 0, 2)) - out)))
    assert err_layout < 1e-5, f"seq-first wrapper mismatch: {err_layout}"

    print("KERNEL_OK")
</pallas_src>

<mosaic_0001>
module attributes {stable_mosaic.version = 11 : i64} {
  func.func @_encoder_block_kernel(%arg0: i32, %arg1: memref<16x8x128xf32, #tpu.memory_space<vmem>>, %arg2: memref<1x128xf32, #tpu.memory_space<vmem>>, %arg3: memref<1x128xf32, #tpu.memory_space<vmem>>, %arg4: memref<128x128xbf16, #tpu.memory_space<vmem>>, %arg5: memref<1x128xf32, #tpu.memory_space<vmem>>, %arg6: memref<128x384xbf16, #tpu.memory_space<vmem>>, %arg7: memref<1x384xf32, #tpu.memory_space<vmem>>, %arg8: memref<4x32x128xbf16, #tpu.memory_space<vmem>>, %arg9: memref<1x128xf32, #tpu.memory_space<vmem>>, %arg10: memref<1x128xf32, #tpu.memory_space<vmem>>, %arg11: memref<1x128xf32, #tpu.memory_space<vmem>>, %arg12: memref<16x8x128xf32, #tpu.memory_space<vmem>>) attributes {dimension_semantics = [#tpu.dimension_semantics<parallel>], iteration_bounds = array<i64: 2>, scalar_prefetch = 0 : i64, scratch_operands = 0 : i64, tpu.core_type = #tpu.core_type<tc>, window_params = [{transform_indices = @transform_0, window_bounds = array<i64: 16, 8, 128>}, {pipeline_mode = #tpu.pipeline_mode<synchronous>, transform_indices = @transform_1, window_bounds = array<i64: 1, 128>}, {pipeline_mode = #tpu.pipeline_mode<synchronous>, transform_indices = @transform_2, window_bounds = array<i64: 1, 128>}, {pipeline_mode = #tpu.pipeline_mode<synchronous>, transform_indices = @transform_3, window_bounds = array<i64: 128, 128>}, {pipeline_mode = #tpu.pipeline_mode<synchronous>, transform_indices = @transform_4, window_bounds = array<i64: 1, 128>}, {pipeline_mode = #tpu.pipeline_mode<synchronous>, transform_indices = @transform_5, window_bounds = array<i64: 128, 384>}, {pipeline_mode = #tpu.pipeline_mode<synchronous>, transform_indices = @transform_6, window_bounds = array<i64: 1, 384>}, {pipeline_mode = #tpu.pipeline_mode<synchronous>, transform_indices = @transform_7, window_bounds = array<i64: 4, 32, 128>}, {pipeline_mode = #tpu.pipeline_mode<synchronous>, transform_indices = @transform_8, window_bounds = array<i64: 1, 128>}, {pipeline_mode = #tpu.pipeline_mode<synchronous>, transform_indices = @transform_9, window_bounds = array<i64: 1, 128>}, {pipeline_mode = #tpu.pipeline_mode<synchronous>, transform_indices = @transform_10, window_bounds = array<i64: 1, 128>}, {transform_indices = @transform_11, window_bounds = array<i64: 16, 8, 128>}]} {
    %c0 = arith.constant 0 : index
    %c0_0 = arith.constant 0 : index
    %c0_1 = arith.constant 0 : index
    %0 = vector.load %arg1[%c0, %c0_0, %c0_1] : memref<16x8x128xf32, #tpu.memory_space<vmem>>, vector<16x8x128xf32>
    %1 = vector.shape_cast %0 : vector<16x8x128xf32> to vector<128x128xf32>
    %c0_2 = arith.constant 0 : index
    %c0_3 = arith.constant 0 : index
    %2 = vector.load %arg2[%c0_2, %c0_3] : memref<1x128xf32, #tpu.memory_space<vmem>>, vector<1x128xf32>
    %c0_4 = arith.constant 0 : index
    %c0_5 = arith.constant 0 : index
    %3 = vector.load %arg3[%c0_4, %c0_5] : memref<1x128xf32, #tpu.memory_space<vmem>>, vector<1x128xf32>
    %cst = arith.constant dense<0.000000e+00> : vector<128xf32>
    %4 = vector.multi_reduction <add>, %1, %cst [1] : vector<128x128xf32> to vector<128xf32>
    %5 = vector.shape_cast %4 : vector<128xf32> to vector<128x1xf32>
    %cst_6 = arith.constant 1.280000e+02 : f32
    %6 = vector.broadcast %cst_6 : f32 to vector<128x1xf32>
    %7 = arith.divf %5, %6 : vector<128x1xf32>
    %8 = arith.mulf %1, %1 : vector<128x128xf32>
    %cst_7 = arith.constant dense<0.000000e+00> : vector<128xf32>
    %9 = vector.multi_reduction <add>, %8, %cst_7 [1] : vector<128x128xf32> to vector<128xf32>
    %10 = vector.shape_cast %9 : vector<128xf32> to vector<128x1xf32>
    %cst_8 = arith.constant 1.280000e+02 : f32
    %11 = vector.broadcast %cst_8 : f32 to vector<128x1xf32>
    %12 = arith.divf %10, %11 : vector<128x1xf32>
    %13 = arith.mulf %7, %7 : vector<128x1xf32>
    %14 = arith.subf %12, %13 : vector<128x1xf32>
    %15 = vector.broadcast %7 : vector<128x1xf32> to vector<128x128xf32>
    %16 = arith.subf %1, %15 : vector<128x128xf32>
    %cst_9 = arith.constant 9.99999974E-6 : f32
    %17 = vector.broadcast %cst_9 : f32 to vector<128x1xf32>
    %18 = arith.addf %14, %17 : vector<128x1xf32>
    %19 = math.rsqrt %18 : vector<128x1xf32>
    %20 = vector.broadcast %19 : vector<128x1xf32> to vector<128x128xf32>
    %21 = arith.mulf %16, %20 : vector<128x128xf32>
    %22 = vector.broadcast %2 : vector<1x128xf32> to vector<128x128xf32>
    %23 = arith.mulf %21, %22 : vector<128x128xf32>
    %24 = vector.broadcast %3 : vector<1x128xf32> to vector<128x128xf32>
    %25 = arith.addf %23, %24 : vector<128x128xf32>
    %26 = arith.truncf %25 : vector<128x128xf32> to vector<128x128xbf16>
    %c0_10 = arith.constant 0 : index
    %c0_11 = arith.constant 0 : index
    %27 = vector.load %arg4[%c0_10, %c0_11] : memref<128x128xbf16, #tpu.memory_space<vmem>>, vector<128x128xbf16>
    %cst_12 = arith.constant dense<0.000000e+00> : vector<128x128xf32>
    %28 = tpu.matmul %26, %27, %cst_12 {dimension_numbers = #tpu.dot_dimension_numbers<[1], [0], [0], [1], [0, 0, 1, 1], [], []>} : vector<128x128xbf16>, vector<128x128xbf16>, vector<128x128xf32> -> vector<128x128xf32>
    %c0_13 = arith.constant 0 : index
    %c0_14 = arith.constant 0 : index
    %29 = vector.load %arg5[%c0_13, %c0_14] : memref<1x128xf32, #tpu.memory_space<vmem>>, vector<1x128xf32>
    %30 = vector.broadcast %29 : vector<1x128xf32> to vector<128x128xf32>
    %31 = arith.addf %28, %30 : vector<128x128xf32>
    %cst_15 = arith.constant 0.000000e+00 : f32
    %32 = vector.broadcast %cst_15 : f32 to vector<128x128xf32>
    %33 = arith.maximumf %31, %32 : vector<128x128xf32>
    %34 = arith.truncf %33 : vector<128x128xf32> to vector<128x128xbf16>
    %c0_16 = arith.constant 0 : index
    %c0_17 = arith.constant 0 : index
    %35 = vector.load %arg6[%c0_16, %c0_17] : memref<128x384xbf16, #tpu.memory_space<vmem>>, vector<128x384xbf16>
    %cst_18 = arith.constant dense<0.000000e+00> : vector<128x384xf32>
    %36 = tpu.matmul %34, %35, %cst_18 {dimension_numbers = #tpu.dot_dimension_numbers<[1], [0], [0], [1], [0, 0, 1, 1], [], []>} : vector<128x128xbf16>, vector<128x384xbf16>, vector<128x384xf32> -> vector<128x384xf32>
    %c0_19 = arith.constant 0 : index
    %c0_20 = arith.constant 0 : index
    %37 = vector.load %arg7[%c0_19, %c0_20] : memref<1x384xf32, #tpu.memory_space<vmem>>, vector<1x384xf32>
    %38 = vector.broadcast %37 : vector<1x384xf32> to vector<128x384xf32>
    %39 = arith.addf %36, %38 : vector<128x384xf32>
    %40 = arith.truncf %39 : vector<128x384xf32> to vector<128x384xbf16>
    %41 = vector.extract_strided_slice %40 {offsets = [0, 0], sizes = [128, 32], strides = [1, 1]} : vector<128x384xbf16> to vector<128x32xbf16>
    %42 = vector.shape_cast %41 : vector<128x32xbf16> to vector<16x8x32xbf16>
    %43 = vector.extract_strided_slice %40 {offsets = [0, 32], sizes = [128, 32], strides = [1, 1]} : vector<128x384xbf16> to vector<128x32xbf16>
    %44 = vector.shape_cast %43 : vector<128x32xbf16> to vector<16x8x32xbf16>
    %45 = vector.extract_strided_slice %40 {offsets = [0, 64], sizes = [128, 32], strides = [1, 1]} : vector<128x384xbf16> to vector<128x32xbf16>
    %46 = vector.shape_cast %45 : vector<128x32xbf16> to vector<16x8x32xbf16>
    %47 = vector.extract_strided_slice %40 {offsets = [0, 96], sizes = [128, 32], strides = [1, 1]} : vector<128x384xbf16> to vector<128x32xbf16>
    %48 = vector.shape_cast %47 : vector<128x32xbf16> to vector<16x8x32xbf16>
    %49 = tpu.concatenate %42, %44, %46, %48 in 0 : vector<16x8x32xbf16>, vector<16x8x32xbf16>, vector<16x8x32xbf16>, vector<16x8x32xbf16> -> vector<64x8x32xbf16>
    %50 = vector.extract_strided_slice %40 {offsets = [0, 128], sizes = [128, 32], strides = [1, 1]} : vector<128x384xbf16> to vector<128x32xbf16>
    %51 = vector.shape_cast %50 : vector<128x32xbf16> to vector<16x8x32xbf16>
    %52 = vector.extract_strided_slice %40 {offsets = [0, 160], sizes = [128, 32], strides = [1, 1]} : vector<128x384xbf16> to vector<128x32xbf16>
    %53 = vector.shape_cast %52 : vector<128x32xbf16> to vector<16x8x32xbf16>
    %54 = vector.extract_strided_slice %40 {offsets = [0, 192], sizes = [128, 32], strides = [1, 1]} : vector<128x384xbf16> to vector<128x32xbf16>
    %55 = vector.shape_cast %54 : vector<128x32xbf16> to vector<16x8x32xbf16>
    %56 = vector.extract_strided_slice %40 {offsets = [0, 224], sizes = [128, 32], strides = [1, 1]} : vector<128x384xbf16> to vector<128x32xbf16>
    %57 = vector.shape_cast %56 : vector<128x32xbf16> to vector<16x8x32xbf16>
    %58 = tpu.concatenate %51, %53, %55, %57 in 0 : vector<16x8x32xbf16>, vector<16x8x32xbf16>, vector<16x8x32xbf16>, vector<16x8x32xbf16> -> vector<64x8x32xbf16>
    %59 = vector.extract_strided_slice %40 {offsets = [0, 256], sizes = [128, 32], strides = [1, 1]} : vector<128x384xbf16> to vector<128x32xbf16>
    %60 = vector.shape_cast %59 : vector<128x32xbf16> to vector<16x8x32xbf16>
    %61 = vector.extract_strided_slice %40 {offsets = [0, 288], sizes = [128, 32], strides = [1, 1]} : vector<128x384xbf16> to vector<128x32xbf16>
    %62 = vector.shape_cast %61 : vector<128x32xbf16> to vector<16x8x32xbf16>
    %63 = vector.extract_strided_slice %40 {offsets = [0, 320], sizes = [128, 32], strides = [1, 1]} : vector<128x384xbf16> to vector<128x32xbf16>
    %64 = vector.shape_cast %63 : vector<128x32xbf16> to vector<16x8x32xbf16>
    %65 = vector.extract_strided_slice %40 {offsets = [0, 352], sizes = [128, 32], strides = [1, 1]} : vector<128x384xbf16> to vector<128x32xbf16>
    %66 = vector.shape_cast %65 : vector<128x32xbf16> to vector<16x8x32xbf16>
    %67 = tpu.concatenate %60, %62, %64, %66 in 0 : vector<16x8x32xbf16>, vector<16x8x32xbf16>, vector<16x8x32xbf16>, vector<16x8x32xbf16> -> vector<64x8x32xbf16>
    "tpu.trace_start"() <{level = 10 : i32, message = "gqd,gkd->gqk"}> : () -> ()
    %cst_21 = arith.constant dense<0.000000e+00> : vector<64x8x8xf32>
    %68 = tpu.matmul %49, %58, %cst_21 {dimension_numbers = #tpu.dot_dimension_numbers<[2], [2], [1], [1], [0, 0, 0, 1, 1, 1], [0], [0]>} : vector<64x8x32xbf16>, vector<64x8x32xbf16>, vector<64x8x8xf32> -> vector<64x8x8xf32>
    "tpu.trace_stop"() : () -> ()
    %cst_22 = arith.constant dense<0xFF800000> : vector<64x8xf32>
    %69 = vector.multi_reduction <maximumf>, %68, %cst_22 [2] : vector<64x8x8xf32> to vector<64x8xf32>
    %70 = vector.shape_cast %69 : vector<64x8xf32> to vector<64x8x1xf32>
    %71 = vector.broadcast %70 : vector<64x8x1xf32> to vector<64x8x8xf32>
    %72 = arith.subf %68, %71 : vector<64x8x8xf32>
    %73 = math.exp %72 : vector<64x8x8xf32>
    %cst_23 = arith.constant dense<0.000000e+00> : vector<64x8xf32>
    %74 = vector.multi_reduction <add>, %73, %cst_23 [2] : vector<64x8x8xf32> to vector<64x8xf32>
    %75 = vector.shape_cast %74 : vector<64x8xf32> to vector<64x8x1xf32>
    %76 = tpu.reciprocal %75 {approx = true} : vector<64x8x1xf32> -> vector<64x8x1xf32>
    %77 = vector.broadcast %76 : vector<64x8x1xf32> to vector<64x8x8xf32>
    %78 = arith.mulf %73, %77 : vector<64x8x8xf32>
    %79 = arith.truncf %78 : vector<64x8x8xf32> to vector<64x8x8xbf16>
    "tpu.trace_start"() <{level = 10 : i32, message = "gqk,gkd->gqd"}> : () -> ()
    %cst_24 = arith.constant dense<0.000000e+00> : vector<64x8x32xf32>
    %80 = tpu.matmul %79, %67, %cst_24 {dimension_numbers = #tpu.dot_dimension_numbers<[2], [1], [1], [2], [0, 0, 0, 1, 1, 2], [0], [0]>} : vector<64x8x8xbf16>, vector<64x8x32xbf16>, vector<64x8x32xf32> -> vector<64x8x32xf32>
    "tpu.trace_stop"() : () -> ()
    %81 = arith.truncf %80 : vector<64x8x32xf32> to vector<64x8x32xbf16>
    %82 = vector.extract_strided_slice %81 {offsets = [0, 0, 0], sizes = [16, 8, 32], strides = [1, 1, 1]} : vector<64x8x32xbf16> to vector<16x8x32xbf16>
    %83 = vector.shape_cast %82 : vector<16x8x32xbf16> to vector<128x32xbf16>
    %c0_25 = arith.constant 0 : index
    %c0_26 = arith.constant 0 : index
    %c0_27 = arith.constant 0 : index
    %84 = vector.load %arg8[%c0_25, %c0_26, %c0_27] : memref<4x32x128xbf16, #tpu.memory_space<vmem>>, vector<1x32x128xbf16>
    %85 = vector.shape_cast %84 : vector<1x32x128xbf16> to vector<32x128xbf16>
    %cst_28 = arith.constant dense<0.000000e+00> : vector<128x128xf32>
    %86 = tpu.matmul %83, %85, %cst_28 {dimension_numbers = #tpu.dot_dimension_numbers<[1], [0], [0], [1], [0, 0, 1, 1], [], []>} : vector<128x32xbf16>, vector<32x128xbf16>, vector<128x128xf32> -> vector<128x128xf32>
    %87 = vector.extract_strided_slice %81 {offsets = [16, 0, 0], sizes = [16, 8, 32], strides = [1, 1, 1]} : vector<64x8x32xbf16> to vector<16x8x32xbf16>
    %88 = vector.shape_cast %87 : vector<16x8x32xbf16> to vector<128x32xbf16>
    %c1 = arith.constant 1 : index
    %c0_29 = arith.constant 0 : index
    %c0_30 = arith.constant 0 : index
    %89 = vector.load %arg8[%c1, %c0_29, %c0_30] : memref<4x32x128xbf16, #tpu.memory_space<vmem>>, vector<1x32x128xbf16>
    %90 = vector.shape_cast %89 : vector<1x32x128xbf16> to vector<32x128xbf16>
    %cst_31 = arith.constant dense<0.000000e+00> : vector<128x128xf32>
    %91 = tpu.matmul %88, %90, %cst_31 {dimension_numbers = #tpu.dot_dimension_numbers<[1], [0], [0], [1], [0, 0, 1, 1], [], []>} : vector<128x32xbf16>, vector<32x128xbf16>, vector<128x128xf32> -> vector<128x128xf32>
    %92 = arith.addf %86, %91 : vector<128x128xf32>
    %93 = vector.extract_strided_slice %81 {offsets = [32, 0, 0], sizes = [16, 8, 32], strides = [1, 1, 1]} : vector<64x8x32xbf16> to vector<16x8x32xbf16>
    %94 = vector.shape_cast %93 : vector<16x8x32xbf16> to vector<128x32xbf16>
    %c2 = arith.constant 2 : index
    %c0_32 = arith.constant 0 : index
    %c0_33 = arith.constant 0 : index
    %95 = vector.load %arg8[%c2, %c0_32, %c0_33] : memref<4x32x128xbf16, #tpu.memory_space<vmem>>, vector<1x32x128xbf16>
    %96 = vector.shape_cast %95 : vector<1x32x128xbf16> to vector<32x128xbf16>
    %cst_34 = arith.constant dense<0.000000e+00> : vector<128x128xf32>
    %97 = tpu.matmul %94, %96, %cst_34 {dimension_numbers = #tpu.dot_dimension_numbers<[1], [0], [0], [1], [0, 0, 1, 1], [], []>} : vector<128x32xbf16>, vector<32x128xbf16>, vector<128x128xf32> -> vector<128x128xf32>
    %98 = arith.addf %92, %97 : vector<128x128xf32>
    %99 = vector.extract_strided_slice %81 {offsets = [48, 0, 0], sizes = [16, 8, 32], strides = [1, 1, 1]} : vector<64x8x32xbf16> to vector<16x8x32xbf16>
    %100 = vector.shape_cast %99 : vector<16x8x32xbf16> to vector<128x32xbf16>
    %c3 = arith.constant 3 : index
    %c0_35 = arith.constant 0 : index
    %c0_36 = arith.constant 0 : index
    %101 = vector.load %arg8[%c3, %c0_35, %c0_36] : memref<4x32x128xbf16, #tpu.memory_space<vmem>>, vector<1x32x128xbf16>
    %102 = vector.shape_cast %101 : vector<1x32x128xbf16> to vector<32x128xbf16>
    %cst_37 = arith.constant dense<0.000000e+00> : vector<128x128xf32>
    %103 = tpu.matmul %100, %102, %cst_37 {dimension_numbers = #tpu.dot_dimension_numbers<[1], [0], [0], [1], [0, 0, 1, 1], [], []>} : vector<128x32xbf16>, vector<32x128xbf16>, vector<128x128xf32> -> vector<128x128xf32>
    %104 = arith.addf %98, %103 : vector<128x128xf32>
    %c0_38 = arith.constant 0 : index
    %c0_39 = arith.constant 0 : index
    %105 = vector.load %arg9[%c0_38, %c0_39] : memref<1x128xf32, #tpu.memory_space<vmem>>, vector<1x128xf32>
    %106 = vector.broadcast %105 : vector<1x128xf32> to vector<128x128xf32>
    %107 = arith.addf %104, %106 : vector<128x128xf32>
    %108 = arith.addf %33, %107 : vector<128x128xf32>
    %c0_40 = arith.constant 0 : index
    %c0_41 = arith.constant 0 : index
    %109 = vector.load %arg10[%c0_40, %c0_41] : memref<1x128xf32, #tpu.memory_space<vmem>>, vector<1x128xf32>
    %c0_42 = arith.constant 0 : index
    %c0_43 = arith.constant 0 : index
    %110 = vector.load %arg11[%c0_42, %c0_43] : memref<1x128xf32, #tpu.memory_space<vmem>>, vector<1x128xf32>
    %cst_44 = arith.constant dense<0.000000e+00> : vector<128xf32>
    %111 = vector.multi_reduction <add>, %108, %cst_44 [1] : vector<128x128xf32> to vector<128xf32>
    %112 = vector.shape_cast %111 : vector<128xf32> to vector<128x1xf32>
    %cst_45 = arith.constant 1.280000e+02 : f32
    %113 = vector.broadcast %cst_45 : f32 to vector<128x1xf32>
    %114 = arith.divf %112, %113 : vector<128x1xf32>
    %115 = arith.mulf %108, %108 : vector<128x128xf32>
    %cst_46 = arith.constant dense<0.000000e+00> : vector<128xf32>
    %116 = vector.multi_reduction <add>, %115, %cst_46 [1] : vector<128x128xf32> to vector<128xf32>
    %117 = vector.shape_cast %116 : vector<128xf32> to vector<128x1xf32>
    %cst_47 = arith.constant 1.280000e+02 : f32
    %118 = vector.broadcast %cst_47 : f32 to vector<128x1xf32>
    %119 = arith.divf %117, %118 : vector<128x1xf32>
    %120 = arith.mulf %114, %114 : vector<128x1xf32>
    %121 = arith.subf %119, %120 : vector<128x1xf32>
    %122 = vector.broadcast %114 : vector<128x1xf32> to vector<128x128xf32>
    %123 = arith.subf %108, %122 : vector<128x128xf32>
    %cst_48 = arith.constant 9.99999974E-6 : f32
    %124 = vector.broadcast %cst_48 : f32 to vector<128x1xf32>
    %125 = arith.addf %121, %124 : vector<128x1xf32>
    %126 = math.rsqrt %125 : vector<128x1xf32>
    %127 = vector.broadcast %126 : vector<128x1xf32> to vector<128x128xf32>
    %128 = arith.mulf %123, %127 : vector<128x128xf32>
    %129 = vector.broadcast %109 : vector<1x128xf32> to vector<128x128xf32>
    %130 = arith.mulf %128, %129 : vector<128x128xf32>
    %131 = vector.broadcast %110 : vector<1x128xf32> to vector<128x128xf32>
    %132 = arith.addf %130, %131 : vector<128x128xf32>
    %133 = vector.shape_cast %132 : vector<128x128xf32> to vector<16x8x128xf32>
    %c0_49 = arith.constant 0 : index
    %c0_50 = arith.constant 0 : index
    %c0_51 = arith.constant 0 : index
    %134 = vector.load %arg12[%c0_49, %c0_50, %c0_51] : memref<16x8x128xf32, #tpu.memory_space<vmem>>, vector<16x8x128xf32>
    tpu.vector_store %arg12[%c0_49, %c0_50, %c0_51], %133 {strides = array<i32>} : memref<16x8x128xf32, #tpu.memory_space<vmem>>, vector<16x8x128xf32>,
    return
  }
  func.func @transform_0(%arg0: i32) -> (i32, i32, i32) {
    %c0_i32 = arith.constant 0 : i32
    %c0_i32_0 = arith.constant 0 : i32
    %c0_i32_1 = arith.constant 0 : i32
    return %arg0, %c0_i32, %c0_i32_0 : i32, i32, i32
  }
  func.func @transform_1(%arg0: i32) -> (i32, i32) {
    %c0_i32 = arith.constant 0 : i32
    %c0_i32_0 = arith.constant 0 : i32
    %c0_i32_1 = arith.constant 0 : i32
    return %c0_i32, %c0_i32_0 : i32, i32
  }
  func.func @transform_2(%arg0: i32) -> (i32, i32) {
    %c0_i32 = arith.constant 0 : i32
    %c0_i32_0 = arith.constant 0 : i32
    %c0_i32_1 = arith.constant 0 : i32
    return %c0_i32, %c0_i32_0 : i32, i32
  }
  func.func @transform_3(%arg0: i32) -> (i32, i32) {
    %c0_i32 = arith.constant 0 : i32
    %c0_i32_0 = arith.constant 0 : i32
    %c0_i32_1 = arith.constant 0 : i32
    return %c0_i32, %c0_i32_0 : i32, i32
  }
  func.func @transform_4(%arg0: i32) -> (i32, i32) {
    %c0_i32 = arith.constant 0 : i32
    %c0_i32_0 = arith.constant 0 : i32
    %c0_i32_1 = arith.constant 0 : i32
    return %c0_i32, %c0_i32_0 : i32, i32
  }
  func.func @transform_5(%arg0: i32) -> (i32, i32) {
    %c0_i32 = arith.constant 0 : i32
    %c0_i32_0 = arith.constant 0 : i32
    %c0_i32_1 = arith.constant 0 : i32
    return %c0_i32, %c0_i32_0 : i32, i32
  }
  func.func @transform_6(%arg0: i32) -> (i32, i32) {
    %c0_i32 = arith.constant 0 : i32
    %c0_i32_0 = arith.constant 0 : i32
    %c0_i32_1 = arith.constant 0 : i32
    return %c0_i32, %c0_i32_0 : i32, i32
  }
  func.func @transform_7(%arg0: i32) -> (i32, i32, i32) {
    %c0_i32 = arith.constant 0 : i32
    %c0_i32_0 = arith.constant 0 : i32
    %c0_i32_1 = arith.constant 0 : i32
    %c0_i32_2 = arith.constant 0 : i32
    return %c0_i32, %c0_i32_0, %c0_i32_1 : i32, i32, i32
  }
  func.func @transform_8(%arg0: i32) -> (i32, i32) {
    %c0_i32 = arith.constant 0 : i32
    %c0_i32_0 = arith.constant 0 : i32
    %c0_i32_1 = arith.constant 0 : i32
    return %c0_i32, %c0_i32_0 : i32, i32
  }
  func.func @transform_9(%arg0: i32) -> (i32, i32) {
    %c0_i32 = arith.constant 0 : i32
    %c0_i32_0 = arith.constant 0 : i32
    %c0_i32_1 = arith.constant 0 : i32
    return %c0_i32, %c0_i32_0 : i32, i32
  }
  func.func @transform_10(%arg0: i32) -> (i32, i32) {
    %c0_i32 = arith.constant 0 : i32
    %c0_i32_0 = arith.constant 0 : i32
    %c0_i32_1 = arith.constant 0 : i32
    return %c0_i32, %c0_i32_0 : i32, i32
  }
  func.func @transform_11(%arg0: i32) -> (i32, i32, i32) {
    %c0_i32 = arith.constant 0 : i32
    %c0_i32_0 = arith.constant 0 : i32
    %c0_i32_1 = arith.constant 0 : i32
    return %arg0, %c0_i32, %c0_i32_0 : i32, i32, i32
  }
}

</mosaic_0001>

<llo_original>
// kernel: transformer_encoder_block_batch_first.1
$region0: #{transformer_encoder_block_batch_first.1}
  #allocation0 [shape = 'u32[]', space=smem, size = 0x4, offset = 0x4, fixed_abs, tag = 'smem constant byte address 0x4 - core index']
  #allocation1 [shape = 'u32[144,128]{1,0:T(1,128)}', space=vmem, size = 0x12000, scoped, tag = 'internal scratch']
  %s0 = inlined_call_operand.hbm [shape: f32[32,8,128], index: 0, kind: input, shape index: {}]
  %s1 = inlined_call_operand.vmem [shape: f32[1,128], index: 1, kind: input, shape index: {}]
  %s2 = inlined_call_operand.vmem [shape: f32[1,128], index: 2, kind: input, shape index: {}]
  %s3 = inlined_call_operand.hbm [shape: bf16[128,128], index: 3, kind: input, shape index: {}]
  %s4 = inlined_call_operand.vmem [shape: f32[1,128], index: 4, kind: input, shape index: {}]
  %s5 = inlined_call_operand.hbm [shape: bf16[128,384], index: 5, kind: input, shape index: {}]
  %s6 = inlined_call_operand.vmem [shape: f32[1,384], index: 6, kind: input, shape index: {}]
  %s7 = inlined_call_operand.hbm [shape: bf16[4,32,128], index: 7, kind: input, shape index: {}]
  %s8 = inlined_call_operand.vmem [shape: f32[1,128], index: 8, kind: input, shape index: {}]
  %s9 = inlined_call_operand.vmem [shape: f32[1,128], index: 9, kind: input, shape index: {}]
  %s10 = inlined_call_operand.vmem [shape: f32[1,128], index: 10, kind: input, shape index: {}]
  %s11 = inlined_call_operand.hbm [shape: f32[32,8,128], index: 11, kind: output, shape index: {}]
  %s12 = sld [smem:[#allocation0]]
  $region93: #{transformer_encoder_block_batch_first.1} parent=0
    _
  %s14 = ssub.s32 1, %s12
  %s15 = scalar_select 0, %s14, %s12
  $region1: #{transformer_encoder_block_batch_first.1} parent=0
    #allocation2 [shape = 'u8[131072]{0}', space=vmem, size = 0x20000, scoped, tag = 'input window, operand 0']
    #allocation3 [shape = 's32[2]{0}', space=sflag, size = 0x8, scoped, tag = 'scoped memory for transformer_encoder_block_batch_first.1']
    #allocation4 [shape = 's32[2]{0}', space=sflag, size = 0x8, scoped, tag = 'scoped memory for transformer_encoder_block_batch_first.1']
    #allocation5 [shape = 'u8[32768]{0}', space=vmem, size = 0x8000, scoped, tag = 'input window, operand 3, single buffered']
    #allocation6 [shape = 's32[1]{0}', space=sflag, size = 0x4, scoped, tag = 'scoped memory for transformer_encoder_block_batch_first.1']
    #allocation7 [shape = 'u8[98304]{0}', space=vmem, size = 0x18000, scoped, tag = 'input window, operand 5, single buffered']
    #allocation8 [shape = 'u8[32768]{0}', space=vmem, size = 0x8000, scoped, tag = 'input window, operand 7, single buffered']
    #allocation9 [shape = 's32[1]{0}', space=sflag, size = 0x4, scoped, tag = 'scoped memory for transformer_encoder_block_batch_first.1']
    #allocation10 [shape = 'u8[131072]{0}', space=vmem, size = 0x20000, scoped, tag = 'output window, operand 0']
    %16 = vsyncpa [#allocation3], 0
    %s17 = scalar_lea.sflag [#allocation3], 1
    %18 = vsyncpa %s17, 0
    %19 = vsyncpa [#allocation6], 0
    %20 = vsyncpa [#allocation9], 0
    %21 = vsyncpa [#allocation4], 0
    %s22 = scalar_lea.sflag [#allocation4], 1
    %23 = vsyncpa %s22, 0
    loop: start=0, step=1, limit=4
    $region2: #{transformer_encoder_block_batch_first.1} parent=1 // loop_pre_header
      _
    $region3: #{transformer_encoder_block_batch_first.1} parent=1 // loop_header
      %s25 = sphi 0, %s29
      %p26 = scmp.ge.s32.totalorder %s25, 4
      %s35 = sphi 0, %s37
      %s38 = sphi 0, %s35
      %s39 = sphi 0, %s38
      %s55 = sphi 0, %s39
      %s59 = sphi 0, %s59
      %s61 = sphi 0, %s59
      %s62 = sphi 0, %s61
      %s76 = sphi 0, %s62
      %s80 = sphi 0, %s80
      %s82 = sphi 0, %s80
      %s83 = sphi 0, %s82
      %s97 = sphi 0, %s83
      %s101 = sphi 0, %s101
      %s103 = sphi 0, %s101
      %s104 = sphi 0, %s103
      %s118 = sphi 0, %s104
      %s122 = sphi 0, %s122
      %s124 = sphi 0, %s122
      %s125 = sphi 0, %s124
      %s139 = sphi 0, %s125
      %s143 = sphi 0, %s143
      %s145 = sphi 0, %s143
      %s146 = sphi 0, %s145
      %s160 = sphi 0, %s146
      %s164 = sphi 0, %s164
      %s166 = sphi 0, %s164
      %s167 = sphi 0, %s166
      %s181 = sphi 0, %s167
      %s185 = sphi 0, %s185
      %s187 = sphi 0, %s185
      %s188 = sphi 0, %s187
      %s202 = sphi 0, %s188
      %s206 = sphi 0, %s206
      %s208 = sphi 0, %s206
      %s209 = sphi 0, %s208
      %s223 = sphi 0, %s209
      %s227 = sphi 0, %s227
      %s229 = sphi 0, %s227
      %s230 = sphi 0, %s229
      %s244 = sphi 0, %s230
      %s248 = sphi 0, %s248
      %s250 = sphi 0, %s248
      %s251 = sphi 0, %s250
      %s265 = sphi 0, %s251
      %s271 = sphi 0, %s273
      %s274 = sphi 0, %s271
      %s275 = sphi 0, %s274
      %s291 = sphi 0, %s275
    $region4: #{transformer_encoder_block_batch_first.1} parent=1 // loop_header_branch
      %28 = sbr.rel (%p26) target = $region8
    $region5: #{transformer_encoder_block_batch_first.1} parent=1 // loop_body
      %s30 = ssub.s32 %s25, 1
      %s31 = ssub.s32 %s25, 2
      %s32 = sadd.s32 %s25, 1
      %s33 = ssub.s32 %s25, %s32
      %p34 = scmp.eq.s32.totalorder %s33, 0
      %s36 = sadd.s32 %s35, 1
      %s37 = scalar_select %p34, %s35, %s36
      %p40 = pneg %p34
      %p41 = scmp.eq.s32.totalorder %s25, 1
      %p42 = por %p40, %p41
      %p43 = scmp.ne.s32.totalorder %s35, %s38
      %p44 = scmp.eq.s32.totalorder %s25, 0
      %p45 = por %p43, %p44
      %p46 = scmp.ne.s32.totalorder %s35, %s38
      %p47 = scmp.eq.s32.totalorder %s30, 1
      %p48 = por %p46, %p47
      %p49 = scmp.ne.s32.totalorder %s38, %s39
      %p50 = scmp.eq.s32.totalorder %s30, 0
      %p51 = por %p49, %p50
      %p52 = scmp.ne.s32.totalorder %s38, %s39
      %p53 = scmp.eq.s32.totalorder %s31, 1
      %p54 = por %p52, %p53
      %p56 = scmp.ne.s32.totalorder %s39, %s55
      %p57 = scmp.eq.s32.totalorder %s31, 0
      %p58 = por %p56, %p57
      %s60 = sadd.s32 %s59, 1
      %p63 = scmp.eq.s32.totalorder %s25, 1
      %p64 = scmp.ne.s32.totalorder %s59, %s61
      %p65 = scmp.eq.s32.totalorder %s25, 0
      %p66 = por %p64, %p65
      %p67 = scmp.ne.s32.totalorder %s59, %s61
      %p68 = scmp.eq.s32.totalorder %s30, 1
      %p69 = por %p67, %p68
      %p70 = scmp.ne.s32.totalorder %s61, %s62
      %p71 = scmp.eq.s32.totalorder %s30, 0
      %p72 = por %p70, %p71
      %p73 = scmp.ne.s32.totalorder %s61, %s62
      %p74 = scmp.eq.s32.totalorder %s31, 1
      %p75 = por %p73, %p74
      %p77 = scmp.ne.s32.totalorder %s62, %s76
      %p78 = scmp.eq.s32.totalorder %s31, 0
      %p79 = por %p77, %p78
      %s81 = sadd.s32 %s80, 1
      %p84 = scmp.eq.s32.totalorder %s25, 1
      %p85 = scmp.ne.s32.totalorder %s80, %s82
      %p86 = scmp.eq.s32.totalorder %s25, 0
      %p87 = por %p85, %p86
      %p88 = scmp.ne.s32.totalorder %s80, %s82
      %p89 = scmp.eq.s32.totalorder %s30, 1
      %p90 = por %p88, %p89
      %p91 = scmp.ne.s32.totalorder %s82, %s83
      %p92 = scmp.eq.s32.totalorder %s30, 0
      %p93 = por %p91, %p92
      %p94 = scmp.ne.s32.totalorder %s82, %s83
      %p95 = scmp.eq.s32.totalorder %s31, 1
      %p96 = por %p94, %p95
      %p98 = scmp.ne.s32.totalorder %s83, %s97
      %p99 = scmp.eq.s32.totalorder %s31, 0
      %p100 = por %p98, %p99
      %s102 = sadd.s32 %s101, 1
      %p105 = scmp.eq.s32.totalorder %s25, 1
      %p106 = scmp.ne.s32.totalorder %s101, %s103
      %p107 = scmp.eq.s32.totalorder %s25, 0
      %p108 = por %p106, %p107
      %p109 = scmp.ne.s32.totalorder %s101, %s103
      %p110 = scmp.eq.s32.totalorder %s30, 1
      %p111 = por %p109, %p110
      %p112 = scmp.ne.s32.totalorder %s103, %s104
      %p113 = scmp.eq.s32.totalorder %s30, 0
      %p114 = por %p112, %p113
      %p115 = scmp.ne.s32.totalorder %s103, %s104
      %p116 = scmp.eq.s32.totalorder %s31, 1
      %p117 = por %p115, %p116
      %p119 = scmp.ne.s32.totalorder %s104, %s118
      %p120 = scmp.eq.s32.totalorder %s31, 0
      %p121 = por %p119, %p120
      %s123 = sadd.s32 %s122, 1
      %p126 = scmp.eq.s32.totalorder %s25, 1
      %p127 = scmp.ne.s32.totalorder %s122, %s124
      %p128 = scmp.eq.s32.totalorder %s25, 0
      %p129 = por %p127, %p128
      %p130 = scmp.ne.s32.totalorder %s122, %s124
      %p131 = scmp.eq.s32.totalorder %s30, 1
      %p132 = por %p130, %p131
      %p133 = scmp.ne.s32.totalorder %s124, %s125
      %p134 = scmp.eq.s32.totalorder %s30, 0
      %p135 = por %p133, %p134
      %p136 = scmp.ne.s32.totalorder %s124, %s125
      %p137 = scmp.eq.s32.totalorder %s31, 1
      %p138 = por %p136, %p137
      %p140 = scmp.ne.s32.totalorder %s125, %s139
      %p141 = scmp.eq.s32.totalorder %s31, 0
      %p142 = por %p140, %p141
      %s144 = sadd.s32 %s143, 1
      %p147 = scmp.eq.s32.totalorder %s25, 1
      %p148 = scmp.ne.s32.totalorder %s143, %s145
      %p149 = scmp.eq.s32.totalorder %s25, 0
      %p150 = por %p148, %p149
      %p151 = scmp.ne.s32.totalorder %s143, %s145
      %p152 = scmp.eq.s32.totalorder %s30, 1
      %p153 = por %p151, %p152
      %p154 = scmp.ne.s32.totalorder %s145, %s146
      %p155 = scmp.eq.s32.totalorder %s30, 0
      %p156 = por %p154, %p155
      %p157 = scmp.ne.s32.totalorder %s145, %s146
      %p158 = scmp.eq.s32.totalorder %s31, 1
      %p159 = por %p157, %p158
      %p161 = scmp.ne.s32.totalorder %s146, %s160
      %p162 = scmp.eq.s32.totalorder %s31, 0
      %p163 = por %p161, %p162
      %s165 = sadd.s32 %s164, 1
      %p168 = scmp.eq.s32.totalorder %s25, 1
      %p169 = scmp.ne.s32.totalorder %s164, %s166
      %p170 = scmp.eq.s32.totalorder %s25, 0
      %p171 = por %p169, %p170
      %p172 = scmp.ne.s32.totalorder %s164, %s166
      %p173 = scmp.eq.s32.totalorder %s30, 1
      %p174 = por %p172, %p173
      %p175 = scmp.ne.s32.totalorder %s166, %s167
      %p176 = scmp.eq.s32.totalorder %s30, 0
      %p177 = por %p175, %p176
      %p178 = scmp.ne.s32.totalorder %s166, %s167
      %p179 = scmp.eq.s32.totalorder %s31, 1
      %p180 = por %p178, %p179
      %p182 = scmp.ne.s32.totalorder %s167, %s181
      %p183 = scmp.eq.s32.totalorder %s31, 0
      %p184 = por %p182, %p183
      %s186 = sadd.s32 %s185, 1
      %p189 = scmp.eq.s32.totalorder %s25, 1
      %p190 = scmp.ne.s32.totalorder %s185, %s187
      %p191 = scmp.eq.s32.totalorder %s25, 0
      %p192 = por %p190, %p191
      %p193 = scmp.ne.s32.totalorder %s185, %s187
      %p194 = scmp.eq.s32.totalorder %s30, 1
      %p195 = por %p193, %p194
      %p196 = scmp.ne.s32.totalorder %s187, %s188
      %p197 = scmp.eq.s32.totalorder %s30, 0
      %p198 = por %p196, %p197
      %p199 = scmp.ne.s32.totalorder %s187, %s188
      %p200 = scmp.eq.s32.totalorder %s31, 1
      %p201 = por %p199, %p200
      %p203 = scmp.ne.s32.totalorder %s188, %s202
      %p204 = scmp.eq.s32.totalorder %s31, 0
      %p205 = por %p203, %p204
      %s207 = sadd.s32 %s206, 1
      %p210 = scmp.eq.s32.totalorder %s25, 1
      %p211 = scmp.ne.s32.totalorder %s206, %s208
      %p212 = scmp.eq.s32.totalorder %s25, 0
      %p213 = por %p211, %p212
      %p214 = scmp.ne.s32.totalorder %s206, %s208
      %p215 = scmp.eq.s32.totalorder %s30, 1
      %p216 = por %p214, %p215
      %p217 = scmp.ne.s32.totalorder %s208, %s209
      %p218 = scmp.eq.s32.totalorder %s30, 0
      %p219 = por %p217, %p218
      %p220 = scmp.ne.s32.totalorder %s208, %s209
      %p221 = scmp.eq.s32.totalorder %s31, 1
      %p222 = por %p220, %p221
      %p224 = scmp.ne.s32.totalorder %s209, %s223
      %p225 = scmp.eq.s32.totalorder %s31, 0
      %p226 = por %p224, %p225
      %s228 = sadd.s32 %s227, 1
      %p231 = scmp.eq.s32.totalorder %s25, 1
      %p232 = scmp.ne.s32.totalorder %s227, %s229
      %p233 = scmp.eq.s32.totalorder %s25, 0
      %p234 = por %p232, %p233
      %p235 = scmp.ne.s32.totalorder %s227, %s229
      %p236 = scmp.eq.s32.totalorder %s30, 1
      %p237 = por %p235, %p236
      %p238 = scmp.ne.s32.totalorder %s229, %s230
      %p239 = scmp.eq.s32.totalorder %s30, 0
      %p240 = por %p238, %p239
      %p241 = scmp.ne.s32.totalorder %s229, %s230
      %p242 = scmp.eq.s32.totalorder %s31, 1
      %p243 = por %p241, %p242
      %p245 = scmp.ne.s32.totalorder %s230, %s244
      %p246 = scmp.eq.s32.totalorder %s31, 0
      %p247 = por %p245, %p246
      %s249 = sadd.s32 %s248, 1
      %p252 = scmp.eq.s32.totalorder %s25, 1
      %p253 = scmp.ne.s32.totalorder %s248, %s250
      %p254 = scmp.eq.s32.totalorder %s25, 0
      %p255 = por %p253, %p254
      %p256 = scmp.ne.s32.totalorder %s248, %s250
      %p257 = scmp.eq.s32.totalorder %s30, 1
      %p258 = por %p256, %p257
      %p259 = scmp.ne.s32.totalorder %s250, %s251
      %p260 = scmp.eq.s32.totalorder %s30, 0
      %p261 = por %p259, %p260
      %p262 = scmp.ne.s32.totalorder %s250, %s251
      %p263 = scmp.eq.s32.totalorder %s31, 1
      %p264 = por %p262, %p263
      %p266 = scmp.ne.s32.totalorder %s251, %s265
      %p267 = scmp.eq.s32.totalorder %s31, 0
      %p268 = por %p266, %p267
      %s269 = ssub.s32 %s25, %s32
      %p270 = scmp.eq.s32.totalorder %s269, 0
      %s272 = sadd.s32 %s271, 1
      %s273 = scalar_select %p270, %s271, %s272
      %p276 = pneg %p270
      %p277 = scmp.eq.s32.totalorder %s25, 1
      %p278 = por %p276, %p277
      %p279 = scmp.ne.s32.totalorder %s271, %s274
      %p280 = scmp.eq.s32.totalorder %s25, 0
      %p281 = por %p279, %p280
      %p282 = scmp.ne.s32.totalorder %s271, %s274
      %p283 = scmp.eq.s32.totalorder %s30, 1
      %p284 = por %p282, %p283
      %p285 = scmp.ne.s32.totalorder %s274, %s275
      %p286 = scmp.eq.s32.totalorder %s30, 0
      %p287 = por %p285, %p286
      %p288 = scmp.ne.s32.totalorder %s274, %s275
      %p289 = scmp.eq.s32.totalorder %s31, 1
      %p290 = por %p288, %p289
      %p292 = scmp.ne.s32.totalorder %s275, %s291
      %p293 = scmp.eq.s32.totalorder %s31, 0
      %p294 = por %p292, %p293
      %p295 = scmp.le.s32.totalorder 1, %s25
      %p296 = scmp.lt.s32.totalorder %s25, 3
      %p297 = pnand %p295, %p296
      %p298 = pneg %p297
      // Predicated region
      $region9: #{transformer_encoder_block_batch_first.1} parent=5 // pred_check
        _
      $region10: #{transformer_encoder_block_batch_first.1} parent=5 // pred_check_branch
        %300 = sbr.rel (%p297) target = $region12
      $region11: #{transformer_encoder_block_batch_first.1} parent=5 // pred_region
        %s301 = ssub.s32 %s25, 1
        // Predicated region
        $region13: #{transformer_encoder_block_batch_first.1} parent=11 // pred_check
          %p302 = pneg %p72
        $region14: #{transformer_encoder_block_batch_first.1} parent=11 // pred_check_branch
          %304 = sbr.rel (%p302) target = $region16
        $region15: #{transformer_encoder_block_batch_first.1} parent=11 // pred_region
          _
        $region16: #{transformer_encoder_block_batch_first.1} parent=11 // pred_fallthru
          _
        // Predicated region
        $region17: #{transformer_encoder_block_batch_first.1} parent=11 // pred_check
          %p305 = pneg %p93
        $region18: #{transformer_encoder_block_batch_first.1} parent=11 // pred_check_branch
          %307 = sbr.rel (%p305) target = $region20
        $region19: #{transformer_encoder_block_batch_first.1} parent=11 // pred_region
          _
        $region20: #{transformer_encoder_block_batch_first.1} parent=11 // pred_fallthru
          _
        // Predicated region
        $region21: #{transformer_encoder_block_batch_first.1} parent=11 // pred_check
          %p308 = pneg %p114
        $region22: #{transformer_encoder_block_batch_first.1} parent=11 // pred_check_branch
          %310 = sbr.rel (%p308) target = $region24
        $region23: #{transformer_encoder_block_batch_first.1} parent=11 // pred_region
          %s312 = ssub.s32 1024, 1024
          %313 = vsyncadd [#allocation6], %s312
          %s314 = sshll.u32 [#allocation5], 4
          %s315 = int_to_ptr.vmem [resolvable:$true] %s314
          %320 = dma.hbm_to_vmem [thread:$0]  %s3, 1024, %s315, [#allocation6], 64, 64, 4
        $region24: #{transformer_encoder_block_batch_first.1} parent=11 // pred_fallthru
          _
        // Predicated region
        $region25: #{transformer_encoder_block_batch_first.1} parent=11 // pred_check
          %p321 = pneg %p135
        $region26: #{transformer_encoder_block_batch_first.1} parent=11 // pred_check_branch
          %323 = sbr.rel (%p321) target = $region28
        $region27: #{transformer_encoder_block_batch_first.1} parent=11 // pred_region
          _
        $region28: #{transformer_encoder_block_batch_first.1} parent=11 // pred_fallthru
          _
        // Predicated region
        $region29: #{transformer_encoder_block_batch_first.1} parent=11 // pred_check
          %p324 = pneg %p156
        $region30: #{transformer_encoder_block_batch_first.1} parent=11 // pred_check_branch
          %326 = sbr.rel (%p324) target = $region32
        $region31: #{transformer_encoder_block_batch_first.1} parent=11 // pred_region
          %s328 = ssub.s32 3072, 3072
          %329 = vsyncadd [#allocation6], %s328
          %s330 = sshll.u32 [#allocation7], 4
          %s331 = int_to_ptr.vmem [resolvable:$true] %s330
          %336 = dma.hbm_to_vmem [thread:$0]  %s5, 3072, %s331, [#allocation6], 192, 192, 12
        $region32: #{transformer_encoder_block_batch_first.1} parent=11 // pred_fallthru
          _
        // Predicated region
        $region33: #{transformer_encoder_block_batch_first.1} parent=11 // pred_check
          %p337 = pneg %p177
        $region34: #{transformer_encoder_block_batch_first.1} parent=11 // pred_check_branch
          %339 = sbr.rel (%p337) target = $region36
        $region35: #{transformer_encoder_block_batch_first.1} parent=11 // pred_region
          _
        $region36: #{transformer_encoder_block_batch_first.1} parent=11 // pred_fallthru
          _
        // Predicated region
        $region37: #{transformer_encoder_block_batch_first.1} parent=11 // pred_check
          %p340 = pneg %p198
        $region38: #{transformer_encoder_block_batch_first.1} parent=11 // pred_check_branch
          %342 = sbr.rel (%p340) target = $region40
        $region39: #{transformer_encoder_block_batch_first.1} parent=11 // pred_region
          %s344 = ssub.s32 1024, 1024
          %345 = vsyncadd [#allocation9], %s344
          %s346 = sshll.u32 [#allocation8], 4
          %s347 = int_to_ptr.vmem [resolvable:$true] %s346
          %352 = dma.hbm_to_vmem [thread:$0]  %s7, 1024, %s347, [#allocation9], 64, 64, 4
        $region40: #{transformer_encoder_block_batch_first.1} parent=11 // pred_fallthru
          _
        // Predicated region
        $region41: #{transformer_encoder_block_batch_first.1} parent=11 // pred_check
          %p353 = pneg %p219
        $region42: #{transformer_encoder_block_batch_first.1} parent=11 // pred_check_branch
          %355 = sbr.rel (%p353) target = $region44
        $region43: #{transformer_encoder_block_batch_first.1} parent=11 // pred_region
          _
        $region44: #{transformer_encoder_block_batch_first.1} parent=11 // pred_fallthru
          _
        // Predicated region
        $region45: #{transformer_encoder_block_batch_first.1} parent=11 // pred_check
          %p356 = pneg %p240
        $region46: #{transformer_encoder_block_batch_first.1} parent=11 // pred_check_branch
          %358 = sbr.rel (%p356) target = $region48
        $region47: #{transformer_encoder_block_batch_first.1} parent=11 // pred_region
          _
        $region48: #{transformer_encoder_block_batch_first.1} parent=11 // pred_fallthru
          _
        // Predicated region
        $region49: #{transformer_encoder_block_batch_first.1} parent=11 // pred_check
          %p359 = pneg %p261
        $region50: #{transformer_encoder_block_batch_first.1} parent=11 // pred_check_branch
          %361 = sbr.rel (%p359) target = $region52
        $region51: #{transformer_encoder_block_batch_first.1} parent=11 // pred_region
          _
        $region52: #{transformer_encoder_block_batch_first.1} parent=11 // pred_fallthru
          _
      $region12: #{transformer_encoder_block_batch_first.1} parent=5 // pred_fallthru
        _
      %p362 = scmp.lt.s32.totalorder %s25, 2
      // Predicated region
      $region53: #{transformer_encoder_block_batch_first.1} parent=5 // pred_check
        %p363 = pneg %p362
      $region54: #{transformer_encoder_block_batch_first.1} parent=5 // pred_check_branch
        %365 = sbr.rel (%p363) target = $region56
      $region55: #{transformer_encoder_block_batch_first.1} parent=5 // pred_region
        // Predicated region
        $region57: #{transformer_encoder_block_batch_first.1} parent=55 // pred_check
          %p366 = pneg %p45
        $region58: #{transformer_encoder_block_batch_first.1} parent=55 // pred_check_branch
          %368 = sbr.rel (%p366) target = $region60
        $region59: #{transformer_encoder_block_batch_first.1} parent=55 // pred_region
          %s369 = sand.u32 %s35, 1
          %s370 = scalar_lea.sflag [#allocation3], %s369
          %s371 = sand.u32 %s35, 1
          %s372 = smul.addr %s371, 128
          %s373 = scalar_lea.vmem [#allocation2], %s372
          %s374 = smul.u32 16, %s25
          %s376 = ssub.s32 2048, 2048
          %377 = vsyncadd %s370, %s376
          %s378 = smul.addr %s374, 128
          %s379 = scalar_lea.hbm %s0, %s378
          %s380 = sshll.u32 %s373, 4
          %s381 = int_to_ptr.vmem [resolvable:$true] %s380
          %386 = dma.hbm_to_vmem [thread:$0]  %s379, 2048, %s381, %s370, 128, 128, 8
        $region60: #{transformer_encoder_block_batch_first.1} parent=55 // pred_fallthru
          _
      $region56: #{transformer_encoder_block_batch_first.1} parent=5 // pred_fallthru
        _
      %p387 = scmp.le.s32.totalorder 1, %s25
      %p388 = scmp.lt.s32.totalorder %s25, 3
      %p389 = pnand %p387, %p388
      %p390 = pneg %p389
      // Predicated region
      $region61: #{transformer_encoder_block_batch_first.1} parent=5 // pred_check
        _
      $region62: #{transformer_encoder_block_batch_first.1} parent=5 // pred_check_branch
        %392 = sbr.rel (%p389) target = $region64
      $region63: #{transformer_encoder_block_batch_first.1} parent=5 // pred_region
        %s393 = ssub.s32 %s25, 1
        %s394 = sand.u32 %s38, 1
        %s395 = scalar_lea.sflag [#allocation3], %s394
        %s396 = sand.u32 %s38, 1
        %s397 = smul.addr %s396, 128
        %s398 = scalar_lea.vmem [#allocation2], %s397
        // Predicated region
        $region65: #{transformer_encoder_block_batch_first.1} parent=63 // pred_check
          %p399 = pneg %p51
        $region66: #{transformer_encoder_block_batch_first.1} parent=63 // pred_check_branch
          %401 = sbr.rel (%p399) target = $region68
        $region67: #{transformer_encoder_block_batch_first.1} parent=63 // pred_region
          %402 = dma.done %s395, 2048
        $region68: #{transformer_encoder_block_batch_first.1} parent=63 // pred_fallthru
          _
        // Predicated region
        $region69: #{transformer_encoder_block_batch_first.1} parent=63 // pred_check
          %p403 = pneg %p114
        $region70: #{transformer_encoder_block_batch_first.1} parent=63 // pred_check_branch
          %405 = sbr.rel (%p403) target = $region72
        $region71: #{transformer_encoder_block_batch_first.1} parent=63 // pred_region
          %406 = dma.done [#allocation6], 1024
        $region72: #{transformer_encoder_block_batch_first.1} parent=63 // pred_fallthru
          _
        // Predicated region
        $region73: #{transformer_encoder_block_batch_first.1} parent=63 // pred_check
          %p407 = pneg %p156
        $region74: #{transformer_encoder_block_batch_first.1} parent=63 // pred_check_branch
          %409 = sbr.rel (%p407) target = $region76
        $region75: #{transformer_encoder_block_batch_first.1} parent=63 // pred_region
          %410 = dma.done [#allocation6], 3072
        $region76: #{transformer_encoder_block_batch_first.1} parent=63 // pred_fallthru
          _
        // Predicated region
        $region77: #{transformer_encoder_block_batch_first.1} parent=63 // pred_check
          %p411 = pneg %p198
        $region78: #{transformer_encoder_block_batch_first.1} parent=63 // pred_check_branch
          %413 = sbr.rel (%p411) target = $region80
        $region79: #{transformer_encoder_block_batch_first.1} parent=63 // pred_region
          %414 = dma.done [#allocation9], 1024
        $region80: #{transformer_encoder_block_batch_first.1} parent=63 // pred_fallthru
          _
        %s415 = sand.u32 %s38, 1
        %s416 = scalar_lea.sflag [#allocation3], %s415
        %s417 = sand.u32 %s38, 1
        %s418 = smul.addr %s417, 128
        %s419 = scalar_lea.vmem [#allocation2], %s418
        %p420 = pneg %p51
        %p421 = pneg %p48
        %p422 = pneg %p72
        %p423 = pneg %p69
        %p424 = pneg %p93
        %p425 = pneg %p90
        %p426 = pneg %p114
        %p427 = pneg %p111
        %p428 = pneg %p135
        %p429 = pneg %p132
        %p430 = pneg %p156
        %p431 = pneg %p153
        %p432 = pneg %p177
        %p433 = pneg %p174
        %p434 = pneg %p198
        %p435 = pneg %p195
        %p436 = pneg %p219
        %p437 = pneg %p216
        %p438 = pneg %p240
        %p439 = pneg %p237
        %p440 = pneg %p261
        %p441 = pneg %p258
        %p442 = pneg %p287
        %p443 = pneg %p284
        %s444 = sand.u32 %s274, 1
        %s445 = scalar_lea.sflag [#allocation4], %s444
        %s446 = sand.u32 %s274, 1
        %s447 = smul.addr %s446, 128
        %s448 = scalar_lea.vmem [#allocation10], %s447
        %s449 = smul.u32 16, %s30
        %s450 = smul.u32 16, %s30
        %v452 = vld [vmem:[%s398] sm:$0xff]
        %v453 = vld [vmem:[%s398 + $0x8] sm:$0xff]
        %v454 = vld [vmem:[%s398 + $0x10] sm:$0xff]
        %v455 = vld [vmem:[%s398 + $0x18] sm:$0xff]
        %v456 = vld [vmem:[%s398 + $0x20] sm:$0xff]
        %v457 = vld [vmem:[%s398 + $0x28] sm:$0xff]
        %v458 = vld [vmem:[%s398 + $0x30] sm:$0xff]
        %v459 = vld [vmem:[%s398 + $0x38] sm:$0xff]
        %v460 = vld [vmem:[%s398 + $0x40] sm:$0xff]
        %v461 = vld [vmem:[%s398 + $0x48] sm:$0xff]
        %v462 = vld [vmem:[%s398 + $0x50] sm:$0xff]
        %v463 = vld [vmem:[%s398 + $0x58] sm:$0xff]
        %v464 = vld [vmem:[%s398 + $0x60] sm:$0xff]
        %v465 = vld [vmem:[%s398 + $0x68] sm:$0xff]
        %v466 = vld [vmem:[%s398 + $0x70] sm:$0xff]
        %v467 = vld [vmem:[%s398 + $0x78] sm:$0xff]
        %v468 = vld [vmem:[%s1] sm:$0x1]
        %v469 = vld [vmem:[%s2] sm:$0x1]
        %470 = vadd.xlane.f32.xlu0 %v452
        %v471 = vpop.xlane.xlu0 %470
        %472 = vadd.xlane.f32.xlu0 %v453
        %v473 = vpop.xlane.xlu0 %472
        %474 = vadd.xlane.f32.xlu0 %v454
        %v475 = vpop.xlane.xlu0 %474
        %476 = vadd.xlane.f32.xlu0 %v455
        %v477 = vpop.xlane.xlu0 %476
        %478 = vadd.xlane.f32.xlu0 %v456
        %v479 = vpop.xlane.xlu0 %478
        %480 = vadd.xlane.f32.xlu0 %v457
        %v481 = vpop.xlane.xlu0 %480
        %482 = vadd.xlane.f32.xlu0 %v458
        %v483 = vpop.xlane.xlu0 %482
        %484 = vadd.xlane.f32.xlu0 %v459
        %v485 = vpop.xlane.xlu0 %484
        %486 = vadd.xlane.f32.xlu0 %v460
        %v487 = vpop.xlane.xlu0 %486
        %488 = vadd.xlane.f32.xlu0 %v461
        %v489 = vpop.xlane.xlu0 %488
        %490 = vadd.xlane.f32.xlu0 %v462
        %v491 = vpop.xlane.xlu0 %490
        %492 = vadd.xlane.f32.xlu0 %v463
        %v493 = vpop.xlane.xlu0 %492
        %494 = vadd.xlane.f32.xlu0 %v464
        %v495 = vpop.xlane.xlu0 %494
        %496 = vadd.xlane.f32.xlu0 %v465
        %v497 = vpop.xlane.xlu0 %496
        %498 = vadd.xlane.f32.xlu0 %v466
        %v499 = vpop.xlane.xlu0 %498
        %500 = vadd.xlane.f32.xlu0 %v467
        %v501 = vpop.xlane.xlu0 %500
        %v502 = vrcp.pop 128.0
        %v503 = vmul.f32 %v471, %v502
        %v504 = vmul.f32 %v473, %v502
        %v505 = vmul.f32 %v475, %v502
        %v506 = vmul.f32 %v477, %v502
        %v507 = vmul.f32 %v479, %v502
        %v508 = vmul.f32 %v481, %v502
        %v509 = vmul.f32 %v483, %v502
        %v510 = vmul.f32 %v485, %v502
        %v511 = vmul.f32 %v487, %v502
        %v512 = vmul.f32 %v489, %v502
        %v513 = vmul.f32 %v491, %v502
        %v514 = vmul.f32 %v493, %v502
        %v515 = vmul.f32 %v495, %v502
        %v516 = vmul.f32 %v497, %v502
        %v517 = vmul.f32 %v499, %v502
        %v518 = vmul.f32 %v501, %v502
        %v519 = vmul.f32 %v452, %v452
        %v520 = vmul.f32 %v453, %v453
        %v521 = vmul.f32 %v454, %v454
        %v522 = vmul.f32 %v455, %v455
        %v523 = vmul.f32 %v456, %v456
        %v524 = vmul.f32 %v457, %v457
        %v525 = vmul.f32 %v458, %v458
        %v526 = vmul.f32 %v459, %v459
        %v527 = vmul.f32 %v460, %v460
        %v528 = vmul.f32 %v461, %v461
        %v529 = vmul.f32 %v462, %v462
        %v530 = vmul.f32 %v463, %v463
        %v531 = vmul.f32 %v464, %v464
        %v532 = vmul.f32 %v465, %v465
        %v533 = vmul.f32 %v466, %v466
        %v534 = vmul.f32 %v467, %v467
        %535 = vadd.xlane.f32.xlu0 %v519
        %v536 = vpop.xlane.xlu0 %535
        %537 = vadd.xlane.f32.xlu0 %v520
        %v538 = vpop.xlane.xlu0 %537
        %539 = vadd.xlane.f32.xlu0 %v521
        %v540 = vpop.xlane.xlu0 %539
        %541 = vadd.xlane.f32.xlu0 %v522
        %v542 = vpop.xlane.xlu0 %541
        %543 = vadd.xlane.f32.xlu0 %v523
        %v544 = vpop.xlane.xlu0 %543
        %545 = vadd.xlane.f32.xlu0 %v524
        %v546 = vpop.xlane.xlu0 %545
        %547 = vadd.xlane.f32.xlu0 %v525
        %v548 = vpop.xlane.xlu0 %547
        %549 = vadd.xlane.f32.xlu0 %v526
        %v550 = vpop.xlane.xlu0 %549
        %551 = vadd.xlane.f32.xlu0 %v527
        %v552 = vpop.xlane.xlu0 %551
        %553 = vadd.xlane.f32.xlu0 %v528
        %v554 = vpop.xlane.xlu0 %553
        %555 = vadd.xlane.f32.xlu0 %v529
        %v556 = vpop.xlane.xlu0 %555
        %557 = vadd.xlane.f32.xlu0 %v530
        %v558 = vpop.xlane.xlu0 %557
        %559 = vadd.xlane.f32.xlu0 %v531
        %v560 = vpop.xlane.xlu0 %559
        %561 = vadd.xlane.f32.xlu0 %v532
        %v562 = vpop.xlane.xlu0 %561
        %563 = vadd.xlane.f32.xlu0 %v533
        %v564 = vpop.xlane.xlu0 %563
        %565 = vadd.xlane.f32.xlu0 %v534
        %v566 = vpop.xlane.xlu0 %565
        %v567 = vmul.f32 %v536, %v502
        %v568 = vmul.f32 %v538, %v502
        %v569 = vmul.f32 %v540, %v502
        %v570 = vmul.f32 %v542, %v502
        %v571 = vmul.f32 %v544, %v502
        %v572 = vmul.f32 %v546, %v502
        %v573 = vmul.f32 %v548, %v502
        %v574 = vmul.f32 %v550, %v502
        %v575 = vmul.f32 %v552, %v502
        %v576 = vmul.f32 %v554, %v502
        %v577 = vmul.f32 %v556, %v502
        %v578 = vmul.f32 %v558, %v502
        %v579 = vmul.f32 %v560, %v502
        %v580 = vmul.f32 %v562, %v502
        %v581 = vmul.f32 %v564, %v502
        %v582 = vmul.f32 %v566, %v502
        %v583 = vmul.f32 %v503, %v503
        %v584 = vmul.f32 %v504, %v504
        %v585 = vmul.f32 %v505, %v505
        %v586 = vmul.f32 %v506, %v506
        %v587 = vmul.f32 %v507, %v507
        %v588 = vmul.f32 %v508, %v508
        %v589 = vmul.f32 %v509, %v509
        %v590 = vmul.f32 %v510, %v510
        %v591 = vmul.f32 %v511, %v511
        %v592 = vmul.f32 %v512, %v512
        %v593 = vmul.f32 %v513, %v513
        %v594 = vmul.f32 %v514, %v514
        %v595 = vmul.f32 %v515, %v515
        %v596 = vmul.f32 %v516, %v516
        %v597 = vmul.f32 %v517, %v517
        %v598 = vmul.f32 %v518, %v518
        %v599 = vsub.f32 %v567, %v583
        %v600 = vsub.f32 %v568, %v584
        %v601 = vsub.f32 %v569, %v585
        %v602 = vsub.f32 %v570, %v586
        %v603 = vsub.f32 %v571, %v587
        %v604 = vsub.f32 %v572, %v588
        %v605 = vsub.f32 %v573, %v589
        %v606 = vsub.f32 %v574, %v590
        %v607 = vsub.f32 %v575, %v591
        %v608 = vsub.f32 %v576, %v592
        %v609 = vsub.f32 %v577, %v593
        %v610 = vsub.f32 %v578, %v594
        %v611 = vsub.f32 %v579, %v595
        %v612 = vsub.f32 %v580, %v596
        %v613 = vsub.f32 %v581, %v597
        %v614 = vsub.f32 %v582, %v598
        %v615 = vsub.f32 %v452, %v503
        %v616 = vsub.f32 %v453, %v504
        %v617 = vsub.f32 %v454, %v505
        %v618 = vsub.f32 %v455, %v506
        %v619 = vsub.f32 %v456, %v507
        %v620 = vsub.f32 %v457, %v508
        %v621 = vsub.f32 %v458, %v509
        %v622 = vsub.f32 %v459, %v510
        %v623 = vsub.f32 %v460, %v511
        %v624 = vsub.f32 %v461, %v512
        %v625 = vsub.f32 %v462, %v513
        %v626 = vsub.f32 %v463, %v514
        %v627 = vsub.f32 %v464, %v515
        %v628 = vsub.f32 %v465, %v516
        %v629 = vsub.f32 %v466, %v517
        %v630 = vsub.f32 %v467, %v518
        %v631 = vadd.f32 %v599, 1e-05
        %v632 = vadd.f32 %v600, 1e-05
        %v633 = vadd.f32 %v601, 1e-05
        %v634 = vadd.f32 %v602, 1e-05
        %v635 = vadd.f32 %v603, 1e-05
        %v636 = vadd.f32 %v604, 1e-05
        %v637 = vadd.f32 %v605, 1e-05
        %v638 = vadd.f32 %v606, 1e-05
        %v639 = vadd.f32 %v607, 1e-05
        %v640 = vadd.f32 %v608, 1e-05
        %v641 = vadd.f32 %v609, 1e-05
        %v642 = vadd.f32 %v610, 1e-05
        %v643 = vadd.f32 %v611, 1e-05
        %v644 = vadd.f32 %v612, 1e-05
        %v645 = vadd.f32 %v613, 1e-05
        %v646 = vadd.f32 %v614, 1e-05
        %v647 = vrsqrt.pop %v631
        %v648 = vrsqrt.pop %v632
        %v649 = vrsqrt.pop %v633
        %v650 = vrsqrt.pop %v634
        %v651 = vrsqrt.pop %v635
        %v652 = vrsqrt.pop %v636
        %v653 = vrsqrt.pop %v637
        %v654 = vrsqrt.pop %v638
        %v655 = vrsqrt.pop %v639
        %v656 = vrsqrt.pop %v640
        %v657 = vrsqrt.pop %v641
        %v658 = vrsqrt.pop %v642
        %v659 = vrsqrt.pop %v643
        %v660 = vrsqrt.pop %v644
        %v661 = vrsqrt.pop %v645
        %v662 = vrsqrt.pop %v646
        %v663 = vmul.f32 %v615, %v647
        %v664 = vmul.f32 %v616, %v648
        %v665 = vmul.f32 %v617, %v649
        %v666 = vmul.f32 %v618, %v650
        %v667 = vmul.f32 %v619, %v651
        %v668 = vmul.f32 %v620, %v652
        %v669 = vmul.f32 %v621, %v653
        %v670 = vmul.f32 %v622, %v654
        %v671 = vmul.f32 %v623, %v655
        %v672 = vmul.f32 %v624, %v656
        %v673 = vmul.f32 %v625, %v657
        %v674 = vmul.f32 %v626, %v658
        %v675 = vmul.f32 %v627, %v659
        %v676 = vmul.f32 %v628, %v660
        %v677 = vmul.f32 %v629, %v661
        %v678 = vmul.f32 %v630, %v662
        %v680 = vlaneseq
        %v681 = vshrl.u32 %v680, 7
        %v682 = vsub.s32 0, %v681
        %v683 = vrot.slane %v468, %v682
        %v685 = vmul.f32 %v663, %v683
        %v686 = vmul.f32 %v664, %v683
        %v687 = vmul.f32 %v665, %v683
        %v688 = vmul.f32 %v666, %v683
        %v689 = vmul.f32 %v667, %v683
        %v690 = vmul.f32 %v668, %v683
        %v691 = vmul.f32 %v669, %v683
        %v692 = vmul.f32 %v670, %v683
        %v693 = vmul.f32 %v671, %v683
        %v694 = vmul.f32 %v672, %v683
        %v695 = vmul.f32 %v673, %v683
        %v696 = vmul.f32 %v674, %v683
        %v697 = vmul.f32 %v675, %v683
        %v698 = vmul.f32 %v676, %v683
        %v699 = vmul.f32 %v677, %v683
        %v700 = vmul.f32 %v678, %v683
        %v702 = vlaneseq
        %v703 = vshrl.u32 %v702, 7
        %v704 = vsub.s32 0, %v703
        %v705 = vrot.slane %v469, %v704
        %v707 = vadd.f32 %v685, %v705
        %v708 = vadd.f32 %v686, %v705
        %v709 = vadd.f32 %v687, %v705
        %v710 = vadd.f32 %v688, %v705
        %v711 = vadd.f32 %v689, %v705
        %v712 = vadd.f32 %v690, %v705
        %v713 = vadd.f32 %v691, %v705
        %v714 = vadd.f32 %v692, %v705
        %v715 = vadd.f32 %v693, %v705
        %v716 = vadd.f32 %v694, %v705
        %v717 = vadd.f32 %v695, %v705
        %v718 = vadd.f32 %v696, %v705
        %v719 = vadd.f32 %v697, %v705
        %v720 = vadd.f32 %v698, %v705
        %v721 = vadd.f32 %v699, %v705
        %v722 = vadd.f32 %v700, %v705
        %v723 = vpack.c.bf16 %v708, %v707
        %v724 = vpack.c.bf16 %v710, %v709
        %v725 = vpack.c.bf16 %v712, %v711
        %v726 = vpack.c.bf16 %v714, %v713
        %v727 = vpack.c.bf16 %v716, %v715
        %v728 = vpack.c.bf16 %v718, %v717
        %v729 = vpack.c.bf16 %v720, %v719
        %v730 = vpack.c.bf16 %v722, %v721
        %v731 = vld [vmem:[#allocation5] sm:$0xf]
        %v732 = vld [vmem:[#allocation5 + $0x4] sm:$0xf]
        %v733 = vld [vmem:[#allocation5 + $0x8] sm:$0xf]
        %v734 = vld [vmem:[#allocation5 + $0xc] sm:$0xf]
        %v735 = vld [vmem:[#allocation5 + $0x10] sm:$0xf]
        %v736 = vld [vmem:[#allocation5 + $0x14] sm:$0xf]
        %v737 = vld [vmem:[#allocation5 + $0x18] sm:$0xf]
        %v738 = vld [vmem:[#allocation5 + $0x1c] sm:$0xf]
        %v739 = vld [vmem:[#allocation5 + $0x20] sm:$0xf]
        %v740 = vld [vmem:[#allocation5 + $0x24] sm:$0xf]
        %v741 = vld [vmem:[#allocation5 + $0x28] sm:$0xf]
        %v742 = vld [vmem:[#allocation5 + $0x2c] sm:$0xf]
        %v743 = vld [vmem:[#allocation5 + $0x30] sm:$0xf]
        %v744 = vld [vmem:[#allocation5 + $0x34] sm:$0xf]
        %v745 = vld [vmem:[#allocation5 + $0x38] sm:$0xf]
        %v746 = vld [vmem:[#allocation5 + $0x3c] sm:$0xf]
        %v747 = vld [vmem:[%s4] sm:$0x1]
        %v749 = vlaneseq
        %v750 = vshrl.u32 %v749, 7
        %v751 = vsub.s32 0, %v750
        %v752 = vrot.slane %v747, %v751
        %v770 = vunpack.c.l.b16 %v731
        %v771 = vunpack.c.l.b16 %v732
        %v772 = vunpack.c.l.b16 %v733
        %v773 = vunpack.c.l.b16 %v734
        %v774 = vunpack.c.l.b16 %v735
        %v775 = vunpack.c.l.b16 %v736
        %v776 = vunpack.c.l.b16 %v737
        %v777 = vunpack.c.l.b16 %v738
        %v778 = vunpack.c.l.b16 %v739
        %v779 = vunpack.c.l.b16 %v740
        %v780 = vunpack.c.l.b16 %v741
        %v781 = vunpack.c.l.b16 %v742
        %v782 = vunpack.c.l.b16 %v743
        %v783 = vunpack.c.l.b16 %v744
        %v784 = vunpack.c.l.b16 %v745
        %v785 = vunpack.c.l.b16 %v746
        %v786 = vpack.c.b16 %v771, %v770
        %v787 = vpack.c.b16 %v773, %v772
        %v788 = vpack.c.b16 %v775, %v774
        %v789 = vpack.c.b16 %v777, %v776
        %v790 = vpack.c.b16 %v779, %v778
        %v791 = vpack.c.b16 %v781, %v780
        %v792 = vpack.c.b16 %v783, %v782
        %v793 = vpack.c.b16 %v785, %v784
        %802 = vmatprep.subr.bf16.mxu0 0
        %803 = vmatpush1.bf16.msra.mxu0 %v793
        %804 = vmatprep.subr.bf16.mxu0 0
        %805 = vmatpush1.bf16.msra.mxu0 %v792
        %806 = vmatprep.subr.bf16.mxu0 0
        %807 = vmatpush1.bf16.msra.mxu0 %v791
        %808 = vmatprep.subr.bf16.mxu0 0
        %809 = vmatpush1.bf16.msra.mxu0 %v790
        %810 = vmatprep.subr.bf16.mxu0 0
        %811 = vmatpush1.bf16.msra.mxu0 %v789
        %812 = vmatprep.subr.bf16.mxu0 0
        %813 = vmatpush1.bf16.msra.mxu0 %v788
        %814 = vmatprep.subr.bf16.mxu0 0
        %815 = vmatpush1.bf16.msra.mxu0 %v787
        %816 = vmatprep.subr.bf16.mxu0 0
        %817 = vmatpush1.bf16.msra.mxu0 %v786
        %818 = vmatprep.subr.bf16.mxu0 0
        %819 = vmatpush2.bf16.msra.mxu0 0
        %820 = vmatprep.subr.bf16.mxu0 0
        %821 = vmatpush2.bf16.msra.mxu0 0
        %822 = vmatprep.subr.bf16.mxu0 0
        %823 = vmatpush2.bf16.msra.mxu0 0
        %824 = vmatprep.subr.bf16.mxu0 0
        %825 = vmatpush2.bf16.msra.mxu0 0
        %826 = vmatprep.subr.bf16.mxu0 0
        %827 = vmatpush2.bf16.msra.mxu0 0
        %828 = vmatprep.subr.bf16.mxu0 0
        %829 = vmatpush2.bf16.msra.mxu0 0
        %830 = vmatprep.subr.bf16.mxu0 0
        %831 = vmatpush2.bf16.msra.mxu0 0
        %832 = vmatprep.subr.bf16.mxu0 0
        %833 = vmatpush2.bf16.msra.mxu0 0
        %834 = vmatprep.mubr.bf16.mxu0 0
        %835 = vmatmul.mubr.bf16.gmra.mxu0 %v723
        %v836 = vpop.f32.mrf.mxu0
        %v837 = vadd.f32 %v752, %v836
        %v838 = vpop.f32.mrf.mxu0
        %v839 = vpop.f32.mrf.mxu0
        %v840 = vadd.f32 %v752, %v839
        %v841 = vpop.f32.mrf.mxu0
        %842 = vmatprep.mubr.bf16.mxu0 0
        %843 = vmatmul.mubr.bf16.gmra.mxu0 %v724
        %v844 = vpop.f32.mrf.mxu0
        %v845 = vadd.f32 %v752, %v844
        %v846 = vpop.f32.mrf.mxu0
        %v847 = vpop.f32.mrf.mxu0
        %v848 = vadd.f32 %v752, %v847
        %v849 = vpop.f32.mrf.mxu0
        %850 = vmatprep.mubr.bf16.mxu0 0
        %851 = vmatmul.mubr.bf16.gmra.mxu0 %v725
        %v852 = vpop.f32.mrf.mxu0
        %v853 = vadd.f32 %v752, %v852
        %v854 = vpop.f32.mrf.mxu0
        %v855 = vpop.f32.mrf.mxu0
        %v856 = vadd.f32 %v752, %v855
        %v857 = vpop.f32.mrf.mxu0
        %858 = vmatprep.mubr.bf16.mxu0 0
        %859 = vmatmul.mubr.bf16.gmra.mxu0 %v726
        %v860 = vpop.f32.mrf.mxu0
        %v861 = vadd.f32 %v752, %v860
        %v862 = vpop.f32.mrf.mxu0
        %v863 = vpop.f32.mrf.mxu0
        %v864 = vadd.f32 %v752, %v863
        %v865 = vpop.f32.mrf.mxu0
        %866 = vmatprep.mubr.bf16.mxu0 0
        %867 = vmatmul.mubr.bf16.gmra.mxu0 %v727
        %v868 = vpop.f32.mrf.mxu0
        %v869 = vadd.f32 %v752, %v868
        %v870 = vpop.f32.mrf.mxu0
        %v871 = vpop.f32.mrf.mxu0
        %v872 = vadd.f32 %v752, %v871
        %v873 = vpop.f32.mrf.mxu0
        %874 = vmatprep.mubr.bf16.mxu0 0
        %875 = vmatmul.mubr.bf16.gmra.mxu0 %v728
        %v876 = vpop.f32.mrf.mxu0
        %v877 = vadd.f32 %v752, %v876
        %v878 = vpop.f32.mrf.mxu0
        %v879 = vpop.f32.mrf.mxu0
        %v880 = vadd.f32 %v752, %v879
        %v881 = vpop.f32.mrf.mxu0
        %882 = vmatprep.mubr.bf16.mxu0 0
        %883 = vmatmul.mubr.bf16.gmra.mxu0 %v729
        %v884 = vpop.f32.mrf.mxu0
        %v885 = vadd.f32 %v752, %v884
        %v886 = vpop.f32.mrf.mxu0
        %v887 = vpop.f32.mrf.mxu0
        %v888 = vadd.f32 %v752, %v887
        %v889 = vpop.f32.mrf.mxu0
        %890 = vmatprep.mubr.bf16.mxu0 0
        %891 = vmatmul.mubr.bf16.gmra.mxu0 %v730
        %v892 = vpop.f32.mrf.mxu0
        %v893 = vadd.f32 %v752, %v892
        %v894 = vpop.f32.mrf.mxu0
        %v895 = vpop.f32.mrf.mxu0
        %v896 = vadd.f32 %v752, %v895
        %v897 = vpop.f32.mrf.mxu0
        %898 = vdwg.mxu0
        %v899 = vmax.f32 %v837, 0.0
        %v900 = vmax.f32 %v840, 0.0
        %v901 = vmax.f32 %v845, 0.0
        %v902 = vmax.f32 %v848, 0.0
        %v903 = vmax.f32 %v853, 0.0
        %v904 = vmax.f32 %v856, 0.0
        %v905 = vmax.f32 %v861, 0.0
        %v906 = vmax.f32 %v864, 0.0
        %v907 = vmax.f32 %v869, 0.0
        %v908 = vmax.f32 %v872, 0.0
        %v909 = vmax.f32 %v877, 0.0
        %v910 = vmax.f32 %v880, 0.0
        %v911 = vmax.f32 %v885, 0.0
        %v912 = vmax.f32 %v888, 0.0
        %v913 = vmax.f32 %v893, 0.0
        %v914 = vmax.f32 %v896, 0.0
        %v915 = vpack.c.bf16 %v900, %v899
        %v916 = vpack.c.bf16 %v902, %v901
        %v917 = vpack.c.bf16 %v904, %v903
        %v918 = vpack.c.bf16 %v906, %v905
        %v919 = vpack.c.bf16 %v908, %v907
        %v920 = vpack.c.bf16 %v910, %v909
        %v921 = vpack.c.bf16 %v912, %v911
        %v922 = vpack.c.bf16 %v914, %v913
        %v923 = vld [vmem:[#allocation7] sm:$0xff]
        %v924 = vld [vmem:[#allocation7 + $0x8] sm:$0xf]
        %v925 = vld [vmem:[#allocation7 + $0xc] sm:$0xff]
        %v926 = vld [vmem:[#allocation7 + $0x14] sm:$0xf]
        %v927 = vld [vmem:[#allocation7 + $0x18] sm:$0xff]
        %v928 = vld [vmem:[#allocation7 + $0x20] sm:$0xf]
        %v929 = vld [vmem:[#allocation7 + $0x24] sm:$0xff]
        %v930 = vld [vmem:[#allocation7 + $0x2c] sm:$0xf]
        %v931 = vld [vmem:[#allocation7 + $0x30] sm:$0xff]
        %v932 = vld [vmem:[#allocation7 + $0x38] sm:$0xf]
        %v933 = vld [vmem:[#allocation7 + $0x3c] sm:$0xff]
        %v934 = vld [vmem:[#allocation7 + $0x44] sm:$0xf]
        %v935 = vld [vmem:[#allocation7 + $0x48] sm:$0xff]
        %v936 = vld [vmem:[#allocation7 + $0x50] sm:$0xf]
        %v937 = vld [vmem:[#allocation7 + $0x54] sm:$0xff]
        %v938 = vld [vmem:[#allocation7 + $0x5c] sm:$0xf]
        %v939 = vld [vmem:[#allocation7 + $0x60] sm:$0xff]
        %v940 = vld [vmem:[#allocation7 + $0x68] sm:$0xf]
        %v941 = vld [vmem:[#allocation7 + $0x6c] sm:$0xff]
        %v942 = vld [vmem:[#allocation7 + $0x74] sm:$0xf]
        %v943 = vld [vmem:[#allocation7 + $0x78] sm:$0xff]
        %v944 = vld [vmem:[#allocation7 + $0x80] sm:$0xf]
        %v945 = vld [vmem:[#allocation7 + $0x84] sm:$0xff]
        %v946 = vld [vmem:[#allocation7 + $0x8c] sm:$0xf]
        %v947 = vld [vmem:[#allocation7 + $0x90] sm:$0xff]
        %v948 = vld [vmem:[#allocation7 + $0x98] sm:$0xf]
        %v949 = vld [vmem:[#allocation7 + $0x9c] sm:$0xff]
        %v950 = vld [vmem:[#allocation7 + $0xa4] sm:$0xf]
        %v951 = vld [vmem:[#allocation7 + $0xa8] sm:$0xff]
        %v952 = vld [vmem:[#allocation7 + $0xb0] sm:$0xf]
        %v953 = vld [vmem:[#allocation7 + $0xb4] sm:$0xff]
        %v954 = vld [vmem:[#allocation7 + $0xbc] sm:$0xf]
        %v955 = vld [vmem:[%s6] sm:$0x7]
        %v957 = vlaneseq
        %v958 = vshrl.u32 %v957, 7
        %v959 = vsub.s32 0, %v958
        %v960 = vrot.slane %v955, %v959
        %v961 = vlaneseq
        %v962 = vshrl.u32 %v961, 7
        %v963 = vsub.s32 1, %v962
        %v964 = vrot.slane %v955, %v963
        %v965 = vlaneseq
        %v966 = vshrl.u32 %v965, 7
        %v967 = vsub.s32 2, %v966
        %v968 = vrot.slane %v955, %v967
        %v1004 = vunpack.c.l.b16 %v923
        %v1005 = vunpack.c.h.b16 %v923
        %v1006 = vunpack.c.l.b16 %v924
        %v1007 = vunpack.c.l.b16 %v925
        %v1008 = vunpack.c.h.b16 %v925
        %v1009 = vunpack.c.l.b16 %v926
        %v1010 = vunpack.c.l.b16 %v927
        %v1011 = vunpack.c.h.b16 %v927
        %v1012 = vunpack.c.l.b16 %v928
        %v1013 = vunpack.c.l.b16 %v929
        %v1014 = vunpack.c.h.b16 %v929
        %v1015 = vunpack.c.l.b16 %v930
        %v1016 = vunpack.c.l.b16 %v931
        %v1017 = vunpack.c.h.b16 %v931
        %v1018 = vunpack.c.l.b16 %v932
        %v1019 = vunpack.c.l.b16 %v933
        %v1020 = vunpack.c.h.b16 %v933
        %v1021 = vunpack.c.l.b16 %v934
        %v1022 = vunpack.c.l.b16 %v935
        %v1023 = vunpack.c.h.b16 %v935
        %v1024 = vunpack.c.l.b16 %v936
        %v1025 = vunpack.c.l.b16 %v937
        %v1026 = vunpack.c.h.b16 %v937
        %v1027 = vunpack.c.l.b16 %v938
        %v1028 = vunpack.c.l.b16 %v939
        %v1029 = vunpack.c.h.b16 %v939
        %v1030 = vunpack.c.l.b16 %v940
        %v1031 = vunpack.c.l.b16 %v941
        %v1032 = vunpack.c.h.b16 %v941
        %v1033 = vunpack.c.l.b16 %v942
        %v1034 = vunpack.c.l.b16 %v943
        %v1035 = vunpack.c.h.b16 %v943
        %v1036 = vunpack.c.l.b16 %v944
        %v1037 = vunpack.c.l.b16 %v945
        %v1038 = vunpack.c.h.b16 %v945
        %v1039 = vunpack.c.l.b16 %v946
        %v1040 = vunpack.c.l.b16 %v947
        %v1041 = vunpack.c.h.b16 %v947
        %v1042 = vunpack.c.l.b16 %v948
        %v1043 = vunpack.c.l.b16 %v949
        %v1044 = vunpack.c.h.b16 %v949
        %v1045 = vunpack.c.l.b16 %v950
        %v1046 = vunpack.c.l.b16 %v951
        %v1047 = vunpack.c.h.b16 %v951
        %v1048 = vunpack.c.l.b16 %v952
        %v1049 = vunpack.c.l.b16 %v953
        %v1050 = vunpack.c.h.b16 %v953
        %v1051 = vunpack.c.l.b16 %v954
        %v1052 = vpack.c.b16 %v1007, %v1004
        %v1053 = vpack.c.b16 %v1008, %v1005
        %v1054 = vpack.c.b16 %v1009, %v1006
        %v1055 = vpack.c.b16 %v1013, %v1010
        %v1056 = vpack.c.b16 %v1014, %v1011
        %v1057 = vpack.c.b16 %v1015, %v1012
        %v1058 = vpack.c.b16 %v1019, %v1016
        %v1059 = vpack.c.b16 %v1020, %v1017
        %v1060 = vpack.c.b16 %v1021, %v1018
        %v1061 = vpack.c.b16 %v1025, %v1022
        %v1062 = vpack.c.b16 %v1026, %v1023
        %v1063 = vpack.c.b16 %v1027, %v1024
        %v1064 = vpack.c.b16 %v1031, %v1028
        %v1065 = vpack.c.b16 %v1032, %v1029
        %v1066 = vpack.c.b16 %v1033, %v1030
        %v1067 = vpack.c.b16 %v1037, %v1034
        %v1068 = vpack.c.b16 %v1038, %v1035
        %v1069 = vpack.c.b16 %v1039, %v1036
        %v1070 = vpack.c.b16 %v1043, %v1040
        %v1071 = vpack.c.b16 %v1044, %v1041
        %v1072 = vpack.c.b16 %v1045, %v1042
        %v1073 = vpack.c.b16 %v1049, %v1046
        %v1074 = vpack.c.b16 %v1050, %v1047
        %v1075 = vpack.c.b16 %v1051, %v1048
        %1100 = vmatprep.subr.bf16.mxu0 %v1074
        %1101 = vmatpush1.bf16.msra.mxu0 %v1073
        %1102 = vmatprep.subr.bf16.mxu0 %v1071
        %1103 = vmatpush1.bf16.msra.mxu0 %v1070
        %1104 = vmatprep.subr.bf16.mxu0 %v1068
        %1105 = vmatpush1.bf16.msra.mxu0 %v1067
        %1106 = vmatprep.subr.bf16.mxu0 %v1065
        %1107 = vmatpush1.bf16.msra.mxu0 %v1064
        %1108 = vmatprep.subr.bf16.mxu0 %v1062
        %1109 = vmatpush1.bf16.msra.mxu0 %v1061
        %1110 = vmatprep.subr.bf16.mxu0 %v1059
        %1111 = vmatpush1.bf16.msra.mxu0 %v1058
        %1112 = vmatprep.subr.bf16.mxu0 %v1056
        %1113 = vmatpush1.bf16.msra.mxu0 %v1055
        %1114 = vmatprep.subr.bf16.mxu0 %v1053
        %1115 = vmatpush1.bf16.msra.mxu0 %v1052
        %1116 = vmatprep.subr.bf16.mxu0 0
        %1117 = vmatpush2.bf16.msra.mxu0 0
        %1118 = vmatprep.subr.bf16.mxu0 0
        %1119 = vmatpush2.bf16.msra.mxu0 0
        %1120 = vmatprep.subr.bf16.mxu0 0
        %1121 = vmatpush2.bf16.msra.mxu0 0
        %1122 = vmatprep.subr.bf16.mxu0 0
        %1123 = vmatpush2.bf16.msra.mxu0 0
        %1124 = vmatprep.subr.bf16.mxu0 0
        %1125 = vmatpush2.bf16.msra.mxu0 0
        %1126 = vmatprep.subr.bf16.mxu0 0
        %1127 = vmatpush2.bf16.msra.mxu0 0
        %1128 = vmatprep.subr.bf16.mxu0 0
        %1129 = vmatpush2.bf16.msra.mxu0 0
        %1130 = vmatprep.subr.bf16.mxu0 0
        %1131 = vmatpush2.bf16.msra.mxu0 0
        %1132 = vmatprep.mubr.bf16.mxu0 0
        %1133 = vmatmul.mubr.bf16.gmra.mxu0 %v915
        %v1134 = vpop.f32.mrf.mxu0
        %v1135 = vadd.f32 %v960, %v1134
        %v1136 = vpop.f32.mrf.mxu0
        %v1137 = vadd.f32 %v964, %v1136
        %v1138 = vpop.f32.mrf.mxu0
        %v1139 = vadd.f32 %v960, %v1138
        %v1140 = vpop.f32.mrf.mxu0
        %v1141 = vadd.f32 %v964, %v1140
        %1142 = vmatprep.mubr.bf16.mxu0 0
        %1143 = vmatmul.mubr.bf16.gmra.mxu0 %v916
        %v1144 = vpop.f32.mrf.mxu0
        %v1145 = vadd.f32 %v960, %v1144
        %v1146 = vpop.f32.mrf.mxu0
        %v1147 = vadd.f32 %v964, %v1146
        %v1148 = vpop.f32.mrf.mxu0
        %v1149 = vadd.f32 %v960, %v1148
        %v1150 = vpop.f32.mrf.mxu0
        %v1151 = vadd.f32 %v964, %v1150
        %1152 = vmatprep.mubr.bf16.mxu0 0
        %1153 = vmatmul.mubr.bf16.gmra.mxu0 %v917
        %v1154 = vpop.f32.mrf.mxu0
        %v1155 = vadd.f32 %v960, %v1154
        %v1156 = vpop.f32.mrf.mxu0
        %v1157 = vadd.f32 %v964, %v1156
        %v1158 = vpop.f32.mrf.mxu0
        %v1159 = vadd.f32 %v960, %v1158
        %v1160 = vpop.f32.mrf.mxu0
        %v1161 = vadd.f32 %v964, %v1160
        %1162 = vmatprep.mubr.bf16.mxu0 0
        %1163 = vmatmul.mubr.bf16.gmra.mxu0 %v918
        %v1164 = vpop.f32.mrf.mxu0
        %v1165 = vadd.f32 %v960, %v1164
        %v1166 = vpop.f32.mrf.mxu0
        %v1167 = vadd.f32 %v964, %v1166
        %v1168 = vpop.f32.mrf.mxu0
        %v1169 = vadd.f32 %v960, %v1168
        %v1170 = vpop.f32.mrf.mxu0
        %v1171 = vadd.f32 %v964, %v1170
        %1172 = vmatprep.mubr.bf16.mxu0 0
        %1173 = vmatmul.mubr.bf16.gmra.mxu0 %v919
        %v1174 = vpop.f32.mrf.mxu0
        %v1175 = vadd.f32 %v960, %v1174
        %v1176 = vpop.f32.mrf.mxu0
        %v1177 = vadd.f32 %v964, %v1176
        %v1178 = vpop.f32.mrf.mxu0
        %v1179 = vadd.f32 %v960, %v1178
        %v1180 = vpop.f32.mrf.mxu0
        %v1181 = vadd.f32 %v964, %v1180
        %1182 = vmatprep.mubr.bf16.mxu0 0
        %1183 = vmatmul.mubr.bf16.gmra.mxu0 %v920
        %v1184 = vpop.f32.mrf.mxu0
        %v1185 = vadd.f32 %v960, %v1184
        %v1186 = vpop.f32.mrf.mxu0
        %v1187 = vadd.f32 %v964, %v1186
        %v1188 = vpop.f32.mrf.mxu0
        %v1189 = vadd.f32 %v960, %v1188
        %v1190 = vpop.f32.mrf.mxu0
        %v1191 = vadd.f32 %v964, %v1190
        %1192 = vmatprep.mubr.bf16.mxu0 0
        %1193 = vmatmul.mubr.bf16.gmra.mxu0 %v921
        %v1194 = vpop.f32.mrf.mxu0
        %v1195 = vadd.f32 %v960, %v1194
        %v1196 = vpop.f32.mrf.mxu0
        %v1197 = vadd.f32 %v964, %v1196
        %v1198 = vpop.f32.mrf.mxu0
        %v1199 = vadd.f32 %v960, %v1198
        %v1200 = vpop.f32.mrf.mxu0
        %v1201 = vadd.f32 %v964, %v1200
        %1202 = vmatprep.mubr.bf16.mxu0 0
        %1203 = vmatmul.mubr.bf16.gmra.mxu0 %v922
        %v1204 = vpop.f32.mrf.mxu0
        %v1205 = vadd.f32 %v960, %v1204
        %v1206 = vpop.f32.mrf.mxu0
        %v1207 = vadd.f32 %v964, %v1206
        %v1208 = vpop.f32.mrf.mxu0
        %v1209 = vadd.f32 %v960, %v1208
        %v1210 = vpop.f32.mrf.mxu0
        %v1211 = vadd.f32 %v964, %v1210
        %1212 = vdwg.mxu0
        %1213 = vmatprep.subr.bf16.mxu0 0
        %1214 = vmatpush1.bf16.msra.mxu0 %v1075
        %1215 = vmatprep.subr.bf16.mxu0 0
        %1216 = vmatpush1.bf16.msra.mxu0 %v1072
        %1217 = vmatprep.subr.bf16.mxu0 0
        %1218 = vmatpush1.bf16.msra.mxu0 %v1069
        %1219 = vmatprep.subr.bf16.mxu0 0
        %1220 = vmatpush1.bf16.msra.mxu0 %v1066
        %1221 = vmatprep.subr.bf16.mxu0 0
        %1222 = vmatpush1.bf16.msra.mxu0 %v1063
        %1223 = vmatprep.subr.bf16.mxu0 0
        %1224 = vmatpush1.bf16.msra.mxu0 %v1060
        %1225 = vmatprep.subr.bf16.mxu0 0
        %1226 = vmatpush1.bf16.msra.mxu0 %v1057
        %1227 = vmatprep.subr.bf16.mxu0 0
        %1228 = vmatpush1.bf16.msra.mxu0 %v1054
        %1229 = vmatprep.subr.bf16.mxu0 0
        %1230 = vmatpush2.bf16.msra.mxu0 0
        %1231 = vmatprep.subr.bf16.mxu0 0
        %1232 = vmatpush2.bf16.msra.mxu0 0
        %1233 = vmatprep.subr.bf16.mxu0 0
        %1234 = vmatpush2.bf16.msra.mxu0 0
        %1235 = vmatprep.subr.bf16.mxu0 0
        %1236 = vmatpush2.bf16.msra.mxu0 0
        %1237 = vmatprep.subr.bf16.mxu0 0
        %1238 = vmatpush2.bf16.msra.mxu0 0
        %1239 = vmatprep.subr.bf16.mxu0 0
        %1240 = vmatpush2.bf16.msra.mxu0 0
        %1241 = vmatprep.subr.bf16.mxu0 0
        %1242 = vmatpush2.bf16.msra.mxu0 0
        %1243 = vmatprep.subr.bf16.mxu0 0
        %1244 = vmatpush2.bf16.msra.mxu0 0
        %1245 = vmatprep.mubr.bf16.mxu0 0
        %1246 = vmatmul.mubr.bf16.gmra.mxu0 %v915
        %v1247 = vpop.f32.mrf.mxu0
        %v1248 = vadd.f32 %v968, %v1247
        %v1249 = vpop.f32.mrf.mxu0
        %v1250 = vpop.f32.mrf.mxu0
        %v1251 = vadd.f32 %v968, %v1250
        %v1252 = vpop.f32.mrf.mxu0
        %1253 = vmatprep.mubr.bf16.mxu0 0
        %1254 = vmatmul.mubr.bf16.gmra.mxu0 %v916
        %v1255 = vpop.f32.mrf.mxu0
        %v1256 = vadd.f32 %v968, %v1255
        %v1257 = vpop.f32.mrf.mxu0
        %v1258 = vpop.f32.mrf.mxu0
        %v1259 = vadd.f32 %v968, %v1258
        %v1260 = vpop.f32.mrf.mxu0
        %1261 = vmatprep.mubr.bf16.mxu0 0
        %1262 = vmatmul.mubr.bf16.gmra.mxu0 %v917
        %v1263 = vpop.f32.mrf.mxu0
        %v1264 = vadd.f32 %v968, %v1263
        %v1265 = vpop.f32.mrf.mxu0
        %v1266 = vpop.f32.mrf.mxu0
        %v1267 = vadd.f32 %v968, %v1266
        %v1268 = vpop.f32.mrf.mxu0
        %1269 = vmatprep.mubr.bf16.mxu0 0
        %1270 = vmatmul.mubr.bf16.gmra.mxu0 %v918
        %v1271 = vpop.f32.mrf.mxu0
        %v1272 = vadd.f32 %v968, %v1271
        %v1273 = vpop.f32.mrf.mxu0
        %v1274 = vpop.f32.mrf.mxu0
        %v1275 = vadd.f32 %v968, %v1274
        %v1276 = vpop.f32.mrf.mxu0
        %1277 = vmatprep.mubr.bf16.mxu0 0
        %1278 = vmatmul.mubr.bf16.gmra.mxu0 %v919
        %v1279 = vpop.f32.mrf.mxu0
        %v1280 = vadd.f32 %v968, %v1279
        %v1281 = vpop.f32.mrf.mxu0
        %v1282 = vpop.f32.mrf.mxu0
        %v1283 = vadd.f32 %v968, %v1282
        %v1284 = vpop.f32.mrf.mxu0
        %1285 = vmatprep.mubr.bf16.mxu0 0
        %1286 = vmatmul.mubr.bf16.gmra.mxu0 %v920
        %v1287 = vpop.f32.mrf.mxu0
        %v1288 = vadd.f32 %v968, %v1287
        %v1289 = vpop.f32.mrf.mxu0
        %v1290 = vpop.f32.mrf.mxu0
        %v1291 = vadd.f32 %v968, %v1290
        %v1292 = vpop.f32.mrf.mxu0
        %1293 = vmatprep.mubr.bf16.mxu0 0
        %1294 = vmatmul.mubr.bf16.gmra.mxu0 %v921
        %v1295 = vpop.f32.mrf.mxu0
        %v1296 = vadd.f32 %v968, %v1295
        %v1297 = vpop.f32.mrf.mxu0
        %v1298 = vpop.f32.mrf.mxu0
        %v1299 = vadd.f32 %v968, %v1298
        %v1300 = vpop.f32.mrf.mxu0
        %1301 = vmatprep.mubr.bf16.mxu0 0
        %1302 = vmatmul.mubr.bf16.gmra.mxu0 %v922
        %v1303 = vpop.f32.mrf.mxu0
        %v1304 = vadd.f32 %v968, %v1303
        %v1305 = vpop.f32.mrf.mxu0
        %v1306 = vpop.f32.mrf.mxu0
        %v1307 = vadd.f32 %v968, %v1306
        %v1308 = vpop.f32.mrf.mxu0
        %1309 = vdwg.mxu0
        %v1310 = vpack.c.bf16 %v1139, %v1135
        %v1311 = vpack.c.bf16 %v1141, %v1137
        %v1312 = vpack.c.bf16 %v1251, %v1248
        %v1313 = vpack.c.bf16 %v1149, %v1145
        %v1314 = vpack.c.bf16 %v1151, %v1147
        %v1315 = vpack.c.bf16 %v1259, %v1256
        %v1316 = vpack.c.bf16 %v1159, %v1155
        %v1317 = vpack.c.bf16 %v1161, %v1157
        %v1318 = vpack.c.bf16 %v1267, %v1264
        %v1319 = vpack.c.bf16 %v1169, %v1165
        %v1320 = vpack.c.bf16 %v1171, %v1167
        %v1321 = vpack.c.bf16 %v1275, %v1272
        %v1322 = vpack.c.bf16 %v1179, %v1175
        %v1323 = vpack.c.bf16 %v1181, %v1177
        %v1324 = vpack.c.bf16 %v1283, %v1280
        %v1325 = vpack.c.bf16 %v1189, %v1185
        %v1326 = vpack.c.bf16 %v1191, %v1187
        %v1327 = vpack.c.bf16 %v1291, %v1288
        %v1328 = vpack.c.bf16 %v1199, %v1195
        %v1329 = vpack.c.bf16 %v1201, %v1197
        %v1330 = vpack.c.bf16 %v1299, %v1296
        %v1331 = vpack.c.bf16 %v1209, %v1205
        %v1332 = vpack.c.bf16 %v1211, %v1207
        %v1333 = vpack.c.bf16 %v1307, %v1304
        %v1342 = vunpack.c.l.b16 %v1310
        %v1343 = vunpack.c.h.b16 %v1310
        %v1344 = vunpack.c.l.b16 %v1313
        %v1345 = vunpack.c.h.b16 %v1313
        %v1346 = vunpack.c.l.b16 %v1316
        %v1347 = vunpack.c.h.b16 %v1316
        %v1348 = vunpack.c.l.b16 %v1319
        %v1349 = vunpack.c.h.b16 %v1319
        %v1350 = vunpack.c.l.b16 %v1322
        %v1351 = vunpack.c.h.b16 %v1322
        %v1352 = vunpack.c.l.b16 %v1325
        %v1353 = vunpack.c.h.b16 %v1325
        %v1354 = vunpack.c.l.b16 %v1328
        %v1355 = vunpack.c.h.b16 %v1328
        %v1356 = vunpack.c.l.b16 %v1331
        %v1357 = vunpack.c.h.b16 %v1331
        %v1358 = vpack.c.b16 %v1342, %v1342
        %v1359 = vpack.c.b16 %v1343, %v1343
        %v1360 = vpack.c.b16 %v1344, %v1344
        %v1361 = vpack.c.b16 %v1345, %v1345
        %v1362 = vpack.c.b16 %v1346, %v1346
        %v1363 = vpack.c.b16 %v1347, %v1347
        %v1364 = vpack.c.b16 %v1348, %v1348
        %v1365 = vpack.c.b16 %v1349, %v1349
        %v1366 = vpack.c.b16 %v1350, %v1350
        %v1367 = vpack.c.b16 %v1351, %v1351
        %v1368 = vpack.c.b16 %v1352, %v1352
        %v1369 = vpack.c.b16 %v1353, %v1353
        %v1370 = vpack.c.b16 %v1354, %v1354
        %v1371 = vpack.c.b16 %v1355, %v1355
        %v1372 = vpack.c.b16 %v1356, %v1356
        %v1373 = vpack.c.b16 %v1357, %v1357
        %1374 = vrot.lane.b32.xlu0 %v1358, 96
        %v1375 = vpop.permute.xlu0 %1374
        %1376 = vrot.lane.b32.xlu0 %v1359, 96
        %v1377 = vpop.permute.xlu0 %1376
        %1378 = vrot.lane.b32.xlu0 %v1360, 96
        %v1379 = vpop.permute.xlu0 %1378
        %1380 = vrot.lane.b32.xlu0 %v1361, 96
        %v1381 = vpop.permute.xlu0 %1380
        %1382 = vrot.lane.b32.xlu0 %v1362, 96
        %v1383 = vpop.permute.xlu0 %1382
        %1384 = vrot.lane.b32.xlu0 %v1363, 96
        %v1385 = vpop.permute.xlu0 %1384
        %1386 = vrot.lane.b32.xlu0 %v1364, 96
        %v1387 = vpop.permute.xlu0 %1386
        %1388 = vrot.lane.b32.xlu0 %v1365, 96
        %v1389 = vpop.permute.xlu0 %1388
        %1390 = vrot.lane.b32.xlu0 %v1366, 96
        %v1391 = vpop.permute.xlu0 %1390
        %1392 = vrot.lane.b32.xlu0 %v1367, 96
        %v1393 = vpop.permute.xlu0 %1392
        %1394 = vrot.lane.b32.xlu0 %v1368, 96
        %v1395 = vpop.permute.xlu0 %1394
        %1396 = vrot.lane.b32.xlu0 %v1369, 96
        %v1397 = vpop.permute.xlu0 %1396
        %1398 = vrot.lane.b32.xlu0 %v1370, 96
        %v1399 = vpop.permute.xlu0 %1398
        %1400 = vrot.lane.b32.xlu0 %v1371, 96
        %v1401 = vpop.permute.xlu0 %1400
        %1402 = vrot.lane.b32.xlu0 %v1372, 96
        %v1403 = vpop.permute.xlu0 %1402
        %1404 = vrot.lane.b32.xlu0 %v1373, 96
        %v1405 = vpop.permute.xlu0 %1404
        %1406 = vrot.lane.b32.xlu0 %v1358, 64
        %v1407 = vpop.permute.xlu0 %1406
        %1408 = vrot.lane.b32.xlu0 %v1359, 64
        %v1409 = vpop.permute.xlu0 %1408
        %1410 = vrot.lane.b32.xlu0 %v1360, 64
        %v1411 = vpop.permute.xlu0 %1410
        %1412 = vrot.lane.b32.xlu0 %v1361, 64
        %v1413 = vpop.permute.xlu0 %1412
        %1414 = vrot.lane.b32.xlu0 %v1362, 64
        %v1415 = vpop.permute.xlu0 %1414
        %1416 = vrot.lane.b32.xlu0 %v1363, 64
        %v1417 = vpop.permute.xlu0 %1416
        %1418 = vrot.lane.b32.xlu0 %v1364, 64
        %v1419 = vpop.permute.xlu0 %1418
        %1420 = vrot.lane.b32.xlu0 %v1365, 64
        %v1421 = vpop.permute.xlu0 %1420
        %1422 = vrot.lane.b32.xlu0 %v1366, 64
        %v1423 = vpop.permute.xlu0 %1422
        %1424 = vrot.lane.b32.xlu0 %v1367, 64
        %v1425 = vpop.permute.xlu0 %1424
        %1426 = vrot.lane.b32.xlu0 %v1368, 64
        %v1427 = vpop.permute.xlu0 %1426
        %1428 = vrot.lane.b32.xlu0 %v1369, 64
        %v1429 = vpop.permute.xlu0 %1428
        %1430 = vrot.lane.b32.xlu0 %v1370, 64
        %v1431 = vpop.permute.xlu0 %1430
        %1432 = vrot.lane.b32.xlu0 %v1371, 64
        %v1433 = vpop.permute.xlu0 %1432
        %1434 = vrot.lane.b32.xlu0 %v1372, 64
        %v1435 = vpop.permute.xlu0 %1434
        %1436 = vrot.lane.b32.xlu0 %v1373, 64
        %v1437 = vpop.permute.xlu0 %1436
        %1438 = vrot.lane.b32.xlu0 %v1358, 32
        %v1439 = vpop.permute.xlu0 %1438
        %1440 = vrot.lane.b32.xlu0 %v1359, 32
        %v1441 = vpop.permute.xlu0 %1440
        %1442 = vrot.lane.b32.xlu0 %v1360, 32
        %v1443 = vpop.permute.xlu0 %1442
        %1444 = vrot.lane.b32.xlu0 %v1361, 32
        %v1445 = vpop.permute.xlu0 %1444
        %1446 = vrot.lane.b32.xlu0 %v1362, 32
        %v1447 = vpop.permute.xlu0 %1446
        %1448 = vrot.lane.b32.xlu0 %v1363, 32
        %v1449 = vpop.permute.xlu0 %1448
        %1450 = vrot.lane.b32.xlu0 %v1364, 32
        %v1451 = vpop.permute.xlu0 %1450
        %1452 = vrot.lane.b32.xlu0 %v1365, 32
        %v1453 = vpop.permute.xlu0 %1452
        %1454 = vrot.lane.b32.xlu0 %v1366, 32
        %v1455 = vpop.permute.xlu0 %1454
        %1456 = vrot.lane.b32.xlu0 %v1367, 32
        %v1457 = vpop.permute.xlu0 %1456
        %1458 = vrot.lane.b32.xlu0 %v1368, 32
        %v1459 = vpop.permute.xlu0 %1458
        %1460 = vrot.lane.b32.xlu0 %v1369, 32
        %v1461 = vpop.permute.xlu0 %1460
        %1462 = vrot.lane.b32.xlu0 %v1370, 32
        %v1463 = vpop.permute.xlu0 %1462
        %1464 = vrot.lane.b32.xlu0 %v1371, 32
        %v1465 = vpop.permute.xlu0 %1464
        %1466 = vrot.lane.b32.xlu0 %v1372, 32
        %v1467 = vpop.permute.xlu0 %1466
        %1468 = vrot.lane.b32.xlu0 %v1373, 32
        %v1469 = vpop.permute.xlu0 %1468
        %v1478 = vunpack.c.l.b16 %v1311
        %v1479 = vunpack.c.h.b16 %v1311
        %v1480 = vunpack.c.l.b16 %v1314
        %v1481 = vunpack.c.h.b16 %v1314
        %v1482 = vunpack.c.l.b16 %v1317
        %v1483 = vunpack.c.h.b16 %v1317
        %v1484 = vunpack.c.l.b16 %v1320
        %v1485 = vunpack.c.h.b16 %v1320
        %v1486 = vunpack.c.l.b16 %v1323
        %v1487 = vunpack.c.h.b16 %v1323
        %v1488 = vunpack.c.l.b16 %v1326
        %v1489 = vunpack.c.h.b16 %v1326
        %v1490 = vunpack.c.l.b16 %v1329
        %v1491 = vunpack.c.h.b16 %v1329
        %v1492 = vunpack.c.l.b16 %v1332
        %v1493 = vunpack.c.h.b16 %v1332
        %v1494 = vpack.c.b16 %v1478, %v1478
        %v1495 = vpack.c.b16 %v1479, %v1479
        %v1496 = vpack.c.b16 %v1480, %v1480
        %v1497 = vpack.c.b16 %v1481, %v1481
        %v1498 = vpack.c.b16 %v1482, %v1482
        %v1499 = vpack.c.b16 %v1483, %v1483
        %v1500 = vpack.c.b16 %v1484, %v1484
        %v1501 = vpack.c.b16 %v1485, %v1485
        %v1502 = vpack.c.b16 %v1486, %v1486
        %v1503 = vpack.c.b16 %v1487, %v1487
        %v1504 = vpack.c.b16 %v1488, %v1488
        %v1505 = vpack.c.b16 %v1489, %v1489
        %v1506 = vpack.c.b16 %v1490, %v1490
        %v1507 = vpack.c.b16 %v1491, %v1491
        %v1508 = vpack.c.b16 %v1492, %v1492
        %v1509 = vpack.c.b16 %v1493, %v1493
        %1510 = vrot.lane.b32.xlu0 %v1494, 96
        %v1511 = vpop.permute.xlu0 %1510
        %1512 = vrot.lane.b32.xlu0 %v1495, 96
        %v1513 = vpop.permute.xlu0 %1512
        %1514 = vrot.lane.b32.xlu0 %v1496, 96
        %v1515 = vpop.permute.xlu0 %1514
        %1516 = vrot.lane.b32.xlu0 %v1497, 96
        %v1517 = vpop.permute.xlu0 %1516
        %1518 = vrot.lane.b32.xlu0 %v1498, 96
        %v1519 = vpop.permute.xlu0 %1518
        %1520 = vrot.lane.b32.xlu0 %v1499, 96
        %v1521 = vpop.permute.xlu0 %1520
        %1522 = vrot.lane.b32.xlu0 %v1500, 96
        %v1523 = vpop.permute.xlu0 %1522
        %1524 = vrot.lane.b32.xlu0 %v1501, 96
        %v1525 = vpop.permute.xlu0 %1524
        %1526 = vrot.lane.b32.xlu0 %v1502, 96
        %v1527 = vpop.permute.xlu0 %1526
        %1528 = vrot.lane.b32.xlu0 %v1503, 96
        %v1529 = vpop.permute.xlu0 %1528
        %1530 = vrot.lane.b32.xlu0 %v1504, 96
        %v1531 = vpop.permute.xlu0 %1530
        %1532 = vrot.lane.b32.xlu0 %v1505, 96
        %v1533 = vpop.permute.xlu0 %1532
        %1534 = vrot.lane.b32.xlu0 %v1506, 96
        %v1535 = vpop.permute.xlu0 %1534
        %1536 = vrot.lane.b32.xlu0 %v1507, 96
        %v1537 = vpop.permute.xlu0 %1536
        %1538 = vrot.lane.b32.xlu0 %v1508, 96
        %v1539 = vpop.permute.xlu0 %1538
        %1540 = vrot.lane.b32.xlu0 %v1509, 96
        %v1541 = vpop.permute.xlu0 %1540
        %1542 = vrot.lane.b32.xlu0 %v1494, 64
        %v1543 = vpop.permute.xlu0 %1542
        %1544 = vrot.lane.b32.xlu0 %v1495, 64
        %v1545 = vpop.permute.xlu0 %1544
        %1546 = vrot.lane.b32.xlu0 %v1496, 64
        %v1547 = vpop.permute.xlu0 %1546
        %1548 = vrot.lane.b32.xlu0 %v1497, 64
        %v1549 = vpop.permute.xlu0 %1548
        %1550 = vrot.lane.b32.xlu0 %v1498, 64
        %v1551 = vpop.permute.xlu0 %1550
        %1552 = vrot.lane.b32.xlu0 %v1499, 64
        %v1553 = vpop.permute.xlu0 %1552
        %1554 = vrot.lane.b32.xlu0 %v1500, 64
        %v1555 = vpop.permute.xlu0 %1554
        %1556 = vrot.lane.b32.xlu0 %v1501, 64
        %v1557 = vpop.permute.xlu0 %1556
        %1558 = vrot.lane.b32.xlu0 %v1502, 64
        %v1559 = vpop.permute.xlu0 %1558
        %1560 = vrot.lane.b32.xlu0 %v1503, 64
        %v1561 = vpop.permute.xlu0 %1560
        %1562 = vrot.lane.b32.xlu0 %v1504, 64
        %v1563 = vpop.permute.xlu0 %1562
        %1564 = vrot.lane.b32.xlu0 %v1505, 64
        %v1565 = vpop.permute.xlu0 %1564
        %1566 = vrot.lane.b32.xlu0 %v1506, 64
        %v1567 = vpop.permute.xlu0 %1566
        %1568 = vrot.lane.b32.xlu0 %v1507, 64
        %v1569 = vpop.permute.xlu0 %1568
        %1570 = vrot.lane.b32.xlu0 %v1508, 64
        %v1571 = vpop.permute.xlu0 %1570
        %1572 = vrot.lane.b32.xlu0 %v1509, 64
        %v1573 = vpop.permute.xlu0 %1572
        %1574 = vrot.lane.b32.xlu0 %v1494, 32
        %v1575 = vpop.permute.xlu0 %1574
        %1576 = vrot.lane.b32.xlu0 %v1495, 32
        %v1577 = vpop.permute.xlu0 %1576
        %1578 = vrot.lane.b32.xlu0 %v1496, 32
        %v1579 = vpop.permute.xlu0 %1578
        %1580 = vrot.lane.b32.xlu0 %v1497, 32
        %v1581 = vpop.permute.xlu0 %1580
        %1582 = vrot.lane.b32.xlu0 %v1498, 32
        %v1583 = vpop.permute.xlu0 %1582
        %1584 = vrot.lane.b32.xlu0 %v1499, 32
        %v1585 = vpop.permute.xlu0 %1584
        %1586 = vrot.lane.b32.xlu0 %v1500, 32
        %v1587 = vpop.permute.xlu0 %1586
        %1588 = vrot.lane.b32.xlu0 %v1501, 32
        %v1589 = vpop.permute.xlu0 %1588
        %1590 = vrot.lane.b32.xlu0 %v1502, 32
        %v1591 = vpop.permute.xlu0 %1590
        %1592 = vrot.lane.b32.xlu0 %v1503, 32
        %v1593 = vpop.permute.xlu0 %1592
        %1594 = vrot.lane.b32.xlu0 %v1504, 32
        %v1595 = vpop.permute.xlu0 %1594
        %1596 = vrot.lane.b32.xlu0 %v1505, 32
        %v1597 = vpop.permute.xlu0 %1596
        %1598 = vrot.lane.b32.xlu0 %v1506, 32
        %v1599 = vpop.permute.xlu0 %1598
        %1600 = vrot.lane.b32.xlu0 %v1507, 32
        %v1601 = vpop.permute.xlu0 %1600
        %1602 = vrot.lane.b32.xlu0 %v1508, 32
        %v1603 = vpop.permute.xlu0 %1602
        %1604 = vrot.lane.b32.xlu0 %v1509, 32
        %v1605 = vpop.permute.xlu0 %1604
        %v1614 = vunpack.c.l.b16 %v1312
        %v1615 = vunpack.c.h.b16 %v1312
        %v1616 = vunpack.c.l.b16 %v1315
        %v1617 = vunpack.c.h.b16 %v1315
        %v1618 = vunpack.c.l.b16 %v1318
        %v1619 = vunpack.c.h.b16 %v1318
        %v1620 = vunpack.c.l.b16 %v1321
        %v1621 = vunpack.c.h.b16 %v1321
        %v1622 = vunpack.c.l.b16 %v1324
        %v1623 = vunpack.c.h.b16 %v1324
        %v1624 = vunpack.c.l.b16 %v1327
        %v1625 = vunpack.c.h.b16 %v1327
        %v1626 = vunpack.c.l.b16 %v1330
        %v1627 = vunpack.c.h.b16 %v1330
        %v1628 = vunpack.c.l.b16 %v1333
        %v1629 = vunpack.c.h.b16 %v1333
        %v1630 = vpack.c.b16 %v1614, %v1614
        %v1631 = vpack.c.b16 %v1615, %v1615
        %v1632 = vpack.c.b16 %v1616, %v1616
        %v1633 = vpack.c.b16 %v1617, %v1617
        %v1634 = vpack.c.b16 %v1618, %v1618
        %v1635 = vpack.c.b16 %v1619, %v1619
        %v1636 = vpack.c.b16 %v1620, %v1620
        %v1637 = vpack.c.b16 %v1621, %v1621
        %v1638 = vpack.c.b16 %v1622, %v1622
        %v1639 = vpack.c.b16 %v1623, %v1623
        %v1640 = vpack.c.b16 %v1624, %v1624
        %v1641 = vpack.c.b16 %v1625, %v1625
        %v1642 = vpack.c.b16 %v1626, %v1626
        %v1643 = vpack.c.b16 %v1627, %v1627
        %v1644 = vpack.c.b16 %v1628, %v1628
        %v1645 = vpack.c.b16 %v1629, %v1629
        %1646 = vrot.lane.b32.xlu0 %v1630, 96
        %v1647 = vpop.permute.xlu0 %1646
        %1648 = vrot.lane.b32.xlu0 %v1631, 96
        %v1649 = vpop.permute.xlu0 %1648
        %1650 = vrot.lane.b32.xlu0 %v1632, 96
        %v1651 = vpop.permute.xlu0 %1650
        %1652 = vrot.lane.b32.xlu0 %v1633, 96
        %v1653 = vpop.permute.xlu0 %1652
        %1654 = vrot.lane.b32.xlu0 %v1634, 96
        %v1655 = vpop.permute.xlu0 %1654
        %1656 = vrot.lane.b32.xlu0 %v1635, 96
        %v1657 = vpop.permute.xlu0 %1656
        %1658 = vrot.lane.b32.xlu0 %v1636, 96
        %v1659 = vpop.permute.xlu0 %1658
        %1660 = vrot.lane.b32.xlu0 %v1637, 96
        %v1661 = vpop.permute.xlu0 %1660
        %1662 = vrot.lane.b32.xlu0 %v1638, 96
        %v1663 = vpop.permute.xlu0 %1662
        %1664 = vrot.lane.b32.xlu0 %v1639, 96
        %v1665 = vpop.permute.xlu0 %1664
        %1666 = vrot.lane.b32.xlu0 %v1640, 96
        %v1667 = vpop.permute.xlu0 %1666
        %1668 = vrot.lane.b32.xlu0 %v1641, 96
        %v1669 = vpop.permute.xlu0 %1668
        %1670 = vrot.lane.b32.xlu0 %v1642, 96
        %v1671 = vpop.permute.xlu0 %1670
        %1672 = vrot.lane.b32.xlu0 %v1643, 96
        %v1673 = vpop.permute.xlu0 %1672
        %1674 = vrot.lane.b32.xlu0 %v1644, 96
        %v1675 = vpop.permute.xlu0 %1674
        %1676 = vrot.lane.b32.xlu0 %v1645, 96
        %v1677 = vpop.permute.xlu0 %1676
        %1678 = vrot.lane.b32.xlu0 %v1630, 64
        %v1679 = vpop.permute.xlu0 %1678
        %1680 = vrot.lane.b32.xlu0 %v1631, 64
        %v1681 = vpop.permute.xlu0 %1680
        %1682 = vrot.lane.b32.xlu0 %v1632, 64
        %v1683 = vpop.permute.xlu0 %1682
        %1684 = vrot.lane.b32.xlu0 %v1633, 64
        %v1685 = vpop.permute.xlu0 %1684
        %1686 = vrot.lane.b32.xlu0 %v1634, 64
        %v1687 = vpop.permute.xlu0 %1686
        %1688 = vrot.lane.b32.xlu0 %v1635, 64
        %v1689 = vpop.permute.xlu0 %1688
        %1690 = vrot.lane.b32.xlu0 %v1636, 64
        %v1691 = vpop.permute.xlu0 %1690
        %1692 = vrot.lane.b32.xlu0 %v1637, 64
        %v1693 = vpop.permute.xlu0 %1692
        %1694 = vrot.lane.b32.xlu0 %v1638, 64
        %v1695 = vpop.permute.xlu0 %1694
        %1696 = vrot.lane.b32.xlu0 %v1639, 64
        %v1697 = vpop.permute.xlu0 %1696
        %1698 = vrot.lane.b32.xlu0 %v1640, 64
        %v1699 = vpop.permute.xlu0 %1698
        %1700 = vrot.lane.b32.xlu0 %v1641, 64
        %v1701 = vpop.permute.xlu0 %1700
        %1702 = vrot.lane.b32.xlu0 %v1642, 64
        %v1703 = vpop.permute.xlu0 %1702
        %1704 = vrot.lane.b32.xlu0 %v1643, 64
        %v1705 = vpop.permute.xlu0 %1704
        %1706 = vrot.lane.b32.xlu0 %v1644, 64
        %v1707 = vpop.permute.xlu0 %1706
        %1708 = vrot.lane.b32.xlu0 %v1645, 64
        %v1709 = vpop.permute.xlu0 %1708
        %1710 = vrot.lane.b32.xlu0 %v1630, 32
        %v1711 = vpop.permute.xlu0 %1710
        %1712 = vrot.lane.b32.xlu0 %v1631, 32
        %v1713 = vpop.permute.xlu0 %1712
        %1714 = vrot.lane.b32.xlu0 %v1632, 32
        %v1715 = vpop.permute.xlu0 %1714
        %1716 = vrot.lane.b32.xlu0 %v1633, 32
        %v1717 = vpop.permute.xlu0 %1716
        %1718 = vrot.lane.b32.xlu0 %v1634, 32
        %v1719 = vpop.permute.xlu0 %1718
        %1720 = vrot.lane.b32.xlu0 %v1635, 32
        %v1721 = vpop.permute.xlu0 %1720
        %1722 = vrot.lane.b32.xlu0 %v1636, 32
        %v1723 = vpop.permute.xlu0 %1722
        %1724 = vrot.lane.b32.xlu0 %v1637, 32
        %v1725 = vpop.permute.xlu0 %1724
        %1726 = vrot.lane.b32.xlu0 %v1638, 32
        %v1727 = vpop.permute.xlu0 %1726
        %1728 = vrot.lane.b32.xlu0 %v1639, 32
        %v1729 = vpop.permute.xlu0 %1728
        %1730 = vrot.lane.b32.xlu0 %v1640, 32
        %v1731 = vpop.permute.xlu0 %1730
        %1732 = vrot.lane.b32.xlu0 %v1641, 32
        %v1733 = vpop.permute.xlu0 %1732
        %1734 = vrot.lane.b32.xlu0 %v1642, 32
        %v1735 = vpop.permute.xlu0 %1734
        %1736 = vrot.lane.b32.xlu0 %v1643, 32
        %v1737 = vpop.permute.xlu0 %1736
        %1738 = vrot.lane.b32.xlu0 %v1644, 32
        %v1739 = vpop.permute.xlu0 %1738
        %1740 = vrot.lane.b32.xlu0 %v1645, 32
        %v1741 = vpop.permute.xlu0 %1740
        %vm1742 = vcmask 261120
        %v1744 = vsel %vm1742, %v1358, 0
        %v1747 = vsel %vm1742, %v1494, 0
        %1749 = vmatprep.subr.bf16.mxu0 0
        %1750 = vmatpush1.bf16.xpose.msra.mxu0 0
        %1751 = vmatprep.subr.bf16.mxu0 0
        %1752 = vmatpush1.bf16.xpose.msra.mxu0 0
        %1753 = vmatprep.subr.bf16.mxu0 0
        %1754 = vmatpush1.bf16.xpose.msra.mxu0 0
        %1755 = vmatprep.subr.bf16.mxu0 0
        %1756 = vmatpush1.bf16.xpose.msra.mxu0 0
        %1757 = vmatprep.subr.bf16.mxu0 0
        %1758 = vmatpush1.bf16.xpose.msra.mxu0 0
        %1759 = vmatprep.subr.bf16.mxu0 0
        %1760 = vmatpush1.bf16.xpose.msra.mxu0 0
        %1761 = vmatprep.subr.bf16.mxu0 0
        %1762 = vmatpush1.bf16.xpose.msra.mxu0 0
        %1763 = vmatprep.subr.bf16.mxu0 0
        %1764 = vmatpush1.bf16.xpose.msra.mxu0 %v1747
        %1765 = vmatprep.subr.bf16.mxu0 0
        %1766 = vmatpush2.bf16.xpose.msra.mxu0 0
        %1767 = vmatprep.subr.bf16.mxu0 0
        %1768 = vmatpush2.bf16.xpose.msra.mxu0 0
        %1769 = vmatprep.subr.bf16.mxu0 0
        %1770 = vmatpush2.bf16.xpose.msra.mxu0 0
        %1771 = vmatprep.subr.bf16.mxu0 0
        %1772 = vmatpush2.bf16.xpose.msra.mxu0 0
        %1773 = vmatprep.subr.bf16.mxu0 0
        %1774 = vmatpush2.bf16.xpose.msra.mxu0 0
        %1775 = vmatprep.subr.bf16.mxu0 0
        %1776 = vmatpush2.bf16.xpose.msra.mxu0 0
        %1777 = vmatprep.subr.bf16.mxu0 0
        %1778 = vmatpush2.bf16.xpose.msra.mxu0 0
        %1779 = vmatprep.subr.bf16.mxu0 0
        %1780 = vmatpush2.bf16.xpose.msra.mxu0 0
        %1781 = vmatprep.mubr.bf16.mxu0 0
        %1782 = vmatmul.mubr.bf16.gmra.mxu0 %v1744
        %v1783 = vpop.f32.mrf.mxu0
        %v1784 = vadd.f32 0.0, %v1783
        %v1785 = vpop.f32.mrf.mxu0
        %v1786 = vpop.f32.mrf.mxu0
        %v1787 = vpop.f32.mrf.mxu0
        %1788 = vdwg.mxu0
        %v1790 = vsel %vm1742, %v1359, 0
        %v1793 = vsel %vm1742, %v1495, 0
        %1795 = vmatprep.subr.bf16.mxu0 0
        %1796 = vmatpush1.bf16.xpose.msra.mxu0 0
        %1797 = vmatprep.subr.bf16.mxu0 0
        %1798 = vmatpush1.bf16.xpose.msra.mxu0 0
        %1799 = vmatprep.subr.bf16.mxu0 0
        %1800 = vmatpush1.bf16.xpose.msra.mxu0 0
        %1801 = vmatprep.subr.bf16.mxu0 0
        %1802 = vmatpush1.bf16.xpose.msra.mxu0 0
        %1803 = vmatprep.subr.bf16.mxu0 0
        %1804 = vmatpush1.bf16.xpose.msra.mxu0 0
        %1805 = vmatprep.subr.bf16.mxu0 0
        %1806 = vmatpush1.bf16.xpose.msra.mxu0 0
        %1807 = vmatprep.subr.bf16.mxu0 0
        %1808 = vmatpush1.bf16.xpose.msra.mxu0 0
        %1809 = vmatprep.subr.bf16.mxu0 0
        %1810 = vmatpush1.bf16.xpose.msra.mxu0 %v1793
        %1811 = vmatprep.subr.bf16.mxu0 0
        %1812 = vmatpush2.bf16.xpose.msra.mxu0 0
        %1813 = vmatprep.subr.bf16.mxu0 0
        %1814 = vmatpush2.bf16.xpose.msra.mxu0 0
        %1815 = vmatprep.subr.bf16.mxu0 0
        %1816 = vmatpush2.bf16.xpose.msra.mxu0 0
        %1817 = vmatprep.subr.bf16.mxu0 0
        %1818 = vmatpush2.bf16.xpose.msra.mxu0 0
        %1819 = vmatprep.subr.bf16.mxu0 0
        %1820 = vmatpush2.bf16.xpose.msra.mxu0 0
        %1821 = vmatprep.subr.bf16.mxu0 0
        %1822 = vmatpush2.bf16.xpose.msra.mxu0 0
        %1823 = vmatprep.subr.bf16.mxu0 0
        %1824 = vmatpush2.bf16.xpose.msra.mxu0 0
        %1825 = vmatprep.subr.bf16.mxu0 0
        %1826 = vmatpush2.bf16.xpose.msra.mxu0 0
        %1827 = vmatprep.mubr.bf16.mxu0 0
        %1828 = vmatmul.mubr.bf16.gmra.mxu0 %v1790
        %v1829 = vpop.f32.mrf.mxu0
        %v1830 = vadd.f32 0.0, %v1829
        %v1831 = vpop.f32.mrf.mxu0
        %v1832 = vpop.f32.mrf.mxu0
        %v1833 = vpop.f32.mrf.mxu0
        %1834 = vdwg.mxu0
        %v1836 = vsel %vm1742, %v1360, 0
        %v1839 = vsel %vm1742, %v1496, 0
        %1841 = vmatprep.subr.bf16.mxu0 0
        %1842 = vmatpush1.bf16.xpose.msra.mxu0 0
        %1843 = vmatprep.subr.bf16.mxu0 0
        %1844 = vmatpush1.bf16.xpose.msra.mxu0 0
        %1845 = vmatprep.subr.bf16.mxu0 0
        %1846 = vmatpush1.bf16.xpose.msra.mxu0 0
        %1847 = vmatprep.subr.bf16.mxu0 0
        %1848 = vmatpush1.bf16.xpose.msra.mxu0 0
        %1849 = vmatprep.subr.bf16.mxu0 0
        %1850 = vmatpush1.bf16.xpose.msra.mxu0 0
        %1851 = vmatprep.subr.bf16.mxu0 0
        %1852 = vmatpush1.bf16.xpose.msra.mxu0 0
        %1853 = vmatprep.subr.bf16.mxu0 0
        %1854 = vmatpush1.bf16.xpose.msra.mxu0 0
        %1855 = vmatprep.subr.bf16.mxu0 0
        %1856 = vmatpush1.bf16.xpose.msra.mxu0 %v1839
        %1857 = vmatprep.subr.bf16.mxu0 0
        %1858 = vmatpush2.bf16.xpose.msra.mxu0 0
        %1859 = vmatprep.subr.bf16.mxu0 0
        %1860 = vmatpush2.bf16.xpose.msra.mxu0 0
        %1861 = vmatprep.subr.bf16.mxu0 0
        %1862 = vmatpush2.bf16.xpose.msra.mxu0 0
        %1863 = vmatprep.subr.bf16.mxu0 0
        %1864 = vmatpush2.bf16.xpose.msra.mxu0 0
        %1865 = vmatprep.subr.bf16.mxu0 0
        %1866 = vmatpush2.bf16.xpose.msra.mxu0 0
        %1867 = vmatprep.subr.bf16.mxu0 0
        %1868 = vmatpush2.bf16.xpose.msra.mxu0 0
        %1869 = vmatprep.subr.bf16.mxu0 0
        %1870 = vmatpush2.bf16.xpose.msra.mxu0 0
        %1871 = vmatprep.subr.bf16.mxu0 0
        %1872 = vmatpush2.bf16.xpose.msra.mxu0 0
        %1873 = vmatprep.mubr.bf16.mxu0 0
        %1874 = vmatmul.mubr.bf16.gmra.mxu0 %v1836
        %v1875 = vpop.f32.mrf.mxu0
        %v1876 = vadd.f32 0.0, %v1875
        %v1877 = vpop.f32.mrf.mxu0
        %v1878 = vpop.f32.mrf.mxu0
        %v1879 = vpop.f32.mrf.mxu0
        %1880 = vdwg.mxu0
        %v1882 = vsel %vm1742, %v1361, 0
        %v1885 = vsel %vm1742, %v1497, 0
        %1887 = vmatprep.subr.bf16.mxu0 0
        %1888 = vmatpush1.bf16.xpose.msra.mxu0 0
        %1889 = vmatprep.subr.bf16.mxu0 0
        %1890 = vmatpush1.bf16.xpose.msra.mxu0 0
        %1891 = vmatprep.subr.bf16.mxu0 0
        %1892 = vmatpush1.bf16.xpose.msra.mxu0 0
        %1893 = vmatprep.subr.bf16.mxu0 0
        %1894 = vmatpush1.bf16.xpose.msra.mxu0 0
        %1895 = vmatprep.subr.bf16.mxu0 0
        %1896 = vmatpush1.bf16.xpose.msra.mxu0 0
        %1897 = vmatprep.subr.bf16.mxu0 0
        %1898 = vmatpush1.bf16.xpose.msra.mxu0 0
        %1899 = vmatprep.subr.bf16.mxu0 0
        %1900 = vmatpush1.bf16.xpose.msra.mxu0 0
        %1901 = vmatprep.subr.bf16.mxu0 0
        %1902 = vmatpush1.bf16.xpose.msra.mxu0 %v1885
        %1903 = vmatprep.subr.bf16.mxu0 0
        %1904 = vmatpush2.bf16.xpose.msra.mxu0 0
        %1905 = vmatprep.subr.bf16.mxu0 0
        %1906 = vmatpush2.bf16.xpose.msra.mxu0 0
        %1907 = vmatprep.subr.bf16.mxu0 0
        %1908 = vmatpush2.bf16.xpose.msra.mxu0 0
        %1909 = vmatprep.subr.bf16.mxu0 0
        %1910 = vmatpush2.bf16.xpose.msra.mxu0 0
        %1911 = vmatprep.subr.bf16.mxu0 0
        %1912 = vmatpush2.bf16.xpose.msra.mxu0 0
        %1913 = vmatprep.subr.bf16.mxu0 0
        %1914 = vmatpush2.bf16.xpose.msra.mxu0 0
        %1915 = vmatprep.subr.bf16.mxu0 0
        %1916 = vmatpush2.bf16.xpose.msra.mxu0 0
        %1917 = vmatprep.subr.bf16.mxu0 0
        %1918 = vmatpush2.bf16.xpose.msra.mxu0 0
        %1919 = vmatprep.mubr.bf16.mxu0 0
        %1920 = vmatmul.mubr.bf16.gmra.mxu0 %v1882
        %v1921 = vpop.f32.mrf.mxu0
        %v1922 = vadd.f32 0.0, %v1921
        %v1923 = vpop.f32.mrf.mxu0
        %v1924 = vpop.f32.mrf.mxu0
        %v1925 = vpop.f32.mrf.mxu0
        %1926 = vdwg.mxu0
        %v1928 = vsel %vm1742, %v1362, 0
        %v1931 = vsel %vm1742, %v1498, 0
        %1933 = vmatprep.subr.bf16.mxu0 0
        %1934 = vmatpush1.bf16.xpose.msra.mxu0 0
        %1935 = vmatprep.subr.bf16.mxu0 0
        %1936 = vmatpush1.bf16.xpose.msra.mxu0 0
        %1937 = vmatprep.subr.bf16.mxu0 0
        %1938 = vmatpush1.bf16.xpose.msra.mxu0 0
        %1939 = vmatprep.subr.bf16.mxu0 0
        %1940 = vmatpush1.bf16.xpose.msra.mxu0 0
        %1941 = vmatprep.subr.bf16.mxu0 0
        %1942 = vmatpush1.bf16.xpose.msra.mxu0 0
        %1943 = vmatprep.subr.bf16.mxu0 0
        %1944 = vmatpush1.bf16.xpose.msra.mxu0 0
        %1945 = vmatprep.subr.bf16.mxu0 0
        %1946 = vmatpush1.bf16.xpose.msra.mxu0 0
        %1947 = vmatprep.subr.bf16.mxu0 0
        %1948 = vmatpush1.bf16.xpose.msra.mxu0 %v1931
        %1949 = vmatprep.subr.bf16.mxu0 0
        %1950 = vmatpush2.bf16.xpose.msra.mxu0 0
        %1951 = vmatprep.subr.bf16.mxu0 0
        %1952 = vmatpush2.bf16.xpose.msra.mxu0 0
        %1953 = vmatprep.subr.bf16.mxu0 0
        %1954 = vmatpush2.bf16.xpose.msra.mxu0 0
        %1955 = vmatprep.subr.bf16.mxu0 0
        %1956 = vmatpush2.bf16.xpose.msra.mxu0 0
        %1957 = vmatprep.subr.bf16.mxu0 0
        %1958 = vmatpush2.bf16.xpose.msra.mxu0 0
        %1959 = vmatprep.subr.bf16.mxu0 0
        %1960 = vmatpush2.bf16.xpose.msra.mxu0 0
        %1961 = vmatprep.subr.bf16.mxu0 0
        %1962 = vmatpush2.bf16.xpose.msra.mxu0 0
        %1963 = vmatprep.subr.bf16.mxu0 0
        %1964 = vmatpush2.bf16.xpose.msra.mxu0 0
        %1965 = vmatprep.mubr.bf16.mxu0 0
        %1966 = vmatmul.mubr.bf16.gmra.mxu0 %v1928
        %v1967 = vpop.f32.mrf.mxu0
        %v1968 = vadd.f32 0.0, %v1967
        %v1969 = vpop.f32.mrf.mxu0
        %v1970 = vpop.f32.mrf.mxu0
        %v1971 = vpop.f32.mrf.mxu0
        %1972 = vdwg.mxu0
        %v1974 = vsel %vm1742, %v1363, 0
        %v1977 = vsel %vm1742, %v1499, 0
        %1979 = vmatprep.subr.bf16.mxu0 0
        %1980 = vmatpush1.bf16.xpose.msra.mxu0 0
        %1981 = vmatprep.subr.bf16.mxu0 0
        %1982 = vmatpush1.bf16.xpose.msra.mxu0 0
        %1983 = vmatprep.subr.bf16.mxu0 0
        %1984 = vmatpush1.bf16.xpose.msra.mxu0 0
        %1985 = vmatprep.subr.bf16.mxu0 0
        %1986 = vmatpush1.bf16.xpose.msra.mxu0 0
        %1987 = vmatprep.subr.bf16.mxu0 0
        %1988 = vmatpush1.bf16.xpose.msra.mxu0 0
        %1989 = vmatprep.subr.bf16.mxu0 0
        %1990 = vmatpush1.bf16.xpose.msra.mxu0 0
        %1991 = vmatprep.subr.bf16.mxu0 0
        %1992 = vmatpush1.bf16.xpose.msra.mxu0 0
        %1993 = vmatprep.subr.bf16.mxu0 0
        %1994 = vmatpush1.bf16.xpose.msra.mxu0 %v1977
        %1995 = vmatprep.subr.bf16.mxu0 0
        %1996 = vmatpush2.bf16.xpose.msra.mxu0 0
        %1997 = vmatprep.subr.bf16.mxu0 0
        %1998 = vmatpush2.bf16.xpose.msra.mxu0 0
        %1999 = vmatprep.subr.bf16.mxu0 0
        %2000 = vmatpush2.bf16.xpose.msra.mxu0 0
        %2001 = vmatprep.subr.bf16.mxu0 0
        %2002 = vmatpush2.bf16.xpose.msra.mxu0 0
        %2003 = vmatprep.subr.bf16.mxu0 0
        %2004 = vmatpush2.bf16.xpose.msra.mxu0 0
        %2005 = vmatprep.subr.bf16.mxu0 0
        %2006 = vmatpush2.bf16.xpose.msra.mxu0 0
        %2007 = vmatprep.subr.bf16.mxu0 0
        %2008 = vmatpush2.bf16.xpose.msra.mxu0 0
        %2009 = vmatprep.subr.bf16.mxu0 0
        %2010 = vmatpush2.bf16.xpose.msra.mxu0 0
        %2011 = vmatprep.mubr.bf16.mxu0 0
        %2012 = vmatmul.mubr.bf16.gmra.mxu0 %v1974
        %v2013 = vpop.f32.mrf.mxu0
        %v2014 = vadd.f32 0.0, %v2013
        %v2015 = vpop.f32.mrf.mxu0
        %v2016 = vpop.f32.mrf.mxu0
        %v2017 = vpop.f32.mrf.mxu0
        %2018 = vdwg.mxu0
        %v2020 = vsel %vm1742, %v1364, 0
        %v2023 = vsel %vm1742, %v1500, 0
        %2025 = vmatprep.subr.bf16.mxu0 0
        %2026 = vmatpush1.bf16.xpose.msra.mxu0 0
        %2027 = vmatprep.subr.bf16.mxu0 0
        %2028 = vmatpush1.bf16.xpose.msra.mxu0 0
        %2029 = vmatprep.subr.bf16.mxu0 0
        %2030 = vmatpush1.bf16.xpose.msra.mxu0 0
        %2031 = vmatprep.subr.bf16.mxu0 0
        %2032 = vmatpush1.bf16.xpose.msra.mxu0 0
        %2033 = vmatprep.subr.bf16.mxu0 0
        %2034 = vmatpush1.bf16.xpose.msra.mxu0 0
        %2035 = vmatprep.subr.bf16.mxu0 0
        %2036 = vmatpush1.bf16.xpose.msra.mxu0 0
        %2037 = vmatprep.subr.bf16.mxu0 0
        %2038 = vmatpush1.bf16.xpose.msra.mxu0 0
        %2039 = vmatprep.subr.bf16.mxu0 0
        %2040 = vmatpush1.bf16.xpose.msra.mxu0 %v2023
        %2041 = vmatprep.subr.bf16.mxu0 0
        %2042 = vmatpush2.bf16.xpose.msra.mxu0 0
        %2043 = vmatprep.subr.bf16.mxu0 0
        %2044 = vmatpush2.bf16.xpose.msra.mxu0 0
        %2045 = vmatprep.subr.bf16.mxu0 0
        %2046 = vmatpush2.bf16.xpose.msra.mxu0 0
        %2047 = vmatprep.subr.bf16.mxu0 0
        %2048 = vmatpush2.bf16.xpose.msra.mxu0 0
        %2049 = vmatprep.subr.bf16.mxu0 0
        %2050 = vmatpush2.bf16.xpose.msra.mxu0 0
        %2051 = vmatprep.subr.bf16.mxu0 0
        %2052 = vmatpush2.bf16.xpose.msra.mxu0 0
        %2053 = vmatprep.subr.bf16.mxu0 0
        %2054 = vmatpush2.bf16.xpose.msra.mxu0 0
        %2055 = vmatprep.subr.bf16.mxu0 0
        %2056 = vmatpush2.bf16.xpose.msra.mxu0 0
        %2057 = vmatprep.mubr.bf16.mxu0 0
        %2058 = vmatmul.mubr.bf16.gmra.mxu0 %v2020
        %v2059 = vpop.f32.mrf.mxu0
        %v2060 = vadd.f32 0.0, %v2059
        %v2061 = vpop.f32.mrf.mxu0
        %v2062 = vpop.f32.mrf.mxu0
        %v2063 = vpop.f32.mrf.mxu0
        %2064 = vdwg.mxu0
        %v2066 = vsel %vm1742, %v1365, 0
        %v2069 = vsel %vm1742, %v1501, 0
        %2071 = vmatprep.subr.bf16.mxu0 0
        %2072 = vmatpush1.bf16.xpose.msra.mxu0 0
        %2073 = vmatprep.subr.bf16.mxu0 0
        %2074 = vmatpush1.bf16.xpose.msra.mxu0 0
        %2075 = vmatprep.subr.bf16.mxu0 0
        %2076 = vmatpush1.bf16.xpose.msra.mxu0 0
        %2077 = vmatprep.subr.bf16.mxu0 0
        %2078 = vmatpush1.bf16.xpose.msra.mxu0 0
        %2079 = vmatprep.subr.bf16.mxu0 0
        %2080 = vmatpush1.bf16.xpose.msra.mxu0 0
        %2081 = vmatprep.subr.bf16.mxu0 0
        %2082 = vmatpush1.bf16.xpose.msra.mxu0 0
        %2083 = vmatprep.subr.bf16.mxu0 0
        %2084 = vmatpush1.bf16.xpose.msra.mxu0 0
        %2085 = vmatprep.subr.bf16.mxu0 0
        %2086 = vmatpush1.bf16.xpose.msra.mxu0 %v2069
        %2087 = vmatprep.subr.bf16.mxu0 0
        %2088 = vmatpush2.bf16.xpose.msra.mxu0 0
        %2089 = vmatprep.subr.bf16.mxu0 0
        %2090 = vmatpush2.bf16.xpose.msra.mxu0 0
        %2091 = vmatprep.subr.bf16.mxu0 0
        %2092 = vmatpush2.bf16.xpose.msra.mxu0 0
        %2093 = vmatprep.subr.bf16.mxu0 0
        %2094 = vmatpush2.bf16.xpose.msra.mxu0 0
        %2095 = vmatprep.subr.bf16.mxu0 0
        %2096 = vmatpush2.bf16.xpose.msra.mxu0 0
        %2097 = vmatprep.subr.bf16.mxu0 0
        %2098 = vmatpush2.bf16.xpose.msra.mxu0 0
        %2099 = vmatprep.subr.bf16.mxu0 0
        %2100 = vmatpush2.bf16.xpose.msra.mxu0 0
        %2101 = vmatprep.subr.bf16.mxu0 0
        %2102 = vmatpush2.bf16.xpose.msra.mxu0 0
        %2103 = vmatprep.mubr.bf16.mxu0 0
        %2104 = vmatmul.mubr.bf16.gmra.mxu0 %v2066
        %v2105 = vpop.f32.mrf.mxu0
        %v2106 = vadd.f32 0.0, %v2105
        %v2107 = vpop.f32.mrf.mxu0
        %v2108 = vpop.f32.mrf.mxu0
        %v2109 = vpop.f32.mrf.mxu0
        %2110 = vdwg.mxu0
        %v2112 = vsel %vm1742, %v1366, 0
        %v2115 = vsel %vm1742, %v1502, 0
        %2117 = vmatprep.subr.bf16.mxu0 0
        %2118 = vmatpush1.bf16.xpose.msra.mxu0 0
        %2119 = vmatprep.subr.bf16.mxu0 0
        %2120 = vmatpush1.bf16.xpose.msra.mxu0 0
        %2121 = vmatprep.subr.bf16.mxu0 0
        %2122 = vmatpush1.bf16.xpose.msra.mxu0 0
        %2123 = vmatprep.subr.bf16.mxu0 0
        %2124 = vmatpush1.bf16.xpose.msra.mxu0 0
        %2125 = vmatprep.subr.bf16.mxu0 0
        %2126 = vmatpush1.bf16.xpose.msra.mxu0 0
        %2127 = vmatprep.subr.bf16.mxu0 0
        %2128 = vmatpush1.bf16.xpose.msra.mxu0 0
        %2129 = vmatprep.subr.bf16.mxu0 0
        %2130 = vmatpush1.bf16.xpose.msra.mxu0 0
        %2131 = vmatprep.subr.bf16.mxu0 0
        %2132 = vmatpush1.bf16.xpose.msra.mxu0 %v2115
        %2133 = vmatprep.subr.bf16.mxu0 0
        %2134 = vmatpush2.bf16.xpose.msra.mxu0 0
        %2135 = vmatprep.subr.bf16.mxu0 0
        %2136 = vmatpush2.bf16.xpose.msra.mxu0 0
        %2137 = vmatprep.subr.bf16.mxu0 0
        %2138 = vmatpush2.bf16.xpose.msra.mxu0 0
        %2139 = vmatprep.subr.bf16.mxu0 0
        %2140 = vmatpush2.bf16.xpose.msra.mxu0 0
        %2141 = vmatprep.subr.bf16.mxu0 0
        %2142 = vmatpush2.bf16.xpose.msra.mxu0 0
        %2143 = vmatprep.subr.bf16.mxu0 0
        %2144 = vmatpush2.bf16.xpose.msra.mxu0 0
        %2145 = vmatprep.subr.bf16.mxu0 0
        %2146 = vmatpush2.bf16.xpose.msra.mxu0 0
        %2147 = vmatprep.subr.bf16.mxu0 0
        %2148 = vmatpush2.bf16.xpose.msra.mxu0 0
        %2149 = vmatprep.mubr.bf16.mxu0 0
        %2150 = vmatmul.mubr.bf16.gmra.mxu0 %v2112
        %v2151 = vpop.f32.mrf.mxu0
        %v2152 = vadd.f32 0.0, %v2151
        %v2153 = vpop.f32.mrf.mxu0
        %v2154 = vpop.f32.mrf.mxu0
        %v2155 = vpop.f32.mrf.mxu0
        %2156 = vdwg.mxu0
        %v2158 = vsel %vm1742, %v1367, 0
        %v2161 = vsel %vm1742, %v1503, 0
        %2163 = vmatprep.subr.bf16.mxu0 0
        %2164 = vmatpush1.bf16.xpose.msra.mxu0 0
        %2165 = vmatprep.subr.bf16.mxu0 0
        %2166 = vmatpush1.bf16.xpose.msra.mxu0 0
        %2167 = vmatprep.subr.bf16.mxu0 0
        %2168 = vmatpush1.bf16.xpose.msra.mxu0 0
        %2169 = vmatprep.subr.bf16.mxu0 0
        %2170 = vmatpush1.bf16.xpose.msra.mxu0 0
        %2171 = vmatprep.subr.bf16.mxu0 0
        %2172 = vmatpush1.bf16.xpose.msra.mxu0 0
        %2173 = vmatprep.subr.bf16.mxu0 0
        %2174 = vmatpush1.bf16.xpose.msra.mxu0 0
        %2175 = vmatprep.subr.bf16.mxu0 0
        %2176 = vmatpush1.bf16.xpose.msra.mxu0 0
        %2177 = vmatprep.subr.bf16.mxu0 0
        %2178 = vmatpush1.bf16.xpose.msra.mxu0 %v2161
        %2179 = vmatprep.subr.bf16.mxu0 0
        %2180 = vmatpush2.bf16.xpose.msra.mxu0 0
        %2181 = vmatprep.subr.bf16.mxu0 0
        %2182 = vmatpush2.bf16.xpose.msra.mxu0 0
        %2183 = vmatprep.subr.bf16.mxu0 0
        %2184 = vmatpush2.bf16.xpose.msra.mxu0 0
        %2185 = vmatprep.subr.bf16.mxu0 0
        %2186 = vmatpush2.bf16.xpose.msra.mxu0 0
        %2187 = vmatprep.subr.bf16.mxu0 0
        %2188 = vmatpush2.bf16.xpose.msra.mxu0 0
        %2189 = vmatprep.subr.bf16.mxu0 0
        %2190 = vmatpush2.bf16.xpose.msra.mxu0 0
        %2191 = vmatprep.subr.bf16.mxu0 0
        %2192 = vmatpush2.bf16.xpose.msra.mxu0 0
        %2193 = vmatprep.subr.bf16.mxu0 0
        %2194 = vmatpush2.bf16.xpose.msra.mxu0 0
        %2195 = vmatprep.mubr.bf16.mxu0 0
        %2196 = vmatmul.mubr.bf16.gmra.mxu0 %v2158
        %v2197 = vpop.f32.mrf.mxu0
        %v2198 = vadd.f32 0.0, %v2197
        %v2199 = vpop.f32.mrf.mxu0
        %v2200 = vpop.f32.mrf.mxu0
        %v2201 = vpop.f32.mrf.mxu0
        %2202 = vdwg.mxu0
        %v2204 = vsel %vm1742, %v1368, 0
        %v2207 = vsel %vm1742, %v1504, 0
        %2209 = vmatprep.subr.bf16.mxu0 0
        %2210 = vmatpush1.bf16.xpose.msra.mxu0 0
        %2211 = vmatprep.subr.bf16.mxu0 0
        %2212 = vmatpush1.bf16.xpose.msra.mxu0 0
        %2213 = vmatprep.subr.bf16.mxu0 0
        %2214 = vmatpush1.bf16.xpose.msra.mxu0 0
        %2215 = vmatprep.subr.bf16.mxu0 0
        %2216 = vmatpush1.bf16.xpose.msra.mxu0 0
        %2217 = vmatprep.subr.bf16.mxu0 0
        %2218 = vmatpush1.bf16.xpose.msra.mxu0 0
        %2219 = vmatprep.subr.bf16.mxu0 0
        %2220 = vmatpush1.bf16.xpose.msra.mxu0 0
        %2221 = vmatprep.subr.bf16.mxu0 0
        %2222 = vmatpush1.bf16.xpose.msra.mxu0 0
        %2223 = vmatprep.subr.bf16.mxu0 0
        %2224 = vmatpush1.bf16.xpose.msra.mxu0 %v2207
        %2225 = vmatprep.subr.bf16.mxu0 0
        %2226 = vmatpush2.bf16.xpose.msra.mxu0 0
        %2227 = vmatprep.subr.bf16.mxu0 0
        %2228 = vmatpush2.bf16.xpose.msra.mxu0 0
        %2229 = vmatprep.subr.bf16.mxu0 0
        %2230 = vmatpush2.bf16.xpose.msra.mxu0 0
        %2231 = vmatprep.subr.bf16.mxu0 0
        %2232 = vmatpush2.bf16.xpose.msra.mxu0 0
        %2233 = vmatprep.subr.bf16.mxu0 0
        %2234 = vmatpush2.bf16.xpose.msra.mxu0 0
        %2235 = vmatprep.subr.bf16.mxu0 0
        %2236 = vmatpush2.bf16.xpose.msra.mxu0 0
        %2237 = vmatprep.subr.bf16.mxu0 0
        %2238 = vmatpush2.bf16.xpose.msra.mxu0 0
        %2239 = vmatprep.subr.bf16.mxu0 0
        %2240 = vmatpush2.bf16.xpose.msra.mxu0 0
        %2241 = vmatprep.mubr.bf16.mxu0 0
        %2242 = vmatmul.mubr.bf16.gmra.mxu0 %v2204
        %v2243 = vpop.f32.mrf.mxu0
        %v2244 = vadd.f32 0.0, %v2243
        %v2245 = vpop.f32.mrf.mxu0
        %v2246 = vpop.f32.mrf.mxu0
        %v2247 = vpop.f32.mrf.mxu0
        %2248 = vdwg.mxu0
        %v2250 = vsel %vm1742, %v1369, 0
        %v2253 = vsel %vm1742, %v1505, 0
        %2255 = vmatprep.subr.bf16.mxu0 0
        %2256 = vmatpush1.bf16.xpose.msra.mxu0 0
        %2257 = vmatprep.subr.bf16.mxu0 0
        %2258 = vmatpush1.bf16.xpose.msra.mxu0 0
        %2259 = vmatprep.subr.bf16.mxu0 0
        %2260 = vmatpush1.bf16.xpose.msra.mxu0 0
        %2261 = vmatprep.subr.bf16.mxu0 0
        %2262 = vmatpush1.bf16.xpose.msra.mxu0 0
        %2263 = vmatprep.subr.bf16.mxu0 0
        %2264 = vmatpush1.bf16.xpose.msra.mxu0 0
        %2265 = vmatprep.subr.bf16.mxu0 0
        %2266 = vmatpush1.bf16.xpose.msra.mxu0 0
        %2267 = vmatprep.subr.bf16.mxu0 0
        %2268 = vmatpush1.bf16.xpose.msra.mxu0 0
        %2269 = vmatprep.subr.bf16.mxu0 0
        %2270 = vmatpush1.bf16.xpose.msra.mxu0 %v2253
        %2271 = vmatprep.subr.bf16.mxu0 0
        %2272 = vmatpush2.bf16.xpose.msra.mxu0 0
        %2273 = vmatprep.subr.bf16.mxu0 0
        %2274 = vmatpush2.bf16.xpose.msra.mxu0 0
        %2275 = vmatprep.subr.bf16.mxu0 0
        %2276 = vmatpush2.bf16.xpose.msra.mxu0 0
        %2277 = vmatprep.subr.bf16.mxu0 0
        %2278 = vmatpush2.bf16.xpose.msra.mxu0 0
        %2279 = vmatprep.subr.bf16.mxu0 0
        %2280 = vmatpush2.bf16.xpose.msra.mxu0 0
        %2281 = vmatprep.subr.bf16.mxu0 0
        %2282 = vmatpush2.bf16.xpose.msra.mxu0 0
        %2283 = vmatprep.subr.bf16.mxu0 0
        %2284 = vmatpush2.bf16.xpose.msra.mxu0 0
        %2285 = vmatprep.subr.bf16.mxu0 0
        %2286 = vmatpush2.bf16.xpose.msra.mxu0 0
        %2287 = vmatprep.mubr.bf16.mxu0 0
        %2288 = vmatmul.mubr.bf16.gmra.mxu0 %v2250
        %v2289 = vpop.f32.mrf.mxu0
        %v2290 = vadd.f32 0.0, %v2289
        %v2291 = vpop.f32.mrf.mxu0
        %v2292 = vpop.f32.mrf.mxu0
        %v2293 = vpop.f32.mrf.mxu0
        %2294 = vdwg.mxu0
        %v2296 = vsel %vm1742, %v1370, 0
        %v2299 = vsel %vm1742, %v1506, 0
        %2301 = vmatprep.subr.bf16.mxu0 0
        %2302 = vmatpush1.bf16.xpose.msra.mxu0 0
        %2303 = vmatprep.subr.bf16.mxu0 0
        %2304 = vmatpush1.bf16.xpose.msra.mxu0 0
        %2305 = vmatprep.subr.bf16.mxu0 0
        %2306 = vmatpush1.bf16.xpose.msra.mxu0 0
        %2307 = vmatprep.subr.bf16.mxu0 0
        %2308 = vmatpush1.bf16.xpose.msra.mxu0 0
        %2309 = vmatprep.subr.bf16.mxu0 0
        %2310 = vmatpush1.bf16.xpose.msra.mxu0 0
        %2311 = vmatprep.subr.bf16.mxu0 0
        %2312 = vmatpush1.bf16.xpose.msra.mxu0 0
        %2313 = vmatprep.subr.bf16.mxu0 0
        %2314 = vmatpush1.bf16.xpose.msra.mxu0 0
        %2315 = vmatprep.subr.bf16.mxu0 0
        %2316 = vmatpush1.bf16.xpose.msra.mxu0 %v2299
        %2317 = vmatprep.subr.bf16.mxu0 0
        %2318 = vmatpush2.bf16.xpose.msra.mxu0 0
        %2319 = vmatprep.subr.bf16.mxu0 0
        %2320 = vmatpush2.bf16.xpose.msra.mxu0 0
        %2321 = vmatprep.subr.bf16.mxu0 0
        %2322 = vmatpush2.bf16.xpose.msra.mxu0 0
        %2323 = vmatprep.subr.bf16.mxu0 0
        %2324 = vmatpush2.bf16.xpose.msra.mxu0 0
        %2325 = vmatprep.subr.bf16.mxu0 0
        %2326 = vmatpush2.bf16.xpose.msra.mxu0 0
        %2327 = vmatprep.subr.bf16.mxu0 0
        %2328 = vmatpush2.bf16.xpose.msra.mxu0 0
        %2329 = vmatprep.subr.bf16.mxu0 0
        %2330 = vmatpush2.bf16.xpose.msra.mxu0 0
        %2331 = vmatprep.subr.bf16.mxu0 0
        %2332 = vmatpush2.bf16.xpose.msra.mxu0 0
        %2333 = vmatprep.mubr.bf16.mxu0 0
        %2334 = vmatmul.mubr.bf16.gmra.mxu0 %v2296
        %v2335 = vpop.f32.mrf.mxu0
        %v2336 = vadd.f32 0.0, %v2335
        %v2337 = vpop.f32.mrf.mxu0
        %v2338 = vpop.f32.mrf.mxu0
        %v2339 = vpop.f32.mrf.mxu0
        %2340 = vdwg.mxu0
        %v2342 = vsel %vm1742, %v1371, 0
        %v2345 = vsel %vm1742, %v1507, 0
        %2347 = vmatprep.subr.bf16.mxu0 0
        %2348 = vmatpush1.bf16.xpose.msra.mxu0 0
        %2349 = vmatprep.subr.bf16.mxu0 0
        %2350 = vmatpush1.bf16.xpose.msra.mxu0 0
        %2351 = vmatprep.subr.bf16.mxu0 0
        %2352 = vmatpush1.bf16.xpose.msra.mxu0 0
        %2353 = vmatprep.subr.bf16.mxu0 0
        %2354 = vmatpush1.bf16.xpose.msra.mxu0 0
        %2355 = vmatprep.subr.bf16.mxu0 0
        %2356 = vmatpush1.bf16.xpose.msra.mxu0 0
        %2357 = vmatprep.subr.bf16.mxu0 0
        %2358 = vmatpush1.bf16.xpose.msra.mxu0 0
        %2359 = vmatprep.subr.bf16.mxu0 0
        %2360 = vmatpush1.bf16.xpose.msra.mxu0 0
        %2361 = vmatprep.subr.bf16.mxu0 0
        %2362 = vmatpush1.bf16.xpose.msra.mxu0 %v2345
        %2363 = vmatprep.subr.bf16.mxu0 0
        %2364 = vmatpush2.bf16.xpose.msra.mxu0 0
        %2365 = vmatprep.subr.bf16.mxu0 0
        %2366 = vmatpush2.bf16.xpose.msra.mxu0 0
        %2367 = vmatprep.subr.bf16.mxu0 0
        %2368 = vmatpush2.bf16.xpose.msra.mxu0 0
        %2369 = vmatprep.subr.bf16.mxu0 0
        %2370 = vmatpush2.bf16.xpose.msra.mxu0 0
        %2371 = vmatprep.subr.bf16.mxu0 0
        %2372 = vmatpush2.bf16.xpose.msra.mxu0 0
        %2373 = vmatprep.subr.bf16.mxu0 0
        %2374 = vmatpush2.bf16.xpose.msra.mxu0 0
        %2375 = vmatprep.subr.bf16.mxu0 0
        %2376 = vmatpush2.bf16.xpose.msra.mxu0 0
        %2377 = vmatprep.subr.bf16.mxu0 0
        %2378 = vmatpush2.bf16.xpose.msra.mxu0 0
        %2379 = vmatprep.mubr.bf16.mxu0 0
        %2380 = vmatmul.mubr.bf16.gmra.mxu0 %v2342
        %v2381 = vpop.f32.mrf.mxu0
        %v2382 = vadd.f32 0.0, %v2381
        %v2383 = vpop.f32.mrf.mxu0
        %v2384 = vpop.f32.mrf.mxu0
        %v2385 = vpop.f32.mrf.mxu0
        %2386 = vdwg.mxu0
        %v2388 = vsel %vm1742, %v1372, 0
        %v2391 = vsel %vm1742, %v1508, 0
        %2393 = vmatprep.subr.bf16.mxu0 0
        %2394 = vmatpush1.bf16.xpose.msra.mxu0 0
        %2395 = vmatprep.subr.bf16.mxu0 0
        %2396 = vmatpush1.bf16.xpose.msra.mxu0 0
        %2397 = vmatprep.subr.bf16.mxu0 0
        %2398 = vmatpush1.bf16.xpose.msra.mxu0 0
        %2399 = vmatprep.subr.bf16.mxu0 0
        %2400 = vmatpush1.bf16.xpose.msra.mxu0 0
        %2401 = vmatprep.subr.bf16.mxu0 0
        %2402 = vmatpush1.bf16.xpose.msra.mxu0 0
        %2403 = vmatprep.subr.bf16.mxu0 0
        %2404 = vmatpush1.bf16.xpose.msra.mxu0 0
        %2405 = vmatprep.subr.bf16.mxu0 0
        %2406 = vmatpush1.bf16.xpose.msra.mxu0 0
        %2407 = vmatprep.subr.bf16.mxu0 0
        %2408 = vmatpush1.bf16.xpose.msra.mxu0 %v2391
        %2409 = vmatprep.subr.bf16.mxu0 0
        %2410 = vmatpush2.bf16.xpose.msra.mxu0 0
        %2411 = vmatprep.subr.bf16.mxu0 0
        %2412 = vmatpush2.bf16.xpose.msra.mxu0 0
        %2413 = vmatprep.subr.bf16.mxu0 0
        %2414 = vmatpush2.bf16.xpose.msra.mxu0 0
        %2415 = vmatprep.subr.bf16.mxu0 0
        %2416 = vmatpush2.bf16.xpose.msra.mxu0 0
        %2417 = vmatprep.subr.bf16.mxu0 0
        %2418 = vmatpush2.bf16.xpose.msra.mxu0 0
        %2419 = vmatprep.subr.bf16.mxu0 0
        %2420 = vmatpush2.bf16.xpose.msra.mxu0 0
        %2421 = vmatprep.subr.bf16.mxu0 0
        %2422 = vmatpush2.bf16.xpose.msra.mxu0 0
        %2423 = vmatprep.subr.bf16.mxu0 0
        %2424 = vmatpush2.bf16.xpose.msra.mxu0 0
        %2425 = vmatprep.mubr.bf16.mxu0 0
        %2426 = vmatmul.mubr.bf16.gmra.mxu0 %v2388
        %v2427 = vpop.f32.mrf.mxu0
        %v2428 = vadd.f32 0.0, %v2427
        %v2429 = vpop.f32.mrf.mxu0
        %v2430 = vpop.f32.mrf.mxu0
        %v2431 = vpop.f32.mrf.mxu0
        %2432 = vdwg.mxu0
        %v2434 = vsel %vm1742, %v1373, 0
        %v2437 = vsel %vm1742, %v1509, 0
        %2439 = vmatprep.subr.bf16.mxu0 0
        %2440 = vmatpush1.bf16.xpose.msra.mxu0 0
        %2441 = vmatprep.subr.bf16.mxu0 0
        %2442 = vmatpush1.bf16.xpose.msra.mxu0 0
        %2443 = vmatprep.subr.bf16.mxu0 0
        %2444 = vmatpush1.bf16.xpose.msra.mxu0 0
        %2445 = vmatprep.subr.bf16.mxu0 0
        %2446 = vmatpush1.bf16.xpose.msra.mxu0 0
        %2447 = vmatprep.subr.bf16.mxu0 0
        %2448 = vmatpush1.bf16.xpose.msra.mxu0 0
        %2449 = vmatprep.subr.bf16.mxu0 0
        %2450 = vmatpush1.bf16.xpose.msra.mxu0 0
        %2451 = vmatprep.subr.bf16.mxu0 0
        %2452 = vmatpush1.bf16.xpose.msra.mxu0 0
        %2453 = vmatprep.subr.bf16.mxu0 0
        %2454 = vmatpush1.bf16.xpose.msra.mxu0 %v2437
        %2455 = vmatprep.subr.bf16.mxu0 0
        %2456 = vmatpush2.bf16.xpose.msra.mxu0 0
        %2457 = vmatprep.subr.bf16.mxu0 0
        %2458 = vmatpush2.bf16.xpose.msra.mxu0 0
        %2459 = vmatprep.subr.bf16.mxu0 0
        %2460 = vmatpush2.bf16.xpose.msra.mxu0 0
        %2461 = vmatprep.subr.bf16.mxu0 0
        %2462 = vmatpush2.bf16.xpose.msra.mxu0 0
        %2463 = vmatprep.subr.bf16.mxu0 0
        %2464 = vmatpush2.bf16.xpose.msra.mxu0 0
        %2465 = vmatprep.subr.bf16.mxu0 0
        %2466 = vmatpush2.bf16.xpose.msra.mxu0 0
        %2467 = vmatprep.subr.bf16.mxu0 0
        %2468 = vmatpush2.bf16.xpose.msra.mxu0 0
        %2469 = vmatprep.subr.bf16.mxu0 0
        %2470 = vmatpush2.bf16.xpose.msra.mxu0 0
        %2471 = vmatprep.mubr.bf16.mxu0 0
        %2472 = vmatmul.mubr.bf16.gmra.mxu0 %v2434
        %v2473 = vpop.f32.mrf.mxu0
        %v2474 = vadd.f32 0.0, %v2473
        %v2475 = vpop.f32.mrf.mxu0
        %v2476 = vpop.f32.mrf.mxu0
        %v2477 = vpop.f32.mrf.mxu0
        %2478 = vdwg.mxu0
        %v2480 = vsel %vm1742, %v1375, 0
        %v2483 = vsel %vm1742, %v1511, 0
        %2485 = vmatprep.subr.bf16.mxu0 0
        %2486 = vmatpush1.bf16.xpose.msra.mxu0 0
        %2487 = vmatprep.subr.bf16.mxu0 0
        %2488 = vmatpush1.bf16.xpose.msra.mxu0 0
        %2489 = vmatprep.subr.bf16.mxu0 0
        %2490 = vmatpush1.bf16.xpose.msra.mxu0 0
        %2491 = vmatprep.subr.bf16.mxu0 0
        %2492 = vmatpush1.bf16.xpose.msra.mxu0 0
        %2493 = vmatprep.subr.bf16.mxu0 0
        %2494 = vmatpush1.bf16.xpose.msra.mxu0 0
        %2495 = vmatprep.subr.bf16.mxu0 0
        %2496 = vmatpush1.bf16.xpose.msra.mxu0 0
        %2497 = vmatprep.subr.bf16.mxu0 0
        %2498 = vmatpush1.bf16.xpose.msra.mxu0 0
        %2499 = vmatprep.subr.bf16.mxu0 0
        %2500 = vmatpush1.bf16.xpose.msra.mxu0 %v2483
        %2501 = vmatprep.subr.bf16.mxu0 0
        %2502 = vmatpush2.bf16.xpose.msra.mxu0 0
        %2503 = vmatprep.subr.bf16.mxu0 0
        %2504 = vmatpush2.bf16.xpose.msra.mxu0 0
        %2505 = vmatprep.subr.bf16.mxu0 0
        %2506 = vmatpush2.bf16.xpose.msra.mxu0 0
        %2507 = vmatprep.subr.bf16.mxu0 0
        %2508 = vmatpush2.bf16.xpose.msra.mxu0 0
        %2509 = vmatprep.subr.bf16.mxu0 0
        %2510 = vmatpush2.bf16.xpose.msra.mxu0 0
        %2511 = vmatprep.subr.bf16.mxu0 0
        %2512 = vmatpush2.bf16.xpose.msra.mxu0 0
        %2513 = vmatprep.subr.bf16.mxu0 0
        %2514 = vmatpush2.bf16.xpose.msra.mxu0 0
        %2515 = vmatprep.subr.bf16.mxu0 0
        %2516 = vmatpush2.bf16.xpose.msra.mxu0 0
        %2517 = vmatprep.mubr.bf16.mxu0 0
        %2518 = vmatmul.mubr.bf16.gmra.mxu0 %v2480
        %v2519 = vpop.f32.mrf.mxu0
        %v2520 = vadd.f32 0.0, %v2519
        %v2521 = vpop.f32.mrf.mxu0
        %v2522 = vpop.f32.mrf.mxu0
        %v2523 = vpop.f32.mrf.mxu0
        %2524 = vdwg.mxu0
        %v2526 = vsel %vm1742, %v1377, 0
        %v2529 = vsel %vm1742, %v1513, 0
        %2531 = vmatprep.subr.bf16.mxu0 0
        %2532 = vmatpush1.bf16.xpose.msra.mxu0 0
        %2533 = vmatprep.subr.bf16.mxu0 0
        %2534 = vmatpush1.bf16.xpose.msra.mxu0 0
        %2535 = vmatprep.subr.bf16.mxu0 0
        %2536 = vmatpush1.bf16.xpose.msra.mxu0 0
        %2537 = vmatprep.subr.bf16.mxu0 0
        %2538 = vmatpush1.bf16.xpose.msra.mxu0 0
        %2539 = vmatprep.subr.bf16.mxu0 0
        %2540 = vmatpush1.bf16.xpose.msra.mxu0 0
        %2541 = vmatprep.subr.bf16.mxu0 0
        %2542 = vmatpush1.bf16.xpose.msra.mxu0 0
        %2543 = vmatprep.subr.bf16.mxu0 0
        %2544 = vmatpush1.bf16.xpose.msra.mxu0 0
        %2545 = vmatprep.subr.bf16.mxu0 0
        %2546 = vmatpush1.bf16.xpose.msra.mxu0 %v2529
        %2547 = vmatprep.subr.bf16.mxu0 0
        %2548 = vmatpush2.bf16.xpose.msra.mxu0 0
        %2549 = vmatprep.subr.bf16.mxu0 0
        %2550 = vmatpush2.bf16.xpose.msra.mxu0 0
        %2551 = vmatprep.subr.bf16.mxu0 0
        %2552 = vmatpush2.bf16.xpose.msra.mxu0 0
        %2553 = vmatprep.subr.bf16.mxu0 0
        %2554 = vmatpush2.bf16.xpose.msra.mxu0 0
        %2555 = vmatprep.subr.bf16.mxu0 0
        %2556 = vmatpush2.bf16.xpose.msra.mxu0 0
        %2557 = vmatprep.subr.bf16.mxu0 0
        %2558 = vmatpush2.bf16.xpose.msra.mxu0 0
        %2559 = vmatprep.subr.bf16.mxu0 0
        %2560 = vmatpush2.bf16.xpose.msra.mxu0 0
        %2561 = vmatprep.subr.bf16.mxu0 0
        %2562 = vmatpush2.bf16.xpose.msra.mxu0 0
        %2563 = vmatprep.mubr.bf16.mxu0 0
        %2564 = vmatmul.mubr.bf16.gmra.mxu0 %v2526
        %v2565 = vpop.f32.mrf.mxu0
        %v2566 = vadd.f32 0.0, %v2565
        %v2567 = vpop.f32.mrf.mxu0
        %v2568 = vpop.f32.mrf.mxu0
        %v2569 = vpop.f32.mrf.mxu0
        %2570 = vdwg.mxu0
        %v2572 = vsel %vm1742, %v1379, 0
        %v2575 = vsel %vm1742, %v1515, 0
        %2577 = vmatprep.subr.bf16.mxu0 0
        %2578 = vmatpush1.bf16.xpose.msra.mxu0 0
        %2579 = vmatprep.subr.bf16.mxu0 0
        %2580 = vmatpush1.bf16.xpose.msra.mxu0 0
        %2581 = vmatprep.subr.bf16.mxu0 0
        %2582 = vmatpush1.bf16.xpose.msra.mxu0 0
        %2583 = vmatprep.subr.bf16.mxu0 0
        %2584 = vmatpush1.bf16.xpose.msra.mxu0 0
        %2585 = vmatprep.subr.bf16.mxu0 0
        %2586 = vmatpush1.bf16.xpose.msra.mxu0 0
        %2587 = vmatprep.subr.bf16.mxu0 0
        %2588 = vmatpush1.bf16.xpose.msra.mxu0 0
        %2589 = vmatprep.subr.bf16.mxu0 0
        %2590 = vmatpush1.bf16.xpose.msra.mxu0 0
        %2591 = vmatprep.subr.bf16.mxu0 0
        %2592 = vmatpush1.bf16.xpose.msra.mxu0 %v2575
        %2593 = vmatprep.subr.bf16.mxu0 0
        %2594 = vmatpush2.bf16.xpose.msra.mxu0 0
        %2595 = vmatprep.subr.bf16.mxu0 0
        %2596 = vmatpush2.bf16.xpose.msra.mxu0 0
        %2597 = vmatprep.subr.bf16.mxu0 0
        %2598 = vmatpush2.bf16.xpose.msra.mxu0 0
        %2599 = vmatprep.subr.bf16.mxu0 0
        %2600 = vmatpush2.bf16.xpose.msra.mxu0 0
        %2601 = vmatprep.subr.bf16.mxu0 0
        %2602 = vmatpush2.bf16.xpose.msra.mxu0 0
        %2603 = vmatprep.subr.bf16.mxu0 0
        %2604 = vmatpush2.bf16.xpose.msra.mxu0 0
        %2605 = vmatprep.subr.bf16.mxu0 0
        %2606 = vmatpush2.bf16.xpose.msra.mxu0 0
        %2607 = vmatprep.subr.bf16.mxu0 0
        %2608 = vmatpush2.bf16.xpose.msra.mxu0 0
        %2609 = vmatprep.mubr.bf16.mxu0 0
        %2610 = vmatmul.mubr.bf16.gmra.mxu0 %v2572
        %v2611 = vpop.f32.mrf.mxu0
        %v2612 = vadd.f32 0.0, %v2611
        %v2613 = vpop.f32.mrf.mxu0
        %v2614 = vpop.f32.mrf.mxu0
        %v2615 = vpop.f32.mrf.mxu0
        %2616 = vdwg.mxu0
        %v2618 = vsel %vm1742, %v1381, 0
        %v2621 = vsel %vm1742, %v1517, 0
        %2623 = vmatprep.subr.bf16.mxu0 0
        %2624 = vmatpush1.bf16.xpose.msra.mxu0 0
        %2625 = vmatprep.subr.bf16.mxu0 0
        %2626 = vmatpush1.bf16.xpose.msra.mxu0 0
        %2627 = vmatprep.subr.bf16.mxu0 0
        %2628 = vmatpush1.bf16.xpose.msra.mxu0 0
        %2629 = vmatprep.subr.bf16.mxu0 0
        %2630 = vmatpush1.bf16.xpose.msra.mxu0 0
        %2631 = vmatprep.subr.bf16.mxu0 0
        %2632 = vmatpush1.bf16.xpose.msra.mxu0 0
        %2633 = vmatprep.subr.bf16.mxu0 0
        %2634 = vmatpush1.bf16.xpose.msra.mxu0 0
        %2635 = vmatprep.subr.bf16.mxu0 0
        %2636 = vmatpush1.bf16.xpose.msra.mxu0 0
        %2637 = vmatprep.subr.bf16.mxu0 0
        %2638 = vmatpush1.bf16.xpose.msra.mxu0 %v2621
        %2639 = vmatprep.subr.bf16.mxu0 0
        %2640 = vmatpush2.bf16.xpose.msra.mxu0 0
        %2641 = vmatprep.subr.bf16.mxu0 0
        %2642 = vmatpush2.bf16.xpose.msra.mxu0 0
        %2643 = vmatprep.subr.bf16.mxu0 0
        %2644 = vmatpush2.bf16.xpose.msra.mxu0 0
        %2645 = vmatprep.subr.bf16.mxu0 0
        %2646 = vmatpush2.bf16.xpose.msra.mxu0 0
        %2647 = vmatprep.subr.bf16.mxu0 0
        %2648 = vmatpush2.bf16.xpose.msra.mxu0 0
        %2649 = vmatprep.subr.bf16.mxu0 0
        %2650 = vmatpush2.bf16.xpose.msra.mxu0 0
        %2651 = vmatprep.subr.bf16.mxu0 0
        %2652 = vmatpush2.bf16.xpose.msra.mxu0 0
        %2653 = vmatprep.subr.bf16.mxu0 0
        %2654 = vmatpush2.bf16.xpose.msra.mxu0 0
        %2655 = vmatprep.mubr.bf16.mxu0 0
        %2656 = vmatmul.mubr.bf16.gmra.mxu0 %v2618
        %v2657 = vpop.f32.mrf.mxu0
        %v2658 = vadd.f32 0.0, %v2657
        %v2659 = vpop.f32.mrf.mxu0
        %v2660 = vpop.f32.mrf.mxu0
        %v2661 = vpop.f32.mrf.mxu0
        %2662 = vdwg.mxu0
        %v2664 = vsel %vm1742, %v1383, 0
        %v2667 = vsel %vm1742, %v1519, 0
        %2669 = vmatprep.subr.bf16.mxu0 0
        %2670 = vmatpush1.bf16.xpose.msra.mxu0 0
        %2671 = vmatprep.subr.bf16.mxu0 0
        %2672 = vmatpush1.bf16.xpose.msra.mxu0 0
        %2673 = vmatprep.subr.bf16.mxu0 0
        %2674 = vmatpush1.bf16.xpose.msra.mxu0 0
        %2675 = vmatprep.subr.bf16.mxu0 0
        %2676 = vmatpush1.bf16.xpose.msra.mxu0 0
        %2677 = vmatprep.subr.bf16.mxu0 0
        %2678 = vmatpush1.bf16.xpose.msra.mxu0 0
        %2679 = vmatprep.subr.bf16.mxu0 0
        %2680 = vmatpush1.bf16.xpose.msra.mxu0 0
        %2681 = vmatprep.subr.bf16.mxu0 0
        %2682 = vmatpush1.bf16.xpose.msra.mxu0 0
        %2683 = vmatprep.subr.bf16.mxu0 0
        %2684 = vmatpush1.bf16.xpose.msra.mxu0 %v2667
        %2685 = vmatprep.subr.bf16.mxu0 0
        %2686 = vmatpush2.bf16.xpose.msra.mxu0 0
        %2687 = vmatprep.subr.bf16.mxu0 0
        %2688 = vmatpush2.bf16.xpose.msra.mxu0 0
        %2689 = vmatprep.subr.bf16.mxu0 0
        %2690 = vmatpush2.bf16.xpose.msra.mxu0 0
        %2691 = vmatprep.subr.bf16.mxu0 0
        %2692 = vmatpush2.bf16.xpose.msra.mxu0 0
        %2693 = vmatprep.subr.bf16.mxu0 0
        %2694 = vmatpush2.bf16.xpose.msra.mxu0 0
        %2695 = vmatprep.subr.bf16.mxu0 0
        %2696 = vmatpush2.bf16.xpose.msra.mxu0 0
        %2697 = vmatprep.subr.bf16.mxu0 0
        %2698 = vmatpush2.bf16.xpose.msra.mxu0 0
        %2699 = vmatprep.subr.bf16.mxu0 0
        %2700 = vmatpush2.bf16.xpose.msra.mxu0 0
        %2701 = vmatprep.mubr.bf16.mxu0 0
        %2702 = vmatmul.mubr.bf16.gmra.mxu0 %v2664
        %v2703 = vpop.f32.mrf.mxu0
        %v2704 = vadd.f32 0.0, %v2703
        %v2705 = vpop.f32.mrf.mxu0
        %v2706 = vpop.f32.mrf.mxu0
        %v2707 = vpop.f32.mrf.mxu0
        %2708 = vdwg.mxu0
        %v2710 = vsel %vm1742, %v1385, 0
        %v2713 = vsel %vm1742, %v1521, 0
        %2715 = vmatprep.subr.bf16.mxu0 0
        %2716 = vmatpush1.bf16.xpose.msra.mxu0 0
        %2717 = vmatprep.subr.bf16.mxu0 0
        %2718 = vmatpush1.bf16.xpose.msra.mxu0 0
        %2719 = vmatprep.subr.bf16.mxu0 0
        %2720 = vmatpush1.bf16.xpose.msra.mxu0 0
        %2721 = vmatprep.subr.bf16.mxu0 0
        %2722 = vmatpush1.bf16.xpose.msra.mxu0 0
        %2723 = vmatprep.subr.bf16.mxu0 0
        %2724 = vmatpush1.bf16.xpose.msra.mxu0 0
        %2725 = vmatprep.subr.bf16.mxu0 0
        %2726 = vmatpush1.bf16.xpose.msra.mxu0 0
        %2727 = vmatprep.subr.bf16.mxu0 0
        %2728 = vmatpush1.bf16.xpose.msra.mxu0 0
        %2729 = vmatprep.subr.bf16.mxu0 0
        %2730 = vmatpush1.bf16.xpose.msra.mxu0 %v2713
        %2731 = vmatprep.subr.bf16.mxu0 0
        %2732 = vmatpush2.bf16.xpose.msra.mxu0 0
        %2733 = vmatprep.subr.bf16.mxu0 0
        %2734 = vmatpush2.bf16.xpose.msra.mxu0 0
        %2735 = vmatprep.subr.bf16.mxu0 0
        %2736 = vmatpush2.bf16.xpose.msra.mxu0 0
        %2737 = vmatprep.subr.bf16.mxu0 0
        %2738 = vmatpush2.bf16.xpose.msra.mxu0 0
        %2739 = vmatprep.subr.bf16.mxu0 0
        %2740 = vmatpush2.bf16.xpose.msra.mxu0 0
        %2741 = vmatprep.subr.bf16.mxu0 0
        %2742 = vmatpush2.bf16.xpose.msra.mxu0 0
        %2743 = vmatprep.subr.bf16.mxu0 0
        %2744 = vmatpush2.bf16.xpose.msra.mxu0 0
        %2745 = vmatprep.subr.bf16.mxu0 0
        %2746 = vmatpush2.bf16.xpose.msra.mxu0 0
        %2747 = vmatprep.mubr.bf16.mxu0 0
        %2748 = vmatmul.mubr.bf16.gmra.mxu0 %v2710
        %v2749 = vpop.f32.mrf.mxu0
        %v2750 = vadd.f32 0.0, %v2749
        %v2751 = vpop.f32.mrf.mxu0
        %v2752 = vpop.f32.mrf.mxu0
        %v2753 = vpop.f32.mrf.mxu0
        %2754 = vdwg.mxu0
        %v2756 = vsel %vm1742, %v1387, 0
        %v2759 = vsel %vm1742, %v1523, 0
        %2761 = vmatprep.subr.bf16.mxu0 0
        %2762 = vmatpush1.bf16.xpose.msra.mxu0 0
        %2763 = vmatprep.subr.bf16.mxu0 0
        %2764 = vmatpush1.bf16.xpose.msra.mxu0 0
        %2765 = vmatprep.subr.bf16.mxu0 0
        %2766 = vmatpush1.bf16.xpose.msra.mxu0 0
        %2767 = vmatprep.subr.bf16.mxu0 0
        %2768 = vmatpush1.bf16.xpose.msra.mxu0 0
        %2769 = vmatprep.subr.bf16.mxu0 0
        %2770 = vmatpush1.bf16.xpose.msra.mxu0 0
        %2771 = vmatprep.subr.bf16.mxu0 0
        %2772 = vmatpush1.bf16.xpose.msra.mxu0 0
        %2773 = vmatprep.subr.bf16.mxu0 0
        %2774 = vmatpush1.bf16.xpose.msra.mxu0 0
        %2775 = vmatprep.subr.bf16.mxu0 0
        %2776 = vmatpush1.bf16.xpose.msra.mxu0 %v2759
        %2777 = vmatprep.subr.bf16.mxu0 0
        %2778 = vmatpush2.bf16.xpose.msra.mxu0 0
        %2779 = vmatprep.subr.bf16.mxu0 0
        %2780 = vmatpush2.bf16.xpose.msra.mxu0 0
        %2781 = vmatprep.subr.bf16.mxu0 0
        %2782 = vmatpush2.bf16.xpose.msra.mxu0 0
        %2783 = vmatprep.subr.bf16.mxu0 0
        %2784 = vmatpush2.bf16.xpose.msra.mxu0 0
        %2785 = vmatprep.subr.bf16.mxu0 0
        %2786 = vmatpush2.bf16.xpose.msra.mxu0 0
        %2787 = vmatprep.subr.bf16.mxu0 0
        %2788 = vmatpush2.bf16.xpose.msra.mxu0 0
        %2789 = vmatprep.subr.bf16.mxu0 0
        %2790 = vmatpush2.bf16.xpose.msra.mxu0 0
        %2791 = vmatprep.subr.bf16.mxu0 0
        %2792 = vmatpush2.bf16.xpose.msra.mxu0 0
        %2793 = vmatprep.mubr.bf16.mxu0 0
        %2794 = vmatmul.mubr.bf16.gmra.mxu0 %v2756
        %v2795 = vpop.f32.mrf.mxu0
        %v2796 = vadd.f32 0.0, %v2795
        %v2797 = vpop.f32.mrf.mxu0
        %v2798 = vpop.f32.mrf.mxu0
        %v2799 = vpop.f32.mrf.mxu0
        %2800 = vdwg.mxu0
        %v2802 = vsel %vm1742, %v1389, 0
        %v2805 = vsel %vm1742, %v1525, 0
        %2807 = vmatprep.subr.bf16.mxu0 0
        %2808 = vmatpush1.bf16.xpose.msra.mxu0 0
        %2809 = vmatprep.subr.bf16.mxu0 0
        %2810 = vmatpush1.bf16.xpose.msra.mxu0 0
        %2811 = vmatprep.subr.bf16.mxu0 0
        %2812 = vmatpush1.bf16.xpose.msra.mxu0 0
        %2813 = vmatprep.subr.bf16.mxu0 0
        %2814 = vmatpush1.bf16.xpose.msra.mxu0 0
        %2815 = vmatprep.subr.bf16.mxu0 0
        %2816 = vmatpush1.bf16.xpose.msra.mxu0 0
        %2817 = vmatprep.subr.bf16.mxu0 0
        %2818 = vmatpush1.bf16.xpose.msra.mxu0 0
        %2819 = vmatprep.subr.bf16.mxu0 0
        %2820 = vmatpush1.bf16.xpose.msra.mxu0 0
        %2821 = vmatprep.subr.bf16.mxu0 0
        %2822 = vmatpush1.bf16.xpose.msra.mxu0 %v2805
        %2823 = vmatprep.subr.bf16.mxu0 0
        %2824 = vmatpush2.bf16.xpose.msra.mxu0 0
        %2825 = vmatprep.subr.bf16.mxu0 0
        %2826 = vmatpush2.bf16.xpose.msra.mxu0 0
        %2827 = vmatprep.subr.bf16.mxu0 0
        %2828 = vmatpush2.bf16.xpose.msra.mxu0 0
        %2829 = vmatprep.subr.bf16.mxu0 0
        %2830 = vmatpush2.bf16.xpose.msra.mxu0 0
        %2831 = vmatprep.subr.bf16.mxu0 0
        %2832 = vmatpush2.bf16.xpose.msra.mxu0 0
        %2833 = vmatprep.subr.bf16.mxu0 0
        %2834 = vmatpush2.bf16.xpose.msra.mxu0 0
        %2835 = vmatprep.subr.bf16.mxu0 0
        %2836 = vmatpush2.bf16.xpose.msra.mxu0 0
        %2837 = vmatprep.subr.bf16.mxu0 0
        %2838 = vmatpush2.bf16.xpose.msra.mxu0 0
        %2839 = vmatprep.mubr.bf16.mxu0 0
        %2840 = vmatmul.mubr.bf16.gmra.mxu0 %v2802
        %v2841 = vpop.f32.mrf.mxu0
        %v2842 = vadd.f32 0.0, %v2841
        %v2843 = vpop.f32.mrf.mxu0
        %v2844 = vpop.f32.mrf.mxu0
        %v2845 = vpop.f32.mrf.mxu0
        %2846 = vdwg.mxu0
        %v2848 = vsel %vm1742, %v1391, 0
        %v2851 = vsel %vm1742, %v1527, 0
        %2853 = vmatprep.subr.bf16.mxu0 0
        %2854 = vmatpush1.bf16.xpose.msra.mxu0 0
        %2855 = vmatprep.subr.bf16.mxu0 0
        %2856 = vmatpush1.bf16.xpose.msra.mxu0 0
        %2857 = vmatprep.subr.bf16.mxu0 0
        %2858 = vmatpush1.bf16.xpose.msra.mxu0 0
        %2859 = vmatprep.subr.bf16.mxu0 0
        %2860 = vmatpush1.bf16.xpose.msra.mxu0 0
        %2861 = vmatprep.subr.bf16.mxu0 0
        %2862 = vmatpush1.bf16.xpose.msra.mxu0 0
        %2863 = vmatprep.subr.bf16.mxu0 0
        %2864 = vmatpush1.bf16.xpose.msra.mxu0 0
        %2865 = vmatprep.subr.bf16.mxu0 0
        %2866 = vmatpush1.bf16.xpose.msra.mxu0 0
        %2867 = vmatprep.subr.bf16.mxu0 0
        %2868 = vmatpush1.bf16.xpose.msra.mxu0 %v2851
        %2869 = vmatprep.subr.bf16.mxu0 0
        %2870 = vmatpush2.bf16.xpose.msra.mxu0 0
        %2871 = vmatprep.subr.bf16.mxu0 0
        %2872 = vmatpush2.bf16.xpose.msra.mxu0 0
        %2873 = vmatprep.subr.bf16.mxu0 0
        %2874 = vmatpush2.bf16.xpose.msra.mxu0 0
        %2875 = vmatprep.subr.bf16.mxu0 0
        %2876 = vmatpush2.bf16.xpose.msra.mxu0 0
        %2877 = vmatprep.subr.bf16.mxu0 0
        %2878 = vmatpush2.bf16.xpose.msra.mxu0 0
        %2879 = vmatprep.subr.bf16.mxu0 0
        %2880 = vmatpush2.bf16.xpose.msra.mxu0 0
        %2881 = vmatprep.subr.bf16.mxu0 0
        %2882 = vmatpush2.bf16.xpose.msra.mxu0 0
        %2883 = vmatprep.subr.bf16.mxu0 0
        %2884 = vmatpush2.bf16.xpose.msra.mxu0 0
        %2885 = vmatprep.mubr.bf16.mxu0 0
        %2886 = vmatmul.mubr.bf16.gmra.mxu0 %v2848
        %v2887 = vpop.f32.mrf.mxu0
        %v2888 = vadd.f32 0.0, %v2887
        %v2889 = vpop.f32.mrf.mxu0
        %v2890 = vpop.f32.mrf.mxu0
        %v2891 = vpop.f32.mrf.mxu0
        %2892 = vdwg.mxu0
        %v2894 = vsel %vm1742, %v1393, 0
        %v2897 = vsel %vm1742, %v1529, 0
        %2899 = vmatprep.subr.bf16.mxu0 0
        %2900 = vmatpush1.bf16.xpose.msra.mxu0 0
        %2901 = vmatprep.subr.bf16.mxu0 0
        %2902 = vmatpush1.bf16.xpose.msra.mxu0 0
        %2903 = vmatprep.subr.bf16.mxu0 0
        %2904 = vmatpush1.bf16.xpose.msra.mxu0 0
        %2905 = vmatprep.subr.bf16.mxu0 0
        %2906 = vmatpush1.bf16.xpose.msra.mxu0 0
        %2907 = vmatprep.subr.bf16.mxu0 0
        %2908 = vmatpush1.bf16.xpose.msra.mxu0 0
        %2909 = vmatprep.subr.bf16.mxu0 0
        %2910 = vmatpush1.bf16.xpose.msra.mxu0 0
        %2911 = vmatprep.subr.bf16.mxu0 0
        %2912 = vmatpush1.bf16.xpose.msra.mxu0 0
        %2913 = vmatprep.subr.bf16.mxu0 0
        %2914 = vmatpush1.bf16.xpose.msra.mxu0 %v2897
        %2915 = vmatprep.subr.bf16.mxu0 0
        %2916 = vmatpush2.bf16.xpose.msra.mxu0 0
        %2917 = vmatprep.subr.bf16.mxu0 0
        %2918 = vmatpush2.bf16.xpose.msra.mxu0 0
        %2919 = vmatprep.subr.bf16.mxu0 0
        %2920 = vmatpush2.bf16.xpose.msra.mxu0 0
        %2921 = vmatprep.subr.bf16.mxu0 0
        %2922 = vmatpush2.bf16.xpose.msra.mxu0 0
        %2923 = vmatprep.subr.bf16.mxu0 0
        %2924 = vmatpush2.bf16.xpose.msra.mxu0 0
        %2925 = vmatprep.subr.bf16.mxu0 0
        %2926 = vmatpush2.bf16.xpose.msra.mxu0 0
        %2927 = vmatprep.subr.bf16.mxu0 0
        %2928 = vmatpush2.bf16.xpose.msra.mxu0 0
        %2929 = vmatprep.subr.bf16.mxu0 0
        %2930 = vmatpush2.bf16.xpose.msra.mxu0 0
        %2931 = vmatprep.mubr.bf16.mxu0 0
        %2932 = vmatmul.mubr.bf16.gmra.mxu0 %v2894
        %v2933 = vpop.f32.mrf.mxu0
        %v2934 = vadd.f32 0.0, %v2933
        %v2935 = vpop.f32.mrf.mxu0
        %v2936 = vpop.f32.mrf.mxu0
        %v2937 = vpop.f32.mrf.mxu0
        %2938 = vdwg.mxu0
        %v2940 = vsel %vm1742, %v1395, 0
        %v2943 = vsel %vm1742, %v1531, 0
        %2945 = vmatprep.subr.bf16.mxu0 0
        %2946 = vmatpush1.bf16.xpose.msra.mxu0 0
        %2947 = vmatprep.subr.bf16.mxu0 0
        %2948 = vmatpush1.bf16.xpose.msra.mxu0 0
        %2949 = vmatprep.subr.bf16.mxu0 0
        %2950 = vmatpush1.bf16.xpose.msra.mxu0 0
        %2951 = vmatprep.subr.bf16.mxu0 0
        %2952 = vmatpush1.bf16.xpose.msra.mxu0 0
        %2953 = vmatprep.subr.bf16.mxu0 0
        %2954 = vmatpush1.bf16.xpose.msra.mxu0 0
        %2955 = vmatprep.subr.bf16.mxu0 0
        %2956 = vmatpush1.bf16.xpose.msra.mxu0 0
        %2957 = vmatprep.subr.bf16.mxu0 0
        %2958 = vmatpush1.bf16.xpose.msra.mxu0 0
        %2959 = vmatprep.subr.bf16.mxu0 0
        %2960 = vmatpush1.bf16.xpose.msra.mxu0 %v2943
        %2961 = vmatprep.subr.bf16.mxu0 0
        %2962 = vmatpush2.bf16.xpose.msra.mxu0 0
        %2963 = vmatprep.subr.bf16.mxu0 0
        %2964 = vmatpush2.bf16.xpose.msra.mxu0 0
        %2965 = vmatprep.subr.bf16.mxu0 0
        %2966 = vmatpush2.bf16.xpose.msra.mxu0 0
        %2967 = vmatprep.subr.bf16.mxu0 0
        %2968 = vmatpush2.bf16.xpose.msra.mxu0 0
        %2969 = vmatprep.subr.bf16.mxu0 0
        %2970 = vmatpush2.bf16.xpose.msra.mxu0 0
        %2971 = vmatprep.subr.bf16.mxu0 0
        %2972 = vmatpush2.bf16.xpose.msra.mxu0 0
        %2973 = vmatprep.subr.bf16.mxu0 0
        %2974 = vmatpush2.bf16.xpose.msra.mxu0 0
        %2975 = vmatprep.subr.bf16.mxu0 0
        %2976 = vmatpush2.bf16.xpose.msra.mxu0 0
        %2977 = vmatprep.mubr.bf16.mxu0 0
        %2978 = vmatmul.mubr.bf16.gmra.mxu0 %v2940
        %v2979 = vpop.f32.mrf.mxu0
        %v2980 = vadd.f32 0.0, %v2979
        %v2981 = vpop.f32.mrf.mxu0
        %v2982 = vpop.f32.mrf.mxu0
        %v2983 = vpop.f32.mrf.mxu0
        %2984 = vdwg.mxu0
        %v2986 = vsel %vm1742, %v1397, 0
        %v2989 = vsel %vm1742, %v1533, 0
        %2991 = vmatprep.subr.bf16.mxu0 0
        %2992 = vmatpush1.bf16.xpose.msra.mxu0 0
        %2993 = vmatprep.subr.bf16.mxu0 0
        %2994 = vmatpush1.bf16.xpose.msra.mxu0 0
        %2995 = vmatprep.subr.bf16.mxu0 0
        %2996 = vmatpush1.bf16.xpose.msra.mxu0 0
        %2997 = vmatprep.subr.bf16.mxu0 0
        %2998 = vmatpush1.bf16.xpose.msra.mxu0 0
        %2999 = vmatprep.subr.bf16.mxu0 0
        %3000 = vmatpush1.bf16.xpose.msra.mxu0 0
        %3001 = vmatprep.subr.bf16.mxu0 0
        %3002 = vmatpush1.bf16.xpose.msra.mxu0 0
        %3003 = vmatprep.subr.bf16.mxu0 0
        %3004 = vmatpush1.bf16.xpose.msra.mxu0 0
        %3005 = vmatprep.subr.bf16.mxu0 0
        %3006 = vmatpush1.bf16.xpose.msra.mxu0 %v2989
        %3007 = vmatprep.subr.bf16.mxu0 0
        %3008 = vmatpush2.bf16.xpose.msra.mxu0 0
        %3009 = vmatprep.subr.bf16.mxu0 0
        %3010 = vmatpush2.bf16.xpose.msra.mxu0 0
        %3011 = vmatprep.subr.bf16.mxu0 0
        %3012 = vmatpush2.bf16.xpose.msra.mxu0 0
        %3013 = vmatprep.subr.bf16.mxu0 0
        %3014 = vmatpush2.bf16.xpose.msra.mxu0 0
        %3015 = vmatprep.subr.bf16.mxu0 0
        %3016 = vmatpush2.bf16.xpose.msra.mxu0 0
        %3017 = vmatprep.subr.bf16.mxu0 0
        %3018 = vmatpush2.bf16.xpose.msra.mxu0 0
        %3019 = vmatprep.subr.bf16.mxu0 0
        %3020 = vmatpush2.bf16.xpose.msra.mxu0 0
        %3021 = vmatprep.subr.bf16.mxu0 0
        %3022 = vmatpush2.bf16.xpose.msra.mxu0 0
        %3023 = vmatprep.mubr.bf16.mxu0 0
        %3024 = vmatmul.mubr.bf16.gmra.mxu0 %v2986
        %v3025 = vpop.f32.mrf.mxu0
        %v3026 = vadd.f32 0.0, %v3025
        %v3027 = vpop.f32.mrf.mxu0
        %v3028 = vpop.f32.mrf.mxu0
        %v3029 = vpop.f32.mrf.mxu0
        %3030 = vdwg.mxu0
        %v3032 = vsel %vm1742, %v1399, 0
        %v3035 = vsel %vm1742, %v1535, 0
        %3037 = vmatprep.subr.bf16.mxu0 0
        %3038 = vmatpush1.bf16.xpose.msra.mxu0 0
        %3039 = vmatprep.subr.bf16.mxu0 0
        %3040 = vmatpush1.bf16.xpose.msra.mxu0 0
        %3041 = vmatprep.subr.bf16.mxu0 0
        %3042 = vmatpush1.bf16.xpose.msra.mxu0 0
        %3043 = vmatprep.subr.bf16.mxu0 0
        %3044 = vmatpush1.bf16.xpose.msra.mxu0 0
        %3045 = vmatprep.subr.bf16.mxu0 0
        %3046 = vmatpush1.bf16.xpose.msra.mxu0 0
        %3047 = vmatprep.subr.bf16.mxu0 0
        %3048 = vmatpush1.bf16.xpose.msra.mxu0 0
        %3049 = vmatprep.subr.bf16.mxu0 0
        %3050 = vmatpush1.bf16.xpose.msra.mxu0 0
        %3051 = vmatprep.subr.bf16.mxu0 0
        %3052 = vmatpush1.bf16.xpose.msra.mxu0 %v3035
        %3053 = vmatprep.subr.bf16.mxu0 0
        %3054 = vmatpush2.bf16.xpose.msra.mxu0 0
        %3055 = vmatprep.subr.bf16.mxu0 0
        %3056 = vmatpush2.bf16.xpose.msra.mxu0 0
        %3057 = vmatprep.subr.bf16.mxu0 0
        %3058 = vmatpush2.bf16.xpose.msra.mxu0 0
        %3059 = vmatprep.subr.bf16.mxu0 0
        %3060 = vmatpush2.bf16.xpose.msra.mxu0 0
        %3061 = vmatprep.subr.bf16.mxu0 0
        %3062 = vmatpush2.bf16.xpose.msra.mxu0 0
        %3063 = vmatprep.subr.bf16.mxu0 0
        %3064 = vmatpush2.bf16.xpose.msra.mxu0 0
        %3065 = vmatprep.subr.bf16.mxu0 0
        %3066 = vmatpush2.bf16.xpose.msra.mxu0 0
        %3067 = vmatprep.subr.bf16.mxu0 0
        %3068 = vmatpush2.bf16.xpose.msra.mxu0 0
        %3069 = vmatprep.mubr.bf16.mxu0 0
        %3070 = vmatmul.mubr.bf16.gmra.mxu0 %v3032
        %v3071 = vpop.f32.mrf.mxu0
        %v3072 = vadd.f32 0.0, %v3071
        %v3073 = vpop.f32.mrf.mxu0
        %v3074 = vpop.f32.mrf.mxu0
        %v3075 = vpop.f32.mrf.mxu0
        %3076 = vdwg.mxu0
        %v3078 = vsel %vm1742, %v1401, 0
        %v3081 = vsel %vm1742, %v1537, 0
        %3083 = vmatprep.subr.bf16.mxu0 0
        %3084 = vmatpush1.bf16.xpose.msra.mxu0 0
        %3085 = vmatprep.subr.bf16.mxu0 0
        %3086 = vmatpush1.bf16.xpose.msra.mxu0 0
        %3087 = vmatprep.subr.bf16.mxu0 0
        %3088 = vmatpush1.bf16.xpose.msra.mxu0 0
        %3089 = vmatprep.subr.bf16.mxu0 0
        %3090 = vmatpush1.bf16.xpose.msra.mxu0 0
        %3091 = vmatprep.subr.bf16.mxu0 0
        %3092 = vmatpush1.bf16.xpose.msra.mxu0 0
        %3093 = vmatprep.subr.bf16.mxu0 0
        %3094 = vmatpush1.bf16.xpose.msra.mxu0 0
        %3095 = vmatprep.subr.bf16.mxu0 0
        %3096 = vmatpush1.bf16.xpose.msra.mxu0 0
        %3097 = vmatprep.subr.bf16.mxu0 0
        %3098 = vmatpush1.bf16.xpose.msra.mxu0 %v3081
        %3099 = vmatprep.subr.bf16.mxu0 0
        %3100 = vmatpush2.bf16.xpose.msra.mxu0 0
        %3101 = vmatprep.subr.bf16.mxu0 0
        %3102 = vmatpush2.bf16.xpose.msra.mxu0 0
        %3103 = vmatprep.subr.bf16.mxu0 0
        %3104 = vmatpush2.bf16.xpose.msra.mxu0 0
        %3105 = vmatprep.subr.bf16.mxu0 0
        %3106 = vmatpush2.bf16.xpose.msra.mxu0 0
        %3107 = vmatprep.subr.bf16.mxu0 0
        %3108 = vmatpush2.bf16.xpose.msra.mxu0 0
        %3109 = vmatprep.subr.bf16.mxu0 0
        %3110 = vmatpush2.bf16.xpose.msra.mxu0 0
        %3111 = vmatprep.subr.bf16.mxu0 0
        %3112 = vmatpush2.bf16.xpose.msra.mxu0 0
        %3113 = vmatprep.subr.bf16.mxu0 0
        %3114 = vmatpush2.bf16.xpose.msra.mxu0 0
        %3115 = vmatprep.mubr.bf16.mxu0 0
        %3116 = vmatmul.mubr.bf16.gmra.mxu0 %v3078
        %v3117 = vpop.f32.mrf.mxu0
        %v3118 = vadd.f32 0.0, %v3117
        %v3119 = vpop.f32.mrf.mxu0
        %v3120 = vpop.f32.mrf.mxu0
        %v3121 = vpop.f32.mrf.mxu0
        %3122 = vdwg.mxu0
        %v3124 = vsel %vm1742, %v1403, 0
        %v3127 = vsel %vm1742, %v1539, 0
        %3129 = vmatprep.subr.bf16.mxu0 0
        %3130 = vmatpush1.bf16.xpose.msra.mxu0 0
        %3131 = vmatprep.subr.bf16.mxu0 0
        %3132 = vmatpush1.bf16.xpose.msra.mxu0 0
        %3133 = vmatprep.subr.bf16.mxu0 0
        %3134 = vmatpush1.bf16.xpose.msra.mxu0 0
        %3135 = vmatprep.subr.bf16.mxu0 0
        %3136 = vmatpush1.bf16.xpose.msra.mxu0 0
        %3137 = vmatprep.subr.bf16.mxu0 0
        %3138 = vmatpush1.bf16.xpose.msra.mxu0 0
        %3139 = vmatprep.subr.bf16.mxu0 0
        %3140 = vmatpush1.bf16.xpose.msra.mxu0 0
        %3141 = vmatprep.subr.bf16.mxu0 0
        %3142 = vmatpush1.bf16.xpose.msra.mxu0 0
        %3143 = vmatprep.subr.bf16.mxu0 0
        %3144 = vmatpush1.bf16.xpose.msra.mxu0 %v3127
        %3145 = vmatprep.subr.bf16.mxu0 0
        %3146 = vmatpush2.bf16.xpose.msra.mxu0 0
        %3147 = vmatprep.subr.bf16.mxu0 0
        %3148 = vmatpush2.bf16.xpose.msra.mxu0 0
        %3149 = vmatprep.subr.bf16.mxu0 0
        %3150 = vmatpush2.bf16.xpose.msra.mxu0 0
        %3151 = vmatprep.subr.bf16.mxu0 0
        %3152 = vmatpush2.bf16.xpose.msra.mxu0 0
        %3153 = vmatprep.subr.bf16.mxu0 0
        %3154 = vmatpush2.bf16.xpose.msra.mxu0 0
        %3155 = vmatprep.subr.bf16.mxu0 0
        %3156 = vmatpush2.bf16.xpose.msra.mxu0 0
        %3157 = vmatprep.subr.bf16.mxu0 0
        %3158 = vmatpush2.bf16.xpose.msra.mxu0 0
        %3159 = vmatprep.subr.bf16.mxu0 0
        %3160 = vmatpush2.bf16.xpose.msra.mxu0 0
        %3161 = vmatprep.mubr.bf16.mxu0 0
        %3162 = vmatmul.mubr.bf16.gmra.mxu0 %v3124
        %v3163 = vpop.f32.mrf.mxu0
        %v3164 = vadd.f32 0.0, %v3163
        %v3165 = vpop.f32.mrf.mxu0
        %v3166 = vpop.f32.mrf.mxu0
        %v3167 = vpop.f32.mrf.mxu0
        %3168 = vdwg.mxu0
        %v3170 = vsel %vm1742, %v1405, 0
        %v3173 = vsel %vm1742, %v1541, 0
        %3175 = vmatprep.subr.bf16.mxu0 0
        %3176 = vmatpush1.bf16.xpose.msra.mxu0 0
        %3177 = vmatprep.subr.bf16.mxu0 0
        %3178 = vmatpush1.bf16.xpose.msra.mxu0 0
        %3179 = vmatprep.subr.bf16.mxu0 0
        %3180 = vmatpush1.bf16.xpose.msra.mxu0 0
        %3181 = vmatprep.subr.bf16.mxu0 0
        %3182 = vmatpush1.bf16.xpose.msra.mxu0 0
        %3183 = vmatprep.subr.bf16.mxu0 0
        %3184 = vmatpush1.bf16.xpose.msra.mxu0 0
        %3185 = vmatprep.subr.bf16.mxu0 0
        %3186 = vmatpush1.bf16.xpose.msra.mxu0 0
        %3187 = vmatprep.subr.bf16.mxu0 0
        %3188 = vmatpush1.bf16.xpose.msra.mxu0 0
        %3189 = vmatprep.subr.bf16.mxu0 0
        %3190 = vmatpush1.bf16.xpose.msra.mxu0 %v3173
        %3191 = vmatprep.subr.bf16.mxu0 0
        %3192 = vmatpush2.bf16.xpose.msra.mxu0 0
        %3193 = vmatprep.subr.bf16.mxu0 0
        %3194 = vmatpush2.bf16.xpose.msra.mxu0 0
        %3195 = vmatprep.subr.bf16.mxu0 0
        %3196 = vmatpush2.bf16.xpose.msra.mxu0 0
        %3197 = vmatprep.subr.bf16.mxu0 0
        %3198 = vmatpush2.bf16.xpose.msra.mxu0 0
        %3199 = vmatprep.subr.bf16.mxu0 0
        %3200 = vmatpush2.bf16.xpose.msra.mxu0 0
        %3201 = vmatprep.subr.bf16.mxu0 0
        %3202 = vmatpush2.bf16.xpose.msra.mxu0 0
        %3203 = vmatprep.subr.bf16.mxu0 0
        %3204 = vmatpush2.bf16.xpose.msra.mxu0 0
        %3205 = vmatprep.subr.bf16.mxu0 0
        %3206 = vmatpush2.bf16.xpose.msra.mxu0 0
        %3207 = vmatprep.mubr.bf16.mxu0 0
        %3208 = vmatmul.mubr.bf16.gmra.mxu0 %v3170
        %v3209 = vpop.f32.mrf.mxu0
        %v3210 = vadd.f32 0.0, %v3209
        %v3211 = vpop.f32.mrf.mxu0
        %v3212 = vpop.f32.mrf.mxu0
        %v3213 = vpop.f32.mrf.mxu0
        %3214 = vdwg.mxu0
        %v3216 = vsel %vm1742, %v1407, 0
        %v3219 = vsel %vm1742, %v1543, 0
        %3221 = vmatprep.subr.bf16.mxu0 0
        %3222 = vmatpush1.bf16.xpose.msra.mxu0 0
        %3223 = vmatprep.subr.bf16.mxu0 0
        %3224 = vmatpush1.bf16.xpose.msra.mxu0 0
        %3225 = vmatprep.subr.bf16.mxu0 0
        %3226 = vmatpush1.bf16.xpose.msra.mxu0 0
        %3227 = vmatprep.subr.bf16.mxu0 0
        %3228 = vmatpush1.bf16.xpose.msra.mxu0 0
        %3229 = vmatprep.subr.bf16.mxu0 0
        %3230 = vmatpush1.bf16.xpose.msra.mxu0 0
        %3231 = vmatprep.subr.bf16.mxu0 0
        %3232 = vmatpush1.bf16.xpose.msra.mxu0 0
        %3233 = vmatprep.subr.bf16.mxu0 0
        %3234 = vmatpush1.bf16.xpose.msra.mxu0 0
        %3235 = vmatprep.subr.bf16.mxu0 0
        %3236 = vmatpush1.bf16.xpose.msra.mxu0 %v3219
        %3237 = vmatprep.subr.bf16.mxu0 0
        %3238 = vmatpush2.bf16.xpose.msra.mxu0 0
        %3239 = vmatprep.subr.bf16.mxu0 0
        %3240 = vmatpush2.bf16.xpose.msra.mxu0 0
        %3241 = vmatprep.subr.bf16.mxu0 0
        %3242 = vmatpush2.bf16.xpose.msra.mxu0 0
        %3243 = vmatprep.subr.bf16.mxu0 0
        %3244 = vmatpush2.bf16.xpose.msra.mxu0 0
        %3245 = vmatprep.subr.bf16.mxu0 0
        %3246 = vmatpush2.bf16.xpose.msra.mxu0 0
        %3247 = vmatprep.subr.bf16.mxu0 0
        %3248 = vmatpush2.bf16.xpose.msra.mxu0 0
        %3249 = vmatprep.subr.bf16.mxu0 0
        %3250 = vmatpush2.bf16.xpose.msra.mxu0 0
        %3251 = vmatprep.subr.bf16.mxu0 0
        %3252 = vmatpush2.bf16.xpose.msra.mxu0 0
        %3253 = vmatprep.mubr.bf16.mxu0 0
        %3254 = vmatmul.mubr.bf16.gmra.mxu0 %v3216
        %v3255 = vpop.f32.mrf.mxu0
        %v3256 = vadd.f32 0.0, %v3255
        %v3257 = vpop.f32.mrf.mxu0
        %v3258 = vpop.f32.mrf.mxu0
        %v3259 = vpop.f32.mrf.mxu0
        %3260 = vdwg.mxu0
        %v3262 = vsel %vm1742, %v1409, 0
        %v3265 = vsel %vm1742, %v1545, 0
        %3267 = vmatprep.subr.bf16.mxu0 0
        %3268 = vmatpush1.bf16.xpose.msra.mxu0 0
        %3269 = vmatprep.subr.bf16.mxu0 0
        %3270 = vmatpush1.bf16.xpose.msra.mxu0 0
        %3271 = vmatprep.subr.bf16.mxu0 0
        %3272 = vmatpush1.bf16.xpose.msra.mxu0 0
        %3273 = vmatprep.subr.bf16.mxu0 0
        %3274 = vmatpush1.bf16.xpose.msra.mxu0 0
        %3275 = vmatprep.subr.bf16.mxu0 0
        %3276 = vmatpush1.bf16.xpose.msra.mxu0 0
        %3277 = vmatprep.subr.bf16.mxu0 0
        %3278 = vmatpush1.bf16.xpose.msra.mxu0 0
        %3279 = vmatprep.subr.bf16.mxu0 0
        %3280 = vmatpush1.bf16.xpose.msra.mxu0 0
        %3281 = vmatprep.subr.bf16.mxu0 0
        %3282 = vmatpush1.bf16.xpose.msra.mxu0 %v3265
        %3283 = vmatprep.subr.bf16.mxu0 0
        %3284 = vmatpush2.bf16.xpose.msra.mxu0 0
        %3285 = vmatprep.subr.bf16.mxu0 0
        %3286 = vmatpush2.bf16.xpose.msra.mxu0 0
        %3287 = vmatprep.subr.bf16.mxu0 0
        %3288 = vmatpush2.bf16.xpose.msra.mxu0 0
        %3289 = vmatprep.subr.bf16.mxu0 0
        %3290 = vmatpush2.bf16.xpose.msra.mxu0 0
        %3291 = vmatprep.subr.bf16.mxu0 0
        %3292 = vmatpush2.bf16.xpose.msra.mxu0 0
        %3293 = vmatprep.subr.bf16.mxu0 0
        %3294 = vmatpush2.bf16.xpose.msra.mxu0 0
        %3295 = vmatprep.subr.bf16.mxu0 0
        %3296 = vmatpush2.bf16.xpose.msra.mxu0 0
        %3297 = vmatprep.subr.bf16.mxu0 0
        %3298 = vmatpush2.bf16.xpose.msra.mxu0 0
        %3299 = vmatprep.mubr.bf16.mxu0 0
        %3300 = vmatmul.mubr.bf16.gmra.mxu0 %v3262
        %v3301 = vpop.f32.mrf.mxu0
        %v3302 = vadd.f32 0.0, %v3301
        %v3303 = vpop.f32.mrf.mxu0
        %v3304 = vpop.f32.mrf.mxu0
        %v3305 = vpop.f32.mrf.mxu0
        %3306 = vdwg.mxu0
        %v3308 = vsel %vm1742, %v1411, 0
        %v3311 = vsel %vm1742, %v1547, 0
        %3313 = vmatprep.subr.bf16.mxu0 0
        %3314 = vmatpush1.bf16.xpose.msra.mxu0 0
        %3315 = vmatprep.subr.bf16.mxu0 0
        %3316 = vmatpush1.bf16.xpose.msra.mxu0 0
        %3317 = vmatprep.subr.bf16.mxu0 0
        %3318 = vmatpush1.bf16.xpose.msra.mxu0 0
        %3319 = vmatprep.subr.bf16.mxu0 0
        %3320 = vmatpush1.bf16.xpose.msra.mxu0 0
        %3321 = vmatprep.subr.bf16.mxu0 0
        %3322 = vmatpush1.bf16.xpose.msra.mxu0 0
        %3323 = vmatprep.subr.bf16.mxu0 0
        %3324 = vmatpush1.bf16.xpose.msra.mxu0 0
        %3325 = vmatprep.subr.bf16.mxu0 0
        %3326 = vmatpush1.bf16.xpose.msra.mxu0 0
        %3327 = vmatprep.subr.bf16.mxu0 0
        %3328 = vmatpush1.bf16.xpose.msra.mxu0 %v3311
        %3329 = vmatprep.subr.bf16.mxu0 0
        %3330 = vmatpush2.bf16.xpose.msra.mxu0 0
        %3331 = vmatprep.subr.bf16.mxu0 0
        %3332 = vmatpush2.bf16.xpose.msra.mxu0 0
        %3333 = vmatprep.subr.bf16.mxu0 0
        %3334 = vmatpush2.bf16.xpose.msra.mxu0 0
        %3335 = vmatprep.subr.bf16.mxu0 0
        %3336 = vmatpush2.bf16.xpose.msra.mxu0 0
        %3337 = vmatprep.subr.bf16.mxu0 0
        %3338 = vmatpush2.bf16.xpose.msra.mxu0 0
        %3339 = vmatprep.subr.bf16.mxu0 0
        %3340 = vmatpush2.bf16.xpose.msra.mxu0 0
        %3341 = vmatprep.subr.bf16.mxu0 0
        %3342 = vmatpush2.bf16.xpose.msra.mxu0 0
        %3343 = vmatprep.subr.bf16.mxu0 0
        %3344 = vmatpush2.bf16.xpose.msra.mxu0 0
        %3345 = vmatprep.mubr.bf16.mxu0 0
        %3346 = vmatmul.mubr.bf16.gmra.mxu0 %v3308
        %v3347 = vpop.f32.mrf.mxu0
        %v3348 = vadd.f32 0.0, %v3347
        %v3349 = vpop.f32.mrf.mxu0
        %v3350 = vpop.f32.mrf.mxu0
        %v3351 = vpop.f32.mrf.mxu0
        %3352 = vdwg.mxu0
        %v3354 = vsel %vm1742, %v1413, 0
        %v3357 = vsel %vm1742, %v1549, 0
        %3359 = vmatprep.subr.bf16.mxu0 0
        %3360 = vmatpush1.bf16.xpose.msra.mxu0 0
        %3361 = vmatprep.subr.bf16.mxu0 0
        %3362 = vmatpush1.bf16.xpose.msra.mxu0 0
        %3363 = vmatprep.subr.bf16.mxu0 0
        %3364 = vmatpush1.bf16.xpose.msra.mxu0 0
        %3365 = vmatprep.subr.bf16.mxu0 0
        %3366 = vmatpush1.bf16.xpose.msra.mxu0 0
        %3367 = vmatprep.subr.bf16.mxu0 0
        %3368 = vmatpush1.bf16.xpose.msra.mxu0 0
        %3369 = vmatprep.subr.bf16.mxu0 0
        %3370 = vmatpush1.bf16.xpose.msra.mxu0 0
        %3371 = vmatprep.subr.bf16.mxu0 0
        %3372 = vmatpush1.bf16.xpose.msra.mxu0 0
        %3373 = vmatprep.subr.bf16.mxu0 0
        %3374 = vmatpush1.bf16.xpose.msra.mxu0 %v3357
        %3375 = vmatprep.subr.bf16.mxu0 0
        %3376 = vmatpush2.bf16.xpose.msra.mxu0 0
        %3377 = vmatprep.subr.bf16.mxu0 0
        %3378 = vmatpush2.bf16.xpose.msra.mxu0 0
        %3379 = vmatprep.subr.bf16.mxu0 0
        %3380 = vmatpush2.bf16.xpose.msra.mxu0 0
        %3381 = vmatprep.subr.bf16.mxu0 0
        %3382 = vmatpush2.bf16.xpose.msra.mxu0 0
        %3383 = vmatprep.subr.bf16.mxu0 0
        %3384 = vmatpush2.bf16.xpose.msra.mxu0 0
        %3385 = vmatprep.subr.bf16.mxu0 0
        %3386 = vmatpush2.bf16.xpose.msra.mxu0 0
        %3387 = vmatprep.subr.bf16.mxu0 0
        %3388 = vmatpush2.bf16.xpose.msra.mxu0 0
        %3389 = vmatprep.subr.bf16.mxu0 0
        %3390 = vmatpush2.bf16.xpose.msra.mxu0 0
        %3391 = vmatprep.mubr.bf16.mxu0 0
        %3392 = vmatmul.mubr.bf16.gmra.mxu0 %v3354
        %v3393 = vpop.f32.mrf.mxu0
        %v3394 = vadd.f32 0.0, %v3393
        %v3395 = vpop.f32.mrf.mxu0
        %v3396 = vpop.f32.mrf.mxu0
        %v3397 = vpop.f32.mrf.mxu0
        %3398 = vdwg.mxu0
        %v3400 = vsel %vm1742, %v1415, 0
        %v3403 = vsel %vm1742, %v1551, 0
        %3405 = vmatprep.subr.bf16.mxu0 0
        %3406 = vmatpush1.bf16.xpose.msra.mxu0 0
        %3407 = vmatprep.subr.bf16.mxu0 0
        %3408 = vmatpush1.bf16.xpose.msra.mxu0 0
        %3409 = vmatprep.subr.bf16.mxu0 0
        %3410 = vmatpush1.bf16.xpose.msra.mxu0 0
        %3411 = vmatprep.subr.bf16.mxu0 0
        %3412 = vmatpush1.bf16.xpose.msra.mxu0 0
        %3413 = vmatprep.subr.bf16.mxu0 0
        %3414 = vmatpush1.bf16.xpose.msra.mxu0 0
        %3415 = vmatprep.subr.bf16.mxu0 0
        %3416 = vmatpush1.bf16.xpose.msra.mxu0 0
        %3417 = vmatprep.subr.bf16.mxu0 0
        %3418 = vmatpush1.bf16.xpose.msra.mxu0 0
        %3419 = vmatprep.subr.bf16.mxu0 0
        %3420 = vmatpush1.bf16.xpose.msra.mxu0 %v3403
        %3421 = vmatprep.subr.bf16.mxu0 0
        %3422 = vmatpush2.bf16.xpose.msra.mxu0 0
        %3423 = vmatprep.subr.bf16.mxu0 0
        %3424 = vmatpush2.bf16.xpose.msra.mxu0 0
        %3425 = vmatprep.subr.bf16.mxu0 0
        %3426 = vmatpush2.bf16.xpose.msra.mxu0 0
        %3427 = vmatprep.subr.bf16.mxu0 0
        %3428 = vmatpush2.bf16.xpose.msra.mxu0 0
        %3429 = vmatprep.subr.bf16.mxu0 0
        %3430 = vmatpush2.bf16.xpose.msra.mxu0 0
        %3431 = vmatprep.subr.bf16.mxu0 0
        %3432 = vmatpush2.bf16.xpose.msra.mxu0 0
        %3433 = vmatprep.subr.bf16.mxu0 0
        %3434 = vmatpush2.bf16.xpose.msra.mxu0 0
        %3435 = vmatprep.subr.bf16.mxu0 0
        %3436 = vmatpush2.bf16.xpose.msra.mxu0 0
        %3437 = vmatprep.mubr.bf16.mxu0 0
        %3438 = vmatmul.mubr.bf16.gmra.mxu0 %v3400
        %v3439 = vpop.f32.mrf.mxu0
        %v3440 = vadd.f32 0.0, %v3439
        %v3441 = vpop.f32.mrf.mxu0
        %v3442 = vpop.f32.mrf.mxu0
        %v3443 = vpop.f32.mrf.mxu0
        %3444 = vdwg.mxu0
        %v3446 = vsel %vm1742, %v1417, 0
        %v3449 = vsel %vm1742, %v1553, 0
        %3451 = vmatprep.subr.bf16.mxu0 0
        %3452 = vmatpush1.bf16.xpose.msra.mxu0 0
        %3453 = vmatprep.subr.bf16.mxu0 0
        %3454 = vmatpush1.bf16.xpose.msra.mxu0 0
        %3455 = vmatprep.subr.bf16.mxu0 0
        %3456 = vmatpush1.bf16.xpose.msra.mxu0 0
        %3457 = vmatprep.subr.bf16.mxu0 0
        %3458 = vmatpush1.bf16.xpose.msra.mxu0 0
        %3459 = vmatprep.subr.bf16.mxu0 0
        %3460 = vmatpush1.bf16.xpose.msra.mxu0 0
        %3461 = vmatprep.subr.bf16.mxu0 0
        %3462 = vmatpush1.bf16.xpose.msra.mxu0 0
        %3463 = vmatprep.subr.bf16.mxu0 0
        %3464 = vmatpush1.bf16.xpose.msra.mxu0 0
        %3465 = vmatprep.subr.bf16.mxu0 0
        %3466 = vmatpush1.bf16.xpose.msra.mxu0 %v3449
        %3467 = vmatprep.subr.bf16.mxu0 0
        %3468 = vmatpush2.bf16.xpose.msra.mxu0 0
        %3469 = vmatprep.subr.bf16.mxu0 0
        %3470 = vmatpush2.bf16.xpose.msra.mxu0 0
        %3471 = vmatprep.subr.bf16.mxu0 0
        %3472 = vmatpush2.bf16.xpose.msra.mxu0 0
        %3473 = vmatprep.subr.bf16.mxu0 0
        %3474 = vmatpush2.bf16.xpose.msra.mxu0 0
        %3475 = vmatprep.subr.bf16.mxu0 0
        %3476 = vmatpush2.bf16.xpose.msra.mxu0 0
        %3477 = vmatprep.subr.bf16.mxu0 0
        %3478 = vmatpush2.bf16.xpose.msra.mxu0 0
        %3479 = vmatprep.subr.bf16.mxu0 0
        %3480 = vmatpush2.bf16.xpose.msra.mxu0 0
        %3481 = vmatprep.subr.bf16.mxu0 0
        %3482 = vmatpush2.bf16.xpose.msra.mxu0 0
        %3483 = vmatprep.mubr.bf16.mxu0 0
        %3484 = vmatmul.mubr.bf16.gmra.mxu0 %v3446
        %v3485 = vpop.f32.mrf.mxu0
        %v3486 = vadd.f32 0.0, %v3485
        %v3487 = vpop.f32.mrf.mxu0
        %v3488 = vpop.f32.mrf.mxu0
        %v3489 = vpop.f32.mrf.mxu0
        %3490 = vdwg.mxu0
        %v3492 = vsel %vm1742, %v1419, 0
        %v3495 = vsel %vm1742, %v1555, 0
        %3497 = vmatprep.subr.bf16.mxu0 0
        %3498 = vmatpush1.bf16.xpose.msra.mxu0 0
        %3499 = vmatprep.subr.bf16.mxu0 0
        %3500 = vmatpush1.bf16.xpose.msra.mxu0 0
        %3501 = vmatprep.subr.bf16.mxu0 0
        %3502 = vmatpush1.bf16.xpose.msra.mxu0 0
        %3503 = vmatprep.subr.bf16.mxu0 0
        %3504 = vmatpush1.bf16.xpose.msra.mxu0 0
        %3505 = vmatprep.subr.bf16.mxu0 0
        %3506 = vmatpush1.bf16.xpose.msra.mxu0 0
        %3507 = vmatprep.subr.bf16.mxu0 0
        %3508 = vmatpush1.bf16.xpose.msra.mxu0 0
        %3509 = vmatprep.subr.bf16.mxu0 0
        %3510 = vmatpush1.bf16.xpose.msra.mxu0 0
        %3511 = vmatprep.subr.bf16.mxu0 0
        %3512 = vmatpush1.bf16.xpose.msra.mxu0 %v3495
        %3513 = vmatprep.subr.bf16.mxu0 0
        %3514 = vmatpush2.bf16.xpose.msra.mxu0 0
        %3515 = vmatprep.subr.bf16.mxu0 0
        %3516 = vmatpush2.bf16.xpose.msra.mxu0 0
        %3517 = vmatprep.subr.bf16.mxu0 0
        %3518 = vmatpush2.bf16.xpose.msra.mxu0 0
        %3519 = vmatprep.subr.bf16.mxu0 0
        %3520 = vmatpush2.bf16.xpose.msra.mxu0 0
        %3521 = vmatprep.subr.bf16.mxu0 0
        %3522 = vmatpush2.bf16.xpose.msra.mxu0 0
        %3523 = vmatprep.subr.bf16.mxu0 0
        %3524 = vmatpush2.bf16.xpose.msra.mxu0 0
        %3525 = vmatprep.subr.bf16.mxu0 0
        %3526 = vmatpush2.bf16.xpose.msra.mxu0 0
        %3527 = vmatprep.subr.bf16.mxu0 0
        %3528 = vmatpush2.bf16.xpose.msra.mxu0 0
        %3529 = vmatprep.mubr.bf16.mxu0 0
        %3530 = vmatmul.mubr.bf16.gmra.mxu0 %v3492
        %v3531 = vpop.f32.mrf.mxu0
        %v3532 = vadd.f32 0.0, %v3531
        %v3533 = vpop.f32.mrf.mxu0
        %v3534 = vpop.f32.mrf.mxu0
        %v3535 = vpop.f32.mrf.mxu0
        %3536 = vdwg.mxu0
        %v3538 = vsel %vm1742, %v1421, 0
        %v3541 = vsel %vm1742, %v1557, 0
        %3543 = vmatprep.subr.bf16.mxu0 0
        %3544 = vmatpush1.bf16.xpose.msra.mxu0 0
        %3545 = vmatprep.subr.bf16.mxu0 0
        %3546 = vmatpush1.bf16.xpose.msra.mxu0 0
        %3547 = vmatprep.subr.bf16.mxu0 0
        %3548 = vmatpush1.bf16.xpose.msra.mxu0 0
        %3549 = vmatprep.subr.bf16.mxu0 0
        %3550 = vmatpush1.bf16.xpose.msra.mxu0 0
        %3551 = vmatprep.subr.bf16.mxu0 0
        %3552 = vmatpush1.bf16.xpose.msra.mxu0 0
        %3553 = vmatprep.subr.bf16.mxu0 0
        %3554 = vmatpush1.bf16.xpose.msra.mxu0 0
        %3555 = vmatprep.subr.bf16.mxu0 0
        %3556 = vmatpush1.bf16.xpose.msra.mxu0 0
        %3557 = vmatprep.subr.bf16.mxu0 0
        %3558 = vmatpush1.bf16.xpose.msra.mxu0 %v3541
        %3559 = vmatprep.subr.bf16.mxu0 0
        %3560 = vmatpush2.bf16.xpose.msra.mxu0 0
        %3561 = vmatprep.subr.bf16.mxu0 0
        %3562 = vmatpush2.bf16.xpose.msra.mxu0 0
        %3563 = vmatprep.subr.bf16.mxu0 0
        %3564 = vmatpush2.bf16.xpose.msra.mxu0 0
        %3565 = vmatprep.subr.bf16.mxu0 0
        %3566 = vmatpush2.bf16.xpose.msra.mxu0 0
        %3567 = vmatprep.subr.bf16.mxu0 0
        %3568 = vmatpush2.bf16.xpose.msra.mxu0 0
        %3569 = vmatprep.subr.bf16.mxu0 0
        %3570 = vmatpush2.bf16.xpose.msra.mxu0 0
        %3571 = vmatprep.subr.bf16.mxu0 0
        %3572 = vmatpush2.bf16.xpose.msra.mxu0 0
        %3573 = vmatprep.subr.bf16.mxu0 0
        %3574 = vmatpush2.bf16.xpose.msra.mxu0 0
        %3575 = vmatprep.mubr.bf16.mxu0 0
        %3576 = vmatmul.mubr.bf16.gmra.mxu0 %v3538
        %v3577 = vpop.f32.mrf.mxu0
        %v3578 = vadd.f32 0.0, %v3577
        %v3579 = vpop.f32.mrf.mxu0
        %v3580 = vpop.f32.mrf.mxu0
        %v3581 = vpop.f32.mrf.mxu0
        %3582 = vdwg.mxu0
        %v3584 = vsel %vm1742, %v1423, 0
        %v3587 = vsel %vm1742, %v1559, 0
        %3589 = vmatprep.subr.bf16.mxu0 0
        %3590 = vmatpush1.bf16.xpose.msra.mxu0 0
        %3591 = vmatprep.subr.bf16.mxu0 0
        %3592 = vmatpush1.bf16.xpose.msra.mxu0 0
        %3593 = vmatprep.subr.bf16.mxu0 0
        %3594 = vmatpush1.bf16.xpose.msra.mxu0 0
        %3595 = vmatprep.subr.bf16.mxu0 0
        %3596 = vmatpush1.bf16.xpose.msra.mxu0 0
        %3597 = vmatprep.subr.bf16.mxu0 0
        %3598 = vmatpush1.bf16.xpose.msra.mxu0 0
        %3599 = vmatprep.subr.bf16.mxu0 0
        %3600 = vmatpush1.bf16.xpose.msra.mxu0 0
        %3601 = vmatprep.subr.bf16.mxu0 0
        %3602 = vmatpush1.bf16.xpose.msra.mxu0 0
        %3603 = vmatprep.subr.bf16.mxu0 0
        %3604 = vmatpush1.bf16.xpose.msra.mxu0 %v3587
        %3605 = vmatprep.subr.bf16.mxu0 0
        %3606 = vmatpush2.bf16.xpose.msra.mxu0 0
        %3607 = vmatprep.subr.bf16.mxu0 0
        %3608 = vmatpush2.bf16.xpose.msra.mxu0 0
        %3609 = vmatprep.subr.bf16.mxu0 0
        %3610 = vmatpush2.bf16.xpose.msra.mxu0 0
        %3611 = vmatprep.subr.bf16.mxu0 0
        %3612 = vmatpush2.bf16.xpose.msra.mxu0 0
        %3613 = vmatprep.subr.bf16.mxu0 0
        %3614 = vmatpush2.bf16.xpose.msra.mxu0 0
        %3615 = vmatprep.subr.bf16.mxu0 0
        %3616 = vmatpush2.bf16.xpose.msra.mxu0 0
        %3617 = vmatprep.subr.bf16.mxu0 0
        %3618 = vmatpush2.bf16.xpose.msra.mxu0 0
        %3619 = vmatprep.subr.bf16.mxu0 0
        %3620 = vmatpush2.bf16.xpose.msra.mxu0 0
        %3621 = vmatprep.mubr.bf16.mxu0 0
        %3622 = vmatmul.mubr.bf16.gmra.mxu0 %v3584
        %v3623 = vpop.f32.mrf.mxu0
        %v3624 = vadd.f32 0.0, %v3623
        %v3625 = vpop.f32.mrf.mxu0
        %v3626 = vpop.f32.mrf.mxu0
        %v3627 = vpop.f32.mrf.mxu0
        %3628 = vdwg.mxu0
        %v3630 = vsel %vm1742, %v1425, 0
        %v3633 = vsel %vm1742, %v1561, 0
        %3635 = vmatprep.subr.bf16.mxu0 0
        %3636 = vmatpush1.bf16.xpose.msra.mxu0 0
        %3637 = vmatprep.subr.bf16.mxu0 0
        %3638 = vmatpush1.bf16.xpose.msra.mxu0 0
        %3639 = vmatprep.subr.bf16.mxu0 0
        %3640 = vmatpush1.bf16.xpose.msra.mxu0 0
        %3641 = vmatprep.subr.bf16.mxu0 0
        %3642 = vmatpush1.bf16.xpose.msra.mxu0 0
        %3643 = vmatprep.subr.bf16.mxu0 0
        %3644 = vmatpush1.bf16.xpose.msra.mxu0 0
        %3645 = vmatprep.subr.bf16.mxu0 0
        %3646 = vmatpush1.bf16.xpose.msra.mxu0 0
        %3647 = vmatprep.subr.bf16.mxu0 0
        %3648 = vmatpush1.bf16.xpose.msra.mxu0 0
        %3649 = vmatprep.subr.bf16.mxu0 0
        %3650 = vmatpush1.bf16.xpose.msra.mxu0 %v3633
        %3651 = vmatprep.subr.bf16.mxu0 0
        %3652 = vmatpush2.bf16.xpose.msra.mxu0 0
        %3653 = vmatprep.subr.bf16.mxu0 0
        %3654 = vmatpush2.bf16.xpose.msra.mxu0 0
        %3655 = vmatprep.subr.bf16.mxu0 0
        %3656 = vmatpush2.bf16.xpose.msra.mxu0 0
        %3657 = vmatprep.subr.bf16.mxu0 0
        %3658 = vmatpush2.bf16.xpose.msra.mxu0 0
        %3659 = vmatprep.subr.bf16.mxu0 0
        %3660 = vmatpush2.bf16.xpose.msra.mxu0 0
        %3661 = vmatprep.subr.bf16.mxu0 0
        %3662 = vmatpush2.bf16.xpose.msra.mxu0 0
        %3663 = vmatprep.subr.bf16.mxu0 0
        %3664 = vmatpush2.bf16.xpose.msra.mxu0 0
        %3665 = vmatprep.subr.bf16.mxu0 0
        %3666 = vmatpush2.bf16.xpose.msra.mxu0 0
        %3667 = vmatprep.mubr.bf16.mxu0 0
        %3668 = vmatmul.mubr.bf16.gmra.mxu0 %v3630
        %v3669 = vpop.f32.mrf.mxu0
        %v3670 = vadd.f32 0.0, %v3669
        %v3671 = vpop.f32.mrf.mxu0
        %v3672 = vpop.f32.mrf.mxu0
        %v3673 = vpop.f32.mrf.mxu0
        %3674 = vdwg.mxu0
        %v3676 = vsel %vm1742, %v1427, 0
        %v3679 = vsel %vm1742, %v1563, 0
        %3681 = vmatprep.subr.bf16.mxu0 0
        %3682 = vmatpush1.bf16.xpose.msra.mxu0 0
        %3683 = vmatprep.subr.bf16.mxu0 0
        %3684 = vmatpush1.bf16.xpose.msra.mxu0 0
        %3685 = vmatprep.subr.bf16.mxu0 0
        %3686 = vmatpush1.bf16.xpose.msra.mxu0 0
        %3687 = vmatprep.subr.bf16.mxu0 0
        %3688 = vmatpush1.bf16.xpose.msra.mxu0 0
        %3689 = vmatprep.subr.bf16.mxu0 0
        %3690 = vmatpush1.bf16.xpose.msra.mxu0 0
        %3691 = vmatprep.subr.bf16.mxu0 0
        %3692 = vmatpush1.bf16.xpose.msra.mxu0 0
        %3693 = vmatprep.subr.bf16.mxu0 0
        %3694 = vmatpush1.bf16.xpose.msra.mxu0 0
        %3695 = vmatprep.subr.bf16.mxu0 0
        %3696 = vmatpush1.bf16.xpose.msra.mxu0 %v3679
        %3697 = vmatprep.subr.bf16.mxu0 0
        %3698 = vmatpush2.bf16.xpose.msra.mxu0 0
        %3699 = vmatprep.subr.bf16.mxu0 0
        %3700 = vmatpush2.bf16.xpose.msra.mxu0 0
        %3701 = vmatprep.subr.bf16.mxu0 0
        %3702 = vmatpush2.bf16.xpose.msra.mxu0 0
        %3703 = vmatprep.subr.bf16.mxu0 0
        %3704 = vmatpush2.bf16.xpose.msra.mxu0 0
        %3705 = vmatprep.subr.bf16.mxu0 0
        %3706 = vmatpush2.bf16.xpose.msra.mxu0 0
        %3707 = vmatprep.subr.bf16.mxu0 0
        %3708 = vmatpush2.bf16.xpose.msra.mxu0 0
        %3709 = vmatprep.subr.bf16.mxu0 0
        %3710 = vmatpush2.bf16.xpose.msra.mxu0 0
        %3711 = vmatprep.subr.bf16.mxu0 0
        %3712 = vmatpush2.bf16.xpose.msra.mxu0 0
        %3713 = vmatprep.mubr.bf16.mxu0 0
        %3714 = vmatmul.mubr.bf16.gmra.mxu0 %v3676
        %v3715 = vpop.f32.mrf.mxu0
        %v3716 = vadd.f32 0.0, %v3715
        %v3717 = vpop.f32.mrf.mxu0
        %v3718 = vpop.f32.mrf.mxu0
        %v3719 = vpop.f32.mrf.mxu0
        %3720 = vdwg.mxu0
        %v3722 = vsel %vm1742, %v1429, 0
        %v3725 = vsel %vm1742, %v1565, 0
        %3727 = vmatprep.subr.bf16.mxu0 0
        %3728 = vmatpush1.bf16.xpose.msra.mxu0 0
        %3729 = vmatprep.subr.bf16.mxu0 0
        %3730 = vmatpush1.bf16.xpose.msra.mxu0 0
        %3731 = vmatprep.subr.bf16.mxu0 0
        %3732 = vmatpush1.bf16.xpose.msra.mxu0 0
        %3733 = vmatprep.subr.bf16.mxu0 0
        %3734 = vmatpush1.bf16.xpose.msra.mxu0 0
        %3735 = vmatprep.subr.bf16.mxu0 0
        %3736 = vmatpush1.bf16.xpose.msra.mxu0 0
        %3737 = vmatprep.subr.bf16.mxu0 0
        %3738 = vmatpush1.bf16.xpose.msra.mxu0 0
        %3739 = vmatprep.subr.bf16.mxu0 0
        %3740 = vmatpush1.bf16.xpose.msra.mxu0 0
        %3741 = vmatprep.subr.bf16.mxu0 0
        %3742 = vmatpush1.bf16.xpose.msra.mxu0 %v3725
        %3743 = vmatprep.subr.bf16.mxu0 0
        %3744 = vmatpush2.bf16.xpose.msra.mxu0 0
        %3745 = vmatprep.subr.bf16.mxu0 0
        %3746 = vmatpush2.bf16.xpose.msra.mxu0 0
        %3747 = vmatprep.subr.bf16.mxu0 0
        %3748 = vmatpush2.bf16.xpose.msra.mxu0 0
        %3749 = vmatprep.subr.bf16.mxu0 0
        %3750 = vmatpush2.bf16.xpose.msra.mxu0 0
        %3751 = vmatprep.subr.bf16.mxu0 0
        %3752 = vmatpush2.bf16.xpose.msra.mxu0 0
        %3753 = vmatprep.subr.bf16.mxu0 0
        %3754 = vmatpush2.bf16.xpose.msra.mxu0 0
        %3755 = vmatprep.subr.bf16.mxu0 0
        %3756 = vmatpush2.bf16.xpose.msra.mxu0 0
        %3757 = vmatprep.subr.bf16.mxu0 0
        %3758 = vmatpush2.bf16.xpose.msra.mxu0 0
        %3759 = vmatprep.mubr.bf16.mxu0 0
        %3760 = vmatmul.mubr.bf16.gmra.mxu0 %v3722
        %v3761 = vpop.f32.mrf.mxu0
        %v3762 = vadd.f32 0.0, %v3761
        %v3763 = vpop.f32.mrf.mxu0
        %v3764 = vpop.f32.mrf.mxu0
        %v3765 = vpop.f32.mrf.mxu0
        %3766 = vdwg.mxu0
        %v3768 = vsel %vm1742, %v1431, 0
        %v3771 = vsel %vm1742, %v1567, 0
        %3773 = vmatprep.subr.bf16.mxu0 0
        %3774 = vmatpush1.bf16.xpose.msra.mxu0 0
        %3775 = vmatprep.subr.bf16.mxu0 0
        %3776 = vmatpush1.bf16.xpose.msra.mxu0 0
        %3777 = vmatprep.subr.bf16.mxu0 0
        %3778 = vmatpush1.bf16.xpose.msra.mxu0 0
        %3779 = vmatprep.subr.bf16.mxu0 0
        %3780 = vmatpush1.bf16.xpose.msra.mxu0 0
        %3781 = vmatprep.subr.bf16.mxu0 0
        %3782 = vmatpush1.bf16.xpose.msra.mxu0 0
        %3783 = vmatprep.subr.bf16.mxu0 0
        %3784 = vmatpush1.bf16.xpose.msra.mxu0 0
        %3785 = vmatprep.subr.bf16.mxu0 0
        %3786 = vmatpush1.bf16.xpose.msra.mxu0 0
        %3787 = vmatprep.subr.bf16.mxu0 0
        %3788 = vmatpush1.bf16.xpose.msra.mxu0 %v3771
        %3789 = vmatprep.subr.bf16.mxu0 0
        %3790 = vmatpush2.bf16.xpose.msra.mxu0 0
        %3791 = vmatprep.subr.bf16.mxu0 0
        %3792 = vmatpush2.bf16.xpose.msra.mxu0 0
        %3793 = vmatprep.subr.bf16.mxu0 0
        %3794 = vmatpush2.bf16.xpose.msra.mxu0 0
        %3795 = vmatprep.subr.bf16.mxu0 0
        %3796 = vmatpush2.bf16.xpose.msra.mxu0 0
        %3797 = vmatprep.subr.bf16.mxu0 0
        %3798 = vmatpush2.bf16.xpose.msra.mxu0 0
        %3799 = vmatprep.subr.bf16.mxu0 0
        %3800 = vmatpush2.bf16.xpose.msra.mxu0 0
        %3801 = vmatprep.subr.bf16.mxu0 0
        %3802 = vmatpush2.bf16.xpose.msra.mxu0 0
        %3803 = vmatprep.subr.bf16.mxu0 0
        %3804 = vmatpush2.bf16.xpose.msra.mxu0 0
        %3805 = vmatprep.mubr.bf16.mxu0 0
        %3806 = vmatmul.mubr.bf16.gmra.mxu0 %v3768
        %v3807 = vpop.f32.mrf.mxu0
        %v3808 = vadd.f32 0.0, %v3807
        %v3809 = vpop.f32.mrf.mxu0
        %v3810 = vpop.f32.mrf.mxu0
        %v3811 = vpop.f32.mrf.mxu0
        %3812 = vdwg.mxu0
        %v3814 = vsel %vm1742, %v1433, 0
        %v3817 = vsel %vm1742, %v1569, 0
        %3819 = vmatprep.subr.bf16.mxu0 0
        %3820 = vmatpush1.bf16.xpose.msra.mxu0 0
        %3821 = vmatprep.subr.bf16.mxu0 0
        %3822 = vmatpush1.bf16.xpose.msra.mxu0 0
        %3823 = vmatprep.subr.bf16.mxu0 0
        %3824 = vmatpush1.bf16.xpose.msra.mxu0 0
        %3825 = vmatprep.subr.bf16.mxu0 0
        %3826 = vmatpush1.bf16.xpose.msra.mxu0 0
        %3827 = vmatprep.subr.bf16.mxu0 0
        %3828 = vmatpush1.bf16.xpose.msra.mxu0 0
        %3829 = vmatprep.subr.bf16.mxu0 0
        %3830 = vmatpush1.bf16.xpose.msra.mxu0 0
        %3831 = vmatprep.subr.bf16.mxu0 0
        %3832 = vmatpush1.bf16.xpose.msra.mxu0 0
        %3833 = vmatprep.subr.bf16.mxu0 0
        %3834 = vmatpush1.bf16.xpose.msra.mxu0 %v3817
        %3835 = vmatprep.subr.bf16.mxu0 0
        %3836 = vmatpush2.bf16.xpose.msra.mxu0 0
        %3837 = vmatprep.subr.bf16.mxu0 0
        %3838 = vmatpush2.bf16.xpose.msra.mxu0 0
        %3839 = vmatprep.subr.bf16.mxu0 0
        %3840 = vmatpush2.bf16.xpose.msra.mxu0 0
        %3841 = vmatprep.subr.bf16.mxu0 0
        %3842 = vmatpush2.bf16.xpose.msra.mxu0 0
        %3843 = vmatprep.subr.bf16.mxu0 0
        %3844 = vmatpush2.bf16.xpose.msra.mxu0 0
        %3845 = vmatprep.subr.bf16.mxu0 0
        %3846 = vmatpush2.bf16.xpose.msra.mxu0 0
        %3847 = vmatprep.subr.bf16.mxu0 0
        %3848 = vmatpush2.bf16.xpose.msra.mxu0 0
        %3849 = vmatprep.subr.bf16.mxu0 0
        %3850 = vmatpush2.bf16.xpose.msra.mxu0 0
        %3851 = vmatprep.mubr.bf16.mxu0 0
        %3852 = vmatmul.mubr.bf16.gmra.mxu0 %v3814
        %v3853 = vpop.f32.mrf.mxu0
        %v3854 = vadd.f32 0.0, %v3853
        %v3855 = vpop.f32.mrf.mxu0
        %v3856 = vpop.f32.mrf.mxu0
        %v3857 = vpop.f32.mrf.mxu0
        %3858 = vdwg.mxu0
        %v3860 = vsel %vm1742, %v1435, 0
        %v3863 = vsel %vm1742, %v1571, 0
        %3865 = vmatprep.subr.bf16.mxu0 0
        %3866 = vmatpush1.bf16.xpose.msra.mxu0 0
        %3867 = vmatprep.subr.bf16.mxu0 0
        %3868 = vmatpush1.bf16.xpose.msra.mxu0 0
        %3869 = vmatprep.subr.bf16.mxu0 0
        %3870 = vmatpush1.bf16.xpose.msra.mxu0 0
        %3871 = vmatprep.subr.bf16.mxu0 0
        %3872 = vmatpush1.bf16.xpose.msra.mxu0 0
        %3873 = vmatprep.subr.bf16.mxu0 0
        %3874 = vmatpush1.bf16.xpose.msra.mxu0 0
        %3875 = vmatprep.subr.bf16.mxu0 0
        %3876 = vmatpush1.bf16.xpose.msra.mxu0 0
        %3877 = vmatprep.subr.bf16.mxu0 0
        %3878 = vmatpush1.bf16.xpose.msra.mxu0 0
        %3879 = vmatprep.subr.bf16.mxu0 0
        %3880 = vmatpush1.bf16.xpose.msra.mxu0 %v3863
        %3881 = vmatprep.subr.bf16.mxu0 0
        %3882 = vmatpush2.bf16.xpose.msra.mxu0 0
        %3883 = vmatprep.subr.bf16.mxu0 0
        %3884 = vmatpush2.bf16.xpose.msra.mxu0 0
        %3885 = vmatprep.subr.bf16.mxu0 0
        %3886 = vmatpush2.bf16.xpose.msra.mxu0 0
        %3887 = vmatprep.subr.bf16.mxu0 0
        %3888 = vmatpush2.bf16.xpose.msra.mxu0 0
        %3889 = vmatprep.subr.bf16.mxu0 0
        %3890 = vmatpush2.bf16.xpose.msra.mxu0 0
        %3891 = vmatprep.subr.bf16.mxu0 0
        %3892 = vmatpush2.bf16.xpose.msra.mxu0 0
        %3893 = vmatprep.subr.bf16.mxu0 0
        %3894 = vmatpush2.bf16.xpose.msra.mxu0 0
        %3895 = vmatprep.subr.bf16.mxu0 0
        %3896 = vmatpush2.bf16.xpose.msra.mxu0 0
        %3897 = vmatprep.mubr.bf16.mxu0 0
        %3898 = vmatmul.mubr.bf16.gmra.mxu0 %v3860
        %v3899 = vpop.f32.mrf.mxu0
        %v3900 = vadd.f32 0.0, %v3899
        %v3901 = vpop.f32.mrf.mxu0
        %v3902 = vpop.f32.mrf.mxu0
        %v3903 = vpop.f32.mrf.mxu0
        %3904 = vdwg.mxu0
        %v3906 = vsel %vm1742, %v1437, 0
        %v3909 = vsel %vm1742, %v1573, 0
        %3911 = vmatprep.subr.bf16.mxu0 0
        %3912 = vmatpush1.bf16.xpose.msra.mxu0 0
        %3913 = vmatprep.subr.bf16.mxu0 0
        %3914 = vmatpush1.bf16.xpose.msra.mxu0 0
        %3915 = vmatprep.subr.bf16.mxu0 0
        %3916 = vmatpush1.bf16.xpose.msra.mxu0 0
        %3917 = vmatprep.subr.bf16.mxu0 0
        %3918 = vmatpush1.bf16.xpose.msra.mxu0 0
        %3919 = vmatprep.subr.bf16.mxu0 0
        %3920 = vmatpush1.bf16.xpose.msra.mxu0 0
        %3921 = vmatprep.subr.bf16.mxu0 0
        %3922 = vmatpush1.bf16.xpose.msra.mxu0 0
        %3923 = vmatprep.subr.bf16.mxu0 0
        %3924 = vmatpush1.bf16.xpose.msra.mxu0 0
        %3925 = vmatprep.subr.bf16.mxu0 0
        %3926 = vmatpush1.bf16.xpose.msra.mxu0 %v3909
        %3927 = vmatprep.subr.bf16.mxu0 0
        %3928 = vmatpush2.bf16.xpose.msra.mxu0 0
        %3929 = vmatprep.subr.bf16.mxu0 0
        %3930 = vmatpush2.bf16.xpose.msra.mxu0 0
        %3931 = vmatprep.subr.bf16.mxu0 0
        %3932 = vmatpush2.bf16.xpose.msra.mxu0 0
        %3933 = vmatprep.subr.bf16.mxu0 0
        %3934 = vmatpush2.bf16.xpose.msra.mxu0 0
        %3935 = vmatprep.subr.bf16.mxu0 0
        %3936 = vmatpush2.bf16.xpose.msra.mxu0 0
        %3937 = vmatprep.subr.bf16.mxu0 0
        %3938 = vmatpush2.bf16.xpose.msra.mxu0 0
        %3939 = vmatprep.subr.bf16.mxu0 0
        %3940 = vmatpush2.bf16.xpose.msra.mxu0 0
        %3941 = vmatprep.subr.bf16.mxu0 0
        %3942 = vmatpush2.bf16.xpose.msra.mxu0 0
        %3943 = vmatprep.mubr.bf16.mxu0 0
        %3944 = vmatmul.mubr.bf16.gmra.mxu0 %v3906
        %v3945 = vpop.f32.mrf.mxu0
        %v3946 = vadd.f32 0.0, %v3945
        %v3947 = vpop.f32.mrf.mxu0
        %v3948 = vpop.f32.mrf.mxu0
        %v3949 = vpop.f32.mrf.mxu0
        %3950 = vdwg.mxu0
        %v3952 = vsel %vm1742, %v1439, 0
        %v3955 = vsel %vm1742, %v1575, 0
        %3957 = vmatprep.subr.bf16.mxu0 0
        %3958 = vmatpush1.bf16.xpose.msra.mxu0 0
        %3959 = vmatprep.subr.bf16.mxu0 0
        %3960 = vmatpush1.bf16.xpose.msra.mxu0 0
        %3961 = vmatprep.subr.bf16.mxu0 0
        %3962 = vmatpush1.bf16.xpose.msra.mxu0 0
        %3963 = vmatprep.subr.bf16.mxu0 0
        %3964 = vmatpush1.bf16.xpose.msra.mxu0 0
        %3965 = vmatprep.subr.bf16.mxu0 0
        %3966 = vmatpush1.bf16.xpose.msra.mxu0 0
        %3967 = vmatprep.subr.bf16.mxu0 0
        %3968 = vmatpush1.bf16.xpose.msra.mxu0 0
        %3969 = vmatprep.subr.bf16.mxu0 0
        %3970 = vmatpush1.bf16.xpose.msra.mxu0 0
        %3971 = vmatprep.subr.bf16.mxu0 0
        %3972 = vmatpush1.bf16.xpose.msra.mxu0 %v3955
        %3973 = vmatprep.subr.bf16.mxu0 0
        %3974 = vmatpush2.bf16.xpose.msra.mxu0 0
        %3975 = vmatprep.subr.bf16.mxu0 0
        %3976 = vmatpush2.bf16.xpose.msra.mxu0 0
        %3977 = vmatprep.subr.bf16.mxu0 0
        %3978 = vmatpush2.bf16.xpose.msra.mxu0 0
        %3979 = vmatprep.subr.bf16.mxu0 0
        %3980 = vmatpush2.bf16.xpose.msra.mxu0 0
        %3981 = vmatprep.subr.bf16.mxu0 0
        %3982 = vmatpush2.bf16.xpose.msra.mxu0 0
        %3983 = vmatprep.subr.bf16.mxu0 0
        %3984 = vmatpush2.bf16.xpose.msra.mxu0 0
        %3985 = vmatprep.subr.bf16.mxu0 0
        %3986 = vmatpush2.bf16.xpose.msra.mxu0 0
        %3987 = vmatprep.subr.bf16.mxu0 0
        %3988 = vmatpush2.bf16.xpose.msra.mxu0 0
        %3989 = vmatprep.mubr.bf16.mxu0 0
        %3990 = vmatmul.mubr.bf16.gmra.mxu0 %v3952
        %v3991 = vpop.f32.mrf.mxu0
        %v3992 = vadd.f32 0.0, %v3991
        %v3993 = vpop.f32.mrf.mxu0
        %v3994 = vpop.f32.mrf.mxu0
        %v3995 = vpop.f32.mrf.mxu0
        %3996 = vdwg.mxu0
        %v3998 = vsel %vm1742, %v1441, 0
        %v4001 = vsel %vm1742, %v1577, 0
        %4003 = vmatprep.subr.bf16.mxu0 0
        %4004 = vmatpush1.bf16.xpose.msra.mxu0 0
        %4005 = vmatprep.subr.bf16.mxu0 0
        %4006 = vmatpush1.bf16.xpose.msra.mxu0 0
        %4007 = vmatprep.subr.bf16.mxu0 0
        %4008 = vmatpush1.bf16.xpose.msra.mxu0 0
        %4009 = vmatprep.subr.bf16.mxu0 0
        %4010 = vmatpush1.bf16.xpose.msra.mxu0 0
        %4011 = vmatprep.subr.bf16.mxu0 0
        %4012 = vmatpush1.bf16.xpose.msra.mxu0 0
        %4013 = vmatprep.subr.bf16.mxu0 0
        %4014 = vmatpush1.bf16.xpose.msra.mxu0 0
        %4015 = vmatprep.subr.bf16.mxu0 0
        %4016 = vmatpush1.bf16.xpose.msra.mxu0 0
        %4017 = vmatprep.subr.bf16.mxu0 0
        %4018 = vmatpush1.bf16.xpose.msra.mxu0 %v4001
        %4019 = vmatprep.subr.bf16.mxu0 0
        %4020 = vmatpush2.bf16.xpose.msra.mxu0 0
        %4021 = vmatprep.subr.bf16.mxu0 0
        %4022 = vmatpush2.bf16.xpose.msra.mxu0 0
        %4023 = vmatprep.subr.bf16.mxu0 0
        %4024 = vmatpush2.bf16.xpose.msra.mxu0 0
        %4025 = vmatprep.subr.bf16.mxu0 0
        %4026 = vmatpush2.bf16.xpose.msra.mxu0 0
        %4027 = vmatprep.subr.bf16.mxu0 0
        %4028 = vmatpush2.bf16.xpose.msra.mxu0 0
        %4029 = vmatprep.subr.bf16.mxu0 0
        %4030 = vmatpush2.bf16.xpose.msra.mxu0 0
        %4031 = vmatprep.subr.bf16.mxu0 0
        %4032 = vmatpush2.bf16.xpose.msra.mxu0 0
        %4033 = vmatprep.subr.bf16.mxu0 0
        %4034 = vmatpush2.bf16.xpose.msra.mxu0 0
        %4035 = vmatprep.mubr.bf16.mxu0 0
        %4036 = vmatmul.mubr.bf16.gmra.mxu0 %v3998
        %v4037 = vpop.f32.mrf.mxu0
        %v4038 = vadd.f32 0.0, %v4037
        %v4039 = vpop.f32.mrf.mxu0
        %v4040 = vpop.f32.mrf.mxu0
        %v4041 = vpop.f32.mrf.mxu0
        %4042 = vdwg.mxu0
        %v4044 = vsel %vm1742, %v1443, 0
        %v4047 = vsel %vm1742, %v1579, 0
        %4049 = vmatprep.subr.bf16.mxu0 0
        %4050 = vmatpush1.bf16.xpose.msra.mxu0 0
        %4051 = vmatprep.subr.bf16.mxu0 0
        %4052 = vmatpush1.bf16.xpose.msra.mxu0 0
        %4053 = vmatprep.subr.bf16.mxu0 0
        %4054 = vmatpush1.bf16.xpose.msra.mxu0 0
        %4055 = vmatprep.subr.bf16.mxu0 0
        %4056 = vmatpush1.bf16.xpose.msra.mxu0 0
        %4057 = vmatprep.subr.bf16.mxu0 0
        %4058 = vmatpush1.bf16.xpose.msra.mxu0 0
        %4059 = vmatprep.subr.bf16.mxu0 0
        %4060 = vmatpush1.bf16.xpose.msra.mxu0 0
        %4061 = vmatprep.subr.bf16.mxu0 0
        %4062 = vmatpush1.bf16.xpose.msra.mxu0 0
        %4063 = vmatprep.subr.bf16.mxu0 0
        %4064 = vmatpush1.bf16.xpose.msra.mxu0 %v4047
        %4065 = vmatprep.subr.bf16.mxu0 0
        %4066 = vmatpush2.bf16.xpose.msra.mxu0 0
        %4067 = vmatprep.subr.bf16.mxu0 0
        %4068 = vmatpush2.bf16.xpose.msra.mxu0 0
        %4069 = vmatprep.subr.bf16.mxu0 0
        %4070 = vmatpush2.bf16.xpose.msra.mxu0 0
        %4071 = vmatprep.subr.bf16.mxu0 0
        %4072 = vmatpush2.bf16.xpose.msra.mxu0 0
        %4073 = vmatprep.subr.bf16.mxu0 0
        %4074 = vmatpush2.bf16.xpose.msra.mxu0 0
        %4075 = vmatprep.subr.bf16.mxu0 0
        %4076 = vmatpush2.bf16.xpose.msra.mxu0 0
        %4077 = vmatprep.subr.bf16.mxu0 0
        %4078 = vmatpush2.bf16.xpose.msra.mxu0 0
        %4079 = vmatprep.subr.bf16.mxu0 0
        %4080 = vmatpush2.bf16.xpose.msra.mxu0 0
        %4081 = vmatprep.mubr.bf16.mxu0 0
        %4082 = vmatmul.mubr.bf16.gmra.mxu0 %v4044
        %v4083 = vpop.f32.mrf.mxu0
        %v4084 = vadd.f32 0.0, %v4083
        %v4085 = vpop.f32.mrf.mxu0
        %v4086 = vpop.f32.mrf.mxu0
        %v4087 = vpop.f32.mrf.mxu0
        %4088 = vdwg.mxu0
        %v4090 = vsel %vm1742, %v1445, 0
        %v4093 = vsel %vm1742, %v1581, 0
        %4095 = vmatprep.subr.bf16.mxu0 0
        %4096 = vmatpush1.bf16.xpose.msra.mxu0 0
        %4097 = vmatprep.subr.bf16.mxu0 0
        %4098 = vmatpush1.bf16.xpose.msra.mxu0 0
        %4099 = vmatprep.subr.bf16.mxu0 0
        %4100 = vmatpush1.bf16.xpose.msra.mxu0 0
        %4101 = vmatprep.subr.bf16.mxu0 0
        %4102 = vmatpush1.bf16.xpose.msra.mxu0 0
        %4103 = vmatprep.subr.bf16.mxu0 0
        %4104 = vmatpush1.bf16.xpose.msra.mxu0 0
        %4105 = vmatprep.subr.bf16.mxu0 0
        %4106 = vmatpush1.bf16.xpose.msra.mxu0 0
        %4107 = vmatprep.subr.bf16.mxu0 0
        %4108 = vmatpush1.bf16.xpose.msra.mxu0 0
        %4109 = vmatprep.subr.bf16.mxu0 0
        %4110 = vmatpush1.bf16.xpose.msra.mxu0 %v4093
        %4111 = vmatprep.subr.bf16.mxu0 0
        %4112 = vmatpush2.bf16.xpose.msra.mxu0 0
        %4113 = vmatprep.subr.bf16.mxu0 0
        %4114 = vmatpush2.bf16.xpose.msra.mxu0 0
        %4115 = vmatprep.subr.bf16.mxu0 0
        %4116 = vmatpush2.bf16.xpose.msra.mxu0 0
        %4117 = vmatprep.subr.bf16.mxu0 0
        %4118 = vmatpush2.bf16.xpose.msra.mxu0 0
        %4119 = vmatprep.subr.bf16.mxu0 0
        %4120 = vmatpush2.bf16.xpose.msra.mxu0 0
        %4121 = vmatprep.subr.bf16.mxu0 0
        %4122 = vmatpush2.bf16.xpose.msra.mxu0 0
        %4123 = vmatprep.subr.bf16.mxu0 0
        %4124 = vmatpush2.bf16.xpose.msra.mxu0 0
        %4125 = vmatprep.subr.bf16.mxu0 0
        %4126 = vmatpush2.bf16.xpose.msra.mxu0 0
        %4127 = vmatprep.mubr.bf16.mxu0 0
        %4128 = vmatmul.mubr.bf16.gmra.mxu0 %v4090
        %v4129 = vpop.f32.mrf.mxu0
        %v4130 = vadd.f32 0.0, %v4129
        %v4131 = vpop.f32.mrf.mxu0
        %v4132 = vpop.f32.mrf.mxu0
        %v4133 = vpop.f32.mrf.mxu0
        %4134 = vdwg.mxu0
        %v4136 = vsel %vm1742, %v1447, 0
        %v4139 = vsel %vm1742, %v1583, 0
        %4141 = vmatprep.subr.bf16.mxu0 0
        %4142 = vmatpush1.bf16.xpose.msra.mxu0 0
        %4143 = vmatprep.subr.bf16.mxu0 0
        %4144 = vmatpush1.bf16.xpose.msra.mxu0 0
        %4145 = vmatprep.subr.bf16.mxu0 0
        %4146 = vmatpush1.bf16.xpose.msra.mxu0 0
        %4147 = vmatprep.subr.bf16.mxu0 0
        %4148 = vmatpush1.bf16.xpose.msra.mxu0 0
        %4149 = vmatprep.subr.bf16.mxu0 0
        %4150 = vmatpush1.bf16.xpose.msra.mxu0 0
        %4151 = vmatprep.subr.bf16.mxu0 0
        %4152 = vmatpush1.bf16.xpose.msra.mxu0 0
        %4153 = vmatprep.subr.bf16.mxu0 0
        %4154 = vmatpush1.bf16.xpose.msra.mxu0 0
        %4155 = vmatprep.subr.bf16.mxu0 0
        %4156 = vmatpush1.bf16.xpose.msra.mxu0 %v4139
        %4157 = vmatprep.subr.bf16.mxu0 0
        %4158 = vmatpush2.bf16.xpose.msra.mxu0 0
        %4159 = vmatprep.subr.bf16.mxu0 0
        %4160 = vmatpush2.bf16.xpose.msra.mxu0 0
        %4161 = vmatprep.subr.bf16.mxu0 0
        %4162 = vmatpush2.bf16.xpose.msra.mxu0 0
        %4163 = vmatprep.subr.bf16.mxu0 0
        %4164 = vmatpush2.bf16.xpose.msra.mxu0 0
        %4165 = vmatprep.subr.bf16.mxu0 0
        %4166 = vmatpush2.bf16.xpose.msra.mxu0 0
        %4167 = vmatprep.subr.bf16.mxu0 0
        %4168 = vmatpush2.bf16.xpose.msra.mxu0 0
        %4169 = vmatprep.subr.bf16.mxu0 0
        %4170 = vmatpush2.bf16.xpose.msra.mxu0 0
        %4171 = vmatprep.subr.bf16.mxu0 0
        %4172 = vmatpush2.bf16.xpose.msra.mxu0 0
        %4173 = vmatprep.mubr.bf16.mxu0 0
        %4174 = vmatmul.mubr.bf16.gmra.mxu0 %v4136
        %v4175 = vpop.f32.mrf.mxu0
        %v4176 = vadd.f32 0.0, %v4175
        %v4177 = vpop.f32.mrf.mxu0
        %v4178 = vpop.f32.mrf.mxu0
        %v4179 = vpop.f32.mrf.mxu0
        %4180 = vdwg.mxu0
        %v4182 = vsel %vm1742, %v1449, 0
        %v4185 = vsel %vm1742, %v1585, 0
        %4187 = vmatprep.subr.bf16.mxu0 0
        %4188 = vmatpush1.bf16.xpose.msra.mxu0 0
        %4189 = vmatprep.subr.bf16.mxu0 0
        %4190 = vmatpush1.bf16.xpose.msra.mxu0 0
        %4191 = vmatprep.subr.bf16.mxu0 0
        %4192 = vmatpush1.bf16.xpose.msra.mxu0 0
        %4193 = vmatprep.subr.bf16.mxu0 0
        %4194 = vmatpush1.bf16.xpose.msra.mxu0 0
        %4195 = vmatprep.subr.bf16.mxu0 0
        %4196 = vmatpush1.bf16.xpose.msra.mxu0 0
        %4197 = vmatprep.subr.bf16.mxu0 0
        %4198 = vmatpush1.bf16.xpose.msra.mxu0 0
        %4199 = vmatprep.subr.bf16.mxu0 0
        %4200 = vmatpush1.bf16.xpose.msra.mxu0 0
        %4201 = vmatprep.subr.bf16.mxu0 0
        %4202 = vmatpush1.bf16.xpose.msra.mxu0 %v4185
        %4203 = vmatprep.subr.bf16.mxu0 0
        %4204 = vmatpush2.bf16.xpose.msra.mxu0 0
        %4205 = vmatprep.subr.bf16.mxu0 0
        %4206 = vmatpush2.bf16.xpose.msra.mxu0 0
        %4207 = vmatprep.subr.bf16.mxu0 0
        %4208 = vmatpush2.bf16.xpose.msra.mxu0 0
        %4209 = vmatprep.subr.bf16.mxu0 0
        %4210 = vmatpush2.bf16.xpose.msra.mxu0 0
        %4211 = vmatprep.subr.bf16.mxu0 0
        %4212 = vmatpush2.bf16.xpose.msra.mxu0 0
        %4213 = vmatprep.subr.bf16.mxu0 0
        %4214 = vmatpush2.bf16.xpose.msra.mxu0 0
        %4215 = vmatprep.subr.bf16.mxu0 0
        %4216 = vmatpush2.bf16.xpose.msra.mxu0 0
        %4217 = vmatprep.subr.bf16.mxu0 0
        %4218 = vmatpush2.bf16.xpose.msra.mxu0 0
        %4219 = vmatprep.mubr.bf16.mxu0 0
        %4220 = vmatmul.mubr.bf16.gmra.mxu0 %v4182
        %v4221 = vpop.f32.mrf.mxu0
        %v4222 = vadd.f32 0.0, %v4221
        %v4223 = vpop.f32.mrf.mxu0
        %v4224 = vpop.f32.mrf.mxu0
        %v4225 = vpop.f32.mrf.mxu0
        %4226 = vdwg.mxu0
        %v4228 = vsel %vm1742, %v1451, 0
        %v4231 = vsel %vm1742, %v1587, 0
        %4233 = vmatprep.subr.bf16.mxu0 0
        %4234 = vmatpush1.bf16.xpose.msra.mxu0 0
        %4235 = vmatprep.subr.bf16.mxu0 0
        %4236 = vmatpush1.bf16.xpose.msra.mxu0 0
        %4237 = vmatprep.subr.bf16.mxu0 0
        %4238 = vmatpush1.bf16.xpose.msra.mxu0 0
        %4239 = vmatprep.subr.bf16.mxu0 0
        %4240 = vmatpush1.bf16.xpose.msra.mxu0 0
        %4241 = vmatprep.subr.bf16.mxu0 0
        %4242 = vmatpush1.bf16.xpose.msra.mxu0 0
        %4243 = vmatprep.subr.bf16.mxu0 0
        %4244 = vmatpush1.bf16.xpose.msra.mxu0 0
        %4245 = vmatprep.subr.bf16.mxu0 0
        %4246 = vmatpush1.bf16.xpose.msra.mxu0 0
        %4247 = vmatprep.subr.bf16.mxu0 0
        %4248 = vmatpush1.bf16.xpose.msra.mxu0 %v4231
        %4249 = vmatprep.subr.bf16.mxu0 0
        %4250 = vmatpush2.bf16.xpose.msra.mxu0 0
        %4251 = vmatprep.subr.bf16.mxu0 0
        %4252 = vmatpush2.bf16.xpose.msra.mxu0 0
        %4253 = vmatprep.subr.bf16.mxu0 0
        %4254 = vmatpush2.bf16.xpose.msra.mxu0 0
        %4255 = vmatprep.subr.bf16.mxu0 0
        %4256 = vmatpush2.bf16.xpose.msra.mxu0 0
        %4257 = vmatprep.subr.bf16.mxu0 0
        %4258 = vmatpush2.bf16.xpose.msra.mxu0 0
        %4259 = vmatprep.subr.bf16.mxu0 0
        %4260 = vmatpush2.bf16.xpose.msra.mxu0 0
        %4261 = vmatprep.subr.bf16.mxu0 0
        %4262 = vmatpush2.bf16.xpose.msra.mxu0 0
        %4263 = vmatprep.subr.bf16.mxu0 0
        %4264 = vmatpush2.bf16.xpose.msra.mxu0 0
        %4265 = vmatprep.mubr.bf16.mxu0 0
        %4266 = vmatmul.mubr.bf16.gmra.mxu0 %v4228
        %v4267 = vpop.f32.mrf.mxu0
        %v4268 = vadd.f32 0.0, %v4267
        %v4269 = vpop.f32.mrf.mxu0
        %v4270 = vpop.f32.mrf.mxu0
        %v4271 = vpop.f32.mrf.mxu0
        %4272 = vdwg.mxu0
        %v4274 = vsel %vm1742, %v1453, 0
        %v4277 = vsel %vm1742, %v1589, 0
        %4279 = vmatprep.subr.bf16.mxu0 0
        %4280 = vmatpush1.bf16.xpose.msra.mxu0 0
        %4281 = vmatprep.subr.bf16.mxu0 0
        %4282 = vmatpush1.bf16.xpose.msra.mxu0 0
        %4283 = vmatprep.subr.bf16.mxu0 0
        %4284 = vmatpush1.bf16.xpose.msra.mxu0 0
        %4285 = vmatprep.subr.bf16.mxu0 0
        %4286 = vmatpush1.bf16.xpose.msra.mxu0 0
        %4287 = vmatprep.subr.bf16.mxu0 0
        %4288 = vmatpush1.bf16.xpose.msra.mxu0 0
        %4289 = vmatprep.subr.bf16.mxu0 0
        %4290 = vmatpush1.bf16.xpose.msra.mxu0 0
        %4291 = vmatprep.subr.bf16.mxu0 0
        %4292 = vmatpush1.bf16.xpose.msra.mxu0 0
        %4293 = vmatprep.subr.bf16.mxu0 0
        %4294 = vmatpush1.bf16.xpose.msra.mxu0 %v4277
        %4295 = vmatprep.subr.bf16.mxu0 0
        %4296 = vmatpush2.bf16.xpose.msra.mxu0 0
        %4297 = vmatprep.subr.bf16.mxu0 0
        %4298 = vmatpush2.bf16.xpose.msra.mxu0 0
        %4299 = vmatprep.subr.bf16.mxu0 0
        %4300 = vmatpush2.bf16.xpose.msra.mxu0 0
        %4301 = vmatprep.subr.bf16.mxu0 0
        %4302 = vmatpush2.bf16.xpose.msra.mxu0 0
        %4303 = vmatprep.subr.bf16.mxu0 0
        %4304 = vmatpush2.bf16.xpose.msra.mxu0 0
        %4305 = vmatprep.subr.bf16.mxu0 0
        %4306 = vmatpush2.bf16.xpose.msra.mxu0 0
        %4307 = vmatprep.subr.bf16.mxu0 0
        %4308 = vmatpush2.bf16.xpose.msra.mxu0 0
        %4309 = vmatprep.subr.bf16.mxu0 0
        %4310 = vmatpush2.bf16.xpose.msra.mxu0 0
        %4311 = vmatprep.mubr.bf16.mxu0 0
        %4312 = vmatmul.mubr.bf16.gmra.mxu0 %v4274
        %v4313 = vpop.f32.mrf.mxu0
        %v4314 = vadd.f32 0.0, %v4313
        %v4315 = vpop.f32.mrf.mxu0
        %v4316 = vpop.f32.mrf.mxu0
        %v4317 = vpop.f32.mrf.mxu0
        %4318 = vdwg.mxu0
        %v4320 = vsel %vm1742, %v1455, 0
        %v4323 = vsel %vm1742, %v1591, 0
        %4325 = vmatprep.subr.bf16.mxu0 0
        %4326 = vmatpush1.bf16.xpose.msra.mxu0 0
        %4327 = vmatprep.subr.bf16.mxu0 0
        %4328 = vmatpush1.bf16.xpose.msra.mxu0 0
        %4329 = vmatprep.subr.bf16.mxu0 0
        %4330 = vmatpush1.bf16.xpose.msra.mxu0 0
        %4331 = vmatprep.subr.bf16.mxu0 0
        %4332 = vmatpush1.bf16.xpose.msra.mxu0 0
        %4333 = vmatprep.subr.bf16.mxu0 0
        %4334 = vmatpush1.bf16.xpose.msra.mxu0 0
        %4335 = vmatprep.subr.bf16.mxu0 0
        %4336 = vmatpush1.bf16.xpose.msra.mxu0 0
        %4337 = vmatprep.subr.bf16.mxu0 0
        %4338 = vmatpush1.bf16.xpose.msra.mxu0 0
        %4339 = vmatprep.subr.bf16.mxu0 0
        %4340 = vmatpush1.bf16.xpose.msra.mxu0 %v4323
        %4341 = vmatprep.subr.bf16.mxu0 0
        %4342 = vmatpush2.bf16.xpose.msra.mxu0 0
        %4343 = vmatprep.subr.bf16.mxu0 0
        %4344 = vmatpush2.bf16.xpose.msra.mxu0 0
        %4345 = vmatprep.subr.bf16.mxu0 0
        %4346 = vmatpush2.bf16.xpose.msra.mxu0 0
        %4347 = vmatprep.subr.bf16.mxu0 0
        %4348 = vmatpush2.bf16.xpose.msra.mxu0 0
        %4349 = vmatprep.subr.bf16.mxu0 0
        %4350 = vmatpush2.bf16.xpose.msra.mxu0 0
        %4351 = vmatprep.subr.bf16.mxu0 0
        %4352 = vmatpush2.bf16.xpose.msra.mxu0 0
        %4353 = vmatprep.subr.bf16.mxu0 0
        %4354 = vmatpush2.bf16.xpose.msra.mxu0 0
        %4355 = vmatprep.subr.bf16.mxu0 0
        %4356 = vmatpush2.bf16.xpose.msra.mxu0 0
        %4357 = vmatprep.mubr.bf16.mxu0 0
        %4358 = vmatmul.mubr.bf16.gmra.mxu0 %v4320
        %v4359 = vpop.f32.mrf.mxu0
        %v4360 = vadd.f32 0.0, %v4359
        %v4361 = vpop.f32.mrf.mxu0
        %v4362 = vpop.f32.mrf.mxu0
        %v4363 = vpop.f32.mrf.mxu0
        %4364 = vdwg.mxu0
        %v4366 = vsel %vm1742, %v1457, 0
        %v4369 = vsel %vm1742, %v1593, 0
        %4371 = vmatprep.subr.bf16.mxu0 0
        %4372 = vmatpush1.bf16.xpose.msra.mxu0 0
        %4373 = vmatprep.subr.bf16.mxu0 0
        %4374 = vmatpush1.bf16.xpose.msra.mxu0 0
        %4375 = vmatprep.subr.bf16.mxu0 0
        %4376 = vmatpush1.bf16.xpose.msra.mxu0 0
        %4377 = vmatprep.subr.bf16.mxu0 0
        %4378 = vmatpush1.bf16.xpose.msra.mxu0 0
        %4379 = vmatprep.subr.bf16.mxu0 0
        %4380 = vmatpush1.bf16.xpose.msra.mxu0 0
        %4381 = vmatprep.subr.bf16.mxu0 0
        %4382 = vmatpush1.bf16.xpose.msra.mxu0 0
        %4383 = vmatprep.subr.bf16.mxu0 0
        %4384 = vmatpush1.bf16.xpose.msra.mxu0 0
        %4385 = vmatprep.subr.bf16.mxu0 0
        %4386 = vmatpush1.bf16.xpose.msra.mxu0 %v4369
        %4387 = vmatprep.subr.bf16.mxu0 0
        %4388 = vmatpush2.bf16.xpose.msra.mxu0 0
        %4389 = vmatprep.subr.bf16.mxu0 0
        %4390 = vmatpush2.bf16.xpose.msra.mxu0 0
        %4391 = vmatprep.subr.bf16.mxu0 0
        %4392 = vmatpush2.bf16.xpose.msra.mxu0 0
        %4393 = vmatprep.subr.bf16.mxu0 0
        %4394 = vmatpush2.bf16.xpose.msra.mxu0 0
        %4395 = vmatprep.subr.bf16.mxu0 0
        %4396 = vmatpush2.bf16.xpose.msra.mxu0 0
        %4397 = vmatprep.subr.bf16.mxu0 0
        %4398 = vmatpush2.bf16.xpose.msra.mxu0 0
        %4399 = vmatprep.subr.bf16.mxu0 0
        %4400 = vmatpush2.bf16.xpose.msra.mxu0 0
        %4401 = vmatprep.subr.bf16.mxu0 0
        %4402 = vmatpush2.bf16.xpose.msra.mxu0 0
        %4403 = vmatprep.mubr.bf16.mxu0 0
        %4404 = vmatmul.mubr.bf16.gmra.mxu0 %v4366
        %v4405 = vpop.f32.mrf.mxu0
        %v4406 = vadd.f32 0.0, %v4405
        %v4407 = vpop.f32.mrf.mxu0
        %v4408 = vpop.f32.mrf.mxu0
        %v4409 = vpop.f32.mrf.mxu0
        %4410 = vdwg.mxu0
        %v4412 = vsel %vm1742, %v1459, 0
        %v4415 = vsel %vm1742, %v1595, 0
        %4417 = vmatprep.subr.bf16.mxu0 0
        %4418 = vmatpush1.bf16.xpose.msra.mxu0 0
        %4419 = vmatprep.subr.bf16.mxu0 0
        %4420 = vmatpush1.bf16.xpose.msra.mxu0 0
        %4421 = vmatprep.subr.bf16.mxu0 0
        %4422 = vmatpush1.bf16.xpose.msra.mxu0 0
        %4423 = vmatprep.subr.bf16.mxu0 0
        %4424 = vmatpush1.bf16.xpose.msra.mxu0 0
        %4425 = vmatprep.subr.bf16.mxu0 0
        %4426 = vmatpush1.bf16.xpose.msra.mxu0 0
        %4427 = vmatprep.subr.bf16.mxu0 0
        %4428 = vmatpush1.bf16.xpose.msra.mxu0 0
        %4429 = vmatprep.subr.bf16.mxu0 0
        %4430 = vmatpush1.bf16.xpose.msra.mxu0 0
        %4431 = vmatprep.subr.bf16.mxu0 0
        %4432 = vmatpush1.bf16.xpose.msra.mxu0 %v4415
        %4433 = vmatprep.subr.bf16.mxu0 0
        %4434 = vmatpush2.bf16.xpose.msra.mxu0 0
        %4435 = vmatprep.subr.bf16.mxu0 0
        %4436 = vmatpush2.bf16.xpose.msra.mxu0 0
        %4437 = vmatprep.subr.bf16.mxu0 0
        %4438 = vmatpush2.bf16.xpose.msra.mxu0 0
        %4439 = vmatprep.subr.bf16.mxu0 0
        %4440 = vmatpush2.bf16.xpose.msra.mxu0 0
        %4441 = vmatprep.subr.bf16.mxu0 0
        %4442 = vmatpush2.bf16.xpose.msra.mxu0 0
        %4443 = vmatprep.subr.bf16.mxu0 0
        %4444 = vmatpush2.bf16.xpose.msra.mxu0 0
        %4445 = vmatprep.subr.bf16.mxu0 0
        %4446 = vmatpush2.bf16.xpose.msra.mxu0 0
        %4447 = vmatprep.subr.bf16.mxu0 0
        %4448 = vmatpush2.bf16.xpose.msra.mxu0 0
        %4449 = vmatprep.mubr.bf16.mxu0 0
        %4450 = vmatmul.mubr.bf16.gmra.mxu0 %v4412
        %v4451 = vpop.f32.mrf.mxu0
        %v4452 = vadd.f32 0.0, %v4451
        %v4453 = vpop.f32.mrf.mxu0
        %v4454 = vpop.f32.mrf.mxu0
        %v4455 = vpop.f32.mrf.mxu0
        %4456 = vdwg.mxu0
        %v4458 = vsel %vm1742, %v1461, 0
        %v4461 = vsel %vm1742, %v1597, 0
        %4463 = vmatprep.subr.bf16.mxu0 0
        %4464 = vmatpush1.bf16.xpose.msra.mxu0 0
        %4465 = vmatprep.subr.bf16.mxu0 0
        %4466 = vmatpush1.bf16.xpose.msra.mxu0 0
        %4467 = vmatprep.subr.bf16.mxu0 0
        %4468 = vmatpush1.bf16.xpose.msra.mxu0 0
        %4469 = vmatprep.subr.bf16.mxu0 0
        %4470 = vmatpush1.bf16.xpose.msra.mxu0 0
        %4471 = vmatprep.subr.bf16.mxu0 0
        %4472 = vmatpush1.bf16.xpose.msra.mxu0 0
        %4473 = vmatprep.subr.bf16.mxu0 0
        %4474 = vmatpush1.bf16.xpose.msra.mxu0 0
        %4475 = vmatprep.subr.bf16.mxu0 0
        %4476 = vmatpush1.bf16.xpose.msra.mxu0 0
        %4477 = vmatprep.subr.bf16.mxu0 0
        %4478 = vmatpush1.bf16.xpose.msra.mxu0 %v4461
        %4479 = vmatprep.subr.bf16.mxu0 0
        %4480 = vmatpush2.bf16.xpose.msra.mxu0 0
        %4481 = vmatprep.subr.bf16.mxu0 0
        %4482 = vmatpush2.bf16.xpose.msra.mxu0 0
        %4483 = vmatprep.subr.bf16.mxu0 0
        %4484 = vmatpush2.bf16.xpose.msra.mxu0 0
        %4485 = vmatprep.subr.bf16.mxu0 0
        %4486 = vmatpush2.bf16.xpose.msra.mxu0 0
        %4487 = vmatprep.subr.bf16.mxu0 0
        %4488 = vmatpush2.bf16.xpose.msra.mxu0 0
        %4489 = vmatprep.subr.bf16.mxu0 0
        %4490 = vmatpush2.bf16.xpose.msra.mxu0 0
        %4491 = vmatprep.subr.bf16.mxu0 0
        %4492 = vmatpush2.bf16.xpose.msra.mxu0 0
        %4493 = vmatprep.subr.bf16.mxu0 0
        %4494 = vmatpush2.bf16.xpose.msra.mxu0 0
        %4495 = vmatprep.mubr.bf16.mxu0 0
        %4496 = vmatmul.mubr.bf16.gmra.mxu0 %v4458
        %v4497 = vpop.f32.mrf.mxu0
        %v4498 = vadd.f32 0.0, %v4497
        %v4499 = vpop.f32.mrf.mxu0
        %v4500 = vpop.f32.mrf.mxu0
        %v4501 = vpop.f32.mrf.mxu0
        %4502 = vdwg.mxu0
        %v4504 = vsel %vm1742, %v1463, 0
        %v4507 = vsel %vm1742, %v1599, 0
        %4509 = vmatprep.subr.bf16.mxu0 0
        %4510 = vmatpush1.bf16.xpose.msra.mxu0 0
        %4511 = vmatprep.subr.bf16.mxu0 0
        %4512 = vmatpush1.bf16.xpose.msra.mxu0 0
        %4513 = vmatprep.subr.bf16.mxu0 0
        %4514 = vmatpush1.bf16.xpose.msra.mxu0 0
        %4515 = vmatprep.subr.bf16.mxu0 0
        %4516 = vmatpush1.bf16.xpose.msra.mxu0 0
        %4517 = vmatprep.subr.bf16.mxu0 0
        %4518 = vmatpush1.bf16.xpose.msra.mxu0 0
        %4519 = vmatprep.subr.bf16.mxu0 0
        %4520 = vmatpush1.bf16.xpose.msra.mxu0 0
        %4521 = vmatprep.subr.bf16.mxu0 0
        %4522 = vmatpush1.bf16.xpose.msra.mxu0 0
        %4523 = vmatprep.subr.bf16.mxu0 0
        %4524 = vmatpush1.bf16.xpose.msra.mxu0 %v4507
        %4525 = vmatprep.subr.bf16.mxu0 0
        %4526 = vmatpush2.bf16.xpose.msra.mxu0 0
        %4527 = vmatprep.subr.bf16.mxu0 0
        %4528 = vmatpush2.bf16.xpose.msra.mxu0 0
        %4529 = vmatprep.subr.bf16.mxu0 0
        %4530 = vmatpush2.bf16.xpose.msra.mxu0 0
        %4531 = vmatprep.subr.bf16.mxu0 0
        %4532 = vmatpush2.bf16.xpose.msra.mxu0 0
        %4533 = vmatprep.subr.bf16.mxu0 0
        %4534 = vmatpush2.bf16.xpose.msra.mxu0 0
        %4535 = vmatprep.subr.bf16.mxu0 0
        %4536 = vmatpush2.bf16.xpose.msra.mxu0 0
        %4537 = vmatprep.subr.bf16.mxu0 0
        %4538 = vmatpush2.bf16.xpose.msra.mxu0 0
        %4539 = vmatprep.subr.bf16.mxu0 0
        %4540 = vmatpush2.bf16.xpose.msra.mxu0 0
        %4541 = vmatprep.mubr.bf16.mxu0 0
        %4542 = vmatmul.mubr.bf16.gmra.mxu0 %v4504
        %v4543 = vpop.f32.mrf.mxu0
        %v4544 = vadd.f32 0.0, %v4543
        %v4545 = vpop.f32.mrf.mxu0
        %v4546 = vpop.f32.mrf.mxu0
        %v4547 = vpop.f32.mrf.mxu0
        %4548 = vdwg.mxu0
        %v4550 = vsel %vm1742, %v1465, 0
        %v4553 = vsel %vm1742, %v1601, 0
        %4555 = vmatprep.subr.bf16.mxu0 0
        %4556 = vmatpush1.bf16.xpose.msra.mxu0 0
        %4557 = vmatprep.subr.bf16.mxu0 0
        %4558 = vmatpush1.bf16.xpose.msra.mxu0 0
        %4559 = vmatprep.subr.bf16.mxu0 0
        %4560 = vmatpush1.bf16.xpose.msra.mxu0 0
        %4561 = vmatprep.subr.bf16.mxu0 0
        %4562 = vmatpush1.bf16.xpose.msra.mxu0 0
        %4563 = vmatprep.subr.bf16.mxu0 0
        %4564 = vmatpush1.bf16.xpose.msra.mxu0 0
        %4565 = vmatprep.subr.bf16.mxu0 0
        %4566 = vmatpush1.bf16.xpose.msra.mxu0 0
        %4567 = vmatprep.subr.bf16.mxu0 0
        %4568 = vmatpush1.bf16.xpose.msra.mxu0 0
        %4569 = vmatprep.subr.bf16.mxu0 0
        %4570 = vmatpush1.bf16.xpose.msra.mxu0 %v4553
        %4571 = vmatprep.subr.bf16.mxu0 0
        %4572 = vmatpush2.bf16.xpose.msra.mxu0 0
        %4573 = vmatprep.subr.bf16.mxu0 0
        %4574 = vmatpush2.bf16.xpose.msra.mxu0 0
        %4575 = vmatprep.subr.bf16.mxu0 0
        %4576 = vmatpush2.bf16.xpose.msra.mxu0 0
        %4577 = vmatprep.subr.bf16.mxu0 0
        %4578 = vmatpush2.bf16.xpose.msra.mxu0 0
        %4579 = vmatprep.subr.bf16.mxu0 0
        %4580 = vmatpush2.bf16.xpose.msra.mxu0 0
        %4581 = vmatprep.subr.bf16.mxu0 0
        %4582 = vmatpush2.bf16.xpose.msra.mxu0 0
        %4583 = vmatprep.subr.bf16.mxu0 0
        %4584 = vmatpush2.bf16.xpose.msra.mxu0 0
        %4585 = vmatprep.subr.bf16.mxu0 0
        %4586 = vmatpush2.bf16.xpose.msra.mxu0 0
        %4587 = vmatprep.mubr.bf16.mxu0 0
        %4588 = vmatmul.mubr.bf16.gmra.mxu0 %v4550
        %v4589 = vpop.f32.mrf.mxu0
        %v4590 = vadd.f32 0.0, %v4589
        %v4591 = vpop.f32.mrf.mxu0
        %v4592 = vpop.f32.mrf.mxu0
        %v4593 = vpop.f32.mrf.mxu0
        %4594 = vdwg.mxu0
        %v4596 = vsel %vm1742, %v1467, 0
        %v4599 = vsel %vm1742, %v1603, 0
        %4601 = vmatprep.subr.bf16.mxu0 0
        %4602 = vmatpush1.bf16.xpose.msra.mxu0 0
        %4603 = vmatprep.subr.bf16.mxu0 0
        %4604 = vmatpush1.bf16.xpose.msra.mxu0 0
        %4605 = vmatprep.subr.bf16.mxu0 0
        %4606 = vmatpush1.bf16.xpose.msra.mxu0 0
        %4607 = vmatprep.subr.bf16.mxu0 0
        %4608 = vmatpush1.bf16.xpose.msra.mxu0 0
        %4609 = vmatprep.subr.bf16.mxu0 0
        %4610 = vmatpush1.bf16.xpose.msra.mxu0 0
        %4611 = vmatprep.subr.bf16.mxu0 0
        %4612 = vmatpush1.bf16.xpose.msra.mxu0 0
        %4613 = vmatprep.subr.bf16.mxu0 0
        %4614 = vmatpush1.bf16.xpose.msra.mxu0 0
        %4615 = vmatprep.subr.bf16.mxu0 0
        %4616 = vmatpush1.bf16.xpose.msra.mxu0 %v4599
        %4617 = vmatprep.subr.bf16.mxu0 0
        %4618 = vmatpush2.bf16.xpose.msra.mxu0 0
        %4619 = vmatprep.subr.bf16.mxu0 0
        %4620 = vmatpush2.bf16.xpose.msra.mxu0 0
        %4621 = vmatprep.subr.bf16.mxu0 0
        %4622 = vmatpush2.bf16.xpose.msra.mxu0 0
        %4623 = vmatprep.subr.bf16.mxu0 0
        %4624 = vmatpush2.bf16.xpose.msra.mxu0 0
        %4625 = vmatprep.subr.bf16.mxu0 0
        %4626 = vmatpush2.bf16.xpose.msra.mxu0 0
        %4627 = vmatprep.subr.bf16.mxu0 0
        %4628 = vmatpush2.bf16.xpose.msra.mxu0 0
        %4629 = vmatprep.subr.bf16.mxu0 0
        %4630 = vmatpush2.bf16.xpose.msra.mxu0 0
        %4631 = vmatprep.subr.bf16.mxu0 0
        %4632 = vmatpush2.bf16.xpose.msra.mxu0 0
        %4633 = vmatprep.mubr.bf16.mxu0 0
        %4634 = vmatmul.mubr.bf16.gmra.mxu0 %v4596
        %v4635 = vpop.f32.mrf.mxu0
        %v4636 = vadd.f32 0.0, %v4635
        %v4637 = vpop.f32.mrf.mxu0
        %v4638 = vpop.f32.mrf.mxu0
        %v4639 = vpop.f32.mrf.mxu0
        %4640 = vdwg.mxu0
        %v4642 = vsel %vm1742, %v1469, 0
        %v4645 = vsel %vm1742, %v1605, 0
        %4647 = vmatprep.subr.bf16.mxu0 0
        %4648 = vmatpush1.bf16.xpose.msra.mxu0 0
        %4649 = vmatprep.subr.bf16.mxu0 0
        %4650 = vmatpush1.bf16.xpose.msra.mxu0 0
        %4651 = vmatprep.subr.bf16.mxu0 0
        %4652 = vmatpush1.bf16.xpose.msra.mxu0 0
        %4653 = vmatprep.subr.bf16.mxu0 0
        %4654 = vmatpush1.bf16.xpose.msra.mxu0 0
        %4655 = vmatprep.subr.bf16.mxu0 0
        %4656 = vmatpush1.bf16.xpose.msra.mxu0 0
        %4657 = vmatprep.subr.bf16.mxu0 0
        %4658 = vmatpush1.bf16.xpose.msra.mxu0 0
        %4659 = vmatprep.subr.bf16.mxu0 0
        %4660 = vmatpush1.bf16.xpose.msra.mxu0 0
        %4661 = vmatprep.subr.bf16.mxu0 0
        %4662 = vmatpush1.bf16.xpose.msra.mxu0 %v4645
        %4663 = vmatprep.subr.bf16.mxu0 0
        %4664 = vmatpush2.bf16.xpose.msra.mxu0 0
        %4665 = vmatprep.subr.bf16.mxu0 0
        %4666 = vmatpush2.bf16.xpose.msra.mxu0 0
        %4667 = vmatprep.subr.bf16.mxu0 0
        %4668 = vmatpush2.bf16.xpose.msra.mxu0 0
        %4669 = vmatprep.subr.bf16.mxu0 0
        %4670 = vmatpush2.bf16.xpose.msra.mxu0 0
        %4671 = vmatprep.subr.bf16.mxu0 0
        %4672 = vmatpush2.bf16.xpose.msra.mxu0 0
        %4673 = vmatprep.subr.bf16.mxu0 0
        %4674 = vmatpush2.bf16.xpose.msra.mxu0 0
        %4675 = vmatprep.subr.bf16.mxu0 0
        %4676 = vmatpush2.bf16.xpose.msra.mxu0 0
        %4677 = vmatprep.subr.bf16.mxu0 0
        %4678 = vmatpush2.bf16.xpose.msra.mxu0 0
        %4679 = vmatprep.mubr.bf16.mxu0 0
        %4680 = vmatmul.mubr.bf16.gmra.mxu0 %v4642
        %v4681 = vpop.f32.mrf.mxu0
        %v4682 = vadd.f32 0.0, %v4681
        %v4683 = vpop.f32.mrf.mxu0
        %v4684 = vpop.f32.mrf.mxu0
        %v4685 = vpop.f32.mrf.mxu0
        %4686 = vdwg.mxu0
        %vm4687 = vcmask 64512
        %v4688 = vsel %vm4687, %v1784, -inf
        %4689 = vmax.xlane.f32.xlu0 %v4688
        %v4690 = vpop.xlane.xlu0 %4689
        %v4691 = vsel %vm4687, %v1830, -inf
        %4692 = vmax.xlane.f32.xlu0 %v4691
        %v4693 = vpop.xlane.xlu0 %4692
        %v4694 = vsel %vm4687, %v1876, -inf
        %4695 = vmax.xlane.f32.xlu0 %v4694
        %v4696 = vpop.xlane.xlu0 %4695
        %v4697 = vsel %vm4687, %v1922, -inf
        %4698 = vmax.xlane.f32.xlu0 %v4697
        %v4699 = vpop.xlane.xlu0 %4698
        %v4700 = vsel %vm4687, %v1968, -inf
        %4701 = vmax.xlane.f32.xlu0 %v4700
        %v4702 = vpop.xlane.xlu0 %4701
        %v4703 = vsel %vm4687, %v2014, -inf
        %4704 = vmax.xlane.f32.xlu0 %v4703
        %v4705 = vpop.xlane.xlu0 %4704
        %v4706 = vsel %vm4687, %v2060, -inf
        %4707 = vmax.xlane.f32.xlu0 %v4706
        %v4708 = vpop.xlane.xlu0 %4707
        %v4709 = vsel %vm4687, %v2106, -inf
        %4710 = vmax.xlane.f32.xlu0 %v4709
        %v4711 = vpop.xlane.xlu0 %4710
        %v4712 = vsel %vm4687, %v2152, -inf
        %4713 = vmax.xlane.f32.xlu0 %v4712
        %v4714 = vpop.xlane.xlu0 %4713
        %v4715 = vsel %vm4687, %v2198, -inf
        %4716 = vmax.xlane.f32.xlu0 %v4715
        %v4717 = vpop.xlane.xlu0 %4716
        %v4718 = vsel %vm4687, %v2244, -inf
        %4719 = vmax.xlane.f32.xlu0 %v4718
        %v4720 = vpop.xlane.xlu0 %4719
        %v4721 = vsel %vm4687, %v2290, -inf
        %4722 = vmax.xlane.f32.xlu0 %v4721
        %v4723 = vpop.xlane.xlu0 %4722
        %v4724 = vsel %vm4687, %v2336, -inf
        %4725 = vmax.xlane.f32.xlu0 %v4724
        %v4726 = vpop.xlane.xlu0 %4725
        %v4727 = vsel %vm4687, %v2382, -inf
        %4728 = vmax.xlane.f32.xlu0 %v4727
        %v4729 = vpop.xlane.xlu0 %4728
        %v4730 = vsel %vm4687, %v2428, -inf
        %4731 = vmax.xlane.f32.xlu0 %v4730
        %v4732 = vpop.xlane.xlu0 %4731
        %v4733 = vsel %vm4687, %v2474, -inf
        %4734 = vmax.xlane.f32.xlu0 %v4733
        %v4735 = vpop.xlane.xlu0 %4734
        %v4736 = vsel %vm4687, %v2520, -inf
        %4737 = vmax.xlane.f32.xlu0 %v4736
        %v4738 = vpop.xlane.xlu0 %4737
        %v4739 = vsel %vm4687, %v2566, -inf
        %4740 = vmax.xlane.f32.xlu0 %v4739
        %v4741 = vpop.xlane.xlu0 %4740
        %v4742 = vsel %vm4687, %v2612, -inf
        %4743 = vmax.xlane.f32.xlu0 %v4742
        %v4744 = vpop.xlane.xlu0 %4743
        %v4745 = vsel %vm4687, %v2658, -inf
        %4746 = vmax.xlane.f32.xlu0 %v4745
        %v4747 = vpop.xlane.xlu0 %4746
        %v4748 = vsel %vm4687, %v2704, -inf
        %4749 = vmax.xlane.f32.xlu0 %v4748
        %v4750 = vpop.xlane.xlu0 %4749
        %v4751 = vsel %vm4687, %v2750, -inf
        %4752 = vmax.xlane.f32.xlu0 %v4751
        %v4753 = vpop.xlane.xlu0 %4752
        %v4754 = vsel %vm4687, %v2796, -inf
        %4755 = vmax.xlane.f32.xlu0 %v4754
        %v4756 = vpop.xlane.xlu0 %4755
        %v4757 = vsel %vm4687, %v2842, -inf
        %4758 = vmax.xlane.f32.xlu0 %v4757
        %v4759 = vpop.xlane.xlu0 %4758
        %v4760 = vsel %vm4687, %v2888, -inf
        %4761 = vmax.xlane.f32.xlu0 %v4760
        %v4762 = vpop.xlane.xlu0 %4761
        %v4763 = vsel %vm4687, %v2934, -inf
        %4764 = vmax.xlane.f32.xlu0 %v4763
        %v4765 = vpop.xlane.xlu0 %4764
        %v4766 = vsel %vm4687, %v2980, -inf
        %4767 = vmax.xlane.f32.xlu0 %v4766
        %v4768 = vpop.xlane.xlu0 %4767
        %v4769 = vsel %vm4687, %v3026, -inf
        %4770 = vmax.xlane.f32.xlu0 %v4769
        %v4771 = vpop.xlane.xlu0 %4770
        %v4772 = vsel %vm4687, %v3072, -inf
        %4773 = vmax.xlane.f32.xlu0 %v4772
        %v4774 = vpop.xlane.xlu0 %4773
        %v4775 = vsel %vm4687, %v3118, -inf
        %4776 = vmax.xlane.f32.xlu0 %v4775
        %v4777 = vpop.xlane.xlu0 %4776
        %v4778 = vsel %vm4687, %v3164, -inf
        %4779 = vmax.xlane.f32.xlu0 %v4778
        %v4780 = vpop.xlane.xlu0 %4779
        %v4781 = vsel %vm4687, %v3210, -inf
        %4782 = vmax.xlane.f32.xlu0 %v4781
        %v4783 = vpop.xlane.xlu0 %4782
        %v4784 = vsel %vm4687, %v3256, -inf
        %4785 = vmax.xlane.f32.xlu0 %v4784
        %v4786 = vpop.xlane.xlu0 %4785
        %v4787 = vsel %vm4687, %v3302, -inf
        %4788 = vmax.xlane.f32.xlu0 %v4787
        %v4789 = vpop.xlane.xlu0 %4788
        %v4790 = vsel %vm4687, %v3348, -inf
        %4791 = vmax.xlane.f32.xlu0 %v4790
        %v4792 = vpop.xlane.xlu0 %4791
        %v4793 = vsel %vm4687, %v3394, -inf
        %4794 = vmax.xlane.f32.xlu0 %v4793
        %v4795 = vpop.xlane.xlu0 %4794
        %v4796 = vsel %vm4687, %v3440, -inf
        %4797 = vmax.xlane.f32.xlu0 %v4796
        %v4798 = vpop.xlane.xlu0 %4797
        %v4799 = vsel %vm4687, %v3486, -inf
        %4800 = vmax.xlane.f32.xlu0 %v4799
        %v4801 = vpop.xlane.xlu0 %4800
        %v4802 = vsel %vm4687, %v3532, -inf
        %4803 = vmax.xlane.f32.xlu0 %v4802
        %v4804 = vpop.xlane.xlu0 %4803
        %v4805 = vsel %vm4687, %v3578, -inf
        %4806 = vmax.xlane.f32.xlu0 %v4805
        %v4807 = vpop.xlane.xlu0 %4806
        %v4808 = vsel %vm4687, %v3624, -inf
        %4809 = vmax.xlane.f32.xlu0 %v4808
        %v4810 = vpop.xlane.xlu0 %4809
        %v4811 = vsel %vm4687, %v3670, -inf
        %4812 = vmax.xlane.f32.xlu0 %v4811
        %v4813 = vpop.xlane.xlu0 %4812
        %v4814 = vsel %vm4687, %v3716, -inf
        %4815 = vmax.xlane.f32.xlu0 %v4814
        %v4816 = vpop.xlane.xlu0 %4815
        %v4817 = vsel %vm4687, %v3762, -inf
        %4818 = vmax.xlane.f32.xlu0 %v4817
        %v4819 = vpop.xlane.xlu0 %4818
        %v4820 = vsel %vm4687, %v3808, -inf
        %4821 = vmax.xlane.f32.xlu0 %v4820
        %v4822 = vpop.xlane.xlu0 %4821
        %v4823 = vsel %vm4687, %v3854, -inf
        %4824 = vmax.xlane.f32.xlu0 %v4823
        %v4825 = vpop.xlane.xlu0 %4824
        %v4826 = vsel %vm4687, %v3900, -inf
        %4827 = vmax.xlane.f32.xlu0 %v4826
        %v4828 = vpop.xlane.xlu0 %4827
        %v4829 = vsel %vm4687, %v3946, -inf
        %4830 = vmax.xlane.f32.xlu0 %v4829
        %v4831 = vpop.xlane.xlu0 %4830
        %v4832 = vsel %vm4687, %v3992, -inf
        %4833 = vmax.xlane.f32.xlu0 %v4832
        %v4834 = vpop.xlane.xlu0 %4833
        %v4835 = vsel %vm4687, %v4038, -inf
        %4836 = vmax.xlane.f32.xlu0 %v4835
        %v4837 = vpop.xlane.xlu0 %4836
        %v4838 = vsel %vm4687, %v4084, -inf
        %4839 = vmax.xlane.f32.xlu0 %v4838
        %v4840 = vpop.xlane.xlu0 %4839
        %v4841 = vsel %vm4687, %v4130, -inf
        %4842 = vmax.xlane.f32.xlu0 %v4841
        %v4843 = vpop.xlane.xlu0 %4842
        %v4844 = vsel %vm4687, %v4176, -inf
        %4845 = vmax.xlane.f32.xlu0 %v4844
        %v4846 = vpop.xlane.xlu0 %4845
        %v4847 = vsel %vm4687, %v4222, -inf
        %4848 = vmax.xlane.f32.xlu0 %v4847
        %v4849 = vpop.xlane.xlu0 %4848
        %v4850 = vsel %vm4687, %v4268, -inf
        %4851 = vmax.xlane.f32.xlu0 %v4850
        %v4852 = vpop.xlane.xlu0 %4851
        %v4853 = vsel %vm4687, %v4314, -inf
        %4854 = vmax.xlane.f32.xlu0 %v4853
        %v4855 = vpop.xlane.xlu0 %4854
        %v4856 = vsel %vm4687, %v4360, -inf
        %4857 = vmax.xlane.f32.xlu0 %v4856
        %v4858 = vpop.xlane.xlu0 %4857
        %v4859 = vsel %vm4687, %v4406, -inf
        %4860 = vmax.xlane.f32.xlu0 %v4859
        %v4861 = vpop.xlane.xlu0 %4860
        %v4862 = vsel %vm4687, %v4452, -inf
        %4863 = vmax.xlane.f32.xlu0 %v4862
        %v4864 = vpop.xlane.xlu0 %4863
        %v4865 = vsel %vm4687, %v4498, -inf
        %4866 = vmax.xlane.f32.xlu0 %v4865
        %v4867 = vpop.xlane.xlu0 %4866
        %v4868 = vsel %vm4687, %v4544, -inf
        %4869 = vmax.xlane.f32.xlu0 %v4868
        %v4870 = vpop.xlane.xlu0 %4869
        %v4871 = vsel %vm4687, %v4590, -inf
        %4872 = vmax.xlane.f32.xlu0 %v4871
        %v4873 = vpop.xlane.xlu0 %4872
        %v4874 = vsel %vm4687, %v4636, -inf
        %4875 = vmax.xlane.f32.xlu0 %v4874
        %v4876 = vpop.xlane.xlu0 %4875
        %v4877 = vsel %vm4687, %v4682, -inf
        %4878 = vmax.xlane.f32.xlu0 %v4877
        %v4879 = vpop.xlane.xlu0 %4878
        %v4880 = vsub.f32 %v1784, %v4690
        %v4881 = vsub.f32 %v1830, %v4693
        %v4882 = vsub.f32 %v1876, %v4696
        %v4883 = vsub.f32 %v1922, %v4699
        %v4884 = vsub.f32 %v1968, %v4702
        %v4885 = vsub.f32 %v2014, %v4705
        %v4886 = vsub.f32 %v2060, %v4708
        %v4887 = vsub.f32 %v2106, %v4711
        %v4888 = vsub.f32 %v2152, %v4714
        %v4889 = vsub.f32 %v2198, %v4717
        %v4890 = vsub.f32 %v2244, %v4720
        %v4891 = vsub.f32 %v2290, %v4723
        %v4892 = vsub.f32 %v2336, %v4726
        %v4893 = vsub.f32 %v2382, %v4729
        %v4894 = vsub.f32 %v2428, %v4732
        %v4895 = vsub.f32 %v2474, %v4735
        %v4896 = vsub.f32 %v2520, %v4738
        %v4897 = vsub.f32 %v2566, %v4741
        %v4898 = vsub.f32 %v2612, %v4744
        %v4899 = vsub.f32 %v2658, %v4747
        %v4900 = vsub.f32 %v2704, %v4750
        %v4901 = vsub.f32 %v2750, %v4753
        %v4902 = vsub.f32 %v2796, %v4756
        %v4903 = vsub.f32 %v2842, %v4759
        %v4904 = vsub.f32 %v2888, %v4762
        %v4905 = vsub.f32 %v2934, %v4765
        %v4906 = vsub.f32 %v2980, %v4768
        %v4907 = vsub.f32 %v3026, %v4771
        %v4908 = vsub.f32 %v3072, %v4774
        %v4909 = vsub.f32 %v3118, %v4777
        %v4910 = vsub.f32 %v3164, %v4780
        %v4911 = vsub.f32 %v3210, %v4783
        %v4912 = vsub.f32 %v3256, %v4786
        %v4913 = vsub.f32 %v3302, %v4789
        %v4914 = vsub.f32 %v3348, %v4792
        %v4915 = vsub.f32 %v3394, %v4795
        %v4916 = vsub.f32 %v3440, %v4798
        %v4917 = vsub.f32 %v3486, %v4801
        %v4918 = vsub.f32 %v3532, %v4804
        %v4919 = vsub.f32 %v3578, %v4807
        %v4920 = vsub.f32 %v3624, %v4810
        %v4921 = vsub.f32 %v3670, %v4813
        %v4922 = vsub.f32 %v3716, %v4816
        %v4923 = vsub.f32 %v3762, %v4819
        %v4924 = vsub.f32 %v3808, %v4822
        %v4925 = vsub.f32 %v3854, %v4825
        %v4926 = vsub.f32 %v3900, %v4828
        %v4927 = vsub.f32 %v3946, %v4831
        %v4928 = vsub.f32 %v3992, %v4834
        %v4929 = vsub.f32 %v4038, %v4837
        %v4930 = vsub.f32 %v4084, %v4840
        %v4931 = vsub.f32 %v4130, %v4843
        %v4932 = vsub.f32 %v4176, %v4846
        %v4933 = vsub.f32 %v4222, %v4849
        %v4934 = vsub.f32 %v4268, %v4852
        %v4935 = vsub.f32 %v4314, %v4855
        %v4936 = vsub.f32 %v4360, %v4858
        %v4937 = vsub.f32 %v4406, %v4861
        %v4938 = vsub.f32 %v4452, %v4864
        %v4939 = vsub.f32 %v4498, %v4867
        %v4940 = vsub.f32 %v4544, %v4870
        %v4941 = vsub.f32 %v4590, %v4873
        %v4942 = vsub.f32 %v4636, %v4876
        %v4943 = vsub.f32 %v4682, %v4879
        %v4944 = vmul.f32 %v4880, 1.442695
        %v4945 = vpow.pop %v4944
        %v4946 = vmul.f32 %v4881, 1.442695
        %v4947 = vpow.pop %v4946
        %v4948 = vmul.f32 %v4882, 1.442695
        %v4949 = vpow.pop %v4948
        %v4950 = vmul.f32 %v4883, 1.442695
        %v4951 = vpow.pop %v4950
        %v4952 = vmul.f32 %v4884, 1.442695
        %v4953 = vpow.pop %v4952
        %v4954 = vmul.f32 %v4885, 1.442695
        %v4955 = vpow.pop %v4954
        %v4956 = vmul.f32 %v4886, 1.442695
        %v4957 = vpow.pop %v4956
        %v4958 = vmul.f32 %v4887, 1.442695
        %v4959 = vpow.pop %v4958
        %v4960 = vmul.f32 %v4888, 1.442695
        %v4961 = vpow.pop %v4960
        %v4962 = vmul.f32 %v4889, 1.442695
        %v4963 = vpow.pop %v4962
        %v4964 = vmul.f32 %v4890, 1.442695
        %v4965 = vpow.pop %v4964
        %v4966 = vmul.f32 %v4891, 1.442695
        %v4967 = vpow.pop %v4966
        %v4968 = vmul.f32 %v4892, 1.442695
        %v4969 = vpow.pop %v4968
        %v4970 = vmul.f32 %v4893, 1.442695
        %v4971 = vpow.pop %v4970
        %v4972 = vmul.f32 %v4894, 1.442695
        %v4973 = vpow.pop %v4972
        %v4974 = vmul.f32 %v4895, 1.442695
        %v4975 = vpow.pop %v4974
        %v4976 = vmul.f32 %v4896, 1.442695
        %v4977 = vpow.pop %v4976
        %v4978 = vmul.f32 %v4897, 1.442695
        %v4979 = vpow.pop %v4978
        %v4980 = vmul.f32 %v4898, 1.442695
        %v4981 = vpow.pop %v4980
        %v4982 = vmul.f32 %v4899, 1.442695
        %v4983 = vpow.pop %v4982
        %v4984 = vmul.f32 %v4900, 1.442695
        %v4985 = vpow.pop %v4984
        %v4986 = vmul.f32 %v4901, 1.442695
        %v4987 = vpow.pop %v4986
        %v4988 = vmul.f32 %v4902, 1.442695
        %v4989 = vpow.pop %v4988
        %v4990 = vmul.f32 %v4903, 1.442695
        %v4991 = vpow.pop %v4990
        %v4992 = vmul.f32 %v4904, 1.442695
        %v4993 = vpow.pop %v4992
        %v4994 = vmul.f32 %v4905, 1.442695
        %v4995 = vpow.pop %v4994
        %v4996 = vmul.f32 %v4906, 1.442695
        %v4997 = vpow.pop %v4996
        %v4998 = vmul.f32 %v4907, 1.442695
        %v4999 = vpow.pop %v4998
        %v5000 = vmul.f32 %v4908, 1.442695
        %v5001 = vpow.pop %v5000
        %v5002 = vmul.f32 %v4909, 1.442695
        %v5003 = vpow.pop %v5002
        %v5004 = vmul.f32 %v4910, 1.442695
        %v5005 = vpow.pop %v5004
        %v5006 = vmul.f32 %v4911, 1.442695
        %v5007 = vpow.pop %v5006
        %v5008 = vmul.f32 %v4912, 1.442695
        %v5009 = vpow.pop %v5008
        %v5010 = vmul.f32 %v4913, 1.442695
        %v5011 = vpow.pop %v5010
        %v5012 = vmul.f32 %v4914, 1.442695
        %v5013 = vpow.pop %v5012
        %v5014 = vmul.f32 %v4915, 1.442695
        %v5015 = vpow.pop %v5014
        %v5016 = vmul.f32 %v4916, 1.442695
        %v5017 = vpow.pop %v5016
        %v5018 = vmul.f32 %v4917, 1.442695
        %v5019 = vpow.pop %v5018
        %v5020 = vmul.f32 %v4918, 1.442695
        %v5021 = vpow.pop %v5020
        %v5022 = vmul.f32 %v4919, 1.442695
        %v5023 = vpow.pop %v5022
        %v5024 = vmul.f32 %v4920, 1.442695
        %v5025 = vpow.pop %v5024
        %v5026 = vmul.f32 %v4921, 1.442695
        %v5027 = vpow.pop %v5026
        %v5028 = vmul.f32 %v4922, 1.442695
        %v5029 = vpow.pop %v5028
        %v5030 = vmul.f32 %v4923, 1.442695
        %v5031 = vpow.pop %v5030
        %v5032 = vmul.f32 %v4924, 1.442695
        %v5033 = vpow.pop %v5032
        %v5034 = vmul.f32 %v4925, 1.442695
        %v5035 = vpow.pop %v5034
        %v5036 = vmul.f32 %v4926, 1.442695
        %v5037 = vpow.pop %v5036
        %v5038 = vmul.f32 %v4927, 1.442695
        %v5039 = vpow.pop %v5038
        %v5040 = vmul.f32 %v4928, 1.442695
        %v5041 = vpow.pop %v5040
        %v5042 = vmul.f32 %v4929, 1.442695
        %v5043 = vpow.pop %v5042
        %v5044 = vmul.f32 %v4930, 1.442695
        %v5045 = vpow.pop %v5044
        %v5046 = vmul.f32 %v4931, 1.442695
        %v5047 = vpow.pop %v5046
        %v5048 = vmul.f32 %v4932, 1.442695
        %v5049 = vpow.pop %v5048
        %v5050 = vmul.f32 %v4933, 1.442695
        %v5051 = vpow.pop %v5050
        %v5052 = vmul.f32 %v4934, 1.442695
        %v5053 = vpow.pop %v5052
        %v5054 = vmul.f32 %v4935, 1.442695
        %v5055 = vpow.pop %v5054
        %v5056 = vmul.f32 %v4936, 1.442695
        %v5057 = vpow.pop %v5056
        %v5058 = vmul.f32 %v4937, 1.442695
        %v5059 = vpow.pop %v5058
        %v5060 = vmul.f32 %v4938, 1.442695
        %v5061 = vpow.pop %v5060
        %v5062 = vmul.f32 %v4939, 1.442695
        %v5063 = vpow.pop %v5062
        %v5064 = vmul.f32 %v4940, 1.442695
        %v5065 = vpow.pop %v5064
        %v5066 = vmul.f32 %v4941, 1.442695
        %v5067 = vpow.pop %v5066
        %v5068 = vmul.f32 %v4942, 1.442695
        %v5069 = vpow.pop %v5068
        %v5070 = vmul.f32 %v4943, 1.442695
        %v5071 = vpow.pop %v5070
        %v5072 = vsel %vm4687, %v4945, 0.0
        %5073 = vadd.xlane.f32.xlu0 %v5072
        %v5074 = vpop.xlane.xlu0 %5073
        %v5075 = vsel %vm4687, %v4947, 0.0
        %5076 = vadd.xlane.f32.xlu0 %v5075
        %v5077 = vpop.xlane.xlu0 %5076
        %v5078 = vsel %vm4687, %v4949, 0.0
        %5079 = vadd.xlane.f32.xlu0 %v5078
        %v5080 = vpop.xlane.xlu0 %5079
        %v5081 = vsel %vm4687, %v4951, 0.0
        %5082 = vadd.xlane.f32.xlu0 %v5081
        %v5083 = vpop.xlane.xlu0 %5082
        %v5084 = vsel %vm4687, %v4953, 0.0
        %5085 = vadd.xlane.f32.xlu0 %v5084
        %v5086 = vpop.xlane.xlu0 %5085
        %v5087 = vsel %vm4687, %v4955, 0.0
        %5088 = vadd.xlane.f32.xlu0 %v5087
        %v5089 = vpop.xlane.xlu0 %5088
        %v5090 = vsel %vm4687, %v4957, 0.0
        %5091 = vadd.xlane.f32.xlu0 %v5090
        %v5092 = vpop.xlane.xlu0 %5091
        %v5093 = vsel %vm4687, %v4959, 0.0
        %5094 = vadd.xlane.f32.xlu0 %v5093
        %v5095 = vpop.xlane.xlu0 %5094
        %v5096 = vsel %vm4687, %v4961, 0.0
        %5097 = vadd.xlane.f32.xlu0 %v5096
        %v5098 = vpop.xlane.xlu0 %5097
        %v5099 = vsel %vm4687, %v4963, 0.0
        %5100 = vadd.xlane.f32.xlu0 %v5099
        %v5101 = vpop.xlane.xlu0 %5100
        %v5102 = vsel %vm4687, %v4965, 0.0
        %5103 = vadd.xlane.f32.xlu0 %v5102
        %v5104 = vpop.xlane.xlu0 %5103
        %v5105 = vsel %vm4687, %v4967, 0.0
        %5106 = vadd.xlane.f32.xlu0 %v5105
        %v5107 = vpop.xlane.xlu0 %5106
        %v5108 = vsel %vm4687, %v4969, 0.0
        %5109 = vadd.xlane.f32.xlu0 %v5108
        %v5110 = vpop.xlane.xlu0 %5109
        %v5111 = vsel %vm4687, %v4971, 0.0
        %5112 = vadd.xlane.f32.xlu0 %v5111
        %v5113 = vpop.xlane.xlu0 %5112
        %v5114 = vsel %vm4687, %v4973, 0.0
        %5115 = vadd.xlane.f32.xlu0 %v5114
        %v5116 = vpop.xlane.xlu0 %5115
        %v5117 = vsel %vm4687, %v4975, 0.0
        %5118 = vadd.xlane.f32.xlu0 %v5117
        %v5119 = vpop.xlane.xlu0 %5118
        %v5120 = vsel %vm4687, %v4977, 0.0
        %5121 = vadd.xlane.f32.xlu0 %v5120
        %v5122 = vpop.xlane.xlu0 %5121
        %v5123 = vsel %vm4687, %v4979, 0.0
        %5124 = vadd.xlane.f32.xlu0 %v5123
        %v5125 = vpop.xlane.xlu0 %5124
        %v5126 = vsel %vm4687, %v4981, 0.0
        %5127 = vadd.xlane.f32.xlu0 %v5126
        %v5128 = vpop.xlane.xlu0 %5127
        %v5129 = vsel %vm4687, %v4983, 0.0
        %5130 = vadd.xlane.f32.xlu0 %v5129
        %v5131 = vpop.xlane.xlu0 %5130
        %v5132 = vsel %vm4687, %v4985, 0.0
        %5133 = vadd.xlane.f32.xlu0 %v5132
        %v5134 = vpop.xlane.xlu0 %5133
        %v5135 = vsel %vm4687, %v4987, 0.0
        %5136 = vadd.xlane.f32.xlu0 %v5135
        %v5137 = vpop.xlane.xlu0 %5136
        %v5138 = vsel %vm4687, %v4989, 0.0
        %5139 = vadd.xlane.f32.xlu0 %v5138
        %v5140 = vpop.xlane.xlu0 %5139
        %v5141 = vsel %vm4687, %v4991, 0.0
        %5142 = vadd.xlane.f32.xlu0 %v5141
        %v5143 = vpop.xlane.xlu0 %5142
        %v5144 = vsel %vm4687, %v4993, 0.0
        %5145 = vadd.xlane.f32.xlu0 %v5144
        %v5146 = vpop.xlane.xlu0 %5145
        %v5147 = vsel %vm4687, %v4995, 0.0
        %5148 = vadd.xlane.f32.xlu0 %v5147
        %v5149 = vpop.xlane.xlu0 %5148
        %v5150 = vsel %vm4687, %v4997, 0.0
        %5151 = vadd.xlane.f32.xlu0 %v5150
        %v5152 = vpop.xlane.xlu0 %5151
        %v5153 = vsel %vm4687, %v4999, 0.0
        %5154 = vadd.xlane.f32.xlu0 %v5153
        %v5155 = vpop.xlane.xlu0 %5154
        %v5156 = vsel %vm4687, %v5001, 0.0
        %5157 = vadd.xlane.f32.xlu0 %v5156
        %v5158 = vpop.xlane.xlu0 %5157
        %v5159 = vsel %vm4687, %v5003, 0.0
        %5160 = vadd.xlane.f32.xlu0 %v5159
        %v5161 = vpop.xlane.xlu0 %5160
        %v5162 = vsel %vm4687, %v5005, 0.0
        %5163 = vadd.xlane.f32.xlu0 %v5162
        %v5164 = vpop.xlane.xlu0 %5163
        %v5165 = vsel %vm4687, %v5007, 0.0
        %5166 = vadd.xlane.f32.xlu0 %v5165
        %v5167 = vpop.xlane.xlu0 %5166
        %v5168 = vsel %vm4687, %v5009, 0.0
        %5169 = vadd.xlane.f32.xlu0 %v5168
        %v5170 = vpop.xlane.xlu0 %5169
        %v5171 = vsel %vm4687, %v5011, 0.0
        %5172 = vadd.xlane.f32.xlu0 %v5171
        %v5173 = vpop.xlane.xlu0 %5172
        %v5174 = vsel %vm4687, %v5013, 0.0
        %5175 = vadd.xlane.f32.xlu0 %v5174
        %v5176 = vpop.xlane.xlu0 %5175
        %v5177 = vsel %vm4687, %v5015, 0.0
        %5178 = vadd.xlane.f32.xlu0 %v5177
        %v5179 = vpop.xlane.xlu0 %5178
        %v5180 = vsel %vm4687, %v5017, 0.0
        %5181 = vadd.xlane.f32.xlu0 %v5180
        %v5182 = vpop.xlane.xlu0 %5181
        %v5183 = vsel %vm4687, %v5019, 0.0
        %5184 = vadd.xlane.f32.xlu0 %v5183
        %v5185 = vpop.xlane.xlu0 %5184
        %v5186 = vsel %vm4687, %v5021, 0.0
        %5187 = vadd.xlane.f32.xlu0 %v5186
        %v5188 = vpop.xlane.xlu0 %5187
        %v5189 = vsel %vm4687, %v5023, 0.0
        %5190 = vadd.xlane.f32.xlu0 %v5189
        %v5191 = vpop.xlane.xlu0 %5190
        %v5192 = vsel %vm4687, %v5025, 0.0
        %5193 = vadd.xlane.f32.xlu0 %v5192
        %v5194 = vpop.xlane.xlu0 %5193
        %v5195 = vsel %vm4687, %v5027, 0.0
        %5196 = vadd.xlane.f32.xlu0 %v5195
        %v5197 = vpop.xlane.xlu0 %5196
        %v5198 = vsel %vm4687, %v5029, 0.0
        %5199 = vadd.xlane.f32.xlu0 %v5198
        %v5200 = vpop.xlane.xlu0 %5199
        %v5201 = vsel %vm4687, %v5031, 0.0
        %5202 = vadd.xlane.f32.xlu0 %v5201
        %v5203 = vpop.xlane.xlu0 %5202
        %v5204 = vsel %vm4687, %v5033, 0.0
        %5205 = vadd.xlane.f32.xlu0 %v5204
        %v5206 = vpop.xlane.xlu0 %5205
        %v5207 = vsel %vm4687, %v5035, 0.0
        %5208 = vadd.xlane.f32.xlu0 %v5207
        %v5209 = vpop.xlane.xlu0 %5208
        %v5210 = vsel %vm4687, %v5037, 0.0
        %5211 = vadd.xlane.f32.xlu0 %v5210
        %v5212 = vpop.xlane.xlu0 %5211
        %v5213 = vsel %vm4687, %v5039, 0.0
        %5214 = vadd.xlane.f32.xlu0 %v5213
        %v5215 = vpop.xlane.xlu0 %5214
        %v5216 = vsel %vm4687, %v5041, 0.0
        %5217 = vadd.xlane.f32.xlu0 %v5216
        %v5218 = vpop.xlane.xlu0 %5217
        %v5219 = vsel %vm4687, %v5043, 0.0
        %5220 = vadd.xlane.f32.xlu0 %v5219
        %v5221 = vpop.xlane.xlu0 %5220
        %v5222 = vsel %vm4687, %v5045, 0.0
        %5223 = vadd.xlane.f32.xlu0 %v5222
        %v5224 = vpop.xlane.xlu0 %5223
        %v5225 = vsel %vm4687, %v5047, 0.0
        %5226 = vadd.xlane.f32.xlu0 %v5225
        %v5227 = vpop.xlane.xlu0 %5226
        %v5228 = vsel %vm4687, %v5049, 0.0
        %5229 = vadd.xlane.f32.xlu0 %v5228
        %v5230 = vpop.xlane.xlu0 %5229
        %v5231 = vsel %vm4687, %v5051, 0.0
        %5232 = vadd.xlane.f32.xlu0 %v5231
        %v5233 = vpop.xlane.xlu0 %5232
        %v5234 = vsel %vm4687, %v5053, 0.0
        %5235 = vadd.xlane.f32.xlu0 %v5234
        %v5236 = vpop.xlane.xlu0 %5235
        %v5237 = vsel %vm4687, %v5055, 0.0
        %5238 = vadd.xlane.f32.xlu0 %v5237
        %v5239 = vpop.xlane.xlu0 %5238
        %v5240 = vsel %vm4687, %v5057, 0.0
        %5241 = vadd.xlane.f32.xlu0 %v5240
        %v5242 = vpop.xlane.xlu0 %5241
        %v5243 = vsel %vm4687, %v5059, 0.0
        %5244 = vadd.xlane.f32.xlu0 %v5243
        %v5245 = vpop.xlane.xlu0 %5244
        %v5246 = vsel %vm4687, %v5061, 0.0
        %5247 = vadd.xlane.f32.xlu0 %v5246
        %v5248 = vpop.xlane.xlu0 %5247
        %v5249 = vsel %vm4687, %v5063, 0.0
        %5250 = vadd.xlane.f32.xlu0 %v5249
        %v5251 = vpop.xlane.xlu0 %5250
        %v5252 = vsel %vm4687, %v5065, 0.0
        %5253 = vadd.xlane.f32.xlu0 %v5252
        %v5254 = vpop.xlane.xlu0 %5253
        %v5255 = vsel %vm4687, %v5067, 0.0
        %5256 = vadd.xlane.f32.xlu0 %v5255
        %v5257 = vpop.xlane.xlu0 %5256
        %v5258 = vsel %vm4687, %v5069, 0.0
        %5259 = vadd.xlane.f32.xlu0 %v5258
        %v5260 = vpop.xlane.xlu0 %5259
        %v5261 = vsel %vm4687, %v5071, 0.0
        %5262 = vadd.xlane.f32.xlu0 %v5261
        %v5263 = vpop.xlane.xlu0 %5262
        %v5264 = vrcp.pop %v5074
        %v5265 = vrcp.pop %v5077
        %v5266 = vrcp.pop %v5080
        %v5267 = vrcp.pop %v5083
        %v5268 = vrcp.pop %v5086
        %v5269 = vrcp.pop %v5089
        %v5270 = vrcp.pop %v5092
        %v5271 = vrcp.pop %v5095
        %v5272 = vrcp.pop %v5098
        %v5273 = vrcp.pop %v5101
        %v5274 = vrcp.pop %v5104
        %v5275 = vrcp.pop %v5107
        %v5276 = vrcp.pop %v5110
        %v5277 = vrcp.pop %v5113
        %v5278 = vrcp.pop %v5116
        %v5279 = vrcp.pop %v5119
        %v5280 = vrcp.pop %v5122
        %v5281 = vrcp.pop %v5125
        %v5282 = vrcp.pop %v5128
        %v5283 = vrcp.pop %v5131
        %v5284 = vrcp.pop %v5134
        %v5285 = vrcp.pop %v5137
        %v5286 = vrcp.pop %v5140
        %v5287 = vrcp.pop %v5143
        %v5288 = vrcp.pop %v5146
        %v5289 = vrcp.pop %v5149
        %v5290 = vrcp.pop %v5152
        %v5291 = vrcp.pop %v5155
        %v5292 = vrcp.pop %v5158
        %v5293 = vrcp.pop %v5161
        %v5294 = vrcp.pop %v5164
        %v5295 = vrcp.pop %v5167
        %v5296 = vrcp.pop %v5170
        %v5297 = vrcp.pop %v5173
        %v5298 = vrcp.pop %v5176
        %v5299 = vrcp.pop %v5179
        %v5300 = vrcp.pop %v5182
        %v5301 = vrcp.pop %v5185
        %v5302 = vrcp.pop %v5188
        %v5303 = vrcp.pop %v5191
        %v5304 = vrcp.pop %v5194
        %v5305 = vrcp.pop %v5197
        %v5306 = vrcp.pop %v5200
        %v5307 = vrcp.pop %v5203
        %v5308 = vrcp.pop %v5206
        %v5309 = vrcp.pop %v5209
        %v5310 = vrcp.pop %v5212
        %v5311 = vrcp.pop %v5215
        %v5312 = vrcp.pop %v5218
        %v5313 = vrcp.pop %v5221
        %v5314 = vrcp.pop %v5224
        %v5315 = vrcp.pop %v5227
        %v5316 = vrcp.pop %v5230
        %v5317 = vrcp.pop %v5233
        %v5318 = vrcp.pop %v5236
        %v5319 = vrcp.pop %v5239
        %v5320 = vrcp.pop %v5242
        %v5321 = vrcp.pop %v5245
        %v5322 = vrcp.pop %v5248
        %v5323 = vrcp.pop %v5251
        %v5324 = vrcp.pop %v5254
        %v5325 = vrcp.pop %v5257
        %v5326 = vrcp.pop %v5260
        %v5327 = vrcp.pop %v5263
        %v5328 = vmul.f32 %v4945, %v5264
        %v5329 = vmul.f32 %v4947, %v5265
        %v5330 = vmul.f32 %v4949, %v5266
        %v5331 = vmul.f32 %v4951, %v5267
        %v5332 = vmul.f32 %v4953, %v5268
        %v5333 = vmul.f32 %v4955, %v5269
        %v5334 = vmul.f32 %v4957, %v5270
        %v5335 = vmul.f32 %v4959, %v5271
        %v5336 = vmul.f32 %v4961, %v5272
        %v5337 = vmul.f32 %v4963, %v5273
        %v5338 = vmul.f32 %v4965, %v5274
        %v5339 = vmul.f32 %v4967, %v5275
        %v5340 = vmul.f32 %v4969, %v5276
        %v5341 = vmul.f32 %v4971, %v5277
        %v5342 = vmul.f32 %v4973, %v5278
        %v5343 = vmul.f32 %v4975, %v5279
        %v5344 = vmul.f32 %v4977, %v5280
        %v5345 = vmul.f32 %v4979, %v5281
        %v5346 = vmul.f32 %v4981, %v5282
        %v5347 = vmul.f32 %v4983, %v5283
        %v5348 = vmul.f32 %v4985, %v5284
        %v5349 = vmul.f32 %v4987, %v5285
        %v5350 = vmul.f32 %v4989, %v5286
        %v5351 = vmul.f32 %v4991, %v5287
        %v5352 = vmul.f32 %v4993, %v5288
        %v5353 = vmul.f32 %v4995, %v5289
        %v5354 = vmul.f32 %v4997, %v5290
        %v5355 = vmul.f32 %v4999, %v5291
        %v5356 = vmul.f32 %v5001, %v5292
        %v5357 = vmul.f32 %v5003, %v5293
        %v5358 = vmul.f32 %v5005, %v5294
        %v5359 = vmul.f32 %v5007, %v5295
        %v5360 = vmul.f32 %v5009, %v5296
        %v5361 = vmul.f32 %v5011, %v5297
        %v5362 = vmul.f32 %v5013, %v5298
        %v5363 = vmul.f32 %v5015, %v5299
        %v5364 = vmul.f32 %v5017, %v5300
        %v5365 = vmul.f32 %v5019, %v5301
        %v5366 = vmul.f32 %v5021, %v5302
        %v5367 = vmul.f32 %v5023, %v5303
        %v5368 = vmul.f32 %v5025, %v5304
        %v5369 = vmul.f32 %v5027, %v5305
        %v5370 = vmul.f32 %v5029, %v5306
        %v5371 = vmul.f32 %v5031, %v5307
        %v5372 = vmul.f32 %v5033, %v5308
        %v5373 = vmul.f32 %v5035, %v5309
        %v5374 = vmul.f32 %v5037, %v5310
        %v5375 = vmul.f32 %v5039, %v5311
        %v5376 = vmul.f32 %v5041, %v5312
        %v5377 = vmul.f32 %v5043, %v5313
        %v5378 = vmul.f32 %v5045, %v5314
        %v5379 = vmul.f32 %v5047, %v5315
        %v5380 = vmul.f32 %v5049, %v5316
        %v5381 = vmul.f32 %v5051, %v5317
        %v5382 = vmul.f32 %v5053, %v5318
        %v5383 = vmul.f32 %v5055, %v5319
        %v5384 = vmul.f32 %v5057, %v5320
        %v5385 = vmul.f32 %v5059, %v5321
        %v5386 = vmul.f32 %v5061, %v5322
        %v5387 = vmul.f32 %v5063, %v5323
        %v5388 = vmul.f32 %v5065, %v5324
        %v5389 = vmul.f32 %v5067, %v5325
        %v5390 = vmul.f32 %v5069, %v5326
        %v5391 = vmul.f32 %v5071, %v5327
        %v5392 = vpack.c.bf16 %v5328, %v5328
        %v5393 = vpack.c.bf16 %v5329, %v5329
        %v5394 = vpack.c.bf16 %v5330, %v5330
        %v5395 = vpack.c.bf16 %v5331, %v5331
        %v5396 = vpack.c.bf16 %v5332, %v5332
        %v5397 = vpack.c.bf16 %v5333, %v5333
        %v5398 = vpack.c.bf16 %v5334, %v5334
        %v5399 = vpack.c.bf16 %v5335, %v5335
        %v5400 = vpack.c.bf16 %v5336, %v5336
        %v5401 = vpack.c.bf16 %v5337, %v5337
        %v5402 = vpack.c.bf16 %v5338, %v5338
        %v5403 = vpack.c.bf16 %v5339, %v5339
        %v5404 = vpack.c.bf16 %v5340, %v5340
        %v5405 = vpack.c.bf16 %v5341, %v5341
        %v5406 = vpack.c.bf16 %v5342, %v5342
        %v5407 = vpack.c.bf16 %v5343, %v5343
        %v5408 = vpack.c.bf16 %v5344, %v5344
        %v5409 = vpack.c.bf16 %v5345, %v5345
        %v5410 = vpack.c.bf16 %v5346, %v5346
        %v5411 = vpack.c.bf16 %v5347, %v5347
        %v5412 = vpack.c.bf16 %v5348, %v5348
        %v5413 = vpack.c.bf16 %v5349, %v5349
        %v5414 = vpack.c.bf16 %v5350, %v5350
        %v5415 = vpack.c.bf16 %v5351, %v5351
        %v5416 = vpack.c.bf16 %v5352, %v5352
        %v5417 = vpack.c.bf16 %v5353, %v5353
        %v5418 = vpack.c.bf16 %v5354, %v5354
        %v5419 = vpack.c.bf16 %v5355, %v5355
        %v5420 = vpack.c.bf16 %v5356, %v5356
        %v5421 = vpack.c.bf16 %v5357, %v5357
        %v5422 = vpack.c.bf16 %v5358, %v5358
        %v5423 = vpack.c.bf16 %v5359, %v5359
        %v5424 = vpack.c.bf16 %v5360, %v5360
        %v5425 = vpack.c.bf16 %v5361, %v5361
        %v5426 = vpack.c.bf16 %v5362, %v5362
        %v5427 = vpack.c.bf16 %v5363, %v5363
        %v5428 = vpack.c.bf16 %v5364, %v5364
        %v5429 = vpack.c.bf16 %v5365, %v5365
        %v5430 = vpack.c.bf16 %v5366, %v5366
        %v5431 = vpack.c.bf16 %v5367, %v5367
        %v5432 = vpack.c.bf16 %v5368, %v5368
        %v5433 = vpack.c.bf16 %v5369, %v5369
        %v5434 = vpack.c.bf16 %v5370, %v5370
        %v5435 = vpack.c.bf16 %v5371, %v5371
        %v5436 = vpack.c.bf16 %v5372, %v5372
        %v5437 = vpack.c.bf16 %v5373, %v5373
        %v5438 = vpack.c.bf16 %v5374, %v5374
        %v5439 = vpack.c.bf16 %v5375, %v5375
        %v5440 = vpack.c.bf16 %v5376, %v5376
        %v5441 = vpack.c.bf16 %v5377, %v5377
        %v5442 = vpack.c.bf16 %v5378, %v5378
        %v5443 = vpack.c.bf16 %v5379, %v5379
        %v5444 = vpack.c.bf16 %v5380, %v5380
        %v5445 = vpack.c.bf16 %v5381, %v5381
        %v5446 = vpack.c.bf16 %v5382, %v5382
        %v5447 = vpack.c.bf16 %v5383, %v5383
        %v5448 = vpack.c.bf16 %v5384, %v5384
        %v5449 = vpack.c.bf16 %v5385, %v5385
        %v5450 = vpack.c.bf16 %v5386, %v5386
        %v5451 = vpack.c.bf16 %v5387, %v5387
        %v5452 = vpack.c.bf16 %v5388, %v5388
        %v5453 = vpack.c.bf16 %v5389, %v5389
        %v5454 = vpack.c.bf16 %v5390, %v5390
        %v5455 = vpack.c.bf16 %v5391, %v5391
        %v5457 = vsel %vm4687, %v5392, 0
        %vm5459 = vcmask 1043456
        %v5461 = vsel %vm5459, %v1630, 0
        %5463 = vmatprep.subr.bf16.mxu0 0
        %5464 = vmatpush1.bf16.msra.mxu0 0
        %5465 = vmatprep.subr.bf16.mxu0 0
        %5466 = vmatpush1.bf16.msra.mxu0 0
        %5467 = vmatprep.subr.bf16.mxu0 0
        %5468 = vmatpush1.bf16.msra.mxu0 0
        %5469 = vmatprep.subr.bf16.mxu0 0
        %5470 = vmatpush1.bf16.msra.mxu0 0
        %5471 = vmatprep.subr.bf16.mxu0 0
        %5472 = vmatpush1.bf16.msra.mxu0 0
        %5473 = vmatprep.subr.bf16.mxu0 0
        %5474 = vmatpush1.bf16.msra.mxu0 0
        %5475 = vmatprep.subr.bf16.mxu0 0
        %5476 = vmatpush1.bf16.msra.mxu0 0
        %5477 = vmatprep.subr.bf16.mxu0 0
        %5478 = vmatpush1.bf16.msra.mxu0 %v5461
        %5479 = vmatprep.subr.bf16.mxu0 0
        %5480 = vmatpush2.bf16.msra.mxu0 0
        %5481 = vmatprep.subr.bf16.mxu0 0
        %5482 = vmatpush2.bf16.msra.mxu0 0
        %5483 = vmatprep.subr.bf16.mxu0 0
        %5484 = vmatpush2.bf16.msra.mxu0 0
        %5485 = vmatprep.subr.bf16.mxu0 0
        %5486 = vmatpush2.bf16.msra.mxu0 0
        %5487 = vmatprep.subr.bf16.mxu0 0
        %5488 = vmatpush2.bf16.msra.mxu0 0
        %5489 = vmatprep.subr.bf16.mxu0 0
        %5490 = vmatpush2.bf16.msra.mxu0 0
        %5491 = vmatprep.subr.bf16.mxu0 0
        %5492 = vmatpush2.bf16.msra.mxu0 0
        %5493 = vmatprep.subr.bf16.mxu0 0
        %5494 = vmatpush2.bf16.msra.mxu0 0
        %5495 = vmatprep.mubr.bf16.mxu0 0
        %5496 = vmatmul.mubr.bf16.gmra.mxu0 %v5457
        %v5497 = vpop.f32.mrf.mxu0
        %v5498 = vadd.f32 0.0, %v5497
        %v5499 = vpop.f32.mrf.mxu0
        %v5500 = vpop.f32.mrf.mxu0
        %v5501 = vpop.f32.mrf.mxu0
        %5502 = vdwg.mxu0
        %v5504 = vsel %vm4687, %v5393, 0
        %v5507 = vsel %vm5459, %v1631, 0
        %5509 = vmatprep.subr.bf16.mxu0 0
        %5510 = vmatpush1.bf16.msra.mxu0 0
        %5511 = vmatprep.subr.bf16.mxu0 0
        %5512 = vmatpush1.bf16.msra.mxu0 0
        %5513 = vmatprep.subr.bf16.mxu0 0
        %5514 = vmatpush1.bf16.msra.mxu0 0
        %5515 = vmatprep.subr.bf16.mxu0 0
        %5516 = vmatpush1.bf16.msra.mxu0 0
        %5517 = vmatprep.subr.bf16.mxu0 0
        %5518 = vmatpush1.bf16.msra.mxu0 0
        %5519 = vmatprep.subr.bf16.mxu0 0
        %5520 = vmatpush1.bf16.msra.mxu0 0
        %5521 = vmatprep.subr.bf16.mxu0 0
        %5522 = vmatpush1.bf16.msra.mxu0 0
        %5523 = vmatprep.subr.bf16.mxu0 0
        %5524 = vmatpush1.bf16.msra.mxu0 %v5507
        %5525 = vmatprep.subr.bf16.mxu0 0
        %5526 = vmatpush2.bf16.msra.mxu0 0
        %5527 = vmatprep.subr.bf16.mxu0 0
        %5528 = vmatpush2.bf16.msra.mxu0 0
        %5529 = vmatprep.subr.bf16.mxu0 0
        %5530 = vmatpush2.bf16.msra.mxu0 0
        %5531 = vmatprep.subr.bf16.mxu0 0
        %5532 = vmatpush2.bf16.msra.mxu0 0
        %5533 = vmatprep.subr.bf16.mxu0 0
        %5534 = vmatpush2.bf16.msra.mxu0 0
        %5535 = vmatprep.subr.bf16.mxu0 0
        %5536 = vmatpush2.bf16.msra.mxu0 0
        %5537 = vmatprep.subr.bf16.mxu0 0
        %5538 = vmatpush2.bf16.msra.mxu0 0
        %5539 = vmatprep.subr.bf16.mxu0 0
        %5540 = vmatpush2.bf16.msra.mxu0 0
        %5541 = vmatprep.mubr.bf16.mxu0 0
        %5542 = vmatmul.mubr.bf16.gmra.mxu0 %v5504
        %v5543 = vpop.f32.mrf.mxu0
        %v5544 = vadd.f32 0.0, %v5543
        %v5545 = vpop.f32.mrf.mxu0
        %v5546 = vpop.f32.mrf.mxu0
        %v5547 = vpop.f32.mrf.mxu0
        %5548 = vdwg.mxu0
        %v5550 = vsel %vm4687, %v5394, 0
        %v5553 = vsel %vm5459, %v1632, 0
        %5555 = vmatprep.subr.bf16.mxu0 0
        %5556 = vmatpush1.bf16.msra.mxu0 0
        %5557 = vmatprep.subr.bf16.mxu0 0
        %5558 = vmatpush1.bf16.msra.mxu0 0
        %5559 = vmatprep.subr.bf16.mxu0 0
        %5560 = vmatpush1.bf16.msra.mxu0 0
        %5561 = vmatprep.subr.bf16.mxu0 0
        %5562 = vmatpush1.bf16.msra.mxu0 0
        %5563 = vmatprep.subr.bf16.mxu0 0
        %5564 = vmatpush1.bf16.msra.mxu0 0
        %5565 = vmatprep.subr.bf16.mxu0 0
        %5566 = vmatpush1.bf16.msra.mxu0 0
        %5567 = vmatprep.subr.bf16.mxu0 0
        %5568 = vmatpush1.bf16.msra.mxu0 0
        %5569 = vmatprep.subr.bf16.mxu0 0
        %5570 = vmatpush1.bf16.msra.mxu0 %v5553
        %5571 = vmatprep.subr.bf16.mxu0 0
        %5572 = vmatpush2.bf16.msra.mxu0 0
        %5573 = vmatprep.subr.bf16.mxu0 0
        %5574 = vmatpush2.bf16.msra.mxu0 0
        %5575 = vmatprep.subr.bf16.mxu0 0
        %5576 = vmatpush2.bf16.msra.mxu0 0
        %5577 = vmatprep.subr.bf16.mxu0 0
        %5578 = vmatpush2.bf16.msra.mxu0 0
        %5579 = vmatprep.subr.bf16.mxu0 0
        %5580 = vmatpush2.bf16.msra.mxu0 0
        %5581 = vmatprep.subr.bf16.mxu0 0
        %5582 = vmatpush2.bf16.msra.mxu0 0
        %5583 = vmatprep.subr.bf16.mxu0 0
        %5584 = vmatpush2.bf16.msra.mxu0 0
        %5585 = vmatprep.subr.bf16.mxu0 0
        %5586 = vmatpush2.bf16.msra.mxu0 0
        %5587 = vmatprep.mubr.bf16.mxu0 0
        %5588 = vmatmul.mubr.bf16.gmra.mxu0 %v5550
        %v5589 = vpop.f32.mrf.mxu0
        %v5590 = vadd.f32 0.0, %v5589
        %v5591 = vpop.f32.mrf.mxu0
        %v5592 = vpop.f32.mrf.mxu0
        %v5593 = vpop.f32.mrf.mxu0
        %5594 = vdwg.mxu0
        %v5596 = vsel %vm4687, %v5395, 0
        %v5599 = vsel %vm5459, %v1633, 0
        %5601 = vmatprep.subr.bf16.mxu0 0
        %5602 = vmatpush1.bf16.msra.mxu0 0
        %5603 = vmatprep.subr.bf16.mxu0 0
        %5604 = vmatpush1.bf16.msra.mxu0 0
        %5605 = vmatprep.subr.bf16.mxu0 0
        %5606 = vmatpush1.bf16.msra.mxu0 0
        %5607 = vmatprep.subr.bf16.mxu0 0
        %5608 = vmatpush1.bf16.msra.mxu0 0
        %5609 = vmatprep.subr.bf16.mxu0 0
        %5610 = vmatpush1.bf16.msra.mxu0 0
        %5611 = vmatprep.subr.bf16.mxu0 0
        %5612 = vmatpush1.bf16.msra.mxu0 0
        %5613 = vmatprep.subr.bf16.mxu0 0
        %5614 = vmatpush1.bf16.msra.mxu0 0
        %5615 = vmatprep.subr.bf16.mxu0 0
        %5616 = vmatpush1.bf16.msra.mxu0 %v5599
        %5617 = vmatprep.subr.bf16.mxu0 0
        %5618 = vmatpush2.bf16.msra.mxu0 0
        %5619 = vmatprep.subr.bf16.mxu0 0
        %5620 = vmatpush2.bf16.msra.mxu0 0
        %5621 = vmatprep.subr.bf16.mxu0 0
        %5622 = vmatpush2.bf16.msra.mxu0 0
        %5623 = vmatprep.subr.bf16.mxu0 0
        %5624 = vmatpush2.bf16.msra.mxu0 0
        %5625 = vmatprep.subr.bf16.mxu0 0
        %5626 = vmatpush2.bf16.msra.mxu0 0
        %5627 = vmatprep.subr.bf16.mxu0 0
        %5628 = vmatpush2.bf16.msra.mxu0 0
        %5629 = vmatprep.subr.bf16.mxu0 0
        %5630 = vmatpush2.bf16.msra.mxu0 0
        %5631 = vmatprep.subr.bf16.mxu0 0
        %5632 = vmatpush2.bf16.msra.mxu0 0
        %5633 = vmatprep.mubr.bf16.mxu0 0
        %5634 = vmatmul.mubr.bf16.gmra.mxu0 %v5596
        %v5635 = vpop.f32.mrf.mxu0
        %v5636 = vadd.f32 0.0, %v5635
        %v5637 = vpop.f32.mrf.mxu0
        %v5638 = vpop.f32.mrf.mxu0
        %v5639 = vpop.f32.mrf.mxu0
        %5640 = vdwg.mxu0
        %v5642 = vsel %vm4687, %v5396, 0
        %v5645 = vsel %vm5459, %v1634, 0
        %5647 = vmatprep.subr.bf16.mxu0 0
        %5648 = vmatpush1.bf16.msra.mxu0 0
        %5649 = vmatprep.subr.bf16.mxu0 0
        %5650 = vmatpush1.bf16.msra.mxu0 0
        %5651 = vmatprep.subr.bf16.mxu0 0
        %5652 = vmatpush1.bf16.msra.mxu0 0
        %5653 = vmatprep.subr.bf16.mxu0 0
        %5654 = vmatpush1.bf16.msra.mxu0 0
        %5655 = vmatprep.subr.bf16.mxu0 0
        %5656 = vmatpush1.bf16.msra.mxu0 0
        %5657 = vmatprep.subr.bf16.mxu0 0
        %5658 = vmatpush1.bf16.msra.mxu0 0
        %5659 = vmatprep.subr.bf16.mxu0 0
        %5660 = vmatpush1.bf16.msra.mxu0 0
        %5661 = vmatprep.subr.bf16.mxu0 0
        %5662 = vmatpush1.bf16.msra.mxu0 %v5645
        %5663 = vmatprep.subr.bf16.mxu0 0
        %5664 = vmatpush2.bf16.msra.mxu0 0
        %5665 = vmatprep.subr.bf16.mxu0 0
        %5666 = vmatpush2.bf16.msra.mxu0 0
        %5667 = vmatprep.subr.bf16.mxu0 0
        %5668 = vmatpush2.bf16.msra.mxu0 0
        %5669 = vmatprep.subr.bf16.mxu0 0
        %5670 = vmatpush2.bf16.msra.mxu0 0
        %5671 = vmatprep.subr.bf16.mxu0 0
        %5672 = vmatpush2.bf16.msra.mxu0 0
        %5673 = vmatprep.subr.bf16.mxu0 0
        %5674 = vmatpush2.bf16.msra.mxu0 0
        %5675 = vmatprep.subr.bf16.mxu0 0
        %5676 = vmatpush2.bf16.msra.mxu0 0
        %5677 = vmatprep.subr.bf16.mxu0 0
        %5678 = vmatpush2.bf16.msra.mxu0 0
        %5679 = vmatprep.mubr.bf16.mxu0 0
        %5680 = vmatmul.mubr.bf16.gmra.mxu0 %v5642
        %v5681 = vpop.f32.mrf.mxu0
        %v5682 = vadd.f32 0.0, %v5681
        %v5683 = vpop.f32.mrf.mxu0
        %v5684 = vpop.f32.mrf.mxu0
        %v5685 = vpop.f32.mrf.mxu0
        %5686 = vdwg.mxu0
        %v5688 = vsel %vm4687, %v5397, 0
        %v5691 = vsel %vm5459, %v1635, 0
        %5693 = vmatprep.subr.bf16.mxu0 0
        %5694 = vmatpush1.bf16.msra.mxu0 0
        %5695 = vmatprep.subr.bf16.mxu0 0
        %5696 = vmatpush1.bf16.msra.mxu0 0
        %5697 = vmatprep.subr.bf16.mxu0 0
        %5698 = vmatpush1.bf16.msra.mxu0 0
        %5699 = vmatprep.subr.bf16.mxu0 0
        %5700 = vmatpush1.bf16.msra.mxu0 0
        %5701 = vmatprep.subr.bf16.mxu0 0
        %5702 = vmatpush1.bf16.msra.mxu0 0
        %5703 = vmatprep.subr.bf16.mxu0 0
        %5704 = vmatpush1.bf16.msra.mxu0 0
        %5705 = vmatprep.subr.bf16.mxu0 0
        %5706 = vmatpush1.bf16.msra.mxu0 0
        %5707 = vmatprep.subr.bf16.mxu0 0
        %5708 = vmatpush1.bf16.msra.mxu0 %v5691
        %5709 = vmatprep.subr.bf16.mxu0 0
        %5710 = vmatpush2.bf16.msra.mxu0 0
        %5711 = vmatprep.subr.bf16.mxu0 0
        %5712 = vmatpush2.bf16.msra.mxu0 0
        %5713 = vmatprep.subr.bf16.mxu0 0
        %5714 = vmatpush2.bf16.msra.mxu0 0
        %5715 = vmatprep.subr.bf16.mxu0 0
        %5716 = vmatpush2.bf16.msra.mxu0 0
        %5717 = vmatprep.subr.bf16.mxu0 0
        %5718 = vmatpush2.bf16.msra.mxu0 0
        %5719 = vmatprep.subr.bf16.mxu0 0
        %5720 = vmatpush2.bf16.msra.mxu0 0
        %5721 = vmatprep.subr.bf16.mxu0 0
        %5722 = vmatpush2.bf16.msra.mxu0 0
        %5723 = vmatprep.subr.bf16.mxu0 0
        %5724 = vmatpush2.bf16.msra.mxu0 0
        %5725 = vmatprep.mubr.bf16.mxu0 0
        %5726 = vmatmul.mubr.bf16.gmra.mxu0 %v5688
        %v5727 = vpop.f32.mrf.mxu0
        %v5728 = vadd.f32 0.0, %v5727
        %v5729 = vpop.f32.mrf.mxu0
        %v5730 = vpop.f32.mrf.mxu0
        %v5731 = vpop.f32.mrf.mxu0
        %5732 = vdwg.mxu0
        %v5734 = vsel %vm4687, %v5398, 0
        %v5737 = vsel %vm5459, %v1636, 0
        %5739 = vmatprep.subr.bf16.mxu0 0
        %5740 = vmatpush1.bf16.msra.mxu0 0
        %5741 = vmatprep.subr.bf16.mxu0 0
        %5742 = vmatpush1.bf16.msra.mxu0 0
        %5743 = vmatprep.subr.bf16.mxu0 0
        %5744 = vmatpush1.bf16.msra.mxu0 0
        %5745 = vmatprep.subr.bf16.mxu0 0
        %5746 = vmatpush1.bf16.msra.mxu0 0
        %5747 = vmatprep.subr.bf16.mxu0 0
        %5748 = vmatpush1.bf16.msra.mxu0 0
        %5749 = vmatprep.subr.bf16.mxu0 0
        %5750 = vmatpush1.bf16.msra.mxu0 0
        %5751 = vmatprep.subr.bf16.mxu0 0
        %5752 = vmatpush1.bf16.msra.mxu0 0
        %5753 = vmatprep.subr.bf16.mxu0 0
        %5754 = vmatpush1.bf16.msra.mxu0 %v5737
        %5755 = vmatprep.subr.bf16.mxu0 0
        %5756 = vmatpush2.bf16.msra.mxu0 0
        %5757 = vmatprep.subr.bf16.mxu0 0
        %5758 = vmatpush2.bf16.msra.mxu0 0
        %5759 = vmatprep.subr.bf16.mxu0 0
        %5760 = vmatpush2.bf16.msra.mxu0 0
        %5761 = vmatprep.subr.bf16.mxu0 0
        %5762 = vmatpush2.bf16.msra.mxu0 0
        %5763 = vmatprep.subr.bf16.mxu0 0
        %5764 = vmatpush2.bf16.msra.mxu0 0
        %5765 = vmatprep.subr.bf16.mxu0 0
        %5766 = vmatpush2.bf16.msra.mxu0 0
        %5767 = vmatprep.subr.bf16.mxu0 0
        %5768 = vmatpush2.bf16.msra.mxu0 0
        %5769 = vmatprep.subr.bf16.mxu0 0
        %5770 = vmatpush2.bf16.msra.mxu0 0
        %5771 = vmatprep.mubr.bf16.mxu0 0
        %5772 = vmatmul.mubr.bf16.gmra.mxu0 %v5734
        %v5773 = vpop.f32.mrf.mxu0
        %v5774 = vadd.f32 0.0, %v5773
        %v5775 = vpop.f32.mrf.mxu0
        %v5776 = vpop.f32.mrf.mxu0
        %v5777 = vpop.f32.mrf.mxu0
        %5778 = vdwg.mxu0
        %v5780 = vsel %vm4687, %v5399, 0
        %v5783 = vsel %vm5459, %v1637, 0
        %5785 = vmatprep.subr.bf16.mxu0 0
        %5786 = vmatpush1.bf16.msra.mxu0 0
        %5787 = vmatprep.subr.bf16.mxu0 0
        %5788 = vmatpush1.bf16.msra.mxu0 0
        %5789 = vmatprep.subr.bf16.mxu0 0
        %5790 = vmatpush1.bf16.msra.mxu0 0
        %5791 = vmatprep.subr.bf16.mxu0 0
        %5792 = vmatpush1.bf16.msra.mxu0 0
        %5793 = vmatprep.subr.bf16.mxu0 0
        %5794 = vmatpush1.bf16.msra.mxu0 0
        %5795 = vmatprep.subr.bf16.mxu0 0
        %5796 = vmatpush1.bf16.msra.mxu0 0
        %5797 = vmatprep.subr.bf16.mxu0 0
        %5798 = vmatpush1.bf16.msra.mxu0 0
        %5799 = vmatprep.subr.bf16.mxu0 0
        %5800 = vmatpush1.bf16.msra.mxu0 %v5783
        %5801 = vmatprep.subr.bf16.mxu0 0
        %5802 = vmatpush2.bf16.msra.mxu0 0
        %5803 = vmatprep.subr.bf16.mxu0 0
        %5804 = vmatpush2.bf16.msra.mxu0 0
        %5805 = vmatprep.subr.bf16.mxu0 0
        %5806 = vmatpush2.bf16.msra.mxu0 0
        %5807 = vmatprep.subr.bf16.mxu0 0
        %5808 = vmatpush2.bf16.msra.mxu0 0
        %5809 = vmatprep.subr.bf16.mxu0 0
        %5810 = vmatpush2.bf16.msra.mxu0 0
        %5811 = vmatprep.subr.bf16.mxu0 0
        %5812 = vmatpush2.bf16.msra.mxu0 0
        %5813 = vmatprep.subr.bf16.mxu0 0
        %5814 = vmatpush2.bf16.msra.mxu0 0
        %5815 = vmatprep.subr.bf16.mxu0 0
        %5816 = vmatpush2.bf16.msra.mxu0 0
        %5817 = vmatprep.mubr.bf16.mxu0 0
        %5818 = vmatmul.mubr.bf16.gmra.mxu0 %v5780
        %v5819 = vpop.f32.mrf.mxu0
        %v5820 = vadd.f32 0.0, %v5819
        %v5821 = vpop.f32.mrf.mxu0
        %v5822 = vpop.f32.mrf.mxu0
        %v5823 = vpop.f32.mrf.mxu0
        %5824 = vdwg.mxu0
        %v5826 = vsel %vm4687, %v5400, 0
        %v5829 = vsel %vm5459, %v1638, 0
        %5831 = vmatprep.subr.bf16.mxu0 0
        %5832 = vmatpush1.bf16.msra.mxu0 0
        %5833 = vmatprep.subr.bf16.mxu0 0
        %5834 = vmatpush1.bf16.msra.mxu0 0
        %5835 = vmatprep.subr.bf16.mxu0 0
        %5836 = vmatpush1.bf16.msra.mxu0 0
        %5837 = vmatprep.subr.bf16.mxu0 0
        %5838 = vmatpush1.bf16.msra.mxu0 0
        %5839 = vmatprep.subr.bf16.mxu0 0
        %5840 = vmatpush1.bf16.msra.mxu0 0
        %5841 = vmatprep.subr.bf16.mxu0 0
        %5842 = vmatpush1.bf16.msra.mxu0 0
        %5843 = vmatprep.subr.bf16.mxu0 0
        %5844 = vmatpush1.bf16.msra.mxu0 0
        %5845 = vmatprep.subr.bf16.mxu0 0
        %5846 = vmatpush1.bf16.msra.mxu0 %v5829
        %5847 = vmatprep.subr.bf16.mxu0 0
        %5848 = vmatpush2.bf16.msra.mxu0 0
        %5849 = vmatprep.subr.bf16.mxu0 0
        %5850 = vmatpush2.bf16.msra.mxu0 0
        %5851 = vmatprep.subr.bf16.mxu0 0
        %5852 = vmatpush2.bf16.msra.mxu0 0
        %5853 = vmatprep.subr.bf16.mxu0 0
        %5854 = vmatpush2.bf16.msra.mxu0 0
        %5855 = vmatprep.subr.bf16.mxu0 0
        %5856 = vmatpush2.bf16.msra.mxu0 0
        %5857 = vmatprep.subr.bf16.mxu0 0
        %5858 = vmatpush2.bf16.msra.mxu0 0
        %5859 = vmatprep.subr.bf16.mxu0 0
        %5860 = vmatpush2.bf16.msra.mxu0 0
        %5861 = vmatprep.subr.bf16.mxu0 0
        %5862 = vmatpush2.bf16.msra.mxu0 0
        %5863 = vmatprep.mubr.bf16.mxu0 0
        %5864 = vmatmul.mubr.bf16.gmra.mxu0 %v5826
        %v5865 = vpop.f32.mrf.mxu0
        %v5866 = vadd.f32 0.0, %v5865
        %v5867 = vpop.f32.mrf.mxu0
        %v5868 = vpop.f32.mrf.mxu0
        %v5869 = vpop.f32.mrf.mxu0
        %5870 = vdwg.mxu0
        %v5872 = vsel %vm4687, %v5401, 0
        %v5875 = vsel %vm5459, %v1639, 0
        %5877 = vmatprep.subr.bf16.mxu0 0
        %5878 = vmatpush1.bf16.msra.mxu0 0
        %5879 = vmatprep.subr.bf16.mxu0 0
        %5880 = vmatpush1.bf16.msra.mxu0 0
        %5881 = vmatprep.subr.bf16.mxu0 0
        %5882 = vmatpush1.bf16.msra.mxu0 0
        %5883 = vmatprep.subr.bf16.mxu0 0
        %5884 = vmatpush1.bf16.msra.mxu0 0
        %5885 = vmatprep.subr.bf16.mxu0 0
        %5886 = vmatpush1.bf16.msra.mxu0 0
        %5887 = vmatprep.subr.bf16.mxu0 0
        %5888 = vmatpush1.bf16.msra.mxu0 0
        %5889 = vmatprep.subr.bf16.mxu0 0
        %5890 = vmatpush1.bf16.msra.mxu0 0
        %5891 = vmatprep.subr.bf16.mxu0 0
        %5892 = vmatpush1.bf16.msra.mxu0 %v5875
        %5893 = vmatprep.subr.bf16.mxu0 0
        %5894 = vmatpush2.bf16.msra.mxu0 0
        %5895 = vmatprep.subr.bf16.mxu0 0
        %5896 = vmatpush2.bf16.msra.mxu0 0
        %5897 = vmatprep.subr.bf16.mxu0 0
        %5898 = vmatpush2.bf16.msra.mxu0 0
        %5899 = vmatprep.subr.bf16.mxu0 0
        %5900 = vmatpush2.bf16.msra.mxu0 0
        %5901 = vmatprep.subr.bf16.mxu0 0
        %5902 = vmatpush2.bf16.msra.mxu0 0
        %5903 = vmatprep.subr.bf16.mxu0 0
        %5904 = vmatpush2.bf16.msra.mxu0 0
        %5905 = vmatprep.subr.bf16.mxu0 0
        %5906 = vmatpush2.bf16.msra.mxu0 0
        %5907 = vmatprep.subr.bf16.mxu0 0
        %5908 = vmatpush2.bf16.msra.mxu0 0
        %5909 = vmatprep.mubr.bf16.mxu0 0
        %5910 = vmatmul.mubr.bf16.gmra.mxu0 %v5872
        %v5911 = vpop.f32.mrf.mxu0
        %v5912 = vadd.f32 0.0, %v5911
        %v5913 = vpop.f32.mrf.mxu0
        %v5914 = vpop.f32.mrf.mxu0
        %v5915 = vpop.f32.mrf.mxu0
        %5916 = vdwg.mxu0
        %v5918 = vsel %vm4687, %v5402, 0
        %v5921 = vsel %vm5459, %v1640, 0
        %5923 = vmatprep.subr.bf16.mxu0 0
        %5924 = vmatpush1.bf16.msra.mxu0 0
        %5925 = vmatprep.subr.bf16.mxu0 0
        %5926 = vmatpush1.bf16.msra.mxu0 0
        %5927 = vmatprep.subr.bf16.mxu0 0
        %5928 = vmatpush1.bf16.msra.mxu0 0
        %5929 = vmatprep.subr.bf16.mxu0 0
        %5930 = vmatpush1.bf16.msra.mxu0 0
        %5931 = vmatprep.subr.bf16.mxu0 0
        %5932 = vmatpush1.bf16.msra.mxu0 0
        %5933 = vmatprep.subr.bf16.mxu0 0
        %5934 = vmatpush1.bf16.msra.mxu0 0
        %5935 = vmatprep.subr.bf16.mxu0 0
        %5936 = vmatpush1.bf16.msra.mxu0 0
        %5937 = vmatprep.subr.bf16.mxu0 0
        %5938 = vmatpush1.bf16.msra.mxu0 %v5921
        %5939 = vmatprep.subr.bf16.mxu0 0
        %5940 = vmatpush2.bf16.msra.mxu0 0
        %5941 = vmatprep.subr.bf16.mxu0 0
        %5942 = vmatpush2.bf16.msra.mxu0 0
        %5943 = vmatprep.subr.bf16.mxu0 0
        %5944 = vmatpush2.bf16.msra.mxu0 0
        %5945 = vmatprep.subr.bf16.mxu0 0
        %5946 = vmatpush2.bf16.msra.mxu0 0
        %5947 = vmatprep.subr.bf16.mxu0 0
        %5948 = vmatpush2.bf16.msra.mxu0 0
        %5949 = vmatprep.subr.bf16.mxu0 0
        %5950 = vmatpush2.bf16.msra.mxu0 0
        %5951 = vmatprep.subr.bf16.mxu0 0
        %5952 = vmatpush2.bf16.msra.mxu0 0
        %5953 = vmatprep.subr.bf16.mxu0 0
        %5954 = vmatpush2.bf16.msra.mxu0 0
        %5955 = vmatprep.mubr.bf16.mxu0 0
        %5956 = vmatmul.mubr.bf16.gmra.mxu0 %v5918
        %v5957 = vpop.f32.mrf.mxu0
        %v5958 = vadd.f32 0.0, %v5957
        %v5959 = vpop.f32.mrf.mxu0
        %v5960 = vpop.f32.mrf.mxu0
        %v5961 = vpop.f32.mrf.mxu0
        %5962 = vdwg.mxu0
        %v5964 = vsel %vm4687, %v5403, 0
        %v5967 = vsel %vm5459, %v1641, 0
        %5969 = vmatprep.subr.bf16.mxu0 0
        %5970 = vmatpush1.bf16.msra.mxu0 0
        %5971 = vmatprep.subr.bf16.mxu0 0
        %5972 = vmatpush1.bf16.msra.mxu0 0
        %5973 = vmatprep.subr.bf16.mxu0 0
        %5974 = vmatpush1.bf16.msra.mxu0 0
        %5975 = vmatprep.subr.bf16.mxu0 0
        %5976 = vmatpush1.bf16.msra.mxu0 0
        %5977 = vmatprep.subr.bf16.mxu0 0
        %5978 = vmatpush1.bf16.msra.mxu0 0
        %5979 = vmatprep.subr.bf16.mxu0 0
        %5980 = vmatpush1.bf16.msra.mxu0 0
        %5981 = vmatprep.subr.bf16.mxu0 0
        %5982 = vmatpush1.bf16.msra.mxu0 0
        %5983 = vmatprep.subr.bf16.mxu0 0
        %5984 = vmatpush1.bf16.msra.mxu0 %v5967
        %5985 = vmatprep.subr.bf16.mxu0 0
        %5986 = vmatpush2.bf16.msra.mxu0 0
        %5987 = vmatprep.subr.bf16.mxu0 0
        %5988 = vmatpush2.bf16.msra.mxu0 0
        %5989 = vmatprep.subr.bf16.mxu0 0
        %5990 = vmatpush2.bf16.msra.mxu0 0
        %5991 = vmatprep.subr.bf16.mxu0 0
        %5992 = vmatpush2.bf16.msra.mxu0 0
        %5993 = vmatprep.subr.bf16.mxu0 0
        %5994 = vmatpush2.bf16.msra.mxu0 0
        %5995 = vmatprep.subr.bf16.mxu0 0
        %5996 = vmatpush2.bf16.msra.mxu0 0
        %5997 = vmatprep.subr.bf16.mxu0 0
        %5998 = vmatpush2.bf16.msra.mxu0 0
        %5999 = vmatprep.subr.bf16.mxu0 0
        %6000 = vmatpush2.bf16.msra.mxu0 0
        %6001 = vmatprep.mubr.bf16.mxu0 0
        %6002 = vmatmul.mubr.bf16.gmra.mxu0 %v5964
        %v6003 = vpop.f32.mrf.mxu0
        %v6004 = vadd.f32 0.0, %v6003
        %v6005 = vpop.f32.mrf.mxu0
        %v6006 = vpop.f32.mrf.mxu0
        %v6007 = vpop.f32.mrf.mxu0
        %6008 = vdwg.mxu0
        %v6010 = vsel %vm4687, %v5404, 0
        %v6013 = vsel %vm5459, %v1642, 0
        %6015 = vmatprep.subr.bf16.mxu0 0
        %6016 = vmatpush1.bf16.msra.mxu0 0
        %6017 = vmatprep.subr.bf16.mxu0 0
        %6018 = vmatpush1.bf16.msra.mxu0 0
        %6019 = vmatprep.subr.bf16.mxu0 0
        %6020 = vmatpush1.bf16.msra.mxu0 0
        %6021 = vmatprep.subr.bf16.mxu0 0
        %6022 = vmatpush1.bf16.msra.mxu0 0
        %6023 = vmatprep.subr.bf16.mxu0 0
        %6024 = vmatpush1.bf16.msra.mxu0 0
        %6025 = vmatprep.subr.bf16.mxu0 0
        %6026 = vmatpush1.bf16.msra.mxu0 0
        %6027 = vmatprep.subr.bf16.mxu0 0
        %6028 = vmatpush1.bf16.msra.mxu0 0
        %6029 = vmatprep.subr.bf16.mxu0 0
        %6030 = vmatpush1.bf16.msra.mxu0 %v6013
        %6031 = vmatprep.subr.bf16.mxu0 0
        %6032 = vmatpush2.bf16.msra.mxu0 0
        %6033 = vmatprep.subr.bf16.mxu0 0
        %6034 = vmatpush2.bf16.msra.mxu0 0
        %6035 = vmatprep.subr.bf16.mxu0 0
        %6036 = vmatpush2.bf16.msra.mxu0 0
        %6037 = vmatprep.subr.bf16.mxu0 0
        %6038 = vmatpush2.bf16.msra.mxu0 0
        %6039 = vmatprep.subr.bf16.mxu0 0
        %6040 = vmatpush2.bf16.msra.mxu0 0
        %6041 = vmatprep.subr.bf16.mxu0 0
        %6042 = vmatpush2.bf16.msra.mxu0 0
        %6043 = vmatprep.subr.bf16.mxu0 0
        %6044 = vmatpush2.bf16.msra.mxu0 0
        %6045 = vmatprep.subr.bf16.mxu0 0
        %6046 = vmatpush2.bf16.msra.mxu0 0
        %6047 = vmatprep.mubr.bf16.mxu0 0
        %6048 = vmatmul.mubr.bf16.gmra.mxu0 %v6010
        %v6049 = vpop.f32.mrf.mxu0
        %v6050 = vadd.f32 0.0, %v6049
        %v6051 = vpop.f32.mrf.mxu0
        %v6052 = vpop.f32.mrf.mxu0
        %v6053 = vpop.f32.mrf.mxu0
        %6054 = vdwg.mxu0
        %v6056 = vsel %vm4687, %v5405, 0
        %v6059 = vsel %vm5459, %v1643, 0
        %6061 = vmatprep.subr.bf16.mxu0 0
        %6062 = vmatpush1.bf16.msra.mxu0 0
        %6063 = vmatprep.subr.bf16.mxu0 0
        %6064 = vmatpush1.bf16.msra.mxu0 0
        %6065 = vmatprep.subr.bf16.mxu0 0
        %6066 = vmatpush1.bf16.msra.mxu0 0
        %6067 = vmatprep.subr.bf16.mxu0 0
        %6068 = vmatpush1.bf16.msra.mxu0 0
        %6069 = vmatprep.subr.bf16.mxu0 0
        %6070 = vmatpush1.bf16.msra.mxu0 0
        %6071 = vmatprep.subr.bf16.mxu0 0
        %6072 = vmatpush1.bf16.msra.mxu0 0
        %6073 = vmatprep.subr.bf16.mxu0 0
        %6074 = vmatpush1.bf16.msra.mxu0 0
        %6075 = vmatprep.subr.bf16.mxu0 0
        %6076 = vmatpush1.bf16.msra.mxu0 %v6059
        %6077 = vmatprep.subr.bf16.mxu0 0
        %6078 = vmatpush2.bf16.msra.mxu0 0
        %6079 = vmatprep.subr.bf16.mxu0 0
        %6080 = vmatpush2.bf16.msra.mxu0 0
        %6081 = vmatprep.subr.bf16.mxu0 0
        %6082 = vmatpush2.bf16.msra.mxu0 0
        %6083 = vmatprep.subr.bf16.mxu0 0
        %6084 = vmatpush2.bf16.msra.mxu0 0
        %6085 = vmatprep.subr.bf16.mxu0 0
        %6086 = vmatpush2.bf16.msra.mxu0 0
        %6087 = vmatprep.subr.bf16.mxu0 0
        %6088 = vmatpush2.bf16.msra.mxu0 0
        %6089 = vmatprep.subr.bf16.mxu0 0
        %6090 = vmatpush2.bf16.msra.mxu0 0
        %6091 = vmatprep.subr.bf16.mxu0 0
        %6092 = vmatpush2.bf16.msra.mxu0 0
        %6093 = vmatprep.mubr.bf16.mxu0 0
        %6094 = vmatmul.mubr.bf16.gmra.mxu0 %v6056
        %v6095 = vpop.f32.mrf.mxu0
        %v6096 = vadd.f32 0.0, %v6095
        %v6097 = vpop.f32.mrf.mxu0
        %v6098 = vpop.f32.mrf.mxu0
        %v6099 = vpop.f32.mrf.mxu0
        %6100 = vdwg.mxu0
        %v6102 = vsel %vm4687, %v5406, 0
        %v6105 = vsel %vm5459, %v1644, 0
        %6107 = vmatprep.subr.bf16.mxu0 0
        %6108 = vmatpush1.bf16.msra.mxu0 0
        %6109 = vmatprep.subr.bf16.mxu0 0
        %6110 = vmatpush1.bf16.msra.mxu0 0
        %6111 = vmatprep.subr.bf16.mxu0 0
        %6112 = vmatpush1.bf16.msra.mxu0 0
        %6113 = vmatprep.subr.bf16.mxu0 0
        %6114 = vmatpush1.bf16.msra.mxu0 0
        %6115 = vmatprep.subr.bf16.mxu0 0
        %6116 = vmatpush1.bf16.msra.mxu0 0
        %6117 = vmatprep.subr.bf16.mxu0 0
        %6118 = vmatpush1.bf16.msra.mxu0 0
        %6119 = vmatprep.subr.bf16.mxu0 0
        %6120 = vmatpush1.bf16.msra.mxu0 0
        %6121 = vmatprep.subr.bf16.mxu0 0
        %6122 = vmatpush1.bf16.msra.mxu0 %v6105
        %6123 = vmatprep.subr.bf16.mxu0 0
        %6124 = vmatpush2.bf16.msra.mxu0 0
        %6125 = vmatprep.subr.bf16.mxu0 0
        %6126 = vmatpush2.bf16.msra.mxu0 0
        %6127 = vmatprep.subr.bf16.mxu0 0
        %6128 = vmatpush2.bf16.msra.mxu0 0
        %6129 = vmatprep.subr.bf16.mxu0 0
        %6130 = vmatpush2.bf16.msra.mxu0 0
        %6131 = vmatprep.subr.bf16.mxu0 0
        %6132 = vmatpush2.bf16.msra.mxu0 0
        %6133 = vmatprep.subr.bf16.mxu0 0
        %6134 = vmatpush2.bf16.msra.mxu0 0
        %6135 = vmatprep.subr.bf16.mxu0 0
        %6136 = vmatpush2.bf16.msra.mxu0 0
        %6137 = vmatprep.subr.bf16.mxu0 0
        %6138 = vmatpush2.bf16.msra.mxu0 0
        %6139 = vmatprep.mubr.bf16.mxu0 0
        %6140 = vmatmul.mubr.bf16.gmra.mxu0 %v6102
        %v6141 = vpop.f32.mrf.mxu0
        %v6142 = vadd.f32 0.0, %v6141
        %v6143 = vpop.f32.mrf.mxu0
        %v6144 = vpop.f32.mrf.mxu0
        %v6145 = vpop.f32.mrf.mxu0
        %6146 = vdwg.mxu0
        %v6148 = vsel %vm4687, %v5407, 0
        %v6151 = vsel %vm5459, %v1645, 0
        %6153 = vmatprep.subr.bf16.mxu0 0
        %6154 = vmatpush1.bf16.msra.mxu0 0
        %6155 = vmatprep.subr.bf16.mxu0 0
        %6156 = vmatpush1.bf16.msra.mxu0 0
        %6157 = vmatprep.subr.bf16.mxu0 0
        %6158 = vmatpush1.bf16.msra.mxu0 0
        %6159 = vmatprep.subr.bf16.mxu0 0
        %6160 = vmatpush1.bf16.msra.mxu0 0
        %6161 = vmatprep.subr.bf16.mxu0 0
        %6162 = vmatpush1.bf16.msra.mxu0 0
        %6163 = vmatprep.subr.bf16.mxu0 0
        %6164 = vmatpush1.bf16.msra.mxu0 0
        %6165 = vmatprep.subr.bf16.mxu0 0
        %6166 = vmatpush1.bf16.msra.mxu0 0
        %6167 = vmatprep.subr.bf16.mxu0 0
        %6168 = vmatpush1.bf16.msra.mxu0 %v6151
        %6169 = vmatprep.subr.bf16.mxu0 0
        %6170 = vmatpush2.bf16.msra.mxu0 0
        %6171 = vmatprep.subr.bf16.mxu0 0
        %6172 = vmatpush2.bf16.msra.mxu0 0
        %6173 = vmatprep.subr.bf16.mxu0 0
        %6174 = vmatpush2.bf16.msra.mxu0 0
        %6175 = vmatprep.subr.bf16.mxu0 0
        %6176 = vmatpush2.bf16.msra.mxu0 0
        %6177 = vmatprep.subr.bf16.mxu0 0
        %6178 = vmatpush2.bf16.msra.mxu0 0
        %6179 = vmatprep.subr.bf16.mxu0 0
        %6180 = vmatpush2.bf16.msra.mxu0 0
        %6181 = vmatprep.subr.bf16.mxu0 0
        %6182 = vmatpush2.bf16.msra.mxu0 0
        %6183 = vmatprep.subr.bf16.mxu0 0
        %6184 = vmatpush2.bf16.msra.mxu0 0
        %6185 = vmatprep.mubr.bf16.mxu0 0
        %6186 = vmatmul.mubr.bf16.gmra.mxu0 %v6148
        %v6187 = vpop.f32.mrf.mxu0
        %v6188 = vadd.f32 0.0, %v6187
        %v6189 = vpop.f32.mrf.mxu0
        %v6190 = vpop.f32.mrf.mxu0
        %v6191 = vpop.f32.mrf.mxu0
        %6192 = vdwg.mxu0
        %v6194 = vsel %vm4687, %v5408, 0
        %v6197 = vsel %vm5459, %v1647, 0
        %6199 = vmatprep.subr.bf16.mxu0 0
        %6200 = vmatpush1.bf16.msra.mxu0 0
        %6201 = vmatprep.subr.bf16.mxu0 0
        %6202 = vmatpush1.bf16.msra.mxu0 0
        %6203 = vmatprep.subr.bf16.mxu0 0
        %6204 = vmatpush1.bf16.msra.mxu0 0
        %6205 = vmatprep.subr.bf16.mxu0 0
        %6206 = vmatpush1.bf16.msra.mxu0 0
        %6207 = vmatprep.subr.bf16.mxu0 0
        %6208 = vmatpush1.bf16.msra.mxu0 0
        %6209 = vmatprep.subr.bf16.mxu0 0
        %6210 = vmatpush1.bf16.msra.mxu0 0
        %6211 = vmatprep.subr.bf16.mxu0 0
        %6212 = vmatpush1.bf16.msra.mxu0 0
        %6213 = vmatprep.subr.bf16.mxu0 0
        %6214 = vmatpush1.bf16.msra.mxu0 %v6197
        %6215 = vmatprep.subr.bf16.mxu0 0
        %6216 = vmatpush2.bf16.msra.mxu0 0
        %6217 = vmatprep.subr.bf16.mxu0 0
        %6218 = vmatpush2.bf16.msra.mxu0 0
        %6219 = vmatprep.subr.bf16.mxu0 0
        %6220 = vmatpush2.bf16.msra.mxu0 0
        %6221 = vmatprep.subr.bf16.mxu0 0
        %6222 = vmatpush2.bf16.msra.mxu0 0
        %6223 = vmatprep.subr.bf16.mxu0 0
        %6224 = vmatpush2.bf16.msra.mxu0 0
        %6225 = vmatprep.subr.bf16.mxu0 0
        %6226 = vmatpush2.bf16.msra.mxu0 0
        %6227 = vmatprep.subr.bf16.mxu0 0
        %6228 = vmatpush2.bf16.msra.mxu0 0
        %6229 = vmatprep.subr.bf16.mxu0 0
        %6230 = vmatpush2.bf16.msra.mxu0 0
        %6231 = vmatprep.mubr.bf16.mxu0 0
        %6232 = vmatmul.mubr.bf16.gmra.mxu0 %v6194
        %v6233 = vpop.f32.mrf.mxu0
        %v6234 = vadd.f32 0.0, %v6233
        %v6235 = vpop.f32.mrf.mxu0
        %v6236 = vpop.f32.mrf.mxu0
        %v6237 = vpop.f32.mrf.mxu0
        %6238 = vdwg.mxu0
        %v6240 = vsel %vm4687, %v5409, 0
        %v6243 = vsel %vm5459, %v1649, 0
        %6245 = vmatprep.subr.bf16.mxu0 0
        %6246 = vmatpush1.bf16.msra.mxu0 0
        %6247 = vmatprep.subr.bf16.mxu0 0
        %6248 = vmatpush1.bf16.msra.mxu0 0
        %6249 = vmatprep.subr.bf16.mxu0 0
        %6250 = vmatpush1.bf16.msra.mxu0 0
        %6251 = vmatprep.subr.bf16.mxu0 0
        %6252 = vmatpush1.bf16.msra.mxu0 0
        %6253 = vmatprep.subr.bf16.mxu0 0
        %6254 = vmatpush1.bf16.msra.mxu0 0
        %6255 = vmatprep.subr.bf16.mxu0 0
        %6256 = vmatpush1.bf16.msra.mxu0 0
        %6257 = vmatprep.subr.bf16.mxu0 0
        %6258 = vmatpush1.bf16.msra.mxu0 0
        %6259 = vmatprep.subr.bf16.mxu0 0
        %6260 = vmatpush1.bf16.msra.mxu0 %v6243
        %6261 = vmatprep.subr.bf16.mxu0 0
        %6262 = vmatpush2.bf16.msra.mxu0 0
        %6263 = vmatprep.subr.bf16.mxu0 0
        %6264 = vmatpush2.bf16.msra.mxu0 0
        %6265 = vmatprep.subr.bf16.mxu0 0
        %6266 = vmatpush2.bf16.msra.mxu0 0
        %6267 = vmatprep.subr.bf16.mxu0 0
        %6268 = vmatpush2.bf16.msra.mxu0 0
        %6269 = vmatprep.subr.bf16.mxu0 0
        %6270 = vmatpush2.bf16.msra.mxu0 0
        %6271 = vmatprep.subr.bf16.mxu0 0
        %6272 = vmatpush2.bf16.msra.mxu0 0
        %6273 = vmatprep.subr.bf16.mxu0 0
        %6274 = vmatpush2.bf16.msra.mxu0 0
        %6275 = vmatprep.subr.bf16.mxu0 0
        %6276 = vmatpush2.bf16.msra.mxu0 0
        %6277 = vmatprep.mubr.bf16.mxu0 0
        %6278 = vmatmul.mubr.bf16.gmra.mxu0 %v6240
        %v6279 = vpop.f32.mrf.mxu0
        %v6280 = vadd.f32 0.0, %v6279
        %v6281 = vpop.f32.mrf.mxu0
        %v6282 = vpop.f32.mrf.mxu0
        %v6283 = vpop.f32.mrf.mxu0
        %6284 = vdwg.mxu0
        %v6286 = vsel %vm4687, %v5410, 0
        %v6289 = vsel %vm5459, %v1651, 0
        %6291 = vmatprep.subr.bf16.mxu0 0
        %6292 = vmatpush1.bf16.msra.mxu0 0
        %6293 = vmatprep.subr.bf16.mxu0 0
        %6294 = vmatpush1.bf16.msra.mxu0 0
        %6295 = vmatprep.subr.bf16.mxu0 0
        %6296 = vmatpush1.bf16.msra.mxu0 0
        %6297 = vmatprep.subr.bf16.mxu0 0
        %6298 = vmatpush1.bf16.msra.mxu0 0
        %6299 = vmatprep.subr.bf16.mxu0 0
        %6300 = vmatpush1.bf16.msra.mxu0 0
        %6301 = vmatprep.subr.bf16.mxu0 0
        %6302 = vmatpush1.bf16.msra.mxu0 0
        %6303 = vmatprep.subr.bf16.mxu0 0
        %6304 = vmatpush1.bf16.msra.mxu0 0
        %6305 = vmatprep.subr.bf16.mxu0 0
        %6306 = vmatpush1.bf16.msra.mxu0 %v6289
        %6307 = vmatprep.subr.bf16.mxu0 0
        %6308 = vmatpush2.bf16.msra.mxu0 0
        %6309 = vmatprep.subr.bf16.mxu0 0
        %6310 = vmatpush2.bf16.msra.mxu0 0
        %6311 = vmatprep.subr.bf16.mxu0 0
        %6312 = vmatpush2.bf16.msra.mxu0 0
        %6313 = vmatprep.subr.bf16.mxu0 0
        %6314 = vmatpush2.bf16.msra.mxu0 0
        %6315 = vmatprep.subr.bf16.mxu0 0
        %6316 = vmatpush2.bf16.msra.mxu0 0
        %6317 = vmatprep.subr.bf16.mxu0 0
        %6318 = vmatpush2.bf16.msra.mxu0 0
        %6319 = vmatprep.subr.bf16.mxu0 0
        %6320 = vmatpush2.bf16.msra.mxu0 0
        %6321 = vmatprep.subr.bf16.mxu0 0
        %6322 = vmatpush2.bf16.msra.mxu0 0
        %6323 = vmatprep.mubr.bf16.mxu0 0
        %6324 = vmatmul.mubr.bf16.gmra.mxu0 %v6286
        %v6325 = vpop.f32.mrf.mxu0
        %v6326 = vadd.f32 0.0, %v6325
        %v6327 = vpop.f32.mrf.mxu0
        %v6328 = vpop.f32.mrf.mxu0
        %v6329 = vpop.f32.mrf.mxu0
        %6330 = vdwg.mxu0
        %v6332 = vsel %vm4687, %v5411, 0
        %v6335 = vsel %vm5459, %v1653, 0
        %6337 = vmatprep.subr.bf16.mxu0 0
        %6338 = vmatpush1.bf16.msra.mxu0 0
        %6339 = vmatprep.subr.bf16.mxu0 0
        %6340 = vmatpush1.bf16.msra.mxu0 0
        %6341 = vmatprep.subr.bf16.mxu0 0
        %6342 = vmatpush1.bf16.msra.mxu0 0
        %6343 = vmatprep.subr.bf16.mxu0 0
        %6344 = vmatpush1.bf16.msra.mxu0 0
        %6345 = vmatprep.subr.bf16.mxu0 0
        %6346 = vmatpush1.bf16.msra.mxu0 0
        %6347 = vmatprep.subr.bf16.mxu0 0
        %6348 = vmatpush1.bf16.msra.mxu0 0
        %6349 = vmatprep.subr.bf16.mxu0 0
        %6350 = vmatpush1.bf16.msra.mxu0 0
        %6351 = vmatprep.subr.bf16.mxu0 0
        %6352 = vmatpush1.bf16.msra.mxu0 %v6335
        %6353 = vmatprep.subr.bf16.mxu0 0
        %6354 = vmatpush2.bf16.msra.mxu0 0
        %6355 = vmatprep.subr.bf16.mxu0 0
        %6356 = vmatpush2.bf16.msra.mxu0 0
        %6357 = vmatprep.subr.bf16.mxu0 0
        %6358 = vmatpush2.bf16.msra.mxu0 0
        %6359 = vmatprep.subr.bf16.mxu0 0
        %6360 = vmatpush2.bf16.msra.mxu0 0
        %6361 = vmatprep.subr.bf16.mxu0 0
        %6362 = vmatpush2.bf16.msra.mxu0 0
        %6363 = vmatprep.subr.bf16.mxu0 0
        %6364 = vmatpush2.bf16.msra.mxu0 0
        %6365 = vmatprep.subr.bf16.mxu0 0
        %6366 = vmatpush2.bf16.msra.mxu0 0
        %6367 = vmatprep.subr.bf16.mxu0 0
        %6368 = vmatpush2.bf16.msra.mxu0 0
        %6369 = vmatprep.mubr.bf16.mxu0 0
        %6370 = vmatmul.mubr.bf16.gmra.mxu0 %v6332
        %v6371 = vpop.f32.mrf.mxu0
        %v6372 = vadd.f32 0.0, %v6371
        %v6373 = vpop.f32.mrf.mxu0
        %v6374 = vpop.f32.mrf.mxu0
        %v6375 = vpop.f32.mrf.mxu0
        %6376 = vdwg.mxu0
        %v6378 = vsel %vm4687, %v5412, 0
        %v6381 = vsel %vm5459, %v1655, 0
        %6383 = vmatprep.subr.bf16.mxu0 0
        %6384 = vmatpush1.bf16.msra.mxu0 0
        %6385 = vmatprep.subr.bf16.mxu0 0
        %6386 = vmatpush1.bf16.msra.mxu0 0
        %6387 = vmatprep.subr.bf16.mxu0 0
        %6388 = vmatpush1.bf16.msra.mxu0 0
        %6389 = vmatprep.subr.bf16.mxu0 0
        %6390 = vmatpush1.bf16.msra.mxu0 0
        %6391 = vmatprep.subr.bf16.mxu0 0
        %6392 = vmatpush1.bf16.msra.mxu0 0
        %6393 = vmatprep.subr.bf16.mxu0 0
        %6394 = vmatpush1.bf16.msra.mxu0 0
        %6395 = vmatprep.subr.bf16.mxu0 0
        %6396 = vmatpush1.bf16.msra.mxu0 0
        %6397 = vmatprep.subr.bf16.mxu0 0
        %6398 = vmatpush1.bf16.msra.mxu0 %v6381
        %6399 = vmatprep.subr.bf16.mxu0 0
        %6400 = vmatpush2.bf16.msra.mxu0 0
        %6401 = vmatprep.subr.bf16.mxu0 0
        %6402 = vmatpush2.bf16.msra.mxu0 0
        %6403 = vmatprep.subr.bf16.mxu0 0
        %6404 = vmatpush2.bf16.msra.mxu0 0
        %6405 = vmatprep.subr.bf16.mxu0 0
        %6406 = vmatpush2.bf16.msra.mxu0 0
        %6407 = vmatprep.subr.bf16.mxu0 0
        %6408 = vmatpush2.bf16.msra.mxu0 0
        %6409 = vmatprep.subr.bf16.mxu0 0
        %6410 = vmatpush2.bf16.msra.mxu0 0
        %6411 = vmatprep.subr.bf16.mxu0 0
        %6412 = vmatpush2.bf16.msra.mxu0 0
        %6413 = vmatprep.subr.bf16.mxu0 0
        %6414 = vmatpush2.bf16.msra.mxu0 0
        %6415 = vmatprep.mubr.bf16.mxu0 0
        %6416 = vmatmul.mubr.bf16.gmra.mxu0 %v6378
        %v6417 = vpop.f32.mrf.mxu0
        %v6418 = vadd.f32 0.0, %v6417
        %v6419 = vpop.f32.mrf.mxu0
        %v6420 = vpop.f32.mrf.mxu0
        %v6421 = vpop.f32.mrf.mxu0
        %6422 = vdwg.mxu0
        %v6424 = vsel %vm4687, %v5413, 0
        %v6427 = vsel %vm5459, %v1657, 0
        %6429 = vmatprep.subr.bf16.mxu0 0
        %6430 = vmatpush1.bf16.msra.mxu0 0
        %6431 = vmatprep.subr.bf16.mxu0 0
        %6432 = vmatpush1.bf16.msra.mxu0 0
        %6433 = vmatprep.subr.bf16.mxu0 0
        %6434 = vmatpush1.bf16.msra.mxu0 0
        %6435 = vmatprep.subr.bf16.mxu0 0
        %6436 = vmatpush1.bf16.msra.mxu0 0
        %6437 = vmatprep.subr.bf16.mxu0 0
        %6438 = vmatpush1.bf16.msra.mxu0 0
        %6439 = vmatprep.subr.bf16.mxu0 0
        %6440 = vmatpush1.bf16.msra.mxu0 0
        %6441 = vmatprep.subr.bf16.mxu0 0
        %6442 = vmatpush1.bf16.msra.mxu0 0
        %6443 = vmatprep.subr.bf16.mxu0 0
        %6444 = vmatpush1.bf16.msra.mxu0 %v6427
        %6445 = vmatprep.subr.bf16.mxu0 0
        %6446 = vmatpush2.bf16.msra.mxu0 0
        %6447 = vmatprep.subr.bf16.mxu0 0
        %6448 = vmatpush2.bf16.msra.mxu0 0
        %6449 = vmatprep.subr.bf16.mxu0 0
        %6450 = vmatpush2.bf16.msra.mxu0 0
        %6451 = vmatprep.subr.bf16.mxu0 0
        %6452 = vmatpush2.bf16.msra.mxu0 0
        %6453 = vmatprep.subr.bf16.mxu0 0
        %6454 = vmatpush2.bf16.msra.mxu0 0
        %6455 = vmatprep.subr.bf16.mxu0 0
        %6456 = vmatpush2.bf16.msra.mxu0 0
        %6457 = vmatprep.subr.bf16.mxu0 0
        %6458 = vmatpush2.bf16.msra.mxu0 0
        %6459 = vmatprep.subr.bf16.mxu0 0
        %6460 = vmatpush2.bf16.msra.mxu0 0
        %6461 = vmatprep.mubr.bf16.mxu0 0
        %6462 = vmatmul.mubr.bf16.gmra.mxu0 %v6424
        %v6463 = vpop.f32.mrf.mxu0
        %v6464 = vadd.f32 0.0, %v6463
        %v6465 = vpop.f32.mrf.mxu0
        %v6466 = vpop.f32.mrf.mxu0
        %v6467 = vpop.f32.mrf.mxu0
        %6468 = vdwg.mxu0
        %v6470 = vsel %vm4687, %v5414, 0
        %v6473 = vsel %vm5459, %v1659, 0
        %6475 = vmatprep.subr.bf16.mxu0 0
        %6476 = vmatpush1.bf16.msra.mxu0 0
        %6477 = vmatprep.subr.bf16.mxu0 0
        %6478 = vmatpush1.bf16.msra.mxu0 0
        %6479 = vmatprep.subr.bf16.mxu0 0
        %6480 = vmatpush1.bf16.msra.mxu0 0
        %6481 = vmatprep.subr.bf16.mxu0 0
        %6482 = vmatpush1.bf16.msra.mxu0 0
        %6483 = vmatprep.subr.bf16.mxu0 0
        %6484 = vmatpush1.bf16.msra.mxu0 0
        %6485 = vmatprep.subr.bf16.mxu0 0
        %6486 = vmatpush1.bf16.msra.mxu0 0
        %6487 = vmatprep.subr.bf16.mxu0 0
        %6488 = vmatpush1.bf16.msra.mxu0 0
        %6489 = vmatprep.subr.bf16.mxu0 0
        %6490 = vmatpush1.bf16.msra.mxu0 %v6473
        %6491 = vmatprep.subr.bf16.mxu0 0
        %6492 = vmatpush2.bf16.msra.mxu0 0
        %6493 = vmatprep.subr.bf16.mxu0 0
        %6494 = vmatpush2.bf16.msra.mxu0 0
        %6495 = vmatprep.subr.bf16.mxu0 0
        %6496 = vmatpush2.bf16.msra.mxu0 0
        %6497 = vmatprep.subr.bf16.mxu0 0
        %6498 = vmatpush2.bf16.msra.mxu0 0
        %6499 = vmatprep.subr.bf16.mxu0 0
        %6500 = vmatpush2.bf16.msra.mxu0 0
        %6501 = vmatprep.subr.bf16.mxu0 0
        %6502 = vmatpush2.bf16.msra.mxu0 0
        %6503 = vmatprep.subr.bf16.mxu0 0
        %6504 = vmatpush2.bf16.msra.mxu0 0
        %6505 = vmatprep.subr.bf16.mxu0 0
        %6506 = vmatpush2.bf16.msra.mxu0 0
        %6507 = vmatprep.mubr.bf16.mxu0 0
        %6508 = vmatmul.mubr.bf16.gmra.mxu0 %v6470
        %v6509 = vpop.f32.mrf.mxu0
        %v6510 = vadd.f32 0.0, %v6509
        %v6511 = vpop.f32.mrf.mxu0
        %v6512 = vpop.f32.mrf.mxu0
        %v6513 = vpop.f32.mrf.mxu0
        %6514 = vdwg.mxu0
        %v6516 = vsel %vm4687, %v5415, 0
        %v6519 = vsel %vm5459, %v1661, 0
        %6521 = vmatprep.subr.bf16.mxu0 0
        %6522 = vmatpush1.bf16.msra.mxu0 0
        %6523 = vmatprep.subr.bf16.mxu0 0
        %6524 = vmatpush1.bf16.msra.mxu0 0
        %6525 = vmatprep.subr.bf16.mxu0 0
        %6526 = vmatpush1.bf16.msra.mxu0 0
        %6527 = vmatprep.subr.bf16.mxu0 0
        %6528 = vmatpush1.bf16.msra.mxu0 0
        %6529 = vmatprep.subr.bf16.mxu0 0
        %6530 = vmatpush1.bf16.msra.mxu0 0
        %6531 = vmatprep.subr.bf16.mxu0 0
        %6532 = vmatpush1.bf16.msra.mxu0 0
        %6533 = vmatprep.subr.bf16.mxu0 0
        %6534 = vmatpush1.bf16.msra.mxu0 0
        %6535 = vmatprep.subr.bf16.mxu0 0
        %6536 = vmatpush1.bf16.msra.mxu0 %v6519
        %6537 = vmatprep.subr.bf16.mxu0 0
        %6538 = vmatpush2.bf16.msra.mxu0 0
        %6539 = vmatprep.subr.bf16.mxu0 0
        %6540 = vmatpush2.bf16.msra.mxu0 0
        %6541 = vmatprep.subr.bf16.mxu0 0
        %6542 = vmatpush2.bf16.msra.mxu0 0
        %6543 = vmatprep.subr.bf16.mxu0 0
        %6544 = vmatpush2.bf16.msra.mxu0 0
        %6545 = vmatprep.subr.bf16.mxu0 0
        %6546 = vmatpush2.bf16.msra.mxu0 0
        %6547 = vmatprep.subr.bf16.mxu0 0
        %6548 = vmatpush2.bf16.msra.mxu0 0
        %6549 = vmatprep.subr.bf16.mxu0 0
        %6550 = vmatpush2.bf16.msra.mxu0 0
        %6551 = vmatprep.subr.bf16.mxu0 0
        %6552 = vmatpush2.bf16.msra.mxu0 0
        %6553 = vmatprep.mubr.bf16.mxu0 0
        %6554 = vmatmul.mubr.bf16.gmra.mxu0 %v6516
        %v6555 = vpop.f32.mrf.mxu0
        %v6556 = vadd.f32 0.0, %v6555
        %v6557 = vpop.f32.mrf.mxu0
        %v6558 = vpop.f32.mrf.mxu0
        %v6559 = vpop.f32.mrf.mxu0
        %6560 = vdwg.mxu0
        %v6562 = vsel %vm4687, %v5416, 0
        %v6565 = vsel %vm5459, %v1663, 0
        %6567 = vmatprep.subr.bf16.mxu0 0
        %6568 = vmatpush1.bf16.msra.mxu0 0
        %6569 = vmatprep.subr.bf16.mxu0 0
        %6570 = vmatpush1.bf16.msra.mxu0 0
        %6571 = vmatprep.subr.bf16.mxu0 0
        %6572 = vmatpush1.bf16.msra.mxu0 0
        %6573 = vmatprep.subr.bf16.mxu0 0
        %6574 = vmatpush1.bf16.msra.mxu0 0
        %6575 = vmatprep.subr.bf16.mxu0 0
        %6576 = vmatpush1.bf16.msra.mxu0 0
        %6577 = vmatprep.subr.bf16.mxu0 0
        %6578 = vmatpush1.bf16.msra.mxu0 0
        %6579 = vmatprep.subr.bf16.mxu0 0
        %6580 = vmatpush1.bf16.msra.mxu0 0
        %6581 = vmatprep.subr.bf16.mxu0 0
        %6582 = vmatpush1.bf16.msra.mxu0 %v6565
        %6583 = vmatprep.subr.bf16.mxu0 0
        %6584 = vmatpush2.bf16.msra.mxu0 0
        %6585 = vmatprep.subr.bf16.mxu0 0
        %6586 = vmatpush2.bf16.msra.mxu0 0
        %6587 = vmatprep.subr.bf16.mxu0 0
        %6588 = vmatpush2.bf16.msra.mxu0 0
        %6589 = vmatprep.subr.bf16.mxu0 0
        %6590 = vmatpush2.bf16.msra.mxu0 0
        %6591 = vmatprep.subr.bf16.mxu0 0
        %6592 = vmatpush2.bf16.msra.mxu0 0
        %6593 = vmatprep.subr.bf16.mxu0 0
        %6594 = vmatpush2.bf16.msra.mxu0 0
        %6595 = vmatprep.subr.bf16.mxu0 0
        %6596 = vmatpush2.bf16.msra.mxu0 0
        %6597 = vmatprep.subr.bf16.mxu0 0
        %6598 = vmatpush2.bf16.msra.mxu0 0
        %6599 = vmatprep.mubr.bf16.mxu0 0
        %6600 = vmatmul.mubr.bf16.gmra.mxu0 %v6562
        %v6601 = vpop.f32.mrf.mxu0
        %v6602 = vadd.f32 0.0, %v6601
        %v6603 = vpop.f32.mrf.mxu0
        %v6604 = vpop.f32.mrf.mxu0
        %v6605 = vpop.f32.mrf.mxu0
        %6606 = vdwg.mxu0
        %v6608 = vsel %vm4687, %v5417, 0
        %v6611 = vsel %vm5459, %v1665, 0
        %6613 = vmatprep.subr.bf16.mxu0 0
        %6614 = vmatpush1.bf16.msra.mxu0 0
        %6615 = vmatprep.subr.bf16.mxu0 0
        %6616 = vmatpush1.bf16.msra.mxu0 0
        %6617 = vmatprep.subr.bf16.mxu0 0
        %6618 = vmatpush1.bf16.msra.mxu0 0
        %6619 = vmatprep.subr.bf16.mxu0 0
        %6620 = vmatpush1.bf16.msra.mxu0 0
        %6621 = vmatprep.subr.bf16.mxu0 0
        %6622 = vmatpush1.bf16.msra.mxu0 0
        %6623 = vmatprep.subr.bf16.mxu0 0
        %6624 = vmatpush1.bf16.msra.mxu0 0
        %6625 = vmatprep.subr.bf16.mxu0 0
        %6626 = vmatpush1.bf16.msra.mxu0 0
        %6627 = vmatprep.subr.bf16.mxu0 0
        %6628 = vmatpush1.bf16.msra.mxu0 %v6611
        %6629 = vmatprep.subr.bf16.mxu0 0
        %6630 = vmatpush2.bf16.msra.mxu0 0
        %6631 = vmatprep.subr.bf16.mxu0 0
        %6632 = vmatpush2.bf16.msra.mxu0 0
        %6633 = vmatprep.subr.bf16.mxu0 0
        %6634 = vmatpush2.bf16.msra.mxu0 0
        %6635 = vmatprep.subr.bf16.mxu0 0
        %6636 = vmatpush2.bf16.msra.mxu0 0
        %6637 = vmatprep.subr.bf16.mxu0 0
        %6638 = vmatpush2.bf16.msra.mxu0 0
        %6639 = vmatprep.subr.bf16.mxu0 0
        %6640 = vmatpush2.bf16.msra.mxu0 0
        %6641 = vmatprep.subr.bf16.mxu0 0
        %6642 = vmatpush2.bf16.msra.mxu0 0
        %6643 = vmatprep.subr.bf16.mxu0 0
        %6644 = vmatpush2.bf16.msra.mxu0 0
        %6645 = vmatprep.mubr.bf16.mxu0 0
        %6646 = vmatmul.mubr.bf16.gmra.mxu0 %v6608
        %v6647 = vpop.f32.mrf.mxu0
        %v6648 = vadd.f32 0.0, %v6647
        %v6649 = vpop.f32.mrf.mxu0
        %v6650 = vpop.f32.mrf.mxu0
        %v6651 = vpop.f32.mrf.mxu0
        %6652 = vdwg.mxu0
        %v6654 = vsel %vm4687, %v5418, 0
        %v6657 = vsel %vm5459, %v1667, 0
        %6659 = vmatprep.subr.bf16.mxu0 0
        %6660 = vmatpush1.bf16.msra.mxu0 0
        %6661 = vmatprep.subr.bf16.mxu0 0
        %6662 = vmatpush1.bf16.msra.mxu0 0
        %6663 = vmatprep.subr.bf16.mxu0 0
        %6664 = vmatpush1.bf16.msra.mxu0 0
        %6665 = vmatprep.subr.bf16.mxu0 0
        %6666 = vmatpush1.bf16.msra.mxu0 0
        %6667 = vmatprep.subr.bf16.mxu0 0
        %6668 = vmatpush1.bf16.msra.mxu0 0
        %6669 = vmatprep.subr.bf16.mxu0 0
        %6670 = vmatpush1.bf16.msra.mxu0 0
        %6671 = vmatprep.subr.bf16.mxu0 0
        %6672 = vmatpush1.bf16.msra.mxu0 0
        %6673 = vmatprep.subr.bf16.mxu0 0
        %6674 = vmatpush1.bf16.msra.mxu0 %v6657
        %6675 = vmatprep.subr.bf16.mxu0 0
        %6676 = vmatpush2.bf16.msra.mxu0 0
        %6677 = vmatprep.subr.bf16.mxu0 0
        %6678 = vmatpush2.bf16.msra.mxu0 0
        %6679 = vmatprep.subr.bf16.mxu0 0
        %6680 = vmatpush2.bf16.msra.mxu0 0
        %6681 = vmatprep.subr.bf16.mxu0 0
        %6682 = vmatpush2.bf16.msra.mxu0 0
        %6683 = vmatprep.subr.bf16.mxu0 0
        %6684 = vmatpush2.bf16.msra.mxu0 0
        %6685 = vmatprep.subr.bf16.mxu0 0
        %6686 = vmatpush2.bf16.msra.mxu0 0
        %6687 = vmatprep.subr.bf16.mxu0 0
        %6688 = vmatpush2.bf16.msra.mxu0 0
        %6689 = vmatprep.subr.bf16.mxu0 0
        %6690 = vmatpush2.bf16.msra.mxu0 0
        %6691 = vmatprep.mubr.bf16.mxu0 0
        %6692 = vmatmul.mubr.bf16.gmra.mxu0 %v6654
        %v6693 = vpop.f32.mrf.mxu0
        %v6694 = vadd.f32 0.0, %v6693
        %v6695 = vpop.f32.mrf.mxu0
        %v6696 = vpop.f32.mrf.mxu0
        %v6697 = vpop.f32.mrf.mxu0
        %6698 = vdwg.mxu0
        %v6700 = vsel %vm4687, %v5419, 0
        %v6703 = vsel %vm5459, %v1669, 0
        %6705 = vmatprep.subr.bf16.mxu0 0
        %6706 = vmatpush1.bf16.msra.mxu0 0
        %6707 = vmatprep.subr.bf16.mxu0 0
        %6708 = vmatpush1.bf16.msra.mxu0 0
        %6709 = vmatprep.subr.bf16.mxu0 0
        %6710 = vmatpush1.bf16.msra.mxu0 0
        %6711 = vmatprep.subr.bf16.mxu0 0
        %6712 = vmatpush1.bf16.msra.mxu0 0
        %6713 = vmatprep.subr.bf16.mxu0 0
        %6714 = vmatpush1.bf16.msra.mxu0 0
        %6715 = vmatprep.subr.bf16.mxu0 0
        %6716 = vmatpush1.bf16.msra.mxu0 0
        %6717 = vmatprep.subr.bf16.mxu0 0
        %6718 = vmatpush1.bf16.msra.mxu0 0
        %6719 = vmatprep.subr.bf16.mxu0 0
        %6720 = vmatpush1.bf16.msra.mxu0 %v6703
        %6721 = vmatprep.subr.bf16.mxu0 0
        %6722 = vmatpush2.bf16.msra.mxu0 0
        %6723 = vmatprep.subr.bf16.mxu0 0
        %6724 = vmatpush2.bf16.msra.mxu0 0
        %6725 = vmatprep.subr.bf16.mxu0 0
        %6726 = vmatpush2.bf16.msra.mxu0 0
        %6727 = vmatprep.subr.bf16.mxu0 0
        %6728 = vmatpush2.bf16.msra.mxu0 0
        %6729 = vmatprep.subr.bf16.mxu0 0
        %6730 = vmatpush2.bf16.msra.mxu0 0
        %6731 = vmatprep.subr.bf16.mxu0 0
        %6732 = vmatpush2.bf16.msra.mxu0 0
        %6733 = vmatprep.subr.bf16.mxu0 0
        %6734 = vmatpush2.bf16.msra.mxu0 0
        %6735 = vmatprep.subr.bf16.mxu0 0
        %6736 = vmatpush2.bf16.msra.mxu0 0
        %6737 = vmatprep.mubr.bf16.mxu0 0
        %6738 = vmatmul.mubr.bf16.gmra.mxu0 %v6700
        %v6739 = vpop.f32.mrf.mxu0
        %v6740 = vadd.f32 0.0, %v6739
        %v6741 = vpop.f32.mrf.mxu0
        %v6742 = vpop.f32.mrf.mxu0
        %v6743 = vpop.f32.mrf.mxu0
        %6744 = vdwg.mxu0
        %v6746 = vsel %vm4687, %v5420, 0
        %v6749 = vsel %vm5459, %v1671, 0
        %6751 = vmatprep.subr.bf16.mxu0 0
        %6752 = vmatpush1.bf16.msra.mxu0 0
        %6753 = vmatprep.subr.bf16.mxu0 0
        %6754 = vmatpush1.bf16.msra.mxu0 0
        %6755 = vmatprep.subr.bf16.mxu0 0
        %6756 = vmatpush1.bf16.msra.mxu0 0
        %6757 = vmatprep.subr.bf16.mxu0 0
        %6758 = vmatpush1.bf16.msra.mxu0 0
        %6759 = vmatprep.subr.bf16.mxu0 0
        %6760 = vmatpush1.bf16.msra.mxu0 0
        %6761 = vmatprep.subr.bf16.mxu0 0
        %6762 = vmatpush1.bf16.msra.mxu0 0
        %6763 = vmatprep.subr.bf16.mxu0 0
        %6764 = vmatpush1.bf16.msra.mxu0 0
        %6765 = vmatprep.subr.bf16.mxu0 0
        %6766 = vmatpush1.bf16.msra.mxu0 %v6749
        %6767 = vmatprep.subr.bf16.mxu0 0
        %6768 = vmatpush2.bf16.msra.mxu0 0
        %6769 = vmatprep.subr.bf16.mxu0 0
        %6770 = vmatpush2.bf16.msra.mxu0 0
        %6771 = vmatprep.subr.bf16.mxu0 0
        %6772 = vmatpush2.bf16.msra.mxu0 0
        %6773 = vmatprep.subr.bf16.mxu0 0
        %6774 = vmatpush2.bf16.msra.mxu0 0
        %6775 = vmatprep.subr.bf16.mxu0 0
        %6776 = vmatpush2.bf16.msra.mxu0 0
        %6777 = vmatprep.subr.bf16.mxu0 0
        %6778 = vmatpush2.bf16.msra.mxu0 0
        %6779 = vmatprep.subr.bf16.mxu0 0
        %6780 = vmatpush2.bf16.msra.mxu0 0
        %6781 = vmatprep.subr.bf16.mxu0 0
        %6782 = vmatpush2.bf16.msra.mxu0 0
        %6783 = vmatprep.mubr.bf16.mxu0 0
        %6784 = vmatmul.mubr.bf16.gmra.mxu0 %v6746
        %v6785 = vpop.f32.mrf.mxu0
        %v6786 = vadd.f32 0.0, %v6785
        %v6787 = vpop.f32.mrf.mxu0
        %v6788 = vpop.f32.mrf.mxu0
        %v6789 = vpop.f32.mrf.mxu0
        %6790 = vdwg.mxu0
        %v6792 = vsel %vm4687, %v5421, 0
        %v6795 = vsel %vm5459, %v1673, 0
        %6797 = vmatprep.subr.bf16.mxu0 0
        %6798 = vmatpush1.bf16.msra.mxu0 0
        %6799 = vmatprep.subr.bf16.mxu0 0
        %6800 = vmatpush1.bf16.msra.mxu0 0
        %6801 = vmatprep.subr.bf16.mxu0 0
        %6802 = vmatpush1.bf16.msra.mxu0 0
        %6803 = vmatprep.subr.bf16.mxu0 0
        %6804 = vmatpush1.bf16.msra.mxu0 0
        %6805 = vmatprep.subr.bf16.mxu0 0
        %6806 = vmatpush1.bf16.msra.mxu0 0
        %6807 = vmatprep.subr.bf16.mxu0 0
        %6808 = vmatpush1.bf16.msra.mxu0 0
        %6809 = vmatprep.subr.bf16.mxu0 0
        %6810 = vmatpush1.bf16.msra.mxu0 0
        %6811 = vmatprep.subr.bf16.mxu0 0
        %6812 = vmatpush1.bf16.msra.mxu0 %v6795
        %6813 = vmatprep.subr.bf16.mxu0 0
        %6814 = vmatpush2.bf16.msra.mxu0 0
        %6815 = vmatprep.subr.bf16.mxu0 0
        %6816 = vmatpush2.bf16.msra.mxu0 0
        %6817 = vmatprep.subr.bf16.mxu0 0
        %6818 = vmatpush2.bf16.msra.mxu0 0
        %6819 = vmatprep.subr.bf16.mxu0 0
        %6820 = vmatpush2.bf16.msra.mxu0 0
        %6821 = vmatprep.subr.bf16.mxu0 0
        %6822 = vmatpush2.bf16.msra.mxu0 0
        %6823 = vmatprep.subr.bf16.mxu0 0
        %6824 = vmatpush2.bf16.msra.mxu0 0
        %6825 = vmatprep.subr.bf16.mxu0 0
        %6826 = vmatpush2.bf16.msra.mxu0 0
        %6827 = vmatprep.subr.bf16.mxu0 0
        %6828 = vmatpush2.bf16.msra.mxu0 0
        %6829 = vmatprep.mubr.bf16.mxu0 0
        %6830 = vmatmul.mubr.bf16.gmra.mxu0 %v6792
        %v6831 = vpop.f32.mrf.mxu0
        %v6832 = vadd.f32 0.0, %v6831
        %v6833 = vpop.f32.mrf.mxu0
        %v6834 = vpop.f32.mrf.mxu0
        %v6835 = vpop.f32.mrf.mxu0
        %6836 = vdwg.mxu0
        %v6838 = vsel %vm4687, %v5422, 0
        %v6841 = vsel %vm5459, %v1675, 0
        %6843 = vmatprep.subr.bf16.mxu0 0
        %6844 = vmatpush1.bf16.msra.mxu0 0
        %6845 = vmatprep.subr.bf16.mxu0 0
        %6846 = vmatpush1.bf16.msra.mxu0 0
        %6847 = vmatprep.subr.bf16.mxu0 0
        %6848 = vmatpush1.bf16.msra.mxu0 0
        %6849 = vmatprep.subr.bf16.mxu0 0
        %6850 = vmatpush1.bf16.msra.mxu0 0
        %6851 = vmatprep.subr.bf16.mxu0 0
        %6852 = vmatpush1.bf16.msra.mxu0 0
        %6853 = vmatprep.subr.bf16.mxu0 0
        %6854 = vmatpush1.bf16.msra.mxu0 0
        %6855 = vmatprep.subr.bf16.mxu0 0
        %6856 = vmatpush1.bf16.msra.mxu0 0
        %6857 = vmatprep.subr.bf16.mxu0 0
        %6858 = vmatpush1.bf16.msra.mxu0 %v6841
        %6859 = vmatprep.subr.bf16.mxu0 0
        %6860 = vmatpush2.bf16.msra.mxu0 0
        %6861 = vmatprep.subr.bf16.mxu0 0
        %6862 = vmatpush2.bf16.msra.mxu0 0
        %6863 = vmatprep.subr.bf16.mxu0 0
        %6864 = vmatpush2.bf16.msra.mxu0 0
        %6865 = vmatprep.subr.bf16.mxu0 0
        %6866 = vmatpush2.bf16.msra.mxu0 0
        %6867 = vmatprep.subr.bf16.mxu0 0
        %6868 = vmatpush2.bf16.msra.mxu0 0
        %6869 = vmatprep.subr.bf16.mxu0 0
        %6870 = vmatpush2.bf16.msra.mxu0 0
        %6871 = vmatprep.subr.bf16.mxu0 0
        %6872 = vmatpush2.bf16.msra.mxu0 0
        %6873 = vmatprep.subr.bf16.mxu0 0
        %6874 = vmatpush2.bf16.msra.mxu0 0
        %6875 = vmatprep.mubr.bf16.mxu0 0
        %6876 = vmatmul.mubr.bf16.gmra.mxu0 %v6838
        %v6877 = vpop.f32.mrf.mxu0
        %v6878 = vadd.f32 0.0, %v6877
        %v6879 = vpop.f32.mrf.mxu0
        %v6880 = vpop.f32.mrf.mxu0
        %v6881 = vpop.f32.mrf.mxu0
        %6882 = vdwg.mxu0
        %v6884 = vsel %vm4687, %v5423, 0
        %v6887 = vsel %vm5459, %v1677, 0
        %6889 = vmatprep.subr.bf16.mxu0 0
        %6890 = vmatpush1.bf16.msra.mxu0 0
        %6891 = vmatprep.subr.bf16.mxu0 0
        %6892 = vmatpush1.bf16.msra.mxu0 0
        %6893 = vmatprep.subr.bf16.mxu0 0
        %6894 = vmatpush1.bf16.msra.mxu0 0
        %6895 = vmatprep.subr.bf16.mxu0 0
        %6896 = vmatpush1.bf16.msra.mxu0 0
        %6897 = vmatprep.subr.bf16.mxu0 0
        %6898 = vmatpush1.bf16.msra.mxu0 0
        %6899 = vmatprep.subr.bf16.mxu0 0
        %6900 = vmatpush1.bf16.msra.mxu0 0
        %6901 = vmatprep.subr.bf16.mxu0 0
        %6902 = vmatpush1.bf16.msra.mxu0 0
        %6903 = vmatprep.subr.bf16.mxu0 0
        %6904 = vmatpush1.bf16.msra.mxu0 %v6887
        %6905 = vmatprep.subr.bf16.mxu0 0
        %6906 = vmatpush2.bf16.msra.mxu0 0
        %6907 = vmatprep.subr.bf16.mxu0 0
        %6908 = vmatpush2.bf16.msra.mxu0 0
        %6909 = vmatprep.subr.bf16.mxu0 0
        %6910 = vmatpush2.bf16.msra.mxu0 0
        %6911 = vmatprep.subr.bf16.mxu0 0
        %6912 = vmatpush2.bf16.msra.mxu0 0
        %6913 = vmatprep.subr.bf16.mxu0 0
        %6914 = vmatpush2.bf16.msra.mxu0 0
        %6915 = vmatprep.subr.bf16.mxu0 0
        %6916 = vmatpush2.bf16.msra.mxu0 0
        %6917 = vmatprep.subr.bf16.mxu0 0
        %6918 = vmatpush2.bf16.msra.mxu0 0
        %6919 = vmatprep.subr.bf16.mxu0 0
        %6920 = vmatpush2.bf16.msra.mxu0 0
        %6921 = vmatprep.mubr.bf16.mxu0 0
        %6922 = vmatmul.mubr.bf16.gmra.mxu0 %v6884
        %v6923 = vpop.f32.mrf.mxu0
        %v6924 = vadd.f32 0.0, %v6923
        %v6925 = vpop.f32.mrf.mxu0
        %v6926 = vpop.f32.mrf.mxu0
        %v6927 = vpop.f32.mrf.mxu0
        %6928 = vdwg.mxu0
        %v6930 = vsel %vm4687, %v5424, 0
        %v6933 = vsel %vm5459, %v1679, 0
        %6935 = vmatprep.subr.bf16.mxu0 0
        %6936 = vmatpush1.bf16.msra.mxu0 0
        %6937 = vmatprep.subr.bf16.mxu0 0
        %6938 = vmatpush1.bf16.msra.mxu0 0
        %6939 = vmatprep.subr.bf16.mxu0 0
        %6940 = vmatpush1.bf16.msra.mxu0 0
        %6941 = vmatprep.subr.bf16.mxu0 0
        %6942 = vmatpush1.bf16.msra.mxu0 0
        %6943 = vmatprep.subr.bf16.mxu0 0
        %6944 = vmatpush1.bf16.msra.mxu0 0
        %6945 = vmatprep.subr.bf16.mxu0 0
        %6946 = vmatpush1.bf16.msra.mxu0 0
        %6947 = vmatprep.subr.bf16.mxu0 0
        %6948 = vmatpush1.bf16.msra.mxu0 0
        %6949 = vmatprep.subr.bf16.mxu0 0
        %6950 = vmatpush1.bf16.msra.mxu0 %v6933
        %6951 = vmatprep.subr.bf16.mxu0 0
        %6952 = vmatpush2.bf16.msra.mxu0 0
        %6953 = vmatprep.subr.bf16.mxu0 0
        %6954 = vmatpush2.bf16.msra.mxu0 0
        %6955 = vmatprep.subr.bf16.mxu0 0
        %6956 = vmatpush2.bf16.msra.mxu0 0
        %6957 = vmatprep.subr.bf16.mxu0 0
        %6958 = vmatpush2.bf16.msra.mxu0 0
        %6959 = vmatprep.subr.bf16.mxu0 0
        %6960 = vmatpush2.bf16.msra.mxu0 0
        %6961 = vmatprep.subr.bf16.mxu0 0
        %6962 = vmatpush2.bf16.msra.mxu0 0
        %6963 = vmatprep.subr.bf16.mxu0 0
        %6964 = vmatpush2.bf16.msra.mxu0 0
        %6965 = vmatprep.subr.bf16.mxu0 0
        %6966 = vmatpush2.bf16.msra.mxu0 0
        %6967 = vmatprep.mubr.bf16.mxu0 0
        %6968 = vmatmul.mubr.bf16.gmra.mxu0 %v6930
        %v6969 = vpop.f32.mrf.mxu0
        %v6970 = vadd.f32 0.0, %v6969
        %v6971 = vpop.f32.mrf.mxu0
        %v6972 = vpop.f32.mrf.mxu0
        %v6973 = vpop.f32.mrf.mxu0
        %6974 = vdwg.mxu0
        %v6976 = vsel %vm4687, %v5425, 0
        %v6979 = vsel %vm5459, %v1681, 0
        %6981 = vmatprep.subr.bf16.mxu0 0
        %6982 = vmatpush1.bf16.msra.mxu0 0
        %6983 = vmatprep.subr.bf16.mxu0 0
        %6984 = vmatpush1.bf16.msra.mxu0 0
        %6985 = vmatprep.subr.bf16.mxu0 0
        %6986 = vmatpush1.bf16.msra.mxu0 0
        %6987 = vmatprep.subr.bf16.mxu0 0
        %6988 = vmatpush1.bf16.msra.mxu0 0
        %6989 = vmatprep.subr.bf16.mxu0 0
        %6990 = vmatpush1.bf16.msra.mxu0 0
        %6991 = vmatprep.subr.bf16.mxu0 0
        %6992 = vmatpush1.bf16.msra.mxu0 0
        %6993 = vmatprep.subr.bf16.mxu0 0
        %6994 = vmatpush1.bf16.msra.mxu0 0
        %6995 = vmatprep.subr.bf16.mxu0 0
        %6996 = vmatpush1.bf16.msra.mxu0 %v6979
        %6997 = vmatprep.subr.bf16.mxu0 0
        %6998 = vmatpush2.bf16.msra.mxu0 0
        %6999 = vmatprep.subr.bf16.mxu0 0
        %7000 = vmatpush2.bf16.msra.mxu0 0
        %7001 = vmatprep.subr.bf16.mxu0 0
        %7002 = vmatpush2.bf16.msra.mxu0 0
        %7003 = vmatprep.subr.bf16.mxu0 0
        %7004 = vmatpush2.bf16.msra.mxu0 0
        %7005 = vmatprep.subr.bf16.mxu0 0
        %7006 = vmatpush2.bf16.msra.mxu0 0
        %7007 = vmatprep.subr.bf16.mxu0 0
        %7008 = vmatpush2.bf16.msra.mxu0 0
        %7009 = vmatprep.subr.bf16.mxu0 0
        %7010 = vmatpush2.bf16.msra.mxu0 0
        %7011 = vmatprep.subr.bf16.mxu0 0
        %7012 = vmatpush2.bf16.msra.mxu0 0
        %7013 = vmatprep.mubr.bf16.mxu0 0
        %7014 = vmatmul.mubr.bf16.gmra.mxu0 %v6976
        %v7015 = vpop.f32.mrf.mxu0
        %v7016 = vadd.f32 0.0, %v7015
        %v7017 = vpop.f32.mrf.mxu0
        %v7018 = vpop.f32.mrf.mxu0
        %v7019 = vpop.f32.mrf.mxu0
        %7020 = vdwg.mxu0
        %v7022 = vsel %vm4687, %v5426, 0
        %v7025 = vsel %vm5459, %v1683, 0
        %7027 = vmatprep.subr.bf16.mxu0 0
        %7028 = vmatpush1.bf16.msra.mxu0 0
        %7029 = vmatprep.subr.bf16.mxu0 0
        %7030 = vmatpush1.bf16.msra.mxu0 0
        %7031 = vmatprep.subr.bf16.mxu0 0
        %7032 = vmatpush1.bf16.msra.mxu0 0
        %7033 = vmatprep.subr.bf16.mxu0 0
        %7034 = vmatpush1.bf16.msra.mxu0 0
        %7035 = vmatprep.subr.bf16.mxu0 0
        %7036 = vmatpush1.bf16.msra.mxu0 0
        %7037 = vmatprep.subr.bf16.mxu0 0
        %7038 = vmatpush1.bf16.msra.mxu0 0
        %7039 = vmatprep.subr.bf16.mxu0 0
        %7040 = vmatpush1.bf16.msra.mxu0 0
        %7041 = vmatprep.subr.bf16.mxu0 0
        %7042 = vmatpush1.bf16.msra.mxu0 %v7025
        %7043 = vmatprep.subr.bf16.mxu0 0
        %7044 = vmatpush2.bf16.msra.mxu0 0
        %7045 = vmatprep.subr.bf16.mxu0 0
        %7046 = vmatpush2.bf16.msra.mxu0 0
        %7047 = vmatprep.subr.bf16.mxu0 0
        %7048 = vmatpush2.bf16.msra.mxu0 0
        %7049 = vmatprep.subr.bf16.mxu0 0
        %7050 = vmatpush2.bf16.msra.mxu0 0
        %7051 = vmatprep.subr.bf16.mxu0 0
        %7052 = vmatpush2.bf16.msra.mxu0 0
        %7053 = vmatprep.subr.bf16.mxu0 0
        %7054 = vmatpush2.bf16.msra.mxu0 0
        %7055 = vmatprep.subr.bf16.mxu0 0
        %7056 = vmatpush2.bf16.msra.mxu0 0
        %7057 = vmatprep.subr.bf16.mxu0 0
        %7058 = vmatpush2.bf16.msra.mxu0 0
        %7059 = vmatprep.mubr.bf16.mxu0 0
        %7060 = vmatmul.mubr.bf16.gmra.mxu0 %v7022
        %v7061 = vpop.f32.mrf.mxu0
        %v7062 = vadd.f32 0.0, %v7061
        %v7063 = vpop.f32.mrf.mxu0
        %v7064 = vpop.f32.mrf.mxu0
        %v7065 = vpop.f32.mrf.mxu0
        %7066 = vdwg.mxu0
        %v7068 = vsel %vm4687, %v5427, 0
        %v7071 = vsel %vm5459, %v1685, 0
        %7073 = vmatprep.subr.bf16.mxu0 0
        %7074 = vmatpush1.bf16.msra.mxu0 0
        %7075 = vmatprep.subr.bf16.mxu0 0
        %7076 = vmatpush1.bf16.msra.mxu0 0
        %7077 = vmatprep.subr.bf16.mxu0 0
        %7078 = vmatpush1.bf16.msra.mxu0 0
        %7079 = vmatprep.subr.bf16.mxu0 0
        %7080 = vmatpush1.bf16.msra.mxu0 0
        %7081 = vmatprep.subr.bf16.mxu0 0
        %7082 = vmatpush1.bf16.msra.mxu0 0
        %7083 = vmatprep.subr.bf16.mxu0 0
        %7084 = vmatpush1.bf16.msra.mxu0 0
        %7085 = vmatprep.subr.bf16.mxu0 0
        %7086 = vmatpush1.bf16.msra.mxu0 0
        %7087 = vmatprep.subr.bf16.mxu0 0
        %7088 = vmatpush1.bf16.msra.mxu0 %v7071
        %7089 = vmatprep.subr.bf16.mxu0 0
        %7090 = vmatpush2.bf16.msra.mxu0 0
        %7091 = vmatprep.subr.bf16.mxu0 0
        %7092 = vmatpush2.bf16.msra.mxu0 0
        %7093 = vmatprep.subr.bf16.mxu0 0
        %7094 = vmatpush2.bf16.msra.mxu0 0
        %7095 = vmatprep.subr.bf16.mxu0 0
        %7096 = vmatpush2.bf16.msra.mxu0 0
        %7097 = vmatprep.subr.bf16.mxu0 0
        %7098 = vmatpush2.bf16.msra.mxu0 0
        %7099 = vmatprep.subr.bf16.mxu0 0
        %7100 = vmatpush2.bf16.msra.mxu0 0
        %7101 = vmatprep.subr.bf16.mxu0 0
        %7102 = vmatpush2.bf16.msra.mxu0 0
        %7103 = vmatprep.subr.bf16.mxu0 0
        %7104 = vmatpush2.bf16.msra.mxu0 0
        %7105 = vmatprep.mubr.bf16.mxu0 0
        %7106 = vmatmul.mubr.bf16.gmra.mxu0 %v7068
        %v7107 = vpop.f32.mrf.mxu0
        %v7108 = vadd.f32 0.0, %v7107
        %v7109 = vpop.f32.mrf.mxu0
        %v7110 = vpop.f32.mrf.mxu0
        %v7111 = vpop.f32.mrf.mxu0
        %7112 = vdwg.mxu0
        %v7114 = vsel %vm4687, %v5428, 0
        %v7117 = vsel %vm5459, %v1687, 0
        %7119 = vmatprep.subr.bf16.mxu0 0
        %7120 = vmatpush1.bf16.msra.mxu0 0
        %7121 = vmatprep.subr.bf16.mxu0 0
        %7122 = vmatpush1.bf16.msra.mxu0 0
        %7123 = vmatprep.subr.bf16.mxu0 0
        %7124 = vmatpush1.bf16.msra.mxu0 0
        %7125 = vmatprep.subr.bf16.mxu0 0
        %7126 = vmatpush1.bf16.msra.mxu0 0
        %7127 = vmatprep.subr.bf16.mxu0 0
        %7128 = vmatpush1.bf16.msra.mxu0 0
        %7129 = vmatprep.subr.bf16.mxu0 0
        %7130 = vmatpush1.bf16.msra.mxu0 0
        %7131 = vmatprep.subr.bf16.mxu0 0
        %7132 = vmatpush1.bf16.msra.mxu0 0
        %7133 = vmatprep.subr.bf16.mxu0 0
        %7134 = vmatpush1.bf16.msra.mxu0 %v7117
        %7135 = vmatprep.subr.bf16.mxu0 0
        %7136 = vmatpush2.bf16.msra.mxu0 0
        %7137 = vmatprep.subr.bf16.mxu0 0
        %7138 = vmatpush2.bf16.msra.mxu0 0
        %7139 = vmatprep.subr.bf16.mxu0 0
        %7140 = vmatpush2.bf16.msra.mxu0 0
        %7141 = vmatprep.subr.bf16.mxu0 0
        %7142 = vmatpush2.bf16.msra.mxu0 0
        %7143 = vmatprep.subr.bf16.mxu0 0
        %7144 = vmatpush2.bf16.msra.mxu0 0
        %7145 = vmatprep.subr.bf16.mxu0 0
        %7146 = vmatpush2.bf16.msra.mxu0 0
        %7147 = vmatprep.subr.bf16.mxu0 0
        %7148 = vmatpush2.bf16.msra.mxu0 0
        %7149 = vmatprep.subr.bf16.mxu0 0
        %7150 = vmatpush2.bf16.msra.mxu0 0
        %7151 = vmatprep.mubr.bf16.mxu0 0
        %7152 = vmatmul.mubr.bf16.gmra.mxu0 %v7114
        %v7153 = vpop.f32.mrf.mxu0
        %v7154 = vadd.f32 0.0, %v7153
        %v7155 = vpop.f32.mrf.mxu0
        %v7156 = vpop.f32.mrf.mxu0
        %v7157 = vpop.f32.mrf.mxu0
        %7158 = vdwg.mxu0
        %v7160 = vsel %vm4687, %v5429, 0
        %v7163 = vsel %vm5459, %v1689, 0
        %7165 = vmatprep.subr.bf16.mxu0 0
        %7166 = vmatpush1.bf16.msra.mxu0 0
        %7167 = vmatprep.subr.bf16.mxu0 0
        %7168 = vmatpush1.bf16.msra.mxu0 0
        %7169 = vmatprep.subr.bf16.mxu0 0
        %7170 = vmatpush1.bf16.msra.mxu0 0
        %7171 = vmatprep.subr.bf16.mxu0 0
        %7172 = vmatpush1.bf16.msra.mxu0 0
        %7173 = vmatprep.subr.bf16.mxu0 0
        %7174 = vmatpush1.bf16.msra.mxu0 0
        %7175 = vmatprep.subr.bf16.mxu0 0
        %7176 = vmatpush1.bf16.msra.mxu0 0
        %7177 = vmatprep.subr.bf16.mxu0 0
        %7178 = vmatpush1.bf16.msra.mxu0 0
        %7179 = vmatprep.subr.bf16.mxu0 0
        %7180 = vmatpush1.bf16.msra.mxu0 %v7163
        %7181 = vmatprep.subr.bf16.mxu0 0
        %7182 = vmatpush2.bf16.msra.mxu0 0
        %7183 = vmatprep.subr.bf16.mxu0 0
        %7184 = vmatpush2.bf16.msra.mxu0 0
        %7185 = vmatprep.subr.bf16.mxu0 0
        %7186 = vmatpush2.bf16.msra.mxu0 0
        %7187 = vmatprep.subr.bf16.mxu0 0
        %7188 = vmatpush2.bf16.msra.mxu0 0
        %7189 = vmatprep.subr.bf16.mxu0 0
        %7190 = vmatpush2.bf16.msra.mxu0 0
        %7191 = vmatprep.subr.bf16.mxu0 0
        %7192 = vmatpush2.bf16.msra.mxu0 0
        %7193 = vmatprep.subr.bf16.mxu0 0
        %7194 = vmatpush2.bf16.msra.mxu0 0
        %7195 = vmatprep.subr.bf16.mxu0 0
        %7196 = vmatpush2.bf16.msra.mxu0 0
        %7197 = vmatprep.mubr.bf16.mxu0 0
        %7198 = vmatmul.mubr.bf16.gmra.mxu0 %v7160
        %v7199 = vpop.f32.mrf.mxu0
        %v7200 = vadd.f32 0.0, %v7199
        %v7201 = vpop.f32.mrf.mxu0
        %v7202 = vpop.f32.mrf.mxu0
        %v7203 = vpop.f32.mrf.mxu0
        %7204 = vdwg.mxu0
        %v7206 = vsel %vm4687, %v5430, 0
        %v7209 = vsel %vm5459, %v1691, 0
        %7211 = vmatprep.subr.bf16.mxu0 0
        %7212 = vmatpush1.bf16.msra.mxu0 0
        %7213 = vmatprep.subr.bf16.mxu0 0
        %7214 = vmatpush1.bf16.msra.mxu0 0
        %7215 = vmatprep.subr.bf16.mxu0 0
        %7216 = vmatpush1.bf16.msra.mxu0 0
        %7217 = vmatprep.subr.bf16.mxu0 0
        %7218 = vmatpush1.bf16.msra.mxu0 0
        %7219 = vmatprep.subr.bf16.mxu0 0
        %7220 = vmatpush1.bf16.msra.mxu0 0
        %7221 = vmatprep.subr.bf16.mxu0 0
        %7222 = vmatpush1.bf16.msra.mxu0 0
        %7223 = vmatprep.subr.bf16.mxu0 0
        %7224 = vmatpush1.bf16.msra.mxu0 0
        %7225 = vmatprep.subr.bf16.mxu0 0
        %7226 = vmatpush1.bf16.msra.mxu0 %v7209
        %7227 = vmatprep.subr.bf16.mxu0 0
        %7228 = vmatpush2.bf16.msra.mxu0 0
        %7229 = vmatprep.subr.bf16.mxu0 0
        %7230 = vmatpush2.bf16.msra.mxu0 0
        %7231 = vmatprep.subr.bf16.mxu0 0
        %7232 = vmatpush2.bf16.msra.mxu0 0
        %7233 = vmatprep.subr.bf16.mxu0 0
        %7234 = vmatpush2.bf16.msra.mxu0 0
        %7235 = vmatprep.subr.bf16.mxu0 0
        %7236 = vmatpush2.bf16.msra.mxu0 0
        %7237 = vmatprep.subr.bf16.mxu0 0
        %7238 = vmatpush2.bf16.msra.mxu0 0
        %7239 = vmatprep.subr.bf16.mxu0 0
        %7240 = vmatpush2.bf16.msra.mxu0 0
        %7241 = vmatprep.subr.bf16.mxu0 0
        %7242 = vmatpush2.bf16.msra.mxu0 0
        %7243 = vmatprep.mubr.bf16.mxu0 0
        %7244 = vmatmul.mubr.bf16.gmra.mxu0 %v7206
        %v7245 = vpop.f32.mrf.mxu0
        %v7246 = vadd.f32 0.0, %v7245
        %v7247 = vpop.f32.mrf.mxu0
        %v7248 = vpop.f32.mrf.mxu0
        %v7249 = vpop.f32.mrf.mxu0
        %7250 = vdwg.mxu0
        %v7252 = vsel %vm4687, %v5431, 0
        %v7255 = vsel %vm5459, %v1693, 0
        %7257 = vmatprep.subr.bf16.mxu0 0
        %7258 = vmatpush1.bf16.msra.mxu0 0
        %7259 = vmatprep.subr.bf16.mxu0 0
        %7260 = vmatpush1.bf16.msra.mxu0 0
        %7261 = vmatprep.subr.bf16.mxu0 0
        %7262 = vmatpush1.bf16.msra.mxu0 0
        %7263 = vmatprep.subr.bf16.mxu0 0
        %7264 = vmatpush1.bf16.msra.mxu0 0
        %7265 = vmatprep.subr.bf16.mxu0 0
        %7266 = vmatpush1.bf16.msra.mxu0 0
        %7267 = vmatprep.subr.bf16.mxu0 0
        %7268 = vmatpush1.bf16.msra.mxu0 0
        %7269 = vmatprep.subr.bf16.mxu0 0
        %7270 = vmatpush1.bf16.msra.mxu0 0
        %7271 = vmatprep.subr.bf16.mxu0 0
        %7272 = vmatpush1.bf16.msra.mxu0 %v7255
        %7273 = vmatprep.subr.bf16.mxu0 0
        %7274 = vmatpush2.bf16.msra.mxu0 0
        %7275 = vmatprep.subr.bf16.mxu0 0
        %7276 = vmatpush2.bf16.msra.mxu0 0
        %7277 = vmatprep.subr.bf16.mxu0 0
        %7278 = vmatpush2.bf16.msra.mxu0 0
        %7279 = vmatprep.subr.bf16.mxu0 0
        %7280 = vmatpush2.bf16.msra.mxu0 0
        %7281 = vmatprep.subr.bf16.mxu0 0
        %7282 = vmatpush2.bf16.msra.mxu0 0
        %7283 = vmatprep.subr.bf16.mxu0 0
        %7284 = vmatpush2.bf16.msra.mxu0 0
        %7285 = vmatprep.subr.bf16.mxu0 0
        %7286 = vmatpush2.bf16.msra.mxu0 0
        %7287 = vmatprep.subr.bf16.mxu0 0
        %7288 = vmatpush2.bf16.msra.mxu0 0
        %7289 = vmatprep.mubr.bf16.mxu0 0
        %7290 = vmatmul.mubr.bf16.gmra.mxu0 %v7252
        %v7291 = vpop.f32.mrf.mxu0
        %v7292 = vadd.f32 0.0, %v7291
        %v7293 = vpop.f32.mrf.mxu0
        %v7294 = vpop.f32.mrf.mxu0
        %v7295 = vpop.f32.mrf.mxu0
        %7296 = vdwg.mxu0
        %v7298 = vsel %vm4687, %v5432, 0
        %v7301 = vsel %vm5459, %v1695, 0
        %7303 = vmatprep.subr.bf16.mxu0 0
        %7304 = vmatpush1.bf16.msra.mxu0 0
        %7305 = vmatprep.subr.bf16.mxu0 0
        %7306 = vmatpush1.bf16.msra.mxu0 0
        %7307 = vmatprep.subr.bf16.mxu0 0
        %7308 = vmatpush1.bf16.msra.mxu0 0
        %7309 = vmatprep.subr.bf16.mxu0 0
        %7310 = vmatpush1.bf16.msra.mxu0 0
        %7311 = vmatprep.subr.bf16.mxu0 0
        %7312 = vmatpush1.bf16.msra.mxu0 0
        %7313 = vmatprep.subr.bf16.mxu0 0
        %7314 = vmatpush1.bf16.msra.mxu0 0
        %7315 = vmatprep.subr.bf16.mxu0 0
        %7316 = vmatpush1.bf16.msra.mxu0 0
        %7317 = vmatprep.subr.bf16.mxu0 0
        %7318 = vmatpush1.bf16.msra.mxu0 %v7301
        %7319 = vmatprep.subr.bf16.mxu0 0
        %7320 = vmatpush2.bf16.msra.mxu0 0
        %7321 = vmatprep.subr.bf16.mxu0 0
        %7322 = vmatpush2.bf16.msra.mxu0 0
        %7323 = vmatprep.subr.bf16.mxu0 0
        %7324 = vmatpush2.bf16.msra.mxu0 0
        %7325 = vmatprep.subr.bf16.mxu0 0
        %7326 = vmatpush2.bf16.msra.mxu0 0
        %7327 = vmatprep.subr.bf16.mxu0 0
        %7328 = vmatpush2.bf16.msra.mxu0 0
        %7329 = vmatprep.subr.bf16.mxu0 0
        %7330 = vmatpush2.bf16.msra.mxu0 0
        %7331 = vmatprep.subr.bf16.mxu0 0
        %7332 = vmatpush2.bf16.msra.mxu0 0
        %7333 = vmatprep.subr.bf16.mxu0 0
        %7334 = vmatpush2.bf16.msra.mxu0 0
        %7335 = vmatprep.mubr.bf16.mxu0 0
        %7336 = vmatmul.mubr.bf16.gmra.mxu0 %v7298
        %v7337 = vpop.f32.mrf.mxu0
        %v7338 = vadd.f32 0.0, %v7337
        %v7339 = vpop.f32.mrf.mxu0
        %v7340 = vpop.f32.mrf.mxu0
        %v7341 = vpop.f32.mrf.mxu0
        %7342 = vdwg.mxu0
        %v7344 = vsel %vm4687, %v5433, 0
        %v7347 = vsel %vm5459, %v1697, 0
        %7349 = vmatprep.subr.bf16.mxu0 0
        %7350 = vmatpush1.bf16.msra.mxu0 0
        %7351 = vmatprep.subr.bf16.mxu0 0
        %7352 = vmatpush1.bf16.msra.mxu0 0
        %7353 = vmatprep.subr.bf16.mxu0 0
        %7354 = vmatpush1.bf16.msra.mxu0 0
        %7355 = vmatprep.subr.bf16.mxu0 0
        %7356 = vmatpush1.bf16.msra.mxu0 0
        %7357 = vmatprep.subr.bf16.mxu0 0
        %7358 = vmatpush1.bf16.msra.mxu0 0
        %7359 = vmatprep.subr.bf16.mxu0 0
        %7360 = vmatpush1.bf16.msra.mxu0 0
        %7361 = vmatprep.subr.bf16.mxu0 0
        %7362 = vmatpush1.bf16.msra.mxu0 0
        %7363 = vmatprep.subr.bf16.mxu0 0
        %7364 = vmatpush1.bf16.msra.mxu0 %v7347
        %7365 = vmatprep.subr.bf16.mxu0 0
        %7366 = vmatpush2.bf16.msra.mxu0 0
        %7367 = vmatprep.subr.bf16.mxu0 0
        %7368 = vmatpush2.bf16.msra.mxu0 0
        %7369 = vmatprep.subr.bf16.mxu0 0
        %7370 = vmatpush2.bf16.msra.mxu0 0
        %7371 = vmatprep.subr.bf16.mxu0 0
        %7372 = vmatpush2.bf16.msra.mxu0 0
        %7373 = vmatprep.subr.bf16.mxu0 0
        %7374 = vmatpush2.bf16.msra.mxu0 0
        %7375 = vmatprep.subr.bf16.mxu0 0
        %7376 = vmatpush2.bf16.msra.mxu0 0
        %7377 = vmatprep.subr.bf16.mxu0 0
        %7378 = vmatpush2.bf16.msra.mxu0 0
        %7379 = vmatprep.subr.bf16.mxu0 0
        %7380 = vmatpush2.bf16.msra.mxu0 0
        %7381 = vmatprep.mubr.bf16.mxu0 0
        %7382 = vmatmul.mubr.bf16.gmra.mxu0 %v7344
        %v7383 = vpop.f32.mrf.mxu0
        %v7384 = vadd.f32 0.0, %v7383
        %v7385 = vpop.f32.mrf.mxu0
        %v7386 = vpop.f32.mrf.mxu0
        %v7387 = vpop.f32.mrf.mxu0
        %7388 = vdwg.mxu0
        %v7390 = vsel %vm4687, %v5434, 0
        %v7393 = vsel %vm5459, %v1699, 0
        %7395 = vmatprep.subr.bf16.mxu0 0
        %7396 = vmatpush1.bf16.msra.mxu0 0
        %7397 = vmatprep.subr.bf16.mxu0 0
        %7398 = vmatpush1.bf16.msra.mxu0 0
        %7399 = vmatprep.subr.bf16.mxu0 0
        %7400 = vmatpush1.bf16.msra.mxu0 0
        %7401 = vmatprep.subr.bf16.mxu0 0
        %7402 = vmatpush1.bf16.msra.mxu0 0
        %7403 = vmatprep.subr.bf16.mxu0 0
        %7404 = vmatpush1.bf16.msra.mxu0 0
        %7405 = vmatprep.subr.bf16.mxu0 0
        %7406 = vmatpush1.bf16.msra.mxu0 0
        %7407 = vmatprep.subr.bf16.mxu0 0
        %7408 = vmatpush1.bf16.msra.mxu0 0
        %7409 = vmatprep.subr.bf16.mxu0 0
        %7410 = vmatpush1.bf16.msra.mxu0 %v7393
        %7411 = vmatprep.subr.bf16.mxu0 0
        %7412 = vmatpush2.bf16.msra.mxu0 0
        %7413 = vmatprep.subr.bf16.mxu0 0
        %7414 = vmatpush2.bf16.msra.mxu0 0
        %7415 = vmatprep.subr.bf16.mxu0 0
        %7416 = vmatpush2.bf16.msra.mxu0 0
        %7417 = vmatprep.subr.bf16.mxu0 0
        %7418 = vmatpush2.bf16.msra.mxu0 0
        %7419 = vmatprep.subr.bf16.mxu0 0
        %7420 = vmatpush2.bf16.msra.mxu0 0
        %7421 = vmatprep.subr.bf16.mxu0 0
        %7422 = vmatpush2.bf16.msra.mxu0 0
        %7423 = vmatprep.subr.bf16.mxu0 0
        %7424 = vmatpush2.bf16.msra.mxu0 0
        %7425 = vmatprep.subr.bf16.mxu0 0
        %7426 = vmatpush2.bf16.msra.mxu0 0
        %7427 = vmatprep.mubr.bf16.mxu0 0
        %7428 = vmatmul.mubr.bf16.gmra.mxu0 %v7390
        %v7429 = vpop.f32.mrf.mxu0
        %v7430 = vadd.f32 0.0, %v7429
        %v7431 = vpop.f32.mrf.mxu0
        %v7432 = vpop.f32.mrf.mxu0
        %v7433 = vpop.f32.mrf.mxu0
        %7434 = vdwg.mxu0
        %v7436 = vsel %vm4687, %v5435, 0
        %v7439 = vsel %vm5459, %v1701, 0
        %7441 = vmatprep.subr.bf16.mxu0 0
        %7442 = vmatpush1.bf16.msra.mxu0 0
        %7443 = vmatprep.subr.bf16.mxu0 0
        %7444 = vmatpush1.bf16.msra.mxu0 0
        %7445 = vmatprep.subr.bf16.mxu0 0
        %7446 = vmatpush1.bf16.msra.mxu0 0
        %7447 = vmatprep.subr.bf16.mxu0 0
        %7448 = vmatpush1.bf16.msra.mxu0 0
        %7449 = vmatprep.subr.bf16.mxu0 0
        %7450 = vmatpush1.bf16.msra.mxu0 0
        %7451 = vmatprep.subr.bf16.mxu0 0
        %7452 = vmatpush1.bf16.msra.mxu0 0
        %7453 = vmatprep.subr.bf16.mxu0 0
        %7454 = vmatpush1.bf16.msra.mxu0 0
        %7455 = vmatprep.subr.bf16.mxu0 0
        %7456 = vmatpush1.bf16.msra.mxu0 %v7439
        %7457 = vmatprep.subr.bf16.mxu0 0
        %7458 = vmatpush2.bf16.msra.mxu0 0
        %7459 = vmatprep.subr.bf16.mxu0 0
        %7460 = vmatpush2.bf16.msra.mxu0 0
        %7461 = vmatprep.subr.bf16.mxu0 0
        %7462 = vmatpush2.bf16.msra.mxu0 0
        %7463 = vmatprep.subr.bf16.mxu0 0
        %7464 = vmatpush2.bf16.msra.mxu0 0
        %7465 = vmatprep.subr.bf16.mxu0 0
        %7466 = vmatpush2.bf16.msra.mxu0 0
        %7467 = vmatprep.subr.bf16.mxu0 0
        %7468 = vmatpush2.bf16.msra.mxu0 0
        %7469 = vmatprep.subr.bf16.mxu0 0
        %7470 = vmatpush2.bf16.msra.mxu0 0
        %7471 = vmatprep.subr.bf16.mxu0 0
        %7472 = vmatpush2.bf16.msra.mxu0 0
        %7473 = vmatprep.mubr.bf16.mxu0 0
        %7474 = vmatmul.mubr.bf16.gmra.mxu0 %v7436
        %v7475 = vpop.f32.mrf.mxu0
        %v7476 = vadd.f32 0.0, %v7475
        %v7477 = vpop.f32.mrf.mxu0
        %v7478 = vpop.f32.mrf.mxu0
        %v7479 = vpop.f32.mrf.mxu0
        %7480 = vdwg.mxu0
        %v7482 = vsel %vm4687, %v5436, 0
        %v7485 = vsel %vm5459, %v1703, 0
        %7487 = vmatprep.subr.bf16.mxu0 0
        %7488 = vmatpush1.bf16.msra.mxu0 0
        %7489 = vmatprep.subr.bf16.mxu0 0
        %7490 = vmatpush1.bf16.msra.mxu0 0
        %7491 = vmatprep.subr.bf16.mxu0 0
        %7492 = vmatpush1.bf16.msra.mxu0 0
        %7493 = vmatprep.subr.bf16.mxu0 0
        %7494 = vmatpush1.bf16.msra.mxu0 0
        %7495 = vmatprep.subr.bf16.mxu0 0
        %7496 = vmatpush1.bf16.msra.mxu0 0
        %7497 = vmatprep.subr.bf16.mxu0 0
        %7498 = vmatpush1.bf16.msra.mxu0 0
        %7499 = vmatprep.subr.bf16.mxu0 0
        %7500 = vmatpush1.bf16.msra.mxu0 0
        %7501 = vmatprep.subr.bf16.mxu0 0
        %7502 = vmatpush1.bf16.msra.mxu0 %v7485
        %7503 = vmatprep.subr.bf16.mxu0 0
        %7504 = vmatpush2.bf16.msra.mxu0 0
        %7505 = vmatprep.subr.bf16.mxu0 0
        %7506 = vmatpush2.bf16.msra.mxu0 0
        %7507 = vmatprep.subr.bf16.mxu0 0
        %7508 = vmatpush2.bf16.msra.mxu0 0
        %7509 = vmatprep.subr.bf16.mxu0 0
        %7510 = vmatpush2.bf16.msra.mxu0 0
        %7511 = vmatprep.subr.bf16.mxu0 0
        %7512 = vmatpush2.bf16.msra.mxu0 0
        %7513 = vmatprep.subr.bf16.mxu0 0
        %7514 = vmatpush2.bf16.msra.mxu0 0
        %7515 = vmatprep.subr.bf16.mxu0 0
        %7516 = vmatpush2.bf16.msra.mxu0 0
        %7517 = vmatprep.subr.bf16.mxu0 0
        %7518 = vmatpush2.bf16.msra.mxu0 0
        %7519 = vmatprep.mubr.bf16.mxu0 0
        %7520 = vmatmul.mubr.bf16.gmra.mxu0 %v7482
        %v7521 = vpop.f32.mrf.mxu0
        %v7522 = vadd.f32 0.0, %v7521
        %v7523 = vpop.f32.mrf.mxu0
        %v7524 = vpop.f32.mrf.mxu0
        %v7525 = vpop.f32.mrf.mxu0
        %7526 = vdwg.mxu0
        %v7528 = vsel %vm4687, %v5437, 0
        %v7531 = vsel %vm5459, %v1705, 0
        %7533 = vmatprep.subr.bf16.mxu0 0
        %7534 = vmatpush1.bf16.msra.mxu0 0
        %7535 = vmatprep.subr.bf16.mxu0 0
        %7536 = vmatpush1.bf16.msra.mxu0 0
        %7537 = vmatprep.subr.bf16.mxu0 0
        %7538 = vmatpush1.bf16.msra.mxu0 0
        %7539 = vmatprep.subr.bf16.mxu0 0
        %7540 = vmatpush1.bf16.msra.mxu0 0
        %7541 = vmatprep.subr.bf16.mxu0 0
        %7542 = vmatpush1.bf16.msra.mxu0 0
        %7543 = vmatprep.subr.bf16.mxu0 0
        %7544 = vmatpush1.bf16.msra.mxu0 0
        %7545 = vmatprep.subr.bf16.mxu0 0
        %7546 = vmatpush1.bf16.msra.mxu0 0
        %7547 = vmatprep.subr.bf16.mxu0 0
        %7548 = vmatpush1.bf16.msra.mxu0 %v7531
        %7549 = vmatprep.subr.bf16.mxu0 0
        %7550 = vmatpush2.bf16.msra.mxu0 0
        %7551 = vmatprep.subr.bf16.mxu0 0
        %7552 = vmatpush2.bf16.msra.mxu0 0
        %7553 = vmatprep.subr.bf16.mxu0 0
        %7554 = vmatpush2.bf16.msra.mxu0 0
        %7555 = vmatprep.subr.bf16.mxu0 0
        %7556 = vmatpush2.bf16.msra.mxu0 0
        %7557 = vmatprep.subr.bf16.mxu0 0
        %7558 = vmatpush2.bf16.msra.mxu0 0
        %7559 = vmatprep.subr.bf16.mxu0 0
        %7560 = vmatpush2.bf16.msra.mxu0 0
        %7561 = vmatprep.subr.bf16.mxu0 0
        %7562 = vmatpush2.bf16.msra.mxu0 0
        %7563 = vmatprep.subr.bf16.mxu0 0
        %7564 = vmatpush2.bf16.msra.mxu0 0
        %7565 = vmatprep.mubr.bf16.mxu0 0
        %7566 = vmatmul.mubr.bf16.gmra.mxu0 %v7528
        %v7567 = vpop.f32.mrf.mxu0
        %v7568 = vadd.f32 0.0, %v7567
        %v7569 = vpop.f32.mrf.mxu0
        %v7570 = vpop.f32.mrf.mxu0
        %v7571 = vpop.f32.mrf.mxu0
        %7572 = vdwg.mxu0
        %v7574 = vsel %vm4687, %v5438, 0
        %v7577 = vsel %vm5459, %v1707, 0
        %7579 = vmatprep.subr.bf16.mxu0 0
        %7580 = vmatpush1.bf16.msra.mxu0 0
        %7581 = vmatprep.subr.bf16.mxu0 0
        %7582 = vmatpush1.bf16.msra.mxu0 0
        %7583 = vmatprep.subr.bf16.mxu0 0
        %7584 = vmatpush1.bf16.msra.mxu0 0
        %7585 = vmatprep.subr.bf16.mxu0 0
        %7586 = vmatpush1.bf16.msra.mxu0 0
        %7587 = vmatprep.subr.bf16.mxu0 0
        %7588 = vmatpush1.bf16.msra.mxu0 0
        %7589 = vmatprep.subr.bf16.mxu0 0
        %7590 = vmatpush1.bf16.msra.mxu0 0
        %7591 = vmatprep.subr.bf16.mxu0 0
        %7592 = vmatpush1.bf16.msra.mxu0 0
        %7593 = vmatprep.subr.bf16.mxu0 0
        %7594 = vmatpush1.bf16.msra.mxu0 %v7577
        %7595 = vmatprep.subr.bf16.mxu0 0
        %7596 = vmatpush2.bf16.msra.mxu0 0
        %7597 = vmatprep.subr.bf16.mxu0 0
        %7598 = vmatpush2.bf16.msra.mxu0 0
        %7599 = vmatprep.subr.bf16.mxu0 0
        %7600 = vmatpush2.bf16.msra.mxu0 0
        %7601 = vmatprep.subr.bf16.mxu0 0
        %7602 = vmatpush2.bf16.msra.mxu0 0
        %7603 = vmatprep.subr.bf16.mxu0 0
        %7604 = vmatpush2.bf16.msra.mxu0 0
        %7605 = vmatprep.subr.bf16.mxu0 0
        %7606 = vmatpush2.bf16.msra.mxu0 0
        %7607 = vmatprep.subr.bf16.mxu0 0
        %7608 = vmatpush2.bf16.msra.mxu0 0
        %7609 = vmatprep.subr.bf16.mxu0 0
        %7610 = vmatpush2.bf16.msra.mxu0 0
        %7611 = vmatprep.mubr.bf16.mxu0 0
        %7612 = vmatmul.mubr.bf16.gmra.mxu0 %v7574
        %v7613 = vpop.f32.mrf.mxu0
        %v7614 = vadd.f32 0.0, %v7613
        %v7615 = vpop.f32.mrf.mxu0
        %v7616 = vpop.f32.mrf.mxu0
        %v7617 = vpop.f32.mrf.mxu0
        %7618 = vdwg.mxu0
        %v7620 = vsel %vm4687, %v5439, 0
        %v7623 = vsel %vm5459, %v1709, 0
        %7625 = vmatprep.subr.bf16.mxu0 0
        %7626 = vmatpush1.bf16.msra.mxu0 0
        %7627 = vmatprep.subr.bf16.mxu0 0
        %7628 = vmatpush1.bf16.msra.mxu0 0
        %7629 = vmatprep.subr.bf16.mxu0 0
        %7630 = vmatpush1.bf16.msra.mxu0 0
        %7631 = vmatprep.subr.bf16.mxu0 0
        %7632 = vmatpush1.bf16.msra.mxu0 0
        %7633 = vmatprep.subr.bf16.mxu0 0
        %7634 = vmatpush1.bf16.msra.mxu0 0
        %7635 = vmatprep.subr.bf16.mxu0 0
        %7636 = vmatpush1.bf16.msra.mxu0 0
        %7637 = vmatprep.subr.bf16.mxu0 0
        %7638 = vmatpush1.bf16.msra.mxu0 0
        %7639 = vmatprep.subr.bf16.mxu0 0
        %7640 = vmatpush1.bf16.msra.mxu0 %v7623
        %7641 = vmatprep.subr.bf16.mxu0 0
        %7642 = vmatpush2.bf16.msra.mxu0 0
        %7643 = vmatprep.subr.bf16.mxu0 0
        %7644 = vmatpush2.bf16.msra.mxu0 0
        %7645 = vmatprep.subr.bf16.mxu0 0
        %7646 = vmatpush2.bf16.msra.mxu0 0
        %7647 = vmatprep.subr.bf16.mxu0 0
        %7648 = vmatpush2.bf16.msra.mxu0 0
        %7649 = vmatprep.subr.bf16.mxu0 0
        %7650 = vmatpush2.bf16.msra.mxu0 0
        %7651 = vmatprep.subr.bf16.mxu0 0
        %7652 = vmatpush2.bf16.msra.mxu0 0
        %7653 = vmatprep.subr.bf16.mxu0 0
        %7654 = vmatpush2.bf16.msra.mxu0 0
        %7655 = vmatprep.subr.bf16.mxu0 0
        %7656 = vmatpush2.bf16.msra.mxu0 0
        %7657 = vmatprep.mubr.bf16.mxu0 0
        %7658 = vmatmul.mubr.bf16.gmra.mxu0 %v7620
        %v7659 = vpop.f32.mrf.mxu0
        %v7660 = vadd.f32 0.0, %v7659
        %v7661 = vpop.f32.mrf.mxu0
        %v7662 = vpop.f32.mrf.mxu0
        %v7663 = vpop.f32.mrf.mxu0
        %7664 = vdwg.mxu0
        %v7666 = vsel %vm4687, %v5440, 0
        %v7669 = vsel %vm5459, %v1711, 0
        %7671 = vmatprep.subr.bf16.mxu0 0
        %7672 = vmatpush1.bf16.msra.mxu0 0
        %7673 = vmatprep.subr.bf16.mxu0 0
        %7674 = vmatpush1.bf16.msra.mxu0 0
        %7675 = vmatprep.subr.bf16.mxu0 0
        %7676 = vmatpush1.bf16.msra.mxu0 0
        %7677 = vmatprep.subr.bf16.mxu0 0
        %7678 = vmatpush1.bf16.msra.mxu0 0
        %7679 = vmatprep.subr.bf16.mxu0 0
        %7680 = vmatpush1.bf16.msra.mxu0 0
        %7681 = vmatprep.subr.bf16.mxu0 0
        %7682 = vmatpush1.bf16.msra.mxu0 0
        %7683 = vmatprep.subr.bf16.mxu0 0
        %7684 = vmatpush1.bf16.msra.mxu0 0
        %7685 = vmatprep.subr.bf16.mxu0 0
        %7686 = vmatpush1.bf16.msra.mxu0 %v7669
        %7687 = vmatprep.subr.bf16.mxu0 0
        %7688 = vmatpush2.bf16.msra.mxu0 0
        %7689 = vmatprep.subr.bf16.mxu0 0
        %7690 = vmatpush2.bf16.msra.mxu0 0
        %7691 = vmatprep.subr.bf16.mxu0 0
        %7692 = vmatpush2.bf16.msra.mxu0 0
        %7693 = vmatprep.subr.bf16.mxu0 0
        %7694 = vmatpush2.bf16.msra.mxu0 0
        %7695 = vmatprep.subr.bf16.mxu0 0
        %7696 = vmatpush2.bf16.msra.mxu0 0
        %7697 = vmatprep.subr.bf16.mxu0 0
        %7698 = vmatpush2.bf16.msra.mxu0 0
        %7699 = vmatprep.subr.bf16.mxu0 0
        %7700 = vmatpush2.bf16.msra.mxu0 0
        %7701 = vmatprep.subr.bf16.mxu0 0
        %7702 = vmatpush2.bf16.msra.mxu0 0
        %7703 = vmatprep.mubr.bf16.mxu0 0
        %7704 = vmatmul.mubr.bf16.gmra.mxu0 %v7666
        %v7705 = vpop.f32.mrf.mxu0
        %v7706 = vadd.f32 0.0, %v7705
        %v7707 = vpop.f32.mrf.mxu0
        %v7708 = vpop.f32.mrf.mxu0
        %v7709 = vpop.f32.mrf.mxu0
        %7710 = vdwg.mxu0
        %v7712 = vsel %vm4687, %v5441, 0
        %v7715 = vsel %vm5459, %v1713, 0
        %7717 = vmatprep.subr.bf16.mxu0 0
        %7718 = vmatpush1.bf16.msra.mxu0 0
        %7719 = vmatprep.subr.bf16.mxu0 0
        %7720 = vmatpush1.bf16.msra.mxu0 0
        %7721 = vmatprep.subr.bf16.mxu0 0
        %7722 = vmatpush1.bf16.msra.mxu0 0
        %7723 = vmatprep.subr.bf16.mxu0 0
        %7724 = vmatpush1.bf16.msra.mxu0 0
        %7725 = vmatprep.subr.bf16.mxu0 0
        %7726 = vmatpush1.bf16.msra.mxu0 0
        %7727 = vmatprep.subr.bf16.mxu0 0
        %7728 = vmatpush1.bf16.msra.mxu0 0
        %7729 = vmatprep.subr.bf16.mxu0 0
        %7730 = vmatpush1.bf16.msra.mxu0 0
        %7731 = vmatprep.subr.bf16.mxu0 0
        %7732 = vmatpush1.bf16.msra.mxu0 %v7715
        %7733 = vmatprep.subr.bf16.mxu0 0
        %7734 = vmatpush2.bf16.msra.mxu0 0
        %7735 = vmatprep.subr.bf16.mxu0 0
        %7736 = vmatpush2.bf16.msra.mxu0 0
        %7737 = vmatprep.subr.bf16.mxu0 0
        %7738 = vmatpush2.bf16.msra.mxu0 0
        %7739 = vmatprep.subr.bf16.mxu0 0
        %7740 = vmatpush2.bf16.msra.mxu0 0
        %7741 = vmatprep.subr.bf16.mxu0 0
        %7742 = vmatpush2.bf16.msra.mxu0 0
        %7743 = vmatprep.subr.bf16.mxu0 0
        %7744 = vmatpush2.bf16.msra.mxu0 0
        %7745 = vmatprep.subr.bf16.mxu0 0
        %7746 = vmatpush2.bf16.msra.mxu0 0
        %7747 = vmatprep.subr.bf16.mxu0 0
        %7748 = vmatpush2.bf16.msra.mxu0 0
        %7749 = vmatprep.mubr.bf16.mxu0 0
        %7750 = vmatmul.mubr.bf16.gmra.mxu0 %v7712
        %v7751 = vpop.f32.mrf.mxu0
        %v7752 = vadd.f32 0.0, %v7751
        %v7753 = vpop.f32.mrf.mxu0
        %v7754 = vpop.f32.mrf.mxu0
        %v7755 = vpop.f32.mrf.mxu0
        %7756 = vdwg.mxu0
        %v7758 = vsel %vm4687, %v5442, 0
        %v7761 = vsel %vm5459, %v1715, 0
        %7763 = vmatprep.subr.bf16.mxu0 0
        %7764 = vmatpush1.bf16.msra.mxu0 0
        %7765 = vmatprep.subr.bf16.mxu0 0
        %7766 = vmatpush1.bf16.msra.mxu0 0
        %7767 = vmatprep.subr.bf16.mxu0 0
        %7768 = vmatpush1.bf16.msra.mxu0 0
        %7769 = vmatprep.subr.bf16.mxu0 0
        %7770 = vmatpush1.bf16.msra.mxu0 0
        %7771 = vmatprep.subr.bf16.mxu0 0
        %7772 = vmatpush1.bf16.msra.mxu0 0
        %7773 = vmatprep.subr.bf16.mxu0 0
        %7774 = vmatpush1.bf16.msra.mxu0 0
        %7775 = vmatprep.subr.bf16.mxu0 0
        %7776 = vmatpush1.bf16.msra.mxu0 0
        %7777 = vmatprep.subr.bf16.mxu0 0
        %7778 = vmatpush1.bf16.msra.mxu0 %v7761
        %7779 = vmatprep.subr.bf16.mxu0 0
        %7780 = vmatpush2.bf16.msra.mxu0 0
        %7781 = vmatprep.subr.bf16.mxu0 0
        %7782 = vmatpush2.bf16.msra.mxu0 0
        %7783 = vmatprep.subr.bf16.mxu0 0
        %7784 = vmatpush2.bf16.msra.mxu0 0
        %7785 = vmatprep.subr.bf16.mxu0 0
        %7786 = vmatpush2.bf16.msra.mxu0 0
        %7787 = vmatprep.subr.bf16.mxu0 0
        %7788 = vmatpush2.bf16.msra.mxu0 0
        %7789 = vmatprep.subr.bf16.mxu0 0
        %7790 = vmatpush2.bf16.msra.mxu0 0
        %7791 = vmatprep.subr.bf16.mxu0 0
        %7792 = vmatpush2.bf16.msra.mxu0 0
        %7793 = vmatprep.subr.bf16.mxu0 0
        %7794 = vmatpush2.bf16.msra.mxu0 0
        %7795 = vmatprep.mubr.bf16.mxu0 0
        %7796 = vmatmul.mubr.bf16.gmra.mxu0 %v7758
        %v7797 = vpop.f32.mrf.mxu0
        %v7798 = vadd.f32 0.0, %v7797
        %v7799 = vpop.f32.mrf.mxu0
        %v7800 = vpop.f32.mrf.mxu0
        %v7801 = vpop.f32.mrf.mxu0
        %7802 = vdwg.mxu0
        %v7804 = vsel %vm4687, %v5443, 0
        %v7807 = vsel %vm5459, %v1717, 0
        %7809 = vmatprep.subr.bf16.mxu0 0
        %7810 = vmatpush1.bf16.msra.mxu0 0
        %7811 = vmatprep.subr.bf16.mxu0 0
        %7812 = vmatpush1.bf16.msra.mxu0 0
        %7813 = vmatprep.subr.bf16.mxu0 0
        %7814 = vmatpush1.bf16.msra.mxu0 0
        %7815 = vmatprep.subr.bf16.mxu0 0
        %7816 = vmatpush1.bf16.msra.mxu0 0
        %7817 = vmatprep.subr.bf16.mxu0 0
        %7818 = vmatpush1.bf16.msra.mxu0 0
        %7819 = vmatprep.subr.bf16.mxu0 0
        %7820 = vmatpush1.bf16.msra.mxu0 0
        %7821 = vmatprep.subr.bf16.mxu0 0
        %7822 = vmatpush1.bf16.msra.mxu0 0
        %7823 = vmatprep.subr.bf16.mxu0 0
        %7824 = vmatpush1.bf16.msra.mxu0 %v7807
        %7825 = vmatprep.subr.bf16.mxu0 0
        %7826 = vmatpush2.bf16.msra.mxu0 0
        %7827 = vmatprep.subr.bf16.mxu0 0
        %7828 = vmatpush2.bf16.msra.mxu0 0
        %7829 = vmatprep.subr.bf16.mxu0 0
        %7830 = vmatpush2.bf16.msra.mxu0 0
        %7831 = vmatprep.subr.bf16.mxu0 0
        %7832 = vmatpush2.bf16.msra.mxu0 0
        %7833 = vmatprep.subr.bf16.mxu0 0
        %7834 = vmatpush2.bf16.msra.mxu0 0
        %7835 = vmatprep.subr.bf16.mxu0 0
        %7836 = vmatpush2.bf16.msra.mxu0 0
        %7837 = vmatprep.subr.bf16.mxu0 0
        %7838 = vmatpush2.bf16.msra.mxu0 0
        %7839 = vmatprep.subr.bf16.mxu0 0
        %7840 = vmatpush2.bf16.msra.mxu0 0
        %7841 = vmatprep.mubr.bf16.mxu0 0
        %7842 = vmatmul.mubr.bf16.gmra.mxu0 %v7804
        %v7843 = vpop.f32.mrf.mxu0
        %v7844 = vadd.f32 0.0, %v7843
        %v7845 = vpop.f32.mrf.mxu0
        %v7846 = vpop.f32.mrf.mxu0
        %v7847 = vpop.f32.mrf.mxu0
        %7848 = vdwg.mxu0
        %v7850 = vsel %vm4687, %v5444, 0
        %v7853 = vsel %vm5459, %v1719, 0
        %7855 = vmatprep.subr.bf16.mxu0 0
        %7856 = vmatpush1.bf16.msra.mxu0 0
        %7857 = vmatprep.subr.bf16.mxu0 0
        %7858 = vmatpush1.bf16.msra.mxu0 0
        %7859 = vmatprep.subr.bf16.mxu0 0
        %7860 = vmatpush1.bf16.msra.mxu0 0
        %7861 = vmatprep.subr.bf16.mxu0 0
        %7862 = vmatpush1.bf16.msra.mxu0 0
        %7863 = vmatprep.subr.bf16.mxu0 0
        %7864 = vmatpush1.bf16.msra.mxu0 0
        %7865 = vmatprep.subr.bf16.mxu0 0
        %7866 = vmatpush1.bf16.msra.mxu0 0
        %7867 = vmatprep.subr.bf16.mxu0 0
        %7868 = vmatpush1.bf16.msra.mxu0 0
        %7869 = vmatprep.subr.bf16.mxu0 0
        %7870 = vmatpush1.bf16.msra.mxu0 %v7853
        %7871 = vmatprep.subr.bf16.mxu0 0
        %7872 = vmatpush2.bf16.msra.mxu0 0
        %7873 = vmatprep.subr.bf16.mxu0 0
        %7874 = vmatpush2.bf16.msra.mxu0 0
        %7875 = vmatprep.subr.bf16.mxu0 0
        %7876 = vmatpush2.bf16.msra.mxu0 0
        %7877 = vmatprep.subr.bf16.mxu0 0
        %7878 = vmatpush2.bf16.msra.mxu0 0
        %7879 = vmatprep.subr.bf16.mxu0 0
        %7880 = vmatpush2.bf16.msra.mxu0 0
        %7881 = vmatprep.subr.bf16.mxu0 0
        %7882 = vmatpush2.bf16.msra.mxu0 0
        %7883 = vmatprep.subr.bf16.mxu0 0
        %7884 = vmatpush2.bf16.msra.mxu0 0
        %7885 = vmatprep.subr.bf16.mxu0 0
        %7886 = vmatpush2.bf16.msra.mxu0 0
        %7887 = vmatprep.mubr.bf16.mxu0 0
        %7888 = vmatmul.mubr.bf16.gmra.mxu0 %v7850
        %v7889 = vpop.f32.mrf.mxu0
        %v7890 = vadd.f32 0.0, %v7889
        %v7891 = vpop.f32.mrf.mxu0
        %v7892 = vpop.f32.mrf.mxu0
        %v7893 = vpop.f32.mrf.mxu0
        %7894 = vdwg.mxu0
        %v7896 = vsel %vm4687, %v5445, 0
        %v7899 = vsel %vm5459, %v1721, 0
        %7901 = vmatprep.subr.bf16.mxu0 0
        %7902 = vmatpush1.bf16.msra.mxu0 0
        %7903 = vmatprep.subr.bf16.mxu0 0
        %7904 = vmatpush1.bf16.msra.mxu0 0
        %7905 = vmatprep.subr.bf16.mxu0 0
        %7906 = vmatpush1.bf16.msra.mxu0 0
        %7907 = vmatprep.subr.bf16.mxu0 0
        %7908 = vmatpush1.bf16.msra.mxu0 0
        %7909 = vmatprep.subr.bf16.mxu0 0
        %7910 = vmatpush1.bf16.msra.mxu0 0
        %7911 = vmatprep.subr.bf16.mxu0 0
        %7912 = vmatpush1.bf16.msra.mxu0 0
        %7913 = vmatprep.subr.bf16.mxu0 0
        %7914 = vmatpush1.bf16.msra.mxu0 0
        %7915 = vmatprep.subr.bf16.mxu0 0
        %7916 = vmatpush1.bf16.msra.mxu0 %v7899
        %7917 = vmatprep.subr.bf16.mxu0 0
        %7918 = vmatpush2.bf16.msra.mxu0 0
        %7919 = vmatprep.subr.bf16.mxu0 0
        %7920 = vmatpush2.bf16.msra.mxu0 0
        %7921 = vmatprep.subr.bf16.mxu0 0
        %7922 = vmatpush2.bf16.msra.mxu0 0
        %7923 = vmatprep.subr.bf16.mxu0 0
        %7924 = vmatpush2.bf16.msra.mxu0 0
        %7925 = vmatprep.subr.bf16.mxu0 0
        %7926 = vmatpush2.bf16.msra.mxu0 0
        %7927 = vmatprep.subr.bf16.mxu0 0
        %7928 = vmatpush2.bf16.msra.mxu0 0
        %7929 = vmatprep.subr.bf16.mxu0 0
        %7930 = vmatpush2.bf16.msra.mxu0 0
        %7931 = vmatprep.subr.bf16.mxu0 0
        %7932 = vmatpush2.bf16.msra.mxu0 0
        %7933 = vmatprep.mubr.bf16.mxu0 0
        %7934 = vmatmul.mubr.bf16.gmra.mxu0 %v7896
        %v7935 = vpop.f32.mrf.mxu0
        %v7936 = vadd.f32 0.0, %v7935
        %v7937 = vpop.f32.mrf.mxu0
        %v7938 = vpop.f32.mrf.mxu0
        %v7939 = vpop.f32.mrf.mxu0
        %7940 = vdwg.mxu0
        %v7942 = vsel %vm4687, %v5446, 0
        %v7945 = vsel %vm5459, %v1723, 0
        %7947 = vmatprep.subr.bf16.mxu0 0
        %7948 = vmatpush1.bf16.msra.mxu0 0
        %7949 = vmatprep.subr.bf16.mxu0 0
        %7950 = vmatpush1.bf16.msra.mxu0 0
        %7951 = vmatprep.subr.bf16.mxu0 0
        %7952 = vmatpush1.bf16.msra.mxu0 0
        %7953 = vmatprep.subr.bf16.mxu0 0
        %7954 = vmatpush1.bf16.msra.mxu0 0
        %7955 = vmatprep.subr.bf16.mxu0 0
        %7956 = vmatpush1.bf16.msra.mxu0 0
        %7957 = vmatprep.subr.bf16.mxu0 0
        %7958 = vmatpush1.bf16.msra.mxu0 0
        %7959 = vmatprep.subr.bf16.mxu0 0
        %7960 = vmatpush1.bf16.msra.mxu0 0
        %7961 = vmatprep.subr.bf16.mxu0 0
        %7962 = vmatpush1.bf16.msra.mxu0 %v7945
        %7963 = vmatprep.subr.bf16.mxu0 0
        %7964 = vmatpush2.bf16.msra.mxu0 0
        %7965 = vmatprep.subr.bf16.mxu0 0
        %7966 = vmatpush2.bf16.msra.mxu0 0
        %7967 = vmatprep.subr.bf16.mxu0 0
        %7968 = vmatpush2.bf16.msra.mxu0 0
        %7969 = vmatprep.subr.bf16.mxu0 0
        %7970 = vmatpush2.bf16.msra.mxu0 0
        %7971 = vmatprep.subr.bf16.mxu0 0
        %7972 = vmatpush2.bf16.msra.mxu0 0
        %7973 = vmatprep.subr.bf16.mxu0 0
        %7974 = vmatpush2.bf16.msra.mxu0 0
        %7975 = vmatprep.subr.bf16.mxu0 0
        %7976 = vmatpush2.bf16.msra.mxu0 0
        %7977 = vmatprep.subr.bf16.mxu0 0
        %7978 = vmatpush2.bf16.msra.mxu0 0
        %7979 = vmatprep.mubr.bf16.mxu0 0
        %7980 = vmatmul.mubr.bf16.gmra.mxu0 %v7942
        %v7981 = vpop.f32.mrf.mxu0
        %v7982 = vadd.f32 0.0, %v7981
        %v7983 = vpop.f32.mrf.mxu0
        %v7984 = vpop.f32.mrf.mxu0
        %v7985 = vpop.f32.mrf.mxu0
        %7986 = vdwg.mxu0
        %v7988 = vsel %vm4687, %v5447, 0
        %v7991 = vsel %vm5459, %v1725, 0
        %7993 = vmatprep.subr.bf16.mxu0 0
        %7994 = vmatpush1.bf16.msra.mxu0 0
        %7995 = vmatprep.subr.bf16.mxu0 0
        %7996 = vmatpush1.bf16.msra.mxu0 0
        %7997 = vmatprep.subr.bf16.mxu0 0
        %7998 = vmatpush1.bf16.msra.mxu0 0
        %7999 = vmatprep.subr.bf16.mxu0 0
        %8000 = vmatpush1.bf16.msra.mxu0 0
        %8001 = vmatprep.subr.bf16.mxu0 0
        %8002 = vmatpush1.bf16.msra.mxu0 0
        %8003 = vmatprep.subr.bf16.mxu0 0
        %8004 = vmatpush1.bf16.msra.mxu0 0
        %8005 = vmatprep.subr.bf16.mxu0 0
        %8006 = vmatpush1.bf16.msra.mxu0 0
        %8007 = vmatprep.subr.bf16.mxu0 0
        %8008 = vmatpush1.bf16.msra.mxu0 %v7991
        %8009 = vmatprep.subr.bf16.mxu0 0
        %8010 = vmatpush2.bf16.msra.mxu0 0
        %8011 = vmatprep.subr.bf16.mxu0 0
        %8012 = vmatpush2.bf16.msra.mxu0 0
        %8013 = vmatprep.subr.bf16.mxu0 0
        %8014 = vmatpush2.bf16.msra.mxu0 0
        %8015 = vmatprep.subr.bf16.mxu0 0
        %8016 = vmatpush2.bf16.msra.mxu0 0
        %8017 = vmatprep.subr.bf16.mxu0 0
        %8018 = vmatpush2.bf16.msra.mxu0 0
        %8019 = vmatprep.subr.bf16.mxu0 0
        %8020 = vmatpush2.bf16.msra.mxu0 0
        %8021 = vmatprep.subr.bf16.mxu0 0
        %8022 = vmatpush2.bf16.msra.mxu0 0
        %8023 = vmatprep.subr.bf16.mxu0 0
        %8024 = vmatpush2.bf16.msra.mxu0 0
        %8025 = vmatprep.mubr.bf16.mxu0 0
        %8026 = vmatmul.mubr.bf16.gmra.mxu0 %v7988
        %v8027 = vpop.f32.mrf.mxu0
        %v8028 = vadd.f32 0.0, %v8027
        %v8029 = vpop.f32.mrf.mxu0
        %v8030 = vpop.f32.mrf.mxu0
        %v8031 = vpop.f32.mrf.mxu0
        %8032 = vdwg.mxu0
        %v8034 = vsel %vm4687, %v5448, 0
        %v8037 = vsel %vm5459, %v1727, 0
        %8039 = vmatprep.subr.bf16.mxu0 0
        %8040 = vmatpush1.bf16.msra.mxu0 0
        %8041 = vmatprep.subr.bf16.mxu0 0
        %8042 = vmatpush1.bf16.msra.mxu0 0
        %8043 = vmatprep.subr.bf16.mxu0 0
        %8044 = vmatpush1.bf16.msra.mxu0 0
        %8045 = vmatprep.subr.bf16.mxu0 0
        %8046 = vmatpush1.bf16.msra.mxu0 0
        %8047 = vmatprep.subr.bf16.mxu0 0
        %8048 = vmatpush1.bf16.msra.mxu0 0
        %8049 = vmatprep.subr.bf16.mxu0 0
        %8050 = vmatpush1.bf16.msra.mxu0 0
        %8051 = vmatprep.subr.bf16.mxu0 0
        %8052 = vmatpush1.bf16.msra.mxu0 0
        %8053 = vmatprep.subr.bf16.mxu0 0
        %8054 = vmatpush1.bf16.msra.mxu0 %v8037
        %8055 = vmatprep.subr.bf16.mxu0 0
        %8056 = vmatpush2.bf16.msra.mxu0 0
        %8057 = vmatprep.subr.bf16.mxu0 0
        %8058 = vmatpush2.bf16.msra.mxu0 0
        %8059 = vmatprep.subr.bf16.mxu0 0
        %8060 = vmatpush2.bf16.msra.mxu0 0
        %8061 = vmatprep.subr.bf16.mxu0 0
        %8062 = vmatpush2.bf16.msra.mxu0 0
        %8063 = vmatprep.subr.bf16.mxu0 0
        %8064 = vmatpush2.bf16.msra.mxu0 0
        %8065 = vmatprep.subr.bf16.mxu0 0
        %8066 = vmatpush2.bf16.msra.mxu0 0
        %8067 = vmatprep.subr.bf16.mxu0 0
        %8068 = vmatpush2.bf16.msra.mxu0 0
        %8069 = vmatprep.subr.bf16.mxu0 0
        %8070 = vmatpush2.bf16.msra.mxu0 0
        %8071 = vmatprep.mubr.bf16.mxu0 0
        %8072 = vmatmul.mubr.bf16.gmra.mxu0 %v8034
        %v8073 = vpop.f32.mrf.mxu0
        %v8074 = vadd.f32 0.0, %v8073
        %v8075 = vpop.f32.mrf.mxu0
        %v8076 = vpop.f32.mrf.mxu0
        %v8077 = vpop.f32.mrf.mxu0
        %8078 = vdwg.mxu0
        %v8080 = vsel %vm4687, %v5449, 0
        %v8083 = vsel %vm5459, %v1729, 0
        %8085 = vmatprep.subr.bf16.mxu0 0
        %8086 = vmatpush1.bf16.msra.mxu0 0
        %8087 = vmatprep.subr.bf16.mxu0 0
        %8088 = vmatpush1.bf16.msra.mxu0 0
        %8089 = vmatprep.subr.bf16.mxu0 0
        %8090 = vmatpush1.bf16.msra.mxu0 0
        %8091 = vmatprep.subr.bf16.mxu0 0
        %8092 = vmatpush1.bf16.msra.mxu0 0
        %8093 = vmatprep.subr.bf16.mxu0 0
        %8094 = vmatpush1.bf16.msra.mxu0 0
        %8095 = vmatprep.subr.bf16.mxu0 0
        %8096 = vmatpush1.bf16.msra.mxu0 0
        %8097 = vmatprep.subr.bf16.mxu0 0
        %8098 = vmatpush1.bf16.msra.mxu0 0
        %8099 = vmatprep.subr.bf16.mxu0 0
        %8100 = vmatpush1.bf16.msra.mxu0 %v8083
        %8101 = vmatprep.subr.bf16.mxu0 0
        %8102 = vmatpush2.bf16.msra.mxu0 0
        %8103 = vmatprep.subr.bf16.mxu0 0
        %8104 = vmatpush2.bf16.msra.mxu0 0
        %8105 = vmatprep.subr.bf16.mxu0 0
        %8106 = vmatpush2.bf16.msra.mxu0 0
        %8107 = vmatprep.subr.bf16.mxu0 0
        %8108 = vmatpush2.bf16.msra.mxu0 0
        %8109 = vmatprep.subr.bf16.mxu0 0
        %8110 = vmatpush2.bf16.msra.mxu0 0
        %8111 = vmatprep.subr.bf16.mxu0 0
        %8112 = vmatpush2.bf16.msra.mxu0 0
        %8113 = vmatprep.subr.bf16.mxu0 0
        %8114 = vmatpush2.bf16.msra.mxu0 0
        %8115 = vmatprep.subr.bf16.mxu0 0
        %8116 = vmatpush2.bf16.msra.mxu0 0
        %8117 = vmatprep.mubr.bf16.mxu0 0
        %8118 = vmatmul.mubr.bf16.gmra.mxu0 %v8080
        %v8119 = vpop.f32.mrf.mxu0
        %v8120 = vadd.f32 0.0, %v8119
        %v8121 = vpop.f32.mrf.mxu0
        %v8122 = vpop.f32.mrf.mxu0
        %v8123 = vpop.f32.mrf.mxu0
        %8124 = vdwg.mxu0
        %v8126 = vsel %vm4687, %v5450, 0
        %v8129 = vsel %vm5459, %v1731, 0
        %8131 = vmatprep.subr.bf16.mxu0 0
        %8132 = vmatpush1.bf16.msra.mxu0 0
        %8133 = vmatprep.subr.bf16.mxu0 0
        %8134 = vmatpush1.bf16.msra.mxu0 0
        %8135 = vmatprep.subr.bf16.mxu0 0
        %8136 = vmatpush1.bf16.msra.mxu0 0
        %8137 = vmatprep.subr.bf16.mxu0 0
        %8138 = vmatpush1.bf16.msra.mxu0 0
        %8139 = vmatprep.subr.bf16.mxu0 0
        %8140 = vmatpush1.bf16.msra.mxu0 0
        %8141 = vmatprep.subr.bf16.mxu0 0
        %8142 = vmatpush1.bf16.msra.mxu0 0
        %8143 = vmatprep.subr.bf16.mxu0 0
        %8144 = vmatpush1.bf16.msra.mxu0 0
        %8145 = vmatprep.subr.bf16.mxu0 0
        %8146 = vmatpush1.bf16.msra.mxu0 %v8129
        %8147 = vmatprep.subr.bf16.mxu0 0
        %8148 = vmatpush2.bf16.msra.mxu0 0
        %8149 = vmatprep.subr.bf16.mxu0 0
        %8150 = vmatpush2.bf16.msra.mxu0 0
        %8151 = vmatprep.subr.bf16.mxu0 0
        %8152 = vmatpush2.bf16.msra.mxu0 0
        %8153 = vmatprep.subr.bf16.mxu0 0
        %8154 = vmatpush2.bf16.msra.mxu0 0
        %8155 = vmatprep.subr.bf16.mxu0 0
        %8156 = vmatpush2.bf16.msra.mxu0 0
        %8157 = vmatprep.subr.bf16.mxu0 0
        %8158 = vmatpush2.bf16.msra.mxu0 0
        %8159 = vmatprep.subr.bf16.mxu0 0
        %8160 = vmatpush2.bf16.msra.mxu0 0
        %8161 = vmatprep.subr.bf16.mxu0 0
        %8162 = vmatpush2.bf16.msra.mxu0 0
        %8163 = vmatprep.mubr.bf16.mxu0 0
        %8164 = vmatmul.mubr.bf16.gmra.mxu0 %v8126
        %v8165 = vpop.f32.mrf.mxu0
        %v8166 = vadd.f32 0.0, %v8165
        %v8167 = vpop.f32.mrf.mxu0
        %v8168 = vpop.f32.mrf.mxu0
        %v8169 = vpop.f32.mrf.mxu0
        %8170 = vdwg.mxu0
        %v8172 = vsel %vm4687, %v5451, 0
        %v8175 = vsel %vm5459, %v1733, 0
        %8177 = vmatprep.subr.bf16.mxu0 0
        %8178 = vmatpush1.bf16.msra.mxu0 0
        %8179 = vmatprep.subr.bf16.mxu0 0
        %8180 = vmatpush1.bf16.msra.mxu0 0
        %8181 = vmatprep.subr.bf16.mxu0 0
        %8182 = vmatpush1.bf16.msra.mxu0 0
        %8183 = vmatprep.subr.bf16.mxu0 0
        %8184 = vmatpush1.bf16.msra.mxu0 0
        %8185 = vmatprep.subr.bf16.mxu0 0
        %8186 = vmatpush1.bf16.msra.mxu0 0
        %8187 = vmatprep.subr.bf16.mxu0 0
        %8188 = vmatpush1.bf16.msra.mxu0 0
        %8189 = vmatprep.subr.bf16.mxu0 0
        %8190 = vmatpush1.bf16.msra.mxu0 0
        %8191 = vmatprep.subr.bf16.mxu0 0
        %8192 = vmatpush1.bf16.msra.mxu0 %v8175
        %8193 = vmatprep.subr.bf16.mxu0 0
        %8194 = vmatpush2.bf16.msra.mxu0 0
        %8195 = vmatprep.subr.bf16.mxu0 0
        %8196 = vmatpush2.bf16.msra.mxu0 0
        %8197 = vmatprep.subr.bf16.mxu0 0
        %8198 = vmatpush2.bf16.msra.mxu0 0
        %8199 = vmatprep.subr.bf16.mxu0 0
        %8200 = vmatpush2.bf16.msra.mxu0 0
        %8201 = vmatprep.subr.bf16.mxu0 0
        %8202 = vmatpush2.bf16.msra.mxu0 0
        %8203 = vmatprep.subr.bf16.mxu0 0
        %8204 = vmatpush2.bf16.msra.mxu0 0
        %8205 = vmatprep.subr.bf16.mxu0 0
        %8206 = vmatpush2.bf16.msra.mxu0 0
        %8207 = vmatprep.subr.bf16.mxu0 0
        %8208 = vmatpush2.bf16.msra.mxu0 0
        %8209 = vmatprep.mubr.bf16.mxu0 0
        %8210 = vmatmul.mubr.bf16.gmra.mxu0 %v8172
        %v8211 = vpop.f32.mrf.mxu0
        %v8212 = vadd.f32 0.0, %v8211
        %v8213 = vpop.f32.mrf.mxu0
        %v8214 = vpop.f32.mrf.mxu0
        %v8215 = vpop.f32.mrf.mxu0
        %8216 = vdwg.mxu0
        %v8218 = vsel %vm4687, %v5452, 0
        %v8221 = vsel %vm5459, %v1735, 0
        %8223 = vmatprep.subr.bf16.mxu0 0
        %8224 = vmatpush1.bf16.msra.mxu0 0
        %8225 = vmatprep.subr.bf16.mxu0 0
        %8226 = vmatpush1.bf16.msra.mxu0 0
        %8227 = vmatprep.subr.bf16.mxu0 0
        %8228 = vmatpush1.bf16.msra.mxu0 0
        %8229 = vmatprep.subr.bf16.mxu0 0
        %8230 = vmatpush1.bf16.msra.mxu0 0
        %8231 = vmatprep.subr.bf16.mxu0 0
        %8232 = vmatpush1.bf16.msra.mxu0 0
        %8233 = vmatprep.subr.bf16.mxu0 0
        %8234 = vmatpush1.bf16.msra.mxu0 0
        %8235 = vmatprep.subr.bf16.mxu0 0
        %8236 = vmatpush1.bf16.msra.mxu0 0
        %8237 = vmatprep.subr.bf16.mxu0 0
        %8238 = vmatpush1.bf16.msra.mxu0 %v8221
        %8239 = vmatprep.subr.bf16.mxu0 0
        %8240 = vmatpush2.bf16.msra.mxu0 0
        %8241 = vmatprep.subr.bf16.mxu0 0
        %8242 = vmatpush2.bf16.msra.mxu0 0
        %8243 = vmatprep.subr.bf16.mxu0 0
        %8244 = vmatpush2.bf16.msra.mxu0 0
        %8245 = vmatprep.subr.bf16.mxu0 0
        %8246 = vmatpush2.bf16.msra.mxu0 0
        %8247 = vmatprep.subr.bf16.mxu0 0
        %8248 = vmatpush2.bf16.msra.mxu0 0
        %8249 = vmatprep.subr.bf16.mxu0 0
        %8250 = vmatpush2.bf16.msra.mxu0 0
        %8251 = vmatprep.subr.bf16.mxu0 0
        %8252 = vmatpush2.bf16.msra.mxu0 0
        %8253 = vmatprep.subr.bf16.mxu0 0
        %8254 = vmatpush2.bf16.msra.mxu0 0
        %8255 = vmatprep.mubr.bf16.mxu0 0
        %8256 = vmatmul.mubr.bf16.gmra.mxu0 %v8218
        %v8257 = vpop.f32.mrf.mxu0
        %v8258 = vadd.f32 0.0, %v8257
        %v8259 = vpop.f32.mrf.mxu0
        %v8260 = vpop.f32.mrf.mxu0
        %v8261 = vpop.f32.mrf.mxu0
        %8262 = vdwg.mxu0
        %v8264 = vsel %vm4687, %v5453, 0
        %v8267 = vsel %vm5459, %v1737, 0
        %8269 = vmatprep.subr.bf16.mxu0 0
        %8270 = vmatpush1.bf16.msra.mxu0 0
        %8271 = vmatprep.subr.bf16.mxu0 0
        %8272 = vmatpush1.bf16.msra.mxu0 0
        %8273 = vmatprep.subr.bf16.mxu0 0
        %8274 = vmatpush1.bf16.msra.mxu0 0
        %8275 = vmatprep.subr.bf16.mxu0 0
        %8276 = vmatpush1.bf16.msra.mxu0 0
        %8277 = vmatprep.subr.bf16.mxu0 0
        %8278 = vmatpush1.bf16.msra.mxu0 0
        %8279 = vmatprep.subr.bf16.mxu0 0
        %8280 = vmatpush1.bf16.msra.mxu0 0
        %8281 = vmatprep.subr.bf16.mxu0 0
        %8282 = vmatpush1.bf16.msra.mxu0 0
        %8283 = vmatprep.subr.bf16.mxu0 0
        %8284 = vmatpush1.bf16.msra.mxu0 %v8267
        %8285 = vmatprep.subr.bf16.mxu0 0
        %8286 = vmatpush2.bf16.msra.mxu0 0
        %8287 = vmatprep.subr.bf16.mxu0 0
        %8288 = vmatpush2.bf16.msra.mxu0 0
        %8289 = vmatprep.subr.bf16.mxu0 0
        %8290 = vmatpush2.bf16.msra.mxu0 0
        %8291 = vmatprep.subr.bf16.mxu0 0
        %8292 = vmatpush2.bf16.msra.mxu0 0
        %8293 = vmatprep.subr.bf16.mxu0 0
        %8294 = vmatpush2.bf16.msra.mxu0 0
        %8295 = vmatprep.subr.bf16.mxu0 0
        %8296 = vmatpush2.bf16.msra.mxu0 0
        %8297 = vmatprep.subr.bf16.mxu0 0
        %8298 = vmatpush2.bf16.msra.mxu0 0
        %8299 = vmatprep.subr.bf16.mxu0 0
        %8300 = vmatpush2.bf16.msra.mxu0 0
        %8301 = vmatprep.mubr.bf16.mxu0 0
        %8302 = vmatmul.mubr.bf16.gmra.mxu0 %v8264
        %v8303 = vpop.f32.mrf.mxu0
        %v8304 = vadd.f32 0.0, %v8303
        %v8305 = vpop.f32.mrf.mxu0
        %v8306 = vpop.f32.mrf.mxu0
        %v8307 = vpop.f32.mrf.mxu0
        %8308 = vdwg.mxu0
        %v8310 = vsel %vm4687, %v5454, 0
        %v8313 = vsel %vm5459, %v1739, 0
        %8315 = vmatprep.subr.bf16.mxu0 0
        %8316 = vmatpush1.bf16.msra.mxu0 0
        %8317 = vmatprep.subr.bf16.mxu0 0
        %8318 = vmatpush1.bf16.msra.mxu0 0
        %8319 = vmatprep.subr.bf16.mxu0 0
        %8320 = vmatpush1.bf16.msra.mxu0 0
        %8321 = vmatprep.subr.bf16.mxu0 0
        %8322 = vmatpush1.bf16.msra.mxu0 0
        %8323 = vmatprep.subr.bf16.mxu0 0
        %8324 = vmatpush1.bf16.msra.mxu0 0
        %8325 = vmatprep.subr.bf16.mxu0 0
        %8326 = vmatpush1.bf16.msra.mxu0 0
        %8327 = vmatprep.subr.bf16.mxu0 0
        %8328 = vmatpush1.bf16.msra.mxu0 0
        %8329 = vmatprep.subr.bf16.mxu0 0
        %8330 = vmatpush1.bf16.msra.mxu0 %v8313
        %8331 = vmatprep.subr.bf16.mxu0 0
        %8332 = vmatpush2.bf16.msra.mxu0 0
        %8333 = vmatprep.subr.bf16.mxu0 0
        %8334 = vmatpush2.bf16.msra.mxu0 0
        %8335 = vmatprep.subr.bf16.mxu0 0
        %8336 = vmatpush2.bf16.msra.mxu0 0
        %8337 = vmatprep.subr.bf16.mxu0 0
        %8338 = vmatpush2.bf16.msra.mxu0 0
        %8339 = vmatprep.subr.bf16.mxu0 0
        %8340 = vmatpush2.bf16.msra.mxu0 0
        %8341 = vmatprep.subr.bf16.mxu0 0
        %8342 = vmatpush2.bf16.msra.mxu0 0
        %8343 = vmatprep.subr.bf16.mxu0 0
        %8344 = vmatpush2.bf16.msra.mxu0 0
        %8345 = vmatprep.subr.bf16.mxu0 0
        %8346 = vmatpush2.bf16.msra.mxu0 0
        %8347 = vmatprep.mubr.bf16.mxu0 0
        %8348 = vmatmul.mubr.bf16.gmra.mxu0 %v8310
        %v8349 = vpop.f32.mrf.mxu0
        %v8350 = vadd.f32 0.0, %v8349
        %v8351 = vpop.f32.mrf.mxu0
        %v8352 = vpop.f32.mrf.mxu0
        %v8353 = vpop.f32.mrf.mxu0
        %8354 = vdwg.mxu0
        %v8356 = vsel %vm4687, %v5455, 0
        %v8359 = vsel %vm5459, %v1741, 0
        %8361 = vmatprep.subr.bf16.mxu0 0
        %8362 = vmatpush1.bf16.msra.mxu0 0
        %8363 = vmatprep.subr.bf16.mxu0 0
        %8364 = vmatpush1.bf16.msra.mxu0 0
        %8365 = vmatprep.subr.bf16.mxu0 0
        %8366 = vmatpush1.bf16.msra.mxu0 0
        %8367 = vmatprep.subr.bf16.mxu0 0
        %8368 = vmatpush1.bf16.msra.mxu0 0
        %8369 = vmatprep.subr.bf16.mxu0 0
        %8370 = vmatpush1.bf16.msra.mxu0 0
        %8371 = vmatprep.subr.bf16.mxu0 0
        %8372 = vmatpush1.bf16.msra.mxu0 0
        %8373 = vmatprep.subr.bf16.mxu0 0
        %8374 = vmatpush1.bf16.msra.mxu0 0
        %8375 = vmatprep.subr.bf16.mxu0 0
        %8376 = vmatpush1.bf16.msra.mxu0 %v8359
        %8377 = vmatprep.subr.bf16.mxu0 0
        %8378 = vmatpush2.bf16.msra.mxu0 0
        %8379 = vmatprep.subr.bf16.mxu0 0
        %8380 = vmatpush2.bf16.msra.mxu0 0
        %8381 = vmatprep.subr.bf16.mxu0 0
        %8382 = vmatpush2.bf16.msra.mxu0 0
        %8383 = vmatprep.subr.bf16.mxu0 0
        %8384 = vmatpush2.bf16.msra.mxu0 0
        %8385 = vmatprep.subr.bf16.mxu0 0
        %8386 = vmatpush2.bf16.msra.mxu0 0
        %8387 = vmatprep.subr.bf16.mxu0 0
        %8388 = vmatpush2.bf16.msra.mxu0 0
        %8389 = vmatprep.subr.bf16.mxu0 0
        %8390 = vmatpush2.bf16.msra.mxu0 0
        %8391 = vmatprep.subr.bf16.mxu0 0
        %8392 = vmatpush2.bf16.msra.mxu0 0
        %8393 = vmatprep.mubr.bf16.mxu0 0
        %8394 = vmatmul.mubr.bf16.gmra.mxu0 %v8356
        %v8395 = vpop.f32.mrf.mxu0
        %v8396 = vadd.f32 0.0, %v8395
        %v8397 = vpop.f32.mrf.mxu0
        %v8398 = vpop.f32.mrf.mxu0
        %v8399 = vpop.f32.mrf.mxu0
        %8400 = vdwg.mxu0
        %v8401 = vpack.c.bf16 %v5498, %v5498
        %v8402 = vpack.c.bf16 %v5544, %v5544
        %v8403 = vpack.c.bf16 %v5590, %v5590
        %v8404 = vpack.c.bf16 %v5636, %v5636
        %v8405 = vpack.c.bf16 %v5682, %v5682
        %v8406 = vpack.c.bf16 %v5728, %v5728
        %v8407 = vpack.c.bf16 %v5774, %v5774
        %v8408 = vpack.c.bf16 %v5820, %v5820
        %v8409 = vpack.c.bf16 %v5866, %v5866
        %v8410 = vpack.c.bf16 %v5912, %v5912
        %v8411 = vpack.c.bf16 %v5958, %v5958
        %v8412 = vpack.c.bf16 %v6004, %v6004
        %v8413 = vpack.c.bf16 %v6050, %v6050
        %v8414 = vpack.c.bf16 %v6096, %v6096
        %v8415 = vpack.c.bf16 %v6142, %v6142
        %v8416 = vpack.c.bf16 %v6188, %v6188
        %v8417 = vpack.c.bf16 %v6234, %v6234
        %v8418 = vpack.c.bf16 %v6280, %v6280
        %v8419 = vpack.c.bf16 %v6326, %v6326
        %v8420 = vpack.c.bf16 %v6372, %v6372
        %v8421 = vpack.c.bf16 %v6418, %v6418
        %v8422 = vpack.c.bf16 %v6464, %v6464
        %v8423 = vpack.c.bf16 %v6510, %v6510
        %v8424 = vpack.c.bf16 %v6556, %v6556
        %v8425 = vpack.c.bf16 %v6602, %v6602
        %v8426 = vpack.c.bf16 %v6648, %v6648
        %v8427 = vpack.c.bf16 %v6694, %v6694
        %v8428 = vpack.c.bf16 %v6740, %v6740
        %v8429 = vpack.c.bf16 %v6786, %v6786
        %v8430 = vpack.c.bf16 %v6832, %v6832
        %v8431 = vpack.c.bf16 %v6878, %v6878
        %v8432 = vpack.c.bf16 %v6924, %v6924
        %v8433 = vpack.c.bf16 %v6970, %v6970
        %v8434 = vpack.c.bf16 %v7016, %v7016
        %v8435 = vpack.c.bf16 %v7062, %v7062
        %v8436 = vpack.c.bf16 %v7108, %v7108
        %v8437 = vpack.c.bf16 %v7154, %v7154
        %v8438 = vpack.c.bf16 %v7200, %v7200
        %v8439 = vpack.c.bf16 %v7246, %v7246
        %v8440 = vpack.c.bf16 %v7292, %v7292
        %v8441 = vpack.c.bf16 %v7338, %v7338
        %v8442 = vpack.c.bf16 %v7384, %v7384
        %v8443 = vpack.c.bf16 %v7430, %v7430
        %v8444 = vpack.c.bf16 %v7476, %v7476
        %v8445 = vpack.c.bf16 %v7522, %v7522
        %v8446 = vpack.c.bf16 %v7568, %v7568
        %v8447 = vpack.c.bf16 %v7614, %v7614
        %v8448 = vpack.c.bf16 %v7660, %v7660
        %v8449 = vpack.c.bf16 %v7706, %v7706
        %v8450 = vpack.c.bf16 %v7752, %v7752
        %v8451 = vpack.c.bf16 %v7798, %v7798
        %v8452 = vpack.c.bf16 %v7844, %v7844
        %v8453 = vpack.c.bf16 %v7890, %v7890
        %v8454 = vpack.c.bf16 %v7936, %v7936
        %v8455 = vpack.c.bf16 %v7982, %v7982
        %v8456 = vpack.c.bf16 %v8028, %v8028
        %v8457 = vpack.c.bf16 %v8074, %v8074
        %v8458 = vpack.c.bf16 %v8120, %v8120
        %v8459 = vpack.c.bf16 %v8166, %v8166
        %v8460 = vpack.c.bf16 %v8212, %v8212
        %v8461 = vpack.c.bf16 %v8258, %v8258
        %v8462 = vpack.c.bf16 %v8304, %v8304
        %v8463 = vpack.c.bf16 %v8350, %v8350
        %v8464 = vpack.c.bf16 %v8396, %v8396
        %v8465 = vld [vmem:[#allocation8] sm:$0xf]
        %v8466 = vld [vmem:[#allocation8 + $0x4] sm:$0xf]
        %v8467 = vld [vmem:[#allocation8 + $0x8] sm:$0xf]
        %v8468 = vld [vmem:[#allocation8 + $0xc] sm:$0xf]
        %s8469 = scalar_lea.vmem [#allocation8], 16
        %v8470 = vld [vmem:[%s8469] sm:$0xf]
        %v8471 = vld [vmem:[%s8469 + $0x4] sm:$0xf]
        %v8472 = vld [vmem:[%s8469 + $0x8] sm:$0xf]
        %v8473 = vld [vmem:[%s8469 + $0xc] sm:$0xf]
        %v8490 = vunpack.c.l.b16 %v8417
        %v8491 = vunpack.c.l.b16 %v8418
        %v8492 = vunpack.c.l.b16 %v8419
        %v8493 = vunpack.c.l.b16 %v8420
        %v8494 = vunpack.c.l.b16 %v8421
        %v8495 = vunpack.c.l.b16 %v8422
        %v8496 = vunpack.c.l.b16 %v8423
        %v8497 = vunpack.c.l.b16 %v8424
        %v8498 = vunpack.c.l.b16 %v8425
        %v8499 = vunpack.c.l.b16 %v8426
        %v8500 = vunpack.c.l.b16 %v8427
        %v8501 = vunpack.c.l.b16 %v8428
        %v8502 = vunpack.c.l.b16 %v8429
        %v8503 = vunpack.c.l.b16 %v8430
        %v8504 = vunpack.c.l.b16 %v8431
        %v8505 = vunpack.c.l.b16 %v8432
        %v8506 = vpack.c.b16 %v8491, %v8490
        %v8507 = vpack.c.b16 %v8493, %v8492
        %v8508 = vpack.c.b16 %v8495, %v8494
        %v8509 = vpack.c.b16 %v8497, %v8496
        %v8510 = vpack.c.b16 %v8499, %v8498
        %v8511 = vpack.c.b16 %v8501, %v8500
        %v8512 = vpack.c.b16 %v8503, %v8502
        %v8513 = vpack.c.b16 %v8505, %v8504
        %v8518 = vunpack.c.l.b16 %v8470
        %v8519 = vunpack.c.l.b16 %v8471
        %v8520 = vunpack.c.l.b16 %v8472
        %v8521 = vunpack.c.l.b16 %v8473
        %v8522 = vpack.c.b16 %v8519, %v8518
        %v8523 = vpack.c.b16 %v8521, %v8520
        %v8527 = vsel %vm1742, %v8506, 0
        %v8530 = vsel %vm1742, %v8507, 0
        %v8533 = vsel %vm1742, %v8508, 0
        %v8536 = vsel %vm1742, %v8509, 0
        %v8539 = vsel %vm1742, %v8510, 0
        %v8542 = vsel %vm1742, %v8511, 0
        %v8545 = vsel %vm1742, %v8512, 0
        %v8548 = vsel %vm1742, %v8513, 0
        %8550 = vmatprep.subr.bf16.mxu0 0
        %8551 = vmatpush1.bf16.msra.mxu0 0
        %8552 = vmatprep.subr.bf16.mxu0 0
        %8553 = vmatpush1.bf16.msra.mxu0 0
        %8554 = vmatprep.subr.bf16.mxu0 0
        %8555 = vmatpush1.bf16.msra.mxu0 0
        %8556 = vmatprep.subr.bf16.mxu0 0
        %8557 = vmatpush1.bf16.msra.mxu0 0
        %8558 = vmatprep.subr.bf16.mxu0 0
        %8559 = vmatpush1.bf16.msra.mxu0 0
        %8560 = vmatprep.subr.bf16.mxu0 0
        %8561 = vmatpush1.bf16.msra.mxu0 0
        %8562 = vmatprep.subr.bf16.mxu0 0
        %8563 = vmatpush1.bf16.msra.mxu0 %v8523
        %8564 = vmatprep.subr.bf16.mxu0 0
        %8565 = vmatpush1.bf16.msra.mxu0 %v8522
        %8566 = vmatprep.subr.bf16.mxu0 0
        %8567 = vmatpush2.bf16.msra.mxu0 0
        %8568 = vmatprep.subr.bf16.mxu0 0
        %8569 = vmatpush2.bf16.msra.mxu0 0
        %8570 = vmatprep.subr.bf16.mxu0 0
        %8571 = vmatpush2.bf16.msra.mxu0 0
        %8572 = vmatprep.subr.bf16.mxu0 0
        %8573 = vmatpush2.bf16.msra.mxu0 0
        %8574 = vmatprep.subr.bf16.mxu0 0
        %8575 = vmatpush2.bf16.msra.mxu0 0
        %8576 = vmatprep.subr.bf16.mxu0 0
        %8577 = vmatpush2.bf16.msra.mxu0 0
        %8578 = vmatprep.subr.bf16.mxu0 0
        %8579 = vmatpush2.bf16.msra.mxu0 0
        %8580 = vmatprep.subr.bf16.mxu0 0
        %8581 = vmatpush2.bf16.msra.mxu0 0
        %8582 = vmatprep.mubr.bf16.mxu0 0
        %8583 = vmatmul.mubr.bf16.gmra.mxu0 %v8527
        %v8584 = vpop.f32.mrf.mxu0
        %v8585 = vadd.f32 0.0, %v8584
        %v8586 = vpop.f32.mrf.mxu0
        %v8587 = vpop.f32.mrf.mxu0
        %v8588 = vadd.f32 0.0, %v8587
        %v8589 = vpop.f32.mrf.mxu0
        %8590 = vmatprep.mubr.bf16.mxu0 0
        %8591 = vmatmul.mubr.bf16.gmra.mxu0 %v8530
        %v8592 = vpop.f32.mrf.mxu0
        %v8593 = vadd.f32 0.0, %v8592
        %v8594 = vpop.f32.mrf.mxu0
        %v8595 = vpop.f32.mrf.mxu0
        %v8596 = vadd.f32 0.0, %v8595
        %v8597 = vpop.f32.mrf.mxu0
        %8598 = vmatprep.mubr.bf16.mxu0 0
        %8599 = vmatmul.mubr.bf16.gmra.mxu0 %v8533
        %v8600 = vpop.f32.mrf.mxu0
        %v8601 = vadd.f32 0.0, %v8600
        %v8602 = vpop.f32.mrf.mxu0
        %v8603 = vpop.f32.mrf.mxu0
        %v8604 = vadd.f32 0.0, %v8603
        %v8605 = vpop.f32.mrf.mxu0
        %8606 = vmatprep.mubr.bf16.mxu0 0
        %8607 = vmatmul.mubr.bf16.gmra.mxu0 %v8536
        %v8608 = vpop.f32.mrf.mxu0
        %v8609 = vadd.f32 0.0, %v8608
        %v8610 = vpop.f32.mrf.mxu0
        %v8611 = vpop.f32.mrf.mxu0
        %v8612 = vadd.f32 0.0, %v8611
        %v8613 = vpop.f32.mrf.mxu0
        %8614 = vmatprep.mubr.bf16.mxu0 0
        %8615 = vmatmul.mubr.bf16.gmra.mxu0 %v8539
        %v8616 = vpop.f32.mrf.mxu0
        %v8617 = vadd.f32 0.0, %v8616
        %v8618 = vpop.f32.mrf.mxu0
        %v8619 = vpop.f32.mrf.mxu0
        %v8620 = vadd.f32 0.0, %v8619
        %v8621 = vpop.f32.mrf.mxu0
        %8622 = vmatprep.mubr.bf16.mxu0 0
        %8623 = vmatmul.mubr.bf16.gmra.mxu0 %v8542
        %v8624 = vpop.f32.mrf.mxu0
        %v8625 = vadd.f32 0.0, %v8624
        %v8626 = vpop.f32.mrf.mxu0
        %v8627 = vpop.f32.mrf.mxu0
        %v8628 = vadd.f32 0.0, %v8627
        %v8629 = vpop.f32.mrf.mxu0
        %8630 = vmatprep.mubr.bf16.mxu0 0
        %8631 = vmatmul.mubr.bf16.gmra.mxu0 %v8545
        %v8632 = vpop.f32.mrf.mxu0
        %v8633 = vadd.f32 0.0, %v8632
        %v8634 = vpop.f32.mrf.mxu0
        %v8635 = vpop.f32.mrf.mxu0
        %v8636 = vadd.f32 0.0, %v8635
        %v8637 = vpop.f32.mrf.mxu0
        %8638 = vmatprep.mubr.bf16.mxu0 0
        %8639 = vmatmul.mubr.bf16.gmra.mxu0 %v8548
        %v8640 = vpop.f32.mrf.mxu0
        %v8641 = vadd.f32 0.0, %v8640
        %v8642 = vpop.f32.mrf.mxu0
        %v8643 = vpop.f32.mrf.mxu0
        %v8644 = vadd.f32 0.0, %v8643
        %v8645 = vpop.f32.mrf.mxu0
        %8646 = vdwg.mxu0
        %v8663 = vunpack.c.l.b16 %v8401
        %v8664 = vunpack.c.l.b16 %v8402
        %v8665 = vunpack.c.l.b16 %v8403
        %v8666 = vunpack.c.l.b16 %v8404
        %v8667 = vunpack.c.l.b16 %v8405
        %v8668 = vunpack.c.l.b16 %v8406
        %v8669 = vunpack.c.l.b16 %v8407
        %v8670 = vunpack.c.l.b16 %v8408
        %v8671 = vunpack.c.l.b16 %v8409
        %v8672 = vunpack.c.l.b16 %v8410
        %v8673 = vunpack.c.l.b16 %v8411
        %v8674 = vunpack.c.l.b16 %v8412
        %v8675 = vunpack.c.l.b16 %v8413
        %v8676 = vunpack.c.l.b16 %v8414
        %v8677 = vunpack.c.l.b16 %v8415
        %v8678 = vunpack.c.l.b16 %v8416
        %v8679 = vpack.c.b16 %v8664, %v8663
        %v8680 = vpack.c.b16 %v8666, %v8665
        %v8681 = vpack.c.b16 %v8668, %v8667
        %v8682 = vpack.c.b16 %v8670, %v8669
        %v8683 = vpack.c.b16 %v8672, %v8671
        %v8684 = vpack.c.b16 %v8674, %v8673
        %v8685 = vpack.c.b16 %v8676, %v8675
        %v8686 = vpack.c.b16 %v8678, %v8677
        %v8691 = vunpack.c.l.b16 %v8465
        %v8692 = vunpack.c.l.b16 %v8466
        %v8693 = vunpack.c.l.b16 %v8467
        %v8694 = vunpack.c.l.b16 %v8468
        %v8695 = vpack.c.b16 %v8692, %v8691
        %v8696 = vpack.c.b16 %v8694, %v8693
        %v8700 = vsel %vm1742, %v8679, 0
        %v8703 = vsel %vm1742, %v8680, 0
        %v8706 = vsel %vm1742, %v8681, 0
        %v8709 = vsel %vm1742, %v8682, 0
        %v8712 = vsel %vm1742, %v8683, 0
        %v8715 = vsel %vm1742, %v8684, 0
        %v8718 = vsel %vm1742, %v8685, 0
        %v8721 = vsel %vm1742, %v8686, 0
        %8723 = vmatprep.subr.bf16.mxu0 0
        %8724 = vmatpush1.bf16.msra.mxu0 0
        %8725 = vmatprep.subr.bf16.mxu0 0
        %8726 = vmatpush1.bf16.msra.mxu0 0
        %8727 = vmatprep.subr.bf16.mxu0 0
        %8728 = vmatpush1.bf16.msra.mxu0 0
        %8729 = vmatprep.subr.bf16.mxu0 0
        %8730 = vmatpush1.bf16.msra.mxu0 0
        %8731 = vmatprep.subr.bf16.mxu0 0
        %8732 = vmatpush1.bf16.msra.mxu0 0
        %8733 = vmatprep.subr.bf16.mxu0 0
        %8734 = vmatpush1.bf16.msra.mxu0 0
        %8735 = vmatprep.subr.bf16.mxu0 0
        %8736 = vmatpush1.bf16.msra.mxu0 %v8696
        %8737 = vmatprep.subr.bf16.mxu0 0
        %8738 = vmatpush1.bf16.msra.mxu0 %v8695
        %8739 = vmatprep.subr.bf16.mxu0 0
        %8740 = vmatpush2.bf16.msra.mxu0 0
        %8741 = vmatprep.subr.bf16.mxu0 0
        %8742 = vmatpush2.bf16.msra.mxu0 0
        %8743 = vmatprep.subr.bf16.mxu0 0
        %8744 = vmatpush2.bf16.msra.mxu0 0
        %8745 = vmatprep.subr.bf16.mxu0 0
        %8746 = vmatpush2.bf16.msra.mxu0 0
        %8747 = vmatprep.subr.bf16.mxu0 0
        %8748 = vmatpush2.bf16.msra.mxu0 0
        %8749 = vmatprep.subr.bf16.mxu0 0
        %8750 = vmatpush2.bf16.msra.mxu0 0
        %8751 = vmatprep.subr.bf16.mxu0 0
        %8752 = vmatpush2.bf16.msra.mxu0 0
        %8753 = vmatprep.subr.bf16.mxu0 0
        %8754 = vmatpush2.bf16.msra.mxu0 0
        %8755 = vmatprep.mubr.bf16.mxu0 0
        %8756 = vmatmul.mubr.bf16.gmra.mxu0 %v8700
        %v8757 = vpop.f32.mrf.mxu0
        %v8758 = vadd.f32 %v8585, %v8757
        %v8759 = vpop.f32.mrf.mxu0
        %v8760 = vpop.f32.mrf.mxu0
        %v8761 = vadd.f32 %v8588, %v8760
        %v8762 = vpop.f32.mrf.mxu0
        %8763 = vmatprep.mubr.bf16.mxu0 0
        %8764 = vmatmul.mubr.bf16.gmra.mxu0 %v8703
        %v8765 = vpop.f32.mrf.mxu0
        %v8766 = vadd.f32 %v8593, %v8765
        %v8767 = vpop.f32.mrf.mxu0
        %v8768 = vpop.f32.mrf.mxu0
        %v8769 = vadd.f32 %v8596, %v8768
        %v8770 = vpop.f32.mrf.mxu0
        %8771 = vmatprep.mubr.bf16.mxu0 0
        %8772 = vmatmul.mubr.bf16.gmra.mxu0 %v8706
        %v8773 = vpop.f32.mrf.mxu0
        %v8774 = vadd.f32 %v8601, %v8773
        %v8775 = vpop.f32.mrf.mxu0
        %v8776 = vpop.f32.mrf.mxu0
        %v8777 = vadd.f32 %v8604, %v8776
        %v8778 = vpop.f32.mrf.mxu0
        %8779 = vmatprep.mubr.bf16.mxu0 0
        %8780 = vmatmul.mubr.bf16.gmra.mxu0 %v8709
        %v8781 = vpop.f32.mrf.mxu0
        %v8782 = vadd.f32 %v8609, %v8781
        %v8783 = vpop.f32.mrf.mxu0
        %v8784 = vpop.f32.mrf.mxu0
        %v8785 = vadd.f32 %v8612, %v8784
        %v8786 = vpop.f32.mrf.mxu0
        %8787 = vmatprep.mubr.bf16.mxu0 0
        %8788 = vmatmul.mubr.bf16.gmra.mxu0 %v8712
        %v8789 = vpop.f32.mrf.mxu0
        %v8790 = vadd.f32 %v8617, %v8789
        %v8791 = vpop.f32.mrf.mxu0
        %v8792 = vpop.f32.mrf.mxu0
        %v8793 = vadd.f32 %v8620, %v8792
        %v8794 = vpop.f32.mrf.mxu0
        %8795 = vmatprep.mubr.bf16.mxu0 0
        %8796 = vmatmul.mubr.bf16.gmra.mxu0 %v8715
        %v8797 = vpop.f32.mrf.mxu0
        %v8798 = vadd.f32 %v8625, %v8797
        %v8799 = vpop.f32.mrf.mxu0
        %v8800 = vpop.f32.mrf.mxu0
        %v8801 = vadd.f32 %v8628, %v8800
        %v8802 = vpop.f32.mrf.mxu0
        %8803 = vmatprep.mubr.bf16.mxu0 0
        %8804 = vmatmul.mubr.bf16.gmra.mxu0 %v8718
        %v8805 = vpop.f32.mrf.mxu0
        %v8806 = vadd.f32 %v8633, %v8805
        %v8807 = vpop.f32.mrf.mxu0
        %v8808 = vpop.f32.mrf.mxu0
        %v8809 = vadd.f32 %v8636, %v8808
        %v8810 = vpop.f32.mrf.mxu0
        %8811 = vmatprep.mubr.bf16.mxu0 0
        %8812 = vmatmul.mubr.bf16.gmra.mxu0 %v8721
        %v8813 = vpop.f32.mrf.mxu0
        %v8814 = vadd.f32 %v8641, %v8813
        %v8815 = vpop.f32.mrf.mxu0
        %v8816 = vpop.f32.mrf.mxu0
        %v8817 = vadd.f32 %v8644, %v8816
        %v8818 = vpop.f32.mrf.mxu0
        %8819 = vdwg.mxu0
        %s8820 = scalar_lea.vmem [#allocation8], 32
        %v8821 = vld [vmem:[%s8820] sm:$0xf]
        %v8822 = vld [vmem:[%s8820 + $0x4] sm:$0xf]
        %v8823 = vld [vmem:[%s8820 + $0x8] sm:$0xf]
        %v8824 = vld [vmem:[%s8820 + $0xc] sm:$0xf]
        %v8841 = vunpack.c.l.b16 %v8433
        %v8842 = vunpack.c.l.b16 %v8434
        %v8843 = vunpack.c.l.b16 %v8435
        %v8844 = vunpack.c.l.b16 %v8436
        %v8845 = vunpack.c.l.b16 %v8437
        %v8846 = vunpack.c.l.b16 %v8438
        %v8847 = vunpack.c.l.b16 %v8439
        %v8848 = vunpack.c.l.b16 %v8440
        %v8849 = vunpack.c.l.b16 %v8441
        %v8850 = vunpack.c.l.b16 %v8442
        %v8851 = vunpack.c.l.b16 %v8443
        %v8852 = vunpack.c.l.b16 %v8444
        %v8853 = vunpack.c.l.b16 %v8445
        %v8854 = vunpack.c.l.b16 %v8446
        %v8855 = vunpack.c.l.b16 %v8447
        %v8856 = vunpack.c.l.b16 %v8448
        %v8857 = vpack.c.b16 %v8842, %v8841
        %v8858 = vpack.c.b16 %v8844, %v8843
        %v8859 = vpack.c.b16 %v8846, %v8845
        %v8860 = vpack.c.b16 %v8848, %v8847
        %v8861 = vpack.c.b16 %v8850, %v8849
        %v8862 = vpack.c.b16 %v8852, %v8851
        %v8863 = vpack.c.b16 %v8854, %v8853
        %v8864 = vpack.c.b16 %v8856, %v8855
        %v8869 = vunpack.c.l.b16 %v8821
        %v8870 = vunpack.c.l.b16 %v8822
        %v8871 = vunpack.c.l.b16 %v8823
        %v8872 = vunpack.c.l.b16 %v8824
        %v8873 = vpack.c.b16 %v8870, %v8869
        %v8874 = vpack.c.b16 %v8872, %v8871
        %v8878 = vsel %vm1742, %v8857, 0
        %v8881 = vsel %vm1742, %v8858, 0
        %v8884 = vsel %vm1742, %v8859, 0
        %v8887 = vsel %vm1742, %v8860, 0
        %v8890 = vsel %vm1742, %v8861, 0
        %v8893 = vsel %vm1742, %v8862, 0
        %v8896 = vsel %vm1742, %v8863, 0
        %v8899 = vsel %vm1742, %v8864, 0
        %8901 = vmatprep.subr.bf16.mxu0 0
        %8902 = vmatpush1.bf16.msra.mxu0 0
        %8903 = vmatprep.subr.bf16.mxu0 0
        %8904 = vmatpush1.bf16.msra.mxu0 0
        %8905 = vmatprep.subr.bf16.mxu0 0
        %8906 = vmatpush1.bf16.msra.mxu0 0
        %8907 = vmatprep.subr.bf16.mxu0 0
        %8908 = vmatpush1.bf16.msra.mxu0 0
        %8909 = vmatprep.subr.bf16.mxu0 0
        %8910 = vmatpush1.bf16.msra.mxu0 0
        %8911 = vmatprep.subr.bf16.mxu0 0
        %8912 = vmatpush1.bf16.msra.mxu0 0
        %8913 = vmatprep.subr.bf16.mxu0 0
        %8914 = vmatpush1.bf16.msra.mxu0 %v8874
        %8915 = vmatprep.subr.bf16.mxu0 0
        %8916 = vmatpush1.bf16.msra.mxu0 %v8873
        %8917 = vmatprep.subr.bf16.mxu0 0
        %8918 = vmatpush2.bf16.msra.mxu0 0
        %8919 = vmatprep.subr.bf16.mxu0 0
        %8920 = vmatpush2.bf16.msra.mxu0 0
        %8921 = vmatprep.subr.bf16.mxu0 0
        %8922 = vmatpush2.bf16.msra.mxu0 0
        %8923 = vmatprep.subr.bf16.mxu0 0
        %8924 = vmatpush2.bf16.msra.mxu0 0
        %8925 = vmatprep.subr.bf16.mxu0 0
        %8926 = vmatpush2.bf16.msra.mxu0 0
        %8927 = vmatprep.subr.bf16.mxu0 0
        %8928 = vmatpush2.bf16.msra.mxu0 0
        %8929 = vmatprep.subr.bf16.mxu0 0
        %8930 = vmatpush2.bf16.msra.mxu0 0
        %8931 = vmatprep.subr.bf16.mxu0 0
        %8932 = vmatpush2.bf16.msra.mxu0 0
        %8933 = vmatprep.mubr.bf16.mxu0 0
        %8934 = vmatmul.mubr.bf16.gmra.mxu0 %v8878
        %v8935 = vpop.f32.mrf.mxu0
        %v8936 = vadd.f32 0.0, %v8935
        %v8937 = vpop.f32.mrf.mxu0
        %v8938 = vpop.f32.mrf.mxu0
        %v8939 = vadd.f32 0.0, %v8938
        %v8940 = vpop.f32.mrf.mxu0
        %8941 = vmatprep.mubr.bf16.mxu0 0
        %8942 = vmatmul.mubr.bf16.gmra.mxu0 %v8881
        %v8943 = vpop.f32.mrf.mxu0
        %v8944 = vadd.f32 0.0, %v8943
        %v8945 = vpop.f32.mrf.mxu0
        %v8946 = vpop.f32.mrf.mxu0
        %v8947 = vadd.f32 0.0, %v8946
        %v8948 = vpop.f32.mrf.mxu0
        %8949 = vmatprep.mubr.bf16.mxu0 0
        %8950 = vmatmul.mubr.bf16.gmra.mxu0 %v8884
        %v8951 = vpop.f32.mrf.mxu0
        %v8952 = vadd.f32 0.0, %v8951
        %v8953 = vpop.f32.mrf.mxu0
        %v8954 = vpop.f32.mrf.mxu0
        %v8955 = vadd.f32 0.0, %v8954
        %v8956 = vpop.f32.mrf.mxu0
        %8957 = vmatprep.mubr.bf16.mxu0 0
        %8958 = vmatmul.mubr.bf16.gmra.mxu0 %v8887
        %v8959 = vpop.f32.mrf.mxu0
        %v8960 = vadd.f32 0.0, %v8959
        %v8961 = vpop.f32.mrf.mxu0
        %v8962 = vpop.f32.mrf.mxu0
        %v8963 = vadd.f32 0.0, %v8962
        %v8964 = vpop.f32.mrf.mxu0
        %8965 = vmatprep.mubr.bf16.mxu0 0
        %8966 = vmatmul.mubr.bf16.gmra.mxu0 %v8890
        %v8967 = vpop.f32.mrf.mxu0
        %v8968 = vadd.f32 0.0, %v8967
        %v8969 = vpop.f32.mrf.mxu0
        %v8970 = vpop.f32.mrf.mxu0
        %v8971 = vadd.f32 0.0, %v8970
        %v8972 = vpop.f32.mrf.mxu0
        %8973 = vmatprep.mubr.bf16.mxu0 0
        %8974 = vmatmul.mubr.bf16.gmra.mxu0 %v8893
        %v8975 = vpop.f32.mrf.mxu0
        %v8976 = vadd.f32 0.0, %v8975
        %v8977 = vpop.f32.mrf.mxu0
        %v8978 = vpop.f32.mrf.mxu0
        %v8979 = vadd.f32 0.0, %v8978
        %v8980 = vpop.f32.mrf.mxu0
        %8981 = vmatprep.mubr.bf16.mxu0 0
        %8982 = vmatmul.mubr.bf16.gmra.mxu0 %v8896
        %v8983 = vpop.f32.mrf.mxu0
        %v8984 = vadd.f32 0.0, %v8983
        %v8985 = vpop.f32.mrf.mxu0
        %v8986 = vpop.f32.mrf.mxu0
        %v8987 = vadd.f32 0.0, %v8986
        %v8988 = vpop.f32.mrf.mxu0
        %8989 = vmatprep.mubr.bf16.mxu0 0
        %8990 = vmatmul.mubr.bf16.gmra.mxu0 %v8899
        %v8991 = vpop.f32.mrf.mxu0
        %v8992 = vadd.f32 0.0, %v8991
        %v8993 = vpop.f32.mrf.mxu0
        %v8994 = vpop.f32.mrf.mxu0
        %v8995 = vadd.f32 0.0, %v8994
        %v8996 = vpop.f32.mrf.mxu0
        %8997 = vdwg.mxu0
        %v8998 = vadd.f32 %v8758, %v8936
        %v8999 = vadd.f32 %v8761, %v8939
        %v9000 = vadd.f32 %v8766, %v8944
        %v9001 = vadd.f32 %v8769, %v8947
        %v9002 = vadd.f32 %v8774, %v8952
        %v9003 = vadd.f32 %v8777, %v8955
        %v9004 = vadd.f32 %v8782, %v8960
        %v9005 = vadd.f32 %v8785, %v8963
        %v9006 = vadd.f32 %v8790, %v8968
        %v9007 = vadd.f32 %v8793, %v8971
        %v9008 = vadd.f32 %v8798, %v8976
        %v9009 = vadd.f32 %v8801, %v8979
        %v9010 = vadd.f32 %v8806, %v8984
        %v9011 = vadd.f32 %v8809, %v8987
        %v9012 = vadd.f32 %v8814, %v8992
        %v9013 = vadd.f32 %v8817, %v8995
        %s9014 = scalar_lea.vmem [#allocation8], 48
        %v9015 = vld [vmem:[%s9014] sm:$0xf]
        %v9016 = vld [vmem:[%s9014 + $0x4] sm:$0xf]
        %v9017 = vld [vmem:[%s9014 + $0x8] sm:$0xf]
        %v9018 = vld [vmem:[%s9014 + $0xc] sm:$0xf]
        %v9035 = vunpack.c.l.b16 %v8449
        %v9036 = vunpack.c.l.b16 %v8450
        %v9037 = vunpack.c.l.b16 %v8451
        %v9038 = vunpack.c.l.b16 %v8452
        %v9039 = vunpack.c.l.b16 %v8453
        %v9040 = vunpack.c.l.b16 %v8454
        %v9041 = vunpack.c.l.b16 %v8455
        %v9042 = vunpack.c.l.b16 %v8456
        %v9043 = vunpack.c.l.b16 %v8457
        %v9044 = vunpack.c.l.b16 %v8458
        %v9045 = vunpack.c.l.b16 %v8459
        %v9046 = vunpack.c.l.b16 %v8460
        %v9047 = vunpack.c.l.b16 %v8461
        %v9048 = vunpack.c.l.b16 %v8462
        %v9049 = vunpack.c.l.b16 %v8463
        %v9050 = vunpack.c.l.b16 %v8464
        %v9051 = vpack.c.b16 %v9036, %v9035
        %v9052 = vpack.c.b16 %v9038, %v9037
        %v9053 = vpack.c.b16 %v9040, %v9039
        %v9054 = vpack.c.b16 %v9042, %v9041
        %v9055 = vpack.c.b16 %v9044, %v9043
        %v9056 = vpack.c.b16 %v9046, %v9045
        %v9057 = vpack.c.b16 %v9048, %v9047
        %v9058 = vpack.c.b16 %v9050, %v9049
        %v9063 = vunpack.c.l.b16 %v9015
        %v9064 = vunpack.c.l.b16 %v9016
        %v9065 = vunpack.c.l.b16 %v9017
        %v9066 = vunpack.c.l.b16 %v9018
        %v9067 = vpack.c.b16 %v9064, %v9063
        %v9068 = vpack.c.b16 %v9066, %v9065
        %v9072 = vsel %vm1742, %v9051, 0
        %v9075 = vsel %vm1742, %v9052, 0
        %v9078 = vsel %vm1742, %v9053, 0
        %v9081 = vsel %vm1742, %v9054, 0
        %v9084 = vsel %vm1742, %v9055, 0
        %v9087 = vsel %vm1742, %v9056, 0
        %v9090 = vsel %vm1742, %v9057, 0
        %v9093 = vsel %vm1742, %v9058, 0
        %9095 = vmatprep.subr.bf16.mxu0 0
        %9096 = vmatpush1.bf16.msra.mxu0 0
        %9097 = vmatprep.subr.bf16.mxu0 0
        %9098 = vmatpush1.bf16.msra.mxu0 0
        %9099 = vmatprep.subr.bf16.mxu0 0
        %9100 = vmatpush1.bf16.msra.mxu0 0
        %9101 = vmatprep.subr.bf16.mxu0 0
        %9102 = vmatpush1.bf16.msra.mxu0 0
        %9103 = vmatprep.subr.bf16.mxu0 0
        %9104 = vmatpush1.bf16.msra.mxu0 0
        %9105 = vmatprep.subr.bf16.mxu0 0
        %9106 = vmatpush1.bf16.msra.mxu0 0
        %9107 = vmatprep.subr.bf16.mxu0 0
        %9108 = vmatpush1.bf16.msra.mxu0 %v9068
        %9109 = vmatprep.subr.bf16.mxu0 0
        %9110 = vmatpush1.bf16.msra.mxu0 %v9067
        %9111 = vmatprep.subr.bf16.mxu0 0
        %9112 = vmatpush2.bf16.msra.mxu0 0
        %9113 = vmatprep.subr.bf16.mxu0 0
        %9114 = vmatpush2.bf16.msra.mxu0 0
        %9115 = vmatprep.subr.bf16.mxu0 0
        %9116 = vmatpush2.bf16.msra.mxu0 0
        %9117 = vmatprep.subr.bf16.mxu0 0
        %9118 = vmatpush2.bf16.msra.mxu0 0
        %9119 = vmatprep.subr.bf16.mxu0 0
        %9120 = vmatpush2.bf16.msra.mxu0 0
        %9121 = vmatprep.subr.bf16.mxu0 0
        %9122 = vmatpush2.bf16.msra.mxu0 0
        %9123 = vmatprep.subr.bf16.mxu0 0
        %9124 = vmatpush2.bf16.msra.mxu0 0
        %9125 = vmatprep.subr.bf16.mxu0 0
        %9126 = vmatpush2.bf16.msra.mxu0 0
        %9127 = vmatprep.mubr.bf16.mxu0 0
        %9128 = vmatmul.mubr.bf16.gmra.mxu0 %v9072
        %v9129 = vpop.f32.mrf.mxu0
        %v9130 = vadd.f32 0.0, %v9129
        %v9131 = vpop.f32.mrf.mxu0
        %v9132 = vpop.f32.mrf.mxu0
        %v9133 = vadd.f32 0.0, %v9132
        %v9134 = vpop.f32.mrf.mxu0
        %9135 = vmatprep.mubr.bf16.mxu0 0
        %9136 = vmatmul.mubr.bf16.gmra.mxu0 %v9075
        %v9137 = vpop.f32.mrf.mxu0
        %v9138 = vadd.f32 0.0, %v9137
        %v9139 = vpop.f32.mrf.mxu0
        %v9140 = vpop.f32.mrf.mxu0
        %v9141 = vadd.f32 0.0, %v9140
        %v9142 = vpop.f32.mrf.mxu0
        %9143 = vmatprep.mubr.bf16.mxu0 0
        %9144 = vmatmul.mubr.bf16.gmra.mxu0 %v9078
        %v9145 = vpop.f32.mrf.mxu0
        %v9146 = vadd.f32 0.0, %v9145
        %v9147 = vpop.f32.mrf.mxu0
        %v9148 = vpop.f32.mrf.mxu0
        %v9149 = vadd.f32 0.0, %v9148
        %v9150 = vpop.f32.mrf.mxu0
        %9151 = vmatprep.mubr.bf16.mxu0 0
        %9152 = vmatmul.mubr.bf16.gmra.mxu0 %v9081
        %v9153 = vpop.f32.mrf.mxu0
        %v9154 = vadd.f32 0.0, %v9153
        %v9155 = vpop.f32.mrf.mxu0
        %v9156 = vpop.f32.mrf.mxu0
        %v9157 = vadd.f32 0.0, %v9156
        %v9158 = vpop.f32.mrf.mxu0
        %9159 = vmatprep.mubr.bf16.mxu0 0
        %9160 = vmatmul.mubr.bf16.gmra.mxu0 %v9084
        %v9161 = vpop.f32.mrf.mxu0
        %v9162 = vadd.f32 0.0, %v9161
        %v9163 = vpop.f32.mrf.mxu0
        %v9164 = vpop.f32.mrf.mxu0
        %v9165 = vadd.f32 0.0, %v9164
        %v9166 = vpop.f32.mrf.mxu0
        %9167 = vmatprep.mubr.bf16.mxu0 0
        %9168 = vmatmul.mubr.bf16.gmra.mxu0 %v9087
        %v9169 = vpop.f32.mrf.mxu0
        %v9170 = vadd.f32 0.0, %v9169
        %v9171 = vpop.f32.mrf.mxu0
        %v9172 = vpop.f32.mrf.mxu0
        %v9173 = vadd.f32 0.0, %v9172
        %v9174 = vpop.f32.mrf.mxu0
        %9175 = vmatprep.mubr.bf16.mxu0 0
        %9176 = vmatmul.mubr.bf16.gmra.mxu0 %v9090
        %v9177 = vpop.f32.mrf.mxu0
        %v9178 = vadd.f32 0.0, %v9177
        %v9179 = vpop.f32.mrf.mxu0
        %v9180 = vpop.f32.mrf.mxu0
        %v9181 = vadd.f32 0.0, %v9180
        %v9182 = vpop.f32.mrf.mxu0
        %9183 = vmatprep.mubr.bf16.mxu0 0
        %9184 = vmatmul.mubr.bf16.gmra.mxu0 %v9093
        %v9185 = vpop.f32.mrf.mxu0
        %v9186 = vadd.f32 0.0, %v9185
        %v9187 = vpop.f32.mrf.mxu0
        %v9188 = vpop.f32.mrf.mxu0
        %v9189 = vadd.f32 0.0, %v9188
        %v9190 = vpop.f32.mrf.mxu0
        %9191 = vdwg.mxu0
        %v9192 = vadd.f32 %v8998, %v9130
        %v9193 = vadd.f32 %v8999, %v9133
        %v9194 = vadd.f32 %v9000, %v9138
        %v9195 = vadd.f32 %v9001, %v9141
        %v9196 = vadd.f32 %v9002, %v9146
        %v9197 = vadd.f32 %v9003, %v9149
        %v9198 = vadd.f32 %v9004, %v9154
        %v9199 = vadd.f32 %v9005, %v9157
        %v9200 = vadd.f32 %v9006, %v9162
        %v9201 = vadd.f32 %v9007, %v9165
        %v9202 = vadd.f32 %v9008, %v9170
        %v9203 = vadd.f32 %v9009, %v9173
        %v9204 = vadd.f32 %v9010, %v9178
        %v9205 = vadd.f32 %v9011, %v9181
        %v9206 = vadd.f32 %v9012, %v9186
        %v9207 = vadd.f32 %v9013, %v9189
        %v9208 = vld [vmem:[%s8] sm:$0x1]
        %v9210 = vlaneseq
        %v9211 = vshrl.u32 %v9210, 7
        %v9212 = vsub.s32 0, %v9211
        %v9213 = vrot.slane %v9208, %v9212
        %v9215 = vadd.f32 %v9192, %v9213
        %v9216 = vadd.f32 %v9193, %v9213
        %v9217 = vadd.f32 %v9194, %v9213
        %v9218 = vadd.f32 %v9195, %v9213
        %v9219 = vadd.f32 %v9196, %v9213
        %v9220 = vadd.f32 %v9197, %v9213
        %v9221 = vadd.f32 %v9198, %v9213
        %v9222 = vadd.f32 %v9199, %v9213
        %v9223 = vadd.f32 %v9200, %v9213
        %v9224 = vadd.f32 %v9201, %v9213
        %v9225 = vadd.f32 %v9202, %v9213
        %v9226 = vadd.f32 %v9203, %v9213
        %v9227 = vadd.f32 %v9204, %v9213
        %v9228 = vadd.f32 %v9205, %v9213
        %v9229 = vadd.f32 %v9206, %v9213
        %v9230 = vadd.f32 %v9207, %v9213
        %v9231 = vadd.f32 %v899, %v9215
        %v9232 = vadd.f32 %v900, %v9216
        %v9233 = vadd.f32 %v901, %v9217
        %v9234 = vadd.f32 %v902, %v9218
        %v9235 = vadd.f32 %v903, %v9219
        %v9236 = vadd.f32 %v904, %v9220
        %v9237 = vadd.f32 %v905, %v9221
        %v9238 = vadd.f32 %v906, %v9222
        %v9239 = vadd.f32 %v907, %v9223
        %v9240 = vadd.f32 %v908, %v9224
        %v9241 = vadd.f32 %v909, %v9225
        %v9242 = vadd.f32 %v910, %v9226
        %v9243 = vadd.f32 %v911, %v9227
        %v9244 = vadd.f32 %v912, %v9228
        %v9245 = vadd.f32 %v913, %v9229
        %v9246 = vadd.f32 %v914, %v9230
        %v9247 = vld [vmem:[%s9] sm:$0x1]
        %v9248 = vld [vmem:[%s10] sm:$0x1]
        %9249 = vadd.xlane.f32.xlu0 %v9231
        %v9250 = vpop.xlane.xlu0 %9249
        %9251 = vadd.xlane.f32.xlu0 %v9232
        %v9252 = vpop.xlane.xlu0 %9251
        %9253 = vadd.xlane.f32.xlu0 %v9233
        %v9254 = vpop.xlane.xlu0 %9253
        %9255 = vadd.xlane.f32.xlu0 %v9234
        %v9256 = vpop.xlane.xlu0 %9255
        %9257 = vadd.xlane.f32.xlu0 %v9235
        %v9258 = vpop.xlane.xlu0 %9257
        %9259 = vadd.xlane.f32.xlu0 %v9236
        %v9260 = vpop.xlane.xlu0 %9259
        %9261 = vadd.xlane.f32.xlu0 %v9237
        %v9262 = vpop.xlane.xlu0 %9261
        %9263 = vadd.xlane.f32.xlu0 %v9238
        %v9264 = vpop.xlane.xlu0 %9263
        %9265 = vadd.xlane.f32.xlu0 %v9239
        %v9266 = vpop.xlane.xlu0 %9265
        %9267 = vadd.xlane.f32.xlu0 %v9240
        %v9268 = vpop.xlane.xlu0 %9267
        %9269 = vadd.xlane.f32.xlu0 %v9241
        %v9270 = vpop.xlane.xlu0 %9269
        %9271 = vadd.xlane.f32.xlu0 %v9242
        %v9272 = vpop.xlane.xlu0 %9271
        %9273 = vadd.xlane.f32.xlu0 %v9243
        %v9274 = vpop.xlane.xlu0 %9273
        %9275 = vadd.xlane.f32.xlu0 %v9244
        %v9276 = vpop.xlane.xlu0 %9275
        %9277 = vadd.xlane.f32.xlu0 %v9245
        %v9278 = vpop.xlane.xlu0 %9277
        %9279 = vadd.xlane.f32.xlu0 %v9246
        %v9280 = vpop.xlane.xlu0 %9279
        %v9281 = vmul.f32 %v9250, %v502
        %v9282 = vmul.f32 %v9252, %v502
        %v9283 = vmul.f32 %v9254, %v502
        %v9284 = vmul.f32 %v9256, %v502
        %v9285 = vmul.f32 %v9258, %v502
        %v9286 = vmul.f32 %v9260, %v502
        %v9287 = vmul.f32 %v9262, %v502
        %v9288 = vmul.f32 %v9264, %v502
        %v9289 = vmul.f32 %v9266, %v502
        %v9290 = vmul.f32 %v9268, %v502
        %v9291 = vmul.f32 %v9270, %v502
        %v9292 = vmul.f32 %v9272, %v502
        %v9293 = vmul.f32 %v9274, %v502
        %v9294 = vmul.f32 %v9276, %v502
        %v9295 = vmul.f32 %v9278, %v502
        %v9296 = vmul.f32 %v9280, %v502
        %v9297 = vmul.f32 %v9231, %v9231
        %v9298 = vmul.f32 %v9232, %v9232
        %v9299 = vmul.f32 %v9233, %v9233
        %v9300 = vmul.f32 %v9234, %v9234
        %v9301 = vmul.f32 %v9235, %v9235
        %v9302 = vmul.f32 %v9236, %v9236
        %v9303 = vmul.f32 %v9237, %v9237
        %v9304 = vmul.f32 %v9238, %v9238
        %v9305 = vmul.f32 %v9239, %v9239
        %v9306 = vmul.f32 %v9240, %v9240
        %v9307 = vmul.f32 %v9241, %v9241
        %v9308 = vmul.f32 %v9242, %v9242
        %v9309 = vmul.f32 %v9243, %v9243
        %v9310 = vmul.f32 %v9244, %v9244
        %v9311 = vmul.f32 %v9245, %v9245
        %v9312 = vmul.f32 %v9246, %v9246
        %9313 = vadd.xlane.f32.xlu0 %v9297
        %v9314 = vpop.xlane.xlu0 %9313
        %9315 = vadd.xlane.f32.xlu0 %v9298
        %v9316 = vpop.xlane.xlu0 %9315
        %9317 = vadd.xlane.f32.xlu0 %v9299
        %v9318 = vpop.xlane.xlu0 %9317
        %9319 = vadd.xlane.f32.xlu0 %v9300
        %v9320 = vpop.xlane.xlu0 %9319
        %9321 = vadd.xlane.f32.xlu0 %v9301
        %v9322 = vpop.xlane.xlu0 %9321
        %9323 = vadd.xlane.f32.xlu0 %v9302
        %v9324 = vpop.xlane.xlu0 %9323
        %9325 = vadd.xlane.f32.xlu0 %v9303
        %v9326 = vpop.xlane.xlu0 %9325
        %9327 = vadd.xlane.f32.xlu0 %v9304
        %v9328 = vpop.xlane.xlu0 %9327
        %9329 = vadd.xlane.f32.xlu0 %v9305
        %v9330 = vpop.xlane.xlu0 %9329
        %9331 = vadd.xlane.f32.xlu0 %v9306
        %v9332 = vpop.xlane.xlu0 %9331
        %9333 = vadd.xlane.f32.xlu0 %v9307
        %v9334 = vpop.xlane.xlu0 %9333
        %9335 = vadd.xlane.f32.xlu0 %v9308
        %v9336 = vpop.xlane.xlu0 %9335
        %9337 = vadd.xlane.f32.xlu0 %v9309
        %v9338 = vpop.xlane.xlu0 %9337
        %9339 = vadd.xlane.f32.xlu0 %v9310
        %v9340 = vpop.xlane.xlu0 %9339
        %9341 = vadd.xlane.f32.xlu0 %v9311
        %v9342 = vpop.xlane.xlu0 %9341
        %9343 = vadd.xlane.f32.xlu0 %v9312
        %v9344 = vpop.xlane.xlu0 %9343
        %v9345 = vmul.f32 %v9314, %v502
        %v9346 = vmul.f32 %v9316, %v502
        %v9347 = vmul.f32 %v9318, %v502
        %v9348 = vmul.f32 %v9320, %v502
        %v9349 = vmul.f32 %v9322, %v502
        %v9350 = vmul.f32 %v9324, %v502
        %v9351 = vmul.f32 %v9326, %v502
        %v9352 = vmul.f32 %v9328, %v502
        %v9353 = vmul.f32 %v9330, %v502
        %v9354 = vmul.f32 %v9332, %v502
        %v9355 = vmul.f32 %v9334, %v502
        %v9356 = vmul.f32 %v9336, %v502
        %v9357 = vmul.f32 %v9338, %v502
        %v9358 = vmul.f32 %v9340, %v502
        %v9359 = vmul.f32 %v9342, %v502
        %v9360 = vmul.f32 %v9344, %v502
        %v9361 = vmul.f32 %v9281, %v9281
        %v9362 = vmul.f32 %v9282, %v9282
        %v9363 = vmul.f32 %v9283, %v9283
        %v9364 = vmul.f32 %v9284, %v9284
        %v9365 = vmul.f32 %v9285, %v9285
        %v9366 = vmul.f32 %v9286, %v9286
        %v9367 = vmul.f32 %v9287, %v9287
        %v9368 = vmul.f32 %v9288, %v9288
        %v9369 = vmul.f32 %v9289, %v9289
        %v9370 = vmul.f32 %v9290, %v9290
        %v9371 = vmul.f32 %v9291, %v9291
        %v9372 = vmul.f32 %v9292, %v9292
        %v9373 = vmul.f32 %v9293, %v9293
        %v9374 = vmul.f32 %v9294, %v9294
        %v9375 = vmul.f32 %v9295, %v9295
        %v9376 = vmul.f32 %v9296, %v9296
        %v9377 = vsub.f32 %v9345, %v9361
        %v9378 = vsub.f32 %v9346, %v9362
        %v9379 = vsub.f32 %v9347, %v9363
        %v9380 = vsub.f32 %v9348, %v9364
        %v9381 = vsub.f32 %v9349, %v9365
        %v9382 = vsub.f32 %v9350, %v9366
        %v9383 = vsub.f32 %v9351, %v9367
        %v9384 = vsub.f32 %v9352, %v9368
        %v9385 = vsub.f32 %v9353, %v9369
        %v9386 = vsub.f32 %v9354, %v9370
        %v9387 = vsub.f32 %v9355, %v9371
        %v9388 = vsub.f32 %v9356, %v9372
        %v9389 = vsub.f32 %v9357, %v9373
        %v9390 = vsub.f32 %v9358, %v9374
        %v9391 = vsub.f32 %v9359, %v9375
        %v9392 = vsub.f32 %v9360, %v9376
        %v9393 = vsub.f32 %v9231, %v9281
        %v9394 = vsub.f32 %v9232, %v9282
        %v9395 = vsub.f32 %v9233, %v9283
        %v9396 = vsub.f32 %v9234, %v9284
        %v9397 = vsub.f32 %v9235, %v9285
        %v9398 = vsub.f32 %v9236, %v9286
        %v9399 = vsub.f32 %v9237, %v9287
        %v9400 = vsub.f32 %v9238, %v9288
        %v9401 = vsub.f32 %v9239, %v9289
        %v9402 = vsub.f32 %v9240, %v9290
        %v9403 = vsub.f32 %v9241, %v9291
        %v9404 = vsub.f32 %v9242, %v9292
        %v9405 = vsub.f32 %v9243, %v9293
        %v9406 = vsub.f32 %v9244, %v9294
        %v9407 = vsub.f32 %v9245, %v9295
        %v9408 = vsub.f32 %v9246, %v9296
        %v9409 = vadd.f32 %v9377, 1e-05
        %v9410 = vadd.f32 %v9378, 1e-05
        %v9411 = vadd.f32 %v9379, 1e-05
        %v9412 = vadd.f32 %v9380, 1e-05
        %v9413 = vadd.f32 %v9381, 1e-05
        %v9414 = vadd.f32 %v9382, 1e-05
        %v9415 = vadd.f32 %v9383, 1e-05
        %v9416 = vadd.f32 %v9384, 1e-05
        %v9417 = vadd.f32 %v9385, 1e-05
        %v9418 = vadd.f32 %v9386, 1e-05
        %v9419 = vadd.f32 %v9387, 1e-05
        %v9420 = vadd.f32 %v9388, 1e-05
        %v9421 = vadd.f32 %v9389, 1e-05
        %v9422 = vadd.f32 %v9390, 1e-05
        %v9423 = vadd.f32 %v9391, 1e-05
        %v9424 = vadd.f32 %v9392, 1e-05
        %v9425 = vrsqrt.pop %v9409
        %v9426 = vrsqrt.pop %v9410
        %v9427 = vrsqrt.pop %v9411
        %v9428 = vrsqrt.pop %v9412
        %v9429 = vrsqrt.pop %v9413
        %v9430 = vrsqrt.pop %v9414
        %v9431 = vrsqrt.pop %v9415
        %v9432 = vrsqrt.pop %v9416
        %v9433 = vrsqrt.pop %v9417
        %v9434 = vrsqrt.pop %v9418
        %v9435 = vrsqrt.pop %v9419
        %v9436 = vrsqrt.pop %v9420
        %v9437 = vrsqrt.pop %v9421
        %v9438 = vrsqrt.pop %v9422
        %v9439 = vrsqrt.pop %v9423
        %v9440 = vrsqrt.pop %v9424
        %v9441 = vmul.f32 %v9393, %v9425
        %v9442 = vmul.f32 %v9394, %v9426
        %v9443 = vmul.f32 %v9395, %v9427
        %v9444 = vmul.f32 %v9396, %v9428
        %v9445 = vmul.f32 %v9397, %v9429
        %v9446 = vmul.f32 %v9398, %v9430
        %v9447 = vmul.f32 %v9399, %v9431
        %v9448 = vmul.f32 %v9400, %v9432
        %v9449 = vmul.f32 %v9401, %v9433
        %v9450 = vmul.f32 %v9402, %v9434
        %v9451 = vmul.f32 %v9403, %v9435
        %v9452 = vmul.f32 %v9404, %v9436
        %v9453 = vmul.f32 %v9405, %v9437
        %v9454 = vmul.f32 %v9406, %v9438
        %v9455 = vmul.f32 %v9407, %v9439
        %v9456 = vmul.f32 %v9408, %v9440
        %v9458 = vlaneseq
        %v9459 = vshrl.u32 %v9458, 7
        %v9460 = vsub.s32 0, %v9459
        %v9461 = vrot.slane %v9247, %v9460
        %v9463 = vmul.f32 %v9441, %v9461
        %v9464 = vmul.f32 %v9442, %v9461
        %v9465 = vmul.f32 %v9443, %v9461
        %v9466 = vmul.f32 %v9444, %v9461
        %v9467 = vmul.f32 %v9445, %v9461
        %v9468 = vmul.f32 %v9446, %v9461
        %v9469 = vmul.f32 %v9447, %v9461
        %v9470 = vmul.f32 %v9448, %v9461
        %v9471 = vmul.f32 %v9449, %v9461
        %v9472 = vmul.f32 %v9450, %v9461
        %v9473 = vmul.f32 %v9451, %v9461
        %v9474 = vmul.f32 %v9452, %v9461
        %v9475 = vmul.f32 %v9453, %v9461
        %v9476 = vmul.f32 %v9454, %v9461
        %v9477 = vmul.f32 %v9455, %v9461
        %v9478 = vmul.f32 %v9456, %v9461
        %v9480 = vlaneseq
        %v9481 = vshrl.u32 %v9480, 7
        %v9482 = vsub.s32 0, %v9481
        %v9483 = vrot.slane %v9248, %v9482
        %v9485 = vadd.f32 %v9463, %v9483
        %v9486 = vadd.f32 %v9464, %v9483
        %v9487 = vadd.f32 %v9465, %v9483
        %v9488 = vadd.f32 %v9466, %v9483
        %v9489 = vadd.f32 %v9467, %v9483
        %v9490 = vadd.f32 %v9468, %v9483
        %v9491 = vadd.f32 %v9469, %v9483
        %v9492 = vadd.f32 %v9470, %v9483
        %v9493 = vadd.f32 %v9471, %v9483
        %v9494 = vadd.f32 %v9472, %v9483
        %v9495 = vadd.f32 %v9473, %v9483
        %v9496 = vadd.f32 %v9474, %v9483
        %v9497 = vadd.f32 %v9475, %v9483
        %v9498 = vadd.f32 %v9476, %v9483
        %v9499 = vadd.f32 %v9477, %v9483
        %v9500 = vadd.f32 %v9478, %v9483
        %9501 = vst [vmem:[%s448] sm:$0xff] %v9485
        %9502 = vst [vmem:[%s448 + $0x8] sm:$0xff] %v9486
        %9503 = vst [vmem:[%s448 + $0x10] sm:$0xff] %v9487
        %9504 = vst [vmem:[%s448 + $0x18] sm:$0xff] %v9488
        %9505 = vst [vmem:[%s448 + $0x20] sm:$0xff] %v9489
        %9506 = vst [vmem:[%s448 + $0x28] sm:$0xff] %v9490
        %9507 = vst [vmem:[%s448 + $0x30] sm:$0xff] %v9491
        %9508 = vst [vmem:[%s448 + $0x38] sm:$0xff] %v9492
        %9509 = vst [vmem:[%s448 + $0x40] sm:$0xff] %v9493
        %9510 = vst [vmem:[%s448 + $0x48] sm:$0xff] %v9494
        %9511 = vst [vmem:[%s448 + $0x50] sm:$0xff] %v9495
        %9512 = vst [vmem:[%s448 + $0x58] sm:$0xff] %v9496
        %9513 = vst [vmem:[%s448 + $0x60] sm:$0xff] %v9497
        %9514 = vst [vmem:[%s448 + $0x68] sm:$0xff] %v9498
        %9515 = vst [vmem:[%s448 + $0x70] sm:$0xff] %v9499
        %9516 = vst [vmem:[%s448 + $0x78] sm:$0xff] %v9500
        %s9517 = sand.u32 %s274, 1
        %s9518 = scalar_lea.sflag [#allocation4], %s9517
        %s9519 = sand.u32 %s274, 1
        %s9520 = smul.addr %s9519, 128
        %s9521 = scalar_lea.vmem [#allocation10], %s9520
        // Predicated region
        $region81: #{transformer_encoder_block_batch_first.1} parent=63 // pred_check
          %p9522 = pneg %p284
        $region82: #{transformer_encoder_block_batch_first.1} parent=63 // pred_check_branch
          %9524 = sbr.rel (%p9522) target = $region84
        $region83: #{transformer_encoder_block_batch_first.1} parent=63 // pred_region
          %s9525 = smul.u32 16, %s30
          %s9527 = ssub.s32 2048, 2048
          %9528 = vsyncadd %s9518, %s9527
          %s9529 = smul.addr %s9525, 128
          %s9530 = scalar_lea.hbm %s11, %s9529
          %s9531 = sshll.u32 %s9521, 4
          %s9532 = int_to_ptr.vmem [resolvable:$true] %s9531
          %9537 = dma.vmem_to_hbm [thread:$0]  %s9532, 2048, %s9530, %s9518, 128, 128, 8
        $region84: #{transformer_encoder_block_batch_first.1} parent=63 // pred_fallthru
          _
      $region64: #{transformer_encoder_block_batch_first.1} parent=5 // pred_fallthru
        _
      %p9538 = scmp.le.s32.totalorder 2, %s25
      // Predicated region
      $region85: #{transformer_encoder_block_batch_first.1} parent=5 // pred_check
        %p9539 = pneg %p9538
      $region86: #{transformer_encoder_block_batch_first.1} parent=5 // pred_check_branch
        %9541 = sbr.rel (%p9539) target = $region88
      $region87: #{transformer_encoder_block_batch_first.1} parent=5 // pred_region
        %s9542 = ssub.s32 %s25, 2
        // Predicated region
        $region89: #{transformer_encoder_block_batch_first.1} parent=87 // pred_check
          %p9543 = pneg %p290
        $region90: #{transformer_encoder_block_batch_first.1} parent=87 // pred_check_branch
          %9545 = sbr.rel (%p9543) target = $region92
        $region91: #{transformer_encoder_block_batch_first.1} parent=87 // pred_region
          %s9546 = sand.u32 %s275, 1
          %s9547 = scalar_lea.sflag [#allocation4], %s9546
          %s9548 = sand.u32 %s275, 1
          %s9549 = smul.addr %s9548, 128
          %s9550 = scalar_lea.vmem [#allocation10], %s9549
          %9551 = dma.done %s9547, 2048
        $region92: #{transformer_encoder_block_batch_first.1} parent=87 // pred_fallthru
          _
      $region88: #{transformer_encoder_block_batch_first.1} parent=5 // pred_fallthru
        _
    $region6: #{transformer_encoder_block_batch_first.1} parent=1 // loop_footer
      %s29 = sadd.s32 1, %s25
    $region7: #{transformer_encoder_block_batch_first.1} parent=1 // loop_footer_branch
      %24 = sbr.rel target = $region3
    $region8: #{transformer_encoder_block_batch_first.1} parent=1 // loop_exit
      _
    %9552 = vsyncpa [#allocation3], 1
    %s9553 = scalar_lea.sflag [#allocation3], 1
    %9554 = vsyncpa %s9553, 1
    %9555 = vsyncpa [#allocation6], 1
    %9556 = vsyncpa [#allocation9], 1
    %9557 = vsyncpa [#allocation4], 1
    %s9558 = scalar_lea.sflag [#allocation4], 1
    %9559 = vsyncpa %s9558, 1

</llo_original>
